<compile_context>
chip_gen: v7x
topology: tpu7x:2x2x1
jax: 0.10.0
libtpu: 0.0.40
codegen_flags: <defaults>
</compile_context>

<pallas_src>
import numpy as np
import jax
import jax.numpy as jnp
from jax import lax
from jax.experimental import pallas as pl
from jax.experimental.pallas import tpu as pltpu

EPS = 1e-3                       # BatchNorm2d eps=0.001
VMEM_LIMIT = 64 * 1024 * 1024    # explicit scoped-VMEM budget (fits v5e/v6e/v7x)


# ------------------------------ kernel helpers ------------------------------

def _full_spec(shape):
    """BlockSpec covering the whole array (constant block index -> DMA'd once)."""
    return pl.BlockSpec(shape, lambda *_: (0,) * len(shape))


def _bn_relu(acc, gamma, beta):
    """BatchNorm2d (training-mode batch stats, biased variance) + ReLU.

    acc: (M, Ct) f32 conv output, M = N*H*W.  Two-pass mean / centered sum of
    squares (avoids the E[x^2]-E[x]^2 cancellation issue).
    """
    m = acc.shape[0]
    mean = jnp.sum(acc, axis=0, keepdims=True) * (1.0 / m)
    cen = acc - mean
    var = jnp.sum(cen * cen, axis=0, keepdims=True) * (1.0 / m)
    y = cen * lax.rsqrt(var + EPS) * gamma + beta
    return jnp.maximum(y, 0.0)


def _fill_padded(xpad_ref, x):
    """Zero-pad x by 1 pixel on H and W into a VMEM scratch (no HBM jnp.pad).

    Returns the padded value loaded back from the scratch.
    """
    n, h, w, _ = x.shape
    xpad_ref[...] = jnp.zeros(xpad_ref.shape, xpad_ref.dtype)
    xpad_ref[:, 1:h + 1, 1:w + 1, :] = x.astype(xpad_ref.dtype)
    return xpad_ref[...]


# ------------------------------ kernels --------------------------------------

def _stem_kernel(x_ref, w1_ref, w2_ref, w3_ref,
                 g1_ref, b1_ref, g2_ref, b2_ref, g3_ref, b3_ref,
                 o1_ref, o2_ref, o3_ref):
    """Fused 1x1 convs: branch1x1 | branch3x3_1 | branch3x3dbl_1 (x read once)."""
    N, H, W, Cin = x_ref.shape
    M = N * H * W
    x = x_ref[...].reshape(M, Cin)                       # bf16, shared by 3 matmuls
    for w_ref, g_ref, b_ref, o_ref in ((w1_ref, g1_ref, b1_ref, o1_ref),
                                       (w2_ref, g2_ref, b2_ref, o2_ref),
                                       (w3_ref, g3_ref, b3_ref, o3_ref)):
        acc = jnp.dot(x, w_ref[...], preferred_element_type=jnp.float32)
        y = _bn_relu(acc, g_ref[...], b_ref[...])
        o_ref[...] = y.reshape(N, H, W, y.shape[-1]).astype(o_ref.dtype)


def _conv3x3_kernel(x_ref, w_ref, g_ref, b_ref, o_ref, xpad_ref):
    """3x3 conv (padding 1) + BN + ReLU, per-tap MXU accumulation."""
    N, H, W, Cin = x_ref.shape
    M = N * H * W
    Ct = o_ref.shape[-1]
    xp = _fill_padded(xpad_ref, x_ref[...])
    acc = jnp.zeros((M, Ct), jnp.float32)
    t = 0
    for dh in range(3):
        for dw in range(3):
            patch = xp[:, dh:dh + H, dw:dw + W, :].reshape(M, Cin)
            acc = acc + jnp.dot(patch.astype(jnp.bfloat16), w_ref[t],
                                preferred_element_type=jnp.float32)
            t += 1
    y = _bn_relu(acc, g_ref[...], b_ref[...])
    o_ref[...] = y.reshape(N, H, W, Ct).astype(o_ref.dtype)


def _pair_1x3_3x1_kernel(x_ref, w_ref, g_ref, b_ref, o_ref, xpad_ref):
    """Fused (1x3, pad (0,1)) and (3x1, pad (1,0)) convs on one shared input.

    Grid step 0 computes the 1x3 conv, step 1 the 3x1 conv; both read the same
    input (DMA'd once) and write adjacent 384-wide channel slabs of one output
    tensor (the torch.cat is free).  The padded copy is rebuilt per step (cheap
    VMEM copy) so the steps stay order-independent / core-splittable.
    """
    j = pl.program_id(0)
    N, H, W, Cin = x_ref.shape
    M = N * H * W
    Ct = o_ref.shape[-1]
    xp = _fill_padded(xpad_ref, x_ref[...])

    def run(taps):
        acc = jnp.zeros((M, Ct), jnp.float32)
        for t, (dh, dw) in enumerate(taps):
            patch = xp[:, dh:dh + H, dw:dw + W, :].reshape(M, Cin)
            acc = acc + jnp.dot(patch.astype(jnp.bfloat16), w_ref[0, t],
                                preferred_element_type=jnp.float32)
        y = _bn_relu(acc, g_ref[...], b_ref[...])
        o_ref[...] = y.reshape(N, H, W, Ct).astype(o_ref.dtype)

    @pl.when(j == 0)
    def _():
        run(((1, 0), (1, 1), (1, 2)))     # 1x3 conv, padding (0, 1)

    @pl.when(j == 1)
    def _():
        run(((0, 1), (1, 1), (2, 1)))     # 3x1 conv, padding (1, 0)


def _conv1x1_pool_kernel(x_ref, w_ref, g_ref, b_ref, o_ref, ypad_ref):
    """branch_pool: 1x1 conv, then 3x3/stride-1 avg-pool, then BN + ReLU.

    avg_pool2d(3, stride 1, pad 1, count_include_pad) commutes with the
    bias-free 1x1 conv, so pooling after the matmul shrinks the 9-tap adds from
    Cin channels to 192 and removes any need to pad x.
    """
    N, H, W, Cin = x_ref.shape
    M = N * H * W
    Ct = o_ref.shape[-1]
    y = jnp.dot(x_ref[...].reshape(M, Cin), w_ref[...],
                preferred_element_type=jnp.float32)
    yp = _fill_padded(ypad_ref, y.reshape(N, H, W, Ct))
    acc = jnp.zeros((N, H, W, Ct), jnp.float32)
    for dh in range(3):
        for dw in range(3):
            acc = acc + yp[:, dh:dh + H, dw:dw + W, :]
    pooled = (acc * (1.0 / 9.0)).reshape(M, Ct)
    o_ref[...] = _bn_relu(pooled, g_ref[...], b_ref[...]).reshape(N, H, W, Ct)


# ------------------------------ kernel wrappers ------------------------------

def stem_1x1_convs(x, branches):
    """Three fused 1x1 conv+BN+ReLU branches on one shared bf16 input.

    branches: sequence of (w (Cin,Cout) bf16, gamma (Cout,), beta (Cout,), out_dtype).
    """
    N, H, W, Cin = x.shape
    ws = [b[0] for b in branches]
    gs = [b[1].reshape(1, -1) for b in branches]
    bs = [b[2].reshape(1, -1) for b in branches]
    dts = [b[3] for b in branches]
    cos = [w.shape[-1] for w in ws]
    return pl.pallas_call(
        _stem_kernel,
        out_shape=tuple(jax.ShapeDtypeStruct((N, H, W, co), dt)
                        for co, dt in zip(cos, dts)),
        grid=(1,),
        in_specs=[_full_spec((N, H, W, Cin)),
                  _full_spec((Cin, cos[0])), _full_spec((Cin, cos[1])),
                  _full_spec((Cin, cos[2])),
                  _full_spec((1, cos[0])), _full_spec((1, cos[0])),
                  _full_spec((1, cos[1])), _full_spec((1, cos[1])),
                  _full_spec((1, cos[2])), _full_spec((1, cos[2]))],
        out_specs=tuple(_full_spec((N, H, W, co)) for co in cos),
        compiler_params=pltpu.CompilerParams(
            dimension_semantics=("arbitrary",), vmem_limit_bytes=VMEM_LIMIT),
    )(x, ws[0], ws[1], ws[2], gs[0], bs[0], gs[1], bs[1], gs[2], bs[2])


def conv3x3_bn_relu(x, w9, gamma, beta, out_dtype):
    """3x3 conv (padding 1) + BN + ReLU.  x bf16 NHWC, w9 (9, Cin, Cout) bf16."""
    N, H, W, Cin = x.shape
    Cout = w9.shape[-1]
    return pl.pallas_call(
        _conv3x3_kernel,
        out_shape=jax.ShapeDtypeStruct((N, H, W, Cout), out_dtype),
        grid=(1,),
        in_specs=[_full_spec((N, H, W, Cin)), _full_spec((9, Cin, Cout)),
                  _full_spec((1, Cout)), _full_spec((1, Cout))],
        out_specs=_full_spec((N, H, W, Cout)),
        scratch_shapes=[pltpu.VMEM((N, H + 2, W + 2, Cin), jnp.float32)],
        compiler_params=pltpu.CompilerParams(
            dimension_semantics=("arbitrary",), vmem_limit_bytes=VMEM_LIMIT),
    )(x, w9, gamma.reshape(1, -1), beta.reshape(1, -1))


def conv_pair_1x3_3x1(x, w_a, w_b, gamma_a, beta_a, gamma_b, beta_b):
    """Fused [1x3 conv | 3x1 conv] pair on a shared bf16 input.

    Output channels = [a (384) | b (384)] as one f32 tensor (the concat is free).
    """
    N, H, W, Cin = x.shape
    Cout = w_a.shape[-1]
    w = jnp.stack([w_a, w_b], axis=0)                 # (2, 3, Cin, 384) bf16
    gamma = jnp.concatenate([gamma_a, gamma_b]).reshape(1, -1)
    beta = jnp.concatenate([beta_a, beta_b]).reshape(1, -1)
    return pl.pallas_call(
        _pair_1x3_3x1_kernel,
        out_shape=jax.ShapeDtypeStruct((N, H, W, 2 * Cout), jnp.float32),
        grid=(2,),
        in_specs=[pl.BlockSpec((N, H, W, Cin), lambda j: (0, 0, 0, 0)),
                  pl.BlockSpec((1, 3, Cin, Cout), lambda j: (j, 0, 0, 0)),
                  pl.BlockSpec((1, Cout), lambda j: (0, j)),
                  pl.BlockSpec((1, Cout), lambda j: (0, j))],
        out_specs=pl.BlockSpec((N, H, W, Cout), lambda j: (0, 0, 0, j)),
        scratch_shapes=[pltpu.VMEM((N, H + 2, W + 2, Cin), jnp.float32)],
        compiler_params=pltpu.CompilerParams(
            dimension_semantics=("parallel",), vmem_limit_bytes=VMEM_LIMIT),
    )(x, w, gamma, beta)


def conv1x1_pool_bn_relu(x, w, gamma, beta):
    """branch_pool: 1x1 conv -> 3x3 avg-pool -> BN -> ReLU (f32 output)."""
    N, H, W, Cin = x.shape
    Cout = w.shape[-1]
    return pl.pallas_call(
        _conv1x1_pool_kernel,
        out_shape=jax.ShapeDtypeStruct((N, H, W, Cout), jnp.float32),
        grid=(1,),
        in_specs=[_full_spec((N, H, W, Cin)), _full_spec((Cin, Cout)),
                  _full_spec((1, Cout)), _full_spec((1, Cout))],
        out_specs=_full_spec((N, H, W, Cout)),
        scratch_shapes=[pltpu.VMEM((N, H + 2, W + 2, Cout), jnp.float32)],
        compiler_params=pltpu.CompilerParams(
            dimension_semantics=("arbitrary",), vmem_limit_bytes=VMEM_LIMIT),
    )(x, w, gamma.reshape(1, -1), beta.reshape(1, -1))


# ------------------------------ InceptionE module ----------------------------

# (cout, kh, kw, padding); cin filled in at construction time where None.
_BRANCH_SPECS = {
    "branch1x1":       (320, 1, 1, (0, 0)),
    "branch3x3_1":     (384, 1, 1, (0, 0)),
    "branch3x3_2a":    (384, 1, 3, (0, 1)),
    "branch3x3_2b":    (384, 3, 1, (1, 0)),
    "branch3x3dbl_1":  (448, 1, 1, (0, 0)),
    "branch3x3dbl_2":  (384, 3, 3, (1, 1)),
    "branch3x3dbl_3a": (384, 1, 3, (0, 1)),
    "branch3x3dbl_3b": (384, 3, 1, (1, 0)),
    "branch_pool":     (192, 1, 1, (0, 0)),
}

_BRANCH_CIN = {
    "branch1x1": None, "branch3x3_1": None, "branch3x3_2a": 384,
    "branch3x3_2b": 384, "branch3x3dbl_1": None, "branch3x3dbl_2": 448,
    "branch3x3dbl_3a": 384, "branch3x3dbl_3b": 384, "branch_pool": None,
}


def init_inception_e_params(key, in_channels):
    params = {}
    names = list(_BRANCH_SPECS.keys())
    keys = jax.random.split(key, len(names))
    for k, name in zip(keys, names):
        cout, kh, kw, pad = _BRANCH_SPECS[name]
        cin = _BRANCH_CIN[name] or in_channels
        wk, gk, bk = jax.random.split(k, 3)
        params[name] = {
            "w": 0.05 * jax.random.normal(wk, (kh, kw, cin, cout), jnp.float32),
            "gamma": 1.0 + 0.1 * jax.random.normal(gk, (cout,), jnp.float32),
            "beta": 0.1 * jax.random.normal(bk, (cout,), jnp.float32),
            "padding": pad,
        }
    return params


def _w1x1(p):
    """(1,1,Cin,Cout) HWIO -> (Cin, Cout) bf16."""
    _, _, ci, co = p["w"].shape
    return p["w"].reshape(ci, co).astype(jnp.bfloat16)


def _wtap(p):
    """(Kh,Kw,Cin,Cout) HWIO -> (Kh*Kw, Cin, Cout) bf16 (tap-major)."""
    kh, kw, ci, co = p["w"].shape
    return p["w"].reshape(kh * kw, ci, co).astype(jnp.bfloat16)


def inception_e_forward(x_nchw, params):
    # NCHW -> NHWC; activations travel between kernels as bf16 (halves HBM traffic).
    x = jnp.transpose(x_nchw, (0, 2, 3, 1)).astype(jnp.bfloat16)

    # ---- fused 1x1 stem: branch1x1 (f32, final) | branch3x3_1 | branch3x3dbl_1 (bf16)
    p1, p3, pd = params["branch1x1"], params["branch3x3_1"], params["branch3x3dbl_1"]
    branch1x1, b3_in, bd_in = stem_1x1_convs(
        x, ((_w1x1(p1), p1["gamma"], p1["beta"], jnp.float32),
            (_w1x1(p3), p3["gamma"], p3["beta"], jnp.bfloat16),
            (_w1x1(pd), pd["gamma"], pd["beta"], jnp.bfloat16)))

    # ---- branch3x3: fused (1x3 | 3x1) pair on the shared 384-channel input.
    pa, pb = params["branch3x3_2a"], params["branch3x3_2b"]
    branch3x3 = conv_pair_1x3_3x1(b3_in, _wtap(pa), _wtap(pb),
                                  pa["gamma"], pa["beta"],
                                  pb["gamma"], pb["beta"])        # (N,H,W,768) f32

    # ---- branch3x3dbl: 3x3 conv (per-tap accumulation) then fused pair.
    p2 = params["branch3x3dbl_2"]
    dbl = conv3x3_bn_relu(bd_in, _wtap(p2), p2["gamma"], p2["beta"],
                          jnp.bfloat16)                           # (N,H,W,384) bf16
    pa, pb = params["branch3x3dbl_3a"], params["branch3x3dbl_3b"]
    branch3x3dbl = conv_pair_1x3_3x1(dbl, _wtap(pa), _wtap(pb),
                                     pa["gamma"], pa["beta"],
                                     pb["gamma"], pb["beta"])     # (N,H,W,768) f32

    # ---- branch_pool: 1x1 conv then 3x3 avg-pool (commuted), BN, ReLU.
    pp = params["branch_pool"]
    branch_pool = conv1x1_pool_bn_relu(x, _w1x1(pp),
                                       pp["gamma"], pp["beta"])   # (N,H,W,192) f32

    # TODO(synk): write each branch directly into its channel slice of a
    # preallocated NHWC buffer (input_output_aliases) and skip this concat /
    # the NCHW transpose when the consumer accepts NHWC.
    out = jnp.concatenate([branch1x1, branch3x3, branch3x3dbl, branch_pool],
                          axis=-1)
    return jnp.transpose(out, (0, 3, 1, 2))  # NHWC -> NCHW


# ------------------------------ pure-JAX reference ---------------------------
# The reference mirrors the kernels' matmul precision (bf16 operands, f32
# accumulation) and PyTorch's op order (avg-pool before the branch_pool conv);
# the kernels pool after the bias-free 1x1 conv (mathematically identical), so
# the only extra discrepancy is where the bf16 rounding lands in that branch.

def _ref_cbr(x_nhwc, w, gamma, beta, padding):
    ph, pw = padding
    y = lax.conv_general_dilated(
        x_nhwc.astype(jnp.bfloat16), w.astype(jnp.bfloat16),
        window_strides=(1, 1), padding=((ph, ph), (pw, pw)),
        dimension_numbers=("NHWC", "HWIO", "NHWC"),
        preferred_element_type=jnp.float32)
    mean = jnp.mean(y, axis=(0, 1, 2), keepdims=True)
    var = jnp.mean((y - mean) ** 2, axis=(0, 1, 2), keepdims=True)
    y = (y - mean) * lax.rsqrt(var + EPS) * gamma + beta
    return jnp.maximum(y, 0.0)


def _ref_avgpool(x_nhwc):
    xp = jnp.pad(x_nhwc, ((0, 0), (1, 1), (1, 1), (0, 0)))
    s = lax.reduce_window(xp, 0.0, lax.add, (1, 3, 3, 1), (1, 1, 1, 1), "VALID")
    return s / 9.0


def ref_forward(x_nchw, params):
    x = jnp.transpose(x_nchw, (0, 2, 3, 1))

    def cbr(name, inp):
        p = params[name]
        return _ref_cbr(inp, p["w"], p["gamma"], p["beta"], p["padding"])

    b1 = cbr("branch1x1", x)
    b3 = cbr("branch3x3_1", x)
    b3 = jnp.concatenate([cbr("branch3x3_2a", b3), cbr("branch3x3_2b", b3)], axis=-1)
    bd = cbr("branch3x3dbl_1", x)
    bd = cbr("branch3x3dbl_2", bd)
    bd = jnp.concatenate([cbr("branch3x3dbl_3a", bd), cbr("branch3x3dbl_3b", bd)], axis=-1)
    bp = cbr("branch_pool", _ref_avgpool(x))
    out = jnp.concatenate([b1, b3, bd, bp], axis=-1)
    return jnp.transpose(out, (0, 3, 1, 2))


# ------------------------------------ main -----------------------------------

if __name__ == "__main__":
    key = jax.random.PRNGKey(0)
    xk, pk = jax.random.split(key)

    N, C, H, W = 2, 4, 16, 16
    x = jax.random.normal(xk, (N, C, H, W), jnp.float32)
    params = init_inception_e_params(pk, in_channels=C)

    out = inception_e_forward(x, params)
    out = jax.block_until_ready(out)

    assert out.shape == (N, 320 + 768 + 768 + 192, H, W), out.shape

    ref = jax.block_until_ready(ref_forward(x, params))
    # 2e-2 tolerance: the branch_pool kernel pools AFTER the (commuting) 1x1
    # conv with a bf16 input, so its bf16 rounding lands in a different place
    # than the reference's pool-then-conv order; all other branches match to
    # f32-accumulation noise.
    np.testing.assert_allclose(np.asarray(out), np.asarray(ref),
                               atol=2e-2, rtol=2e-2)

    print("KERNEL_OK")
</pallas_src>

<mosaic_0001>
module attributes {stable_mosaic.version = 11 : i64} {
  func.func @_stem_kernel(%arg0: i32, %arg1: memref<2x16x16x4xbf16, #tpu.memory_space<vmem>>, %arg2: memref<4x320xbf16, #tpu.memory_space<vmem>>, %arg3: memref<4x384xbf16, #tpu.memory_space<vmem>>, %arg4: memref<4x448xbf16, #tpu.memory_space<vmem>>, %arg5: memref<1x320xf32, #tpu.memory_space<vmem>>, %arg6: memref<1x320xf32, #tpu.memory_space<vmem>>, %arg7: memref<1x384xf32, #tpu.memory_space<vmem>>, %arg8: memref<1x384xf32, #tpu.memory_space<vmem>>, %arg9: memref<1x448xf32, #tpu.memory_space<vmem>>, %arg10: memref<1x448xf32, #tpu.memory_space<vmem>>, %arg11: memref<2x16x16x320xf32, #tpu.memory_space<vmem>>, %arg12: memref<2x16x16x384xbf16, #tpu.memory_space<vmem>>, %arg13: memref<2x16x16x448xbf16, #tpu.memory_space<vmem>>) attributes {dimension_semantics = [#tpu.dimension_semantics<arbitrary>], iteration_bounds = array<i64: 1>, scalar_prefetch = 0 : i64, scratch_operands = 0 : i64, tpu.core_type = #tpu.core_type<tc>, window_params = [{pipeline_mode = #tpu.pipeline_mode<synchronous>, transform_indices = @transform_0, window_bounds = array<i64: 2, 16, 16, 4>}, {pipeline_mode = #tpu.pipeline_mode<synchronous>, transform_indices = @transform_1, window_bounds = array<i64: 4, 320>}, {pipeline_mode = #tpu.pipeline_mode<synchronous>, transform_indices = @transform_2, window_bounds = array<i64: 4, 384>}, {pipeline_mode = #tpu.pipeline_mode<synchronous>, transform_indices = @transform_3, window_bounds = array<i64: 4, 448>}, {pipeline_mode = #tpu.pipeline_mode<synchronous>, transform_indices = @transform_4, window_bounds = array<i64: 1, 320>}, {pipeline_mode = #tpu.pipeline_mode<synchronous>, transform_indices = @transform_5, window_bounds = array<i64: 1, 320>}, {pipeline_mode = #tpu.pipeline_mode<synchronous>, transform_indices = @transform_6, window_bounds = array<i64: 1, 384>}, {pipeline_mode = #tpu.pipeline_mode<synchronous>, transform_indices = @transform_7, window_bounds = array<i64: 1, 384>}, {pipeline_mode = #tpu.pipeline_mode<synchronous>, transform_indices = @transform_8, window_bounds = array<i64: 1, 448>}, {pipeline_mode = #tpu.pipeline_mode<synchronous>, transform_indices = @transform_9, window_bounds = array<i64: 1, 448>}, {pipeline_mode = #tpu.pipeline_mode<synchronous>, transform_indices = @transform_10, window_bounds = array<i64: 2, 16, 16, 320>}, {pipeline_mode = #tpu.pipeline_mode<synchronous>, transform_indices = @transform_11, window_bounds = array<i64: 2, 16, 16, 384>}, {pipeline_mode = #tpu.pipeline_mode<synchronous>, transform_indices = @transform_12, window_bounds = array<i64: 2, 16, 16, 448>}]} {
    %c0 = arith.constant 0 : index
    %c0_0 = arith.constant 0 : index
    %c0_1 = arith.constant 0 : index
    %c0_2 = arith.constant 0 : index
    %0 = vector.load %arg1[%c0, %c0_0, %c0_1, %c0_2] : memref<2x16x16x4xbf16, #tpu.memory_space<vmem>>, vector<2x16x16x4xbf16>
    %1 = vector.shape_cast %0 : vector<2x16x16x4xbf16> to vector<512x4xbf16>
    %c0_3 = arith.constant 0 : index
    %c0_4 = arith.constant 0 : index
    %2 = vector.load %arg2[%c0_3, %c0_4] : memref<4x320xbf16, #tpu.memory_space<vmem>>, vector<4x320xbf16>
    %cst = arith.constant dense<0.000000e+00> : vector<512x320xf32>
    %3 = tpu.matmul %1, %2, %cst {dimension_numbers = #tpu.dot_dimension_numbers<[1], [0], [0], [1], [0, 0, 1, 1], [], []>} : vector<512x4xbf16>, vector<4x320xbf16>, vector<512x320xf32> -> vector<512x320xf32>
    %c0_5 = arith.constant 0 : index
    %c0_6 = arith.constant 0 : index
    %4 = vector.load %arg5[%c0_5, %c0_6] : memref<1x320xf32, #tpu.memory_space<vmem>>, vector<1x320xf32>
    %c0_7 = arith.constant 0 : index
    %c0_8 = arith.constant 0 : index
    %5 = vector.load %arg6[%c0_7, %c0_8] : memref<1x320xf32, #tpu.memory_space<vmem>>, vector<1x320xf32>
    %cst_9 = arith.constant dense<0.000000e+00> : vector<320xf32>
    %6 = vector.multi_reduction <add>, %3, %cst_9 [0] : vector<512x320xf32> to vector<320xf32>
    %7 = vector.shape_cast %6 : vector<320xf32> to vector<1x320xf32>
    %cst_10 = arith.constant 0.001953125 : f32
    %8 = vector.broadcast %cst_10 : f32 to vector<1x320xf32>
    %9 = arith.mulf %7, %8 : vector<1x320xf32>
    %10 = vector.broadcast %9 : vector<1x320xf32> to vector<512x320xf32>
    %11 = arith.subf %3, %10 : vector<512x320xf32>
    %12 = arith.mulf %11, %11 : vector<512x320xf32>
    %cst_11 = arith.constant dense<0.000000e+00> : vector<320xf32>
    %13 = vector.multi_reduction <add>, %12, %cst_11 [0] : vector<512x320xf32> to vector<320xf32>
    %14 = vector.shape_cast %13 : vector<320xf32> to vector<1x320xf32>
    %cst_12 = arith.constant 0.001953125 : f32
    %15 = vector.broadcast %cst_12 : f32 to vector<1x320xf32>
    %16 = arith.mulf %14, %15 : vector<1x320xf32>
    %cst_13 = arith.constant 1.000000e-03 : f32
    %17 = vector.broadcast %cst_13 : f32 to vector<1x320xf32>
    %18 = arith.addf %16, %17 : vector<1x320xf32>
    %19 = math.rsqrt %18 : vector<1x320xf32>
    %20 = vector.broadcast %19 : vector<1x320xf32> to vector<512x320xf32>
    %21 = arith.mulf %11, %20 : vector<512x320xf32>
    %22 = vector.broadcast %4 : vector<1x320xf32> to vector<512x320xf32>
    %23 = arith.mulf %21, %22 : vector<512x320xf32>
    %24 = vector.broadcast %5 : vector<1x320xf32> to vector<512x320xf32>
    %25 = arith.addf %23, %24 : vector<512x320xf32>
    %cst_14 = arith.constant 0.000000e+00 : f32
    %26 = vector.broadcast %cst_14 : f32 to vector<512x320xf32>
    %27 = arith.maximumf %25, %26 : vector<512x320xf32>
    %28 = vector.shape_cast %27 : vector<512x320xf32> to vector<2x16x16x320xf32>
    %c0_15 = arith.constant 0 : index
    %c0_16 = arith.constant 0 : index
    %c0_17 = arith.constant 0 : index
    %c0_18 = arith.constant 0 : index
    %29 = vector.load %arg11[%c0_15, %c0_16, %c0_17, %c0_18] : memref<2x16x16x320xf32, #tpu.memory_space<vmem>>, vector<2x16x16x320xf32>
    tpu.vector_store %arg11[%c0_15, %c0_16, %c0_17, %c0_18], %28 {strides = array<i32>} : memref<2x16x16x320xf32, #tpu.memory_space<vmem>>, vector<2x16x16x320xf32>,
    %c0_19 = arith.constant 0 : index
    %c0_20 = arith.constant 0 : index
    %30 = vector.load %arg3[%c0_19, %c0_20] : memref<4x384xbf16, #tpu.memory_space<vmem>>, vector<4x384xbf16>
    %cst_21 = arith.constant dense<0.000000e+00> : vector<512x384xf32>
    %31 = tpu.matmul %1, %30, %cst_21 {dimension_numbers = #tpu.dot_dimension_numbers<[1], [0], [0], [1], [0, 0, 1, 1], [], []>} : vector<512x4xbf16>, vector<4x384xbf16>, vector<512x384xf32> -> vector<512x384xf32>
    %c0_22 = arith.constant 0 : index
    %c0_23 = arith.constant 0 : index
    %32 = vector.load %arg7[%c0_22, %c0_23] : memref<1x384xf32, #tpu.memory_space<vmem>>, vector<1x384xf32>
    %c0_24 = arith.constant 0 : index
    %c0_25 = arith.constant 0 : index
    %33 = vector.load %arg8[%c0_24, %c0_25] : memref<1x384xf32, #tpu.memory_space<vmem>>, vector<1x384xf32>
    %cst_26 = arith.constant dense<0.000000e+00> : vector<384xf32>
    %34 = vector.multi_reduction <add>, %31, %cst_26 [0] : vector<512x384xf32> to vector<384xf32>
    %35 = vector.shape_cast %34 : vector<384xf32> to vector<1x384xf32>
    %cst_27 = arith.constant 0.001953125 : f32
    %36 = vector.broadcast %cst_27 : f32 to vector<1x384xf32>
    %37 = arith.mulf %35, %36 : vector<1x384xf32>
    %38 = vector.broadcast %37 : vector<1x384xf32> to vector<512x384xf32>
    %39 = arith.subf %31, %38 : vector<512x384xf32>
    %40 = arith.mulf %39, %39 : vector<512x384xf32>
    %cst_28 = arith.constant dense<0.000000e+00> : vector<384xf32>
    %41 = vector.multi_reduction <add>, %40, %cst_28 [0] : vector<512x384xf32> to vector<384xf32>
    %42 = vector.shape_cast %41 : vector<384xf32> to vector<1x384xf32>
    %cst_29 = arith.constant 0.001953125 : f32
    %43 = vector.broadcast %cst_29 : f32 to vector<1x384xf32>
    %44 = arith.mulf %42, %43 : vector<1x384xf32>
    %cst_30 = arith.constant 1.000000e-03 : f32
    %45 = vector.broadcast %cst_30 : f32 to vector<1x384xf32>
    %46 = arith.addf %44, %45 : vector<1x384xf32>
    %47 = math.rsqrt %46 : vector<1x384xf32>
    %48 = vector.broadcast %47 : vector<1x384xf32> to vector<512x384xf32>
    %49 = arith.mulf %39, %48 : vector<512x384xf32>
    %50 = vector.broadcast %32 : vector<1x384xf32> to vector<512x384xf32>
    %51 = arith.mulf %49, %50 : vector<512x384xf32>
    %52 = vector.broadcast %33 : vector<1x384xf32> to vector<512x384xf32>
    %53 = arith.addf %51, %52 : vector<512x384xf32>
    %cst_31 = arith.constant 0.000000e+00 : f32
    %54 = vector.broadcast %cst_31 : f32 to vector<512x384xf32>
    %55 = arith.maximumf %53, %54 : vector<512x384xf32>
    %56 = vector.shape_cast %55 : vector<512x384xf32> to vector<2x16x16x384xf32>
    %57 = arith.truncf %56 : vector<2x16x16x384xf32> to vector<2x16x16x384xbf16>
    %c0_32 = arith.constant 0 : index
    %c0_33 = arith.constant 0 : index
    %c0_34 = arith.constant 0 : index
    %c0_35 = arith.constant 0 : index
    %58 = vector.load %arg12[%c0_32, %c0_33, %c0_34, %c0_35] : memref<2x16x16x384xbf16, #tpu.memory_space<vmem>>, vector<2x16x16x384xbf16>
    tpu.vector_store %arg12[%c0_32, %c0_33, %c0_34, %c0_35], %57 {strides = array<i32>} : memref<2x16x16x384xbf16, #tpu.memory_space<vmem>>, vector<2x16x16x384xbf16>,
    %c0_36 = arith.constant 0 : index
    %c0_37 = arith.constant 0 : index
    %59 = vector.load %arg4[%c0_36, %c0_37] : memref<4x448xbf16, #tpu.memory_space<vmem>>, vector<4x448xbf16>
    %cst_38 = arith.constant dense<0.000000e+00> : vector<512x448xf32>
    %60 = tpu.matmul %1, %59, %cst_38 {dimension_numbers = #tpu.dot_dimension_numbers<[1], [0], [0], [1], [0, 0, 1, 1], [], []>} : vector<512x4xbf16>, vector<4x448xbf16>, vector<512x448xf32> -> vector<512x448xf32>
    %c0_39 = arith.constant 0 : index
    %c0_40 = arith.constant 0 : index
    %61 = vector.load %arg9[%c0_39, %c0_40] : memref<1x448xf32, #tpu.memory_space<vmem>>, vector<1x448xf32>
    %c0_41 = arith.constant 0 : index
    %c0_42 = arith.constant 0 : index
    %62 = vector.load %arg10[%c0_41, %c0_42] : memref<1x448xf32, #tpu.memory_space<vmem>>, vector<1x448xf32>
    %cst_43 = arith.constant dense<0.000000e+00> : vector<448xf32>
    %63 = vector.multi_reduction <add>, %60, %cst_43 [0] : vector<512x448xf32> to vector<448xf32>
    %64 = vector.shape_cast %63 : vector<448xf32> to vector<1x448xf32>
    %cst_44 = arith.constant 0.001953125 : f32
    %65 = vector.broadcast %cst_44 : f32 to vector<1x448xf32>
    %66 = arith.mulf %64, %65 : vector<1x448xf32>
    %67 = vector.broadcast %66 : vector<1x448xf32> to vector<512x448xf32>
    %68 = arith.subf %60, %67 : vector<512x448xf32>
    %69 = arith.mulf %68, %68 : vector<512x448xf32>
    %cst_45 = arith.constant dense<0.000000e+00> : vector<448xf32>
    %70 = vector.multi_reduction <add>, %69, %cst_45 [0] : vector<512x448xf32> to vector<448xf32>
    %71 = vector.shape_cast %70 : vector<448xf32> to vector<1x448xf32>
    %cst_46 = arith.constant 0.001953125 : f32
    %72 = vector.broadcast %cst_46 : f32 to vector<1x448xf32>
    %73 = arith.mulf %71, %72 : vector<1x448xf32>
    %cst_47 = arith.constant 1.000000e-03 : f32
    %74 = vector.broadcast %cst_47 : f32 to vector<1x448xf32>
    %75 = arith.addf %73, %74 : vector<1x448xf32>
    %76 = math.rsqrt %75 : vector<1x448xf32>
    %77 = vector.broadcast %76 : vector<1x448xf32> to vector<512x448xf32>
    %78 = arith.mulf %68, %77 : vector<512x448xf32>
    %79 = vector.broadcast %61 : vector<1x448xf32> to vector<512x448xf32>
    %80 = arith.mulf %78, %79 : vector<512x448xf32>
    %81 = vector.broadcast %62 : vector<1x448xf32> to vector<512x448xf32>
    %82 = arith.addf %80, %81 : vector<512x448xf32>
    %cst_48 = arith.constant 0.000000e+00 : f32
    %83 = vector.broadcast %cst_48 : f32 to vector<512x448xf32>
    %84 = arith.maximumf %82, %83 : vector<512x448xf32>
    %85 = vector.shape_cast %84 : vector<512x448xf32> to vector<2x16x16x448xf32>
    %86 = arith.truncf %85 : vector<2x16x16x448xf32> to vector<2x16x16x448xbf16>
    %c0_49 = arith.constant 0 : index
    %c0_50 = arith.constant 0 : index
    %c0_51 = arith.constant 0 : index
    %c0_52 = arith.constant 0 : index
    %87 = vector.load %arg13[%c0_49, %c0_50, %c0_51, %c0_52] : memref<2x16x16x448xbf16, #tpu.memory_space<vmem>>, vector<2x16x16x448xbf16>
    tpu.vector_store %arg13[%c0_49, %c0_50, %c0_51, %c0_52], %86 {strides = array<i32>} : memref<2x16x16x448xbf16, #tpu.memory_space<vmem>>, vector<2x16x16x448xbf16>,
    return
  }
  func.func @transform_0(%arg0: i32) -> (i32, i32, i32, i32) {
    %c0_i32 = arith.constant 0 : i32
    %c0_i32_0 = arith.constant 0 : i32
    %c0_i32_1 = arith.constant 0 : i32
    %c0_i32_2 = arith.constant 0 : i32
    %c0_i32_3 = arith.constant 0 : i32
    return %c0_i32, %c0_i32_0, %c0_i32_1, %c0_i32_2 : i32, i32, i32, i32
  }
  func.func @transform_1(%arg0: i32) -> (i32, i32) {
    %c0_i32 = arith.constant 0 : i32
    %c0_i32_0 = arith.constant 0 : i32
    %c0_i32_1 = arith.constant 0 : i32
    return %c0_i32, %c0_i32_0 : i32, i32
  }
  func.func @transform_2(%arg0: i32) -> (i32, i32) {
    %c0_i32 = arith.constant 0 : i32
    %c0_i32_0 = arith.constant 0 : i32
    %c0_i32_1 = arith.constant 0 : i32
    return %c0_i32, %c0_i32_0 : i32, i32
  }
  func.func @transform_3(%arg0: i32) -> (i32, i32) {
    %c0_i32 = arith.constant 0 : i32
    %c0_i32_0 = arith.constant 0 : i32
    %c0_i32_1 = arith.constant 0 : i32
    return %c0_i32, %c0_i32_0 : i32, i32
  }
  func.func @transform_4(%arg0: i32) -> (i32, i32) {
    %c0_i32 = arith.constant 0 : i32
    %c0_i32_0 = arith.constant 0 : i32
    %c0_i32_1 = arith.constant 0 : i32
    return %c0_i32, %c0_i32_0 : i32, i32
  }
  func.func @transform_5(%arg0: i32) -> (i32, i32) {
    %c0_i32 = arith.constant 0 : i32
    %c0_i32_0 = arith.constant 0 : i32
    %c0_i32_1 = arith.constant 0 : i32
    return %c0_i32, %c0_i32_0 : i32, i32
  }
  func.func @transform_6(%arg0: i32) -> (i32, i32) {
    %c0_i32 = arith.constant 0 : i32
    %c0_i32_0 = arith.constant 0 : i32
    %c0_i32_1 = arith.constant 0 : i32
    return %c0_i32, %c0_i32_0 : i32, i32
  }
  func.func @transform_7(%arg0: i32) -> (i32, i32) {
    %c0_i32 = arith.constant 0 : i32
    %c0_i32_0 = arith.constant 0 : i32
    %c0_i32_1 = arith.constant 0 : i32
    return %c0_i32, %c0_i32_0 : i32, i32
  }
  func.func @transform_8(%arg0: i32) -> (i32, i32) {
    %c0_i32 = arith.constant 0 : i32
    %c0_i32_0 = arith.constant 0 : i32
    %c0_i32_1 = arith.constant 0 : i32
    return %c0_i32, %c0_i32_0 : i32, i32
  }
  func.func @transform_9(%arg0: i32) -> (i32, i32) {
    %c0_i32 = arith.constant 0 : i32
    %c0_i32_0 = arith.constant 0 : i32
    %c0_i32_1 = arith.constant 0 : i32
    return %c0_i32, %c0_i32_0 : i32, i32
  }
  func.func @transform_10(%arg0: i32) -> (i32, i32, i32, i32) {
    %c0_i32 = arith.constant 0 : i32
    %c0_i32_0 = arith.constant 0 : i32
    %c0_i32_1 = arith.constant 0 : i32
    %c0_i32_2 = arith.constant 0 : i32
    %c0_i32_3 = arith.constant 0 : i32
    return %c0_i32, %c0_i32_0, %c0_i32_1, %c0_i32_2 : i32, i32, i32, i32
  }
  func.func @transform_11(%arg0: i32) -> (i32, i32, i32, i32) {
    %c0_i32 = arith.constant 0 : i32
    %c0_i32_0 = arith.constant 0 : i32
    %c0_i32_1 = arith.constant 0 : i32
    %c0_i32_2 = arith.constant 0 : i32
    %c0_i32_3 = arith.constant 0 : i32
    return %c0_i32, %c0_i32_0, %c0_i32_1, %c0_i32_2 : i32, i32, i32, i32
  }
  func.func @transform_12(%arg0: i32) -> (i32, i32, i32, i32) {
    %c0_i32 = arith.constant 0 : i32
    %c0_i32_0 = arith.constant 0 : i32
    %c0_i32_1 = arith.constant 0 : i32
    %c0_i32_2 = arith.constant 0 : i32
    %c0_i32_3 = arith.constant 0 : i32
    return %c0_i32, %c0_i32_0, %c0_i32_1, %c0_i32_2 : i32, i32, i32, i32
  }
}

</mosaic_0001>

<llo_original>
// kernel: tpu_custom_call.1
$region0: #{tpu_custom_call.1}
  #allocation0 [shape = 'u32[]', space=smem, size = 0x4, offset = 0x4, fixed_abs, tag = 'smem constant byte address 0x4 - core index']
  #allocation1 [shape = 'u32[144,128]{1,0:T(1,128)}', space=vmem, size = 0x12000, scoped, tag = 'internal scratch']
  %s0 = inlined_call_operand.hbm [shape: bf16[2,16,16,4], index: 0, kind: input, shape index: {}]
  %s1 = inlined_call_operand.hbm [shape: bf16[4,320], index: 1, kind: input, shape index: {}]
  %s2 = inlined_call_operand.hbm [shape: bf16[4,384], index: 2, kind: input, shape index: {}]
  %s3 = inlined_call_operand.hbm [shape: bf16[4,448], index: 3, kind: input, shape index: {}]
  %s4 = inlined_call_operand.hbm [shape: f32[1,320], index: 4, kind: input, shape index: {}]
  %s5 = inlined_call_operand.hbm [shape: f32[1,320], index: 5, kind: input, shape index: {}]
  %s6 = inlined_call_operand.hbm [shape: f32[1,384], index: 6, kind: input, shape index: {}]
  %s7 = inlined_call_operand.hbm [shape: f32[1,384], index: 7, kind: input, shape index: {}]
  %s8 = inlined_call_operand.hbm [shape: f32[1,448], index: 8, kind: input, shape index: {}]
  %s9 = inlined_call_operand.hbm [shape: f32[1,448], index: 9, kind: input, shape index: {}]
  %s10 = inlined_call_operand.hbm [shape: f32[2,16,16,320], index: 10, kind: output, shape index: {0}]
  %s11 = inlined_call_operand.hbm [shape: bf16[2,16,16,384], index: 11, kind: output, shape index: {1}]
  %s12 = inlined_call_operand.hbm [shape: bf16[2,16,16,448], index: 12, kind: output, shape index: {2}]
  %13 = xla_tuple %s10, %s11, %s12
  %s14 = sld [smem:[#allocation0]]
  $region106: #{tpu_custom_call.1} parent=0
    _
  %s16 = ssub.s32 1, %s14
  %s17 = scalar_select 0, %s16, %s14
  $region1: #{tpu_custom_call.1} parent=0
    #allocation2 [shape = 'u8[131072]{0}', space=vmem, size = 0x20000, scoped, tag = 'input window, operand 0, single buffered']
    #allocation3 [shape = 's32[1]{0}', space=sflag, size = 0x4, scoped, tag = 'scoped memory for tpu_custom_call.1']
    #allocation4 [shape = 's32[1]{0}', space=sflag, size = 0x4, scoped, tag = 'scoped memory for tpu_custom_call.1']
    #allocation5 [shape = 'u8[3072]{0}', space=vmem, size = 0xc00, scoped, tag = 'input window, operand 1, single buffered']
    #allocation6 [shape = 's32[1]{0}', space=sflag, size = 0x4, scoped, tag = 'scoped memory for tpu_custom_call.1']
    #allocation7 [shape = 'u8[3072]{0}', space=vmem, size = 0xc00, scoped, tag = 'input window, operand 2, single buffered']
    #allocation8 [shape = 'u8[4096]{0}', space=vmem, size = 0x1000, scoped, tag = 'input window, operand 3, single buffered']
    #allocation9 [shape = 's32[1]{0}', space=sflag, size = 0x4, scoped, tag = 'scoped memory for tpu_custom_call.1']
    #allocation10 [shape = 'u8[1536]{0}', space=vmem, size = 0x800, scoped, tag = 'input window, operand 4, single buffered']
    #allocation11 [shape = 'u8[1536]{0}', space=vmem, size = 0x800, scoped, tag = 'input window, operand 5, single buffered']
    #allocation12 [shape = 's32[1]{0}', space=sflag, size = 0x4, scoped, tag = 'scoped memory for tpu_custom_call.1']
    #allocation13 [shape = 'u8[1536]{0}', space=vmem, size = 0x800, scoped, tag = 'input window, operand 6, single buffered']
    #allocation14 [shape = 'u8[1536]{0}', space=vmem, size = 0x800, scoped, tag = 'input window, operand 7, single buffered']
    #allocation15 [shape = 's32[1]{0}', space=sflag, size = 0x4, scoped, tag = 'scoped memory for tpu_custom_call.1']
    #allocation16 [shape = 'u8[2048]{0}', space=vmem, size = 0x800, scoped, tag = 'input window, operand 8, single buffered']
    #allocation17 [shape = 'u8[2048]{0}', space=vmem, size = 0x800, scoped, tag = 'input window, operand 9, single buffered']
    #allocation18 [shape = 's32[1]{0}', space=sflag, size = 0x4, scoped, tag = 'scoped memory for tpu_custom_call.1']
    #allocation19 [shape = 'u8[786432]{0}', space=vmem, size = 0xc0000, scoped, tag = 'output window, operand 0, single buffered']
    #allocation20 [shape = 'u8[393216]{0}', space=vmem, size = 0x60000, scoped, tag = 'output window, operand 1, single buffered']
    #allocation21 [shape = 's32[1]{0}', space=sflag, size = 0x4, scoped, tag = 'scoped memory for tpu_custom_call.1']
    #allocation22 [shape = 'u8[524288]{0}', space=vmem, size = 0x80000, scoped, tag = 'output window, operand 2, single buffered']
    %18 = vsyncpa [#allocation3], 0
    %19 = vsyncpa [#allocation6], 0
    %20 = vsyncpa [#allocation9], 0
    %21 = vsyncpa [#allocation12], 0
    %22 = vsyncpa [#allocation15], 0
    %23 = vsyncpa [#allocation18], 0
    %24 = vsyncpa [#allocation4], 0
    %25 = vsyncpa [#allocation21], 0
    // Predicated region
    $region2: #{tpu_custom_call.1} parent=1 // pred_check
      _
    $region3: #{tpu_custom_call.1} parent=1 // pred_check_branch
      %27 = sbr.rel (0) target = $region5
    $region4: #{tpu_custom_call.1} parent=1 // pred_region
      %s29 = ssub.s32 4096, 4096
      %30 = vsyncadd [#allocation3], %s29
      %s31 = sshll.u32 [#allocation2], 4
      %s32 = int_to_ptr.vmem [resolvable:$true] %s31
      %37 = dma.hbm_to_vmem [thread:$0]  %s0, 4096, %s32, [#allocation3], 64, 64, 4
    $region5: #{tpu_custom_call.1} parent=1 // pred_fallthru
      _
    // Predicated region
    $region6: #{tpu_custom_call.1} parent=1 // pred_check
      _
    $region7: #{tpu_custom_call.1} parent=1 // pred_check_branch
      %39 = sbr.rel (0) target = $region9
    $region8: #{tpu_custom_call.1} parent=1 // pred_region
      %s41 = ssub.s32 96, 96
      %42 = vsyncadd [#allocation6], %s41
      %s44 = sshll.u32 [#allocation5], 4
      %s45 = int_to_ptr.vmem [resolvable:$true] %s44
      %47 = dma.hbm_to_vmem [thread:$0]  %s1, 96, %s45, [#allocation6]
    $region9: #{tpu_custom_call.1} parent=1 // pred_fallthru
      _
    // Predicated region
    $region10: #{tpu_custom_call.1} parent=1 // pred_check
      _
    $region11: #{tpu_custom_call.1} parent=1 // pred_check_branch
      %49 = sbr.rel (0) target = $region13
    $region12: #{tpu_custom_call.1} parent=1 // pred_region
      %s51 = ssub.s32 96, 96
      %52 = vsyncadd [#allocation6], %s51
      %s54 = sshll.u32 [#allocation7], 4
      %s55 = int_to_ptr.vmem [resolvable:$true] %s54
      %57 = dma.hbm_to_vmem [thread:$0]  %s2, 96, %s55, [#allocation6]
    $region13: #{tpu_custom_call.1} parent=1 // pred_fallthru
      _
    // Predicated region
    $region14: #{tpu_custom_call.1} parent=1 // pred_check
      _
    $region15: #{tpu_custom_call.1} parent=1 // pred_check_branch
      %59 = sbr.rel (0) target = $region17
    $region16: #{tpu_custom_call.1} parent=1 // pred_region
      %s61 = ssub.s32 128, 128
      %62 = vsyncadd [#allocation9], %s61
      %s64 = sshll.u32 [#allocation8], 4
      %s65 = int_to_ptr.vmem [resolvable:$true] %s64
      %67 = dma.hbm_to_vmem [thread:$0]  %s3, 128, %s65, [#allocation9]
    $region17: #{tpu_custom_call.1} parent=1 // pred_fallthru
      _
    // Predicated region
    $region18: #{tpu_custom_call.1} parent=1 // pred_check
      _
    $region19: #{tpu_custom_call.1} parent=1 // pred_check_branch
      %69 = sbr.rel (0) target = $region21
    $region20: #{tpu_custom_call.1} parent=1 // pred_region
      %s71 = ssub.s32 48, 48
      %72 = vsyncadd [#allocation9], %s71
      %s74 = sshll.u32 [#allocation10], 4
      %s75 = int_to_ptr.vmem [resolvable:$true] %s74
      %77 = dma.hbm_to_vmem [thread:$0]  %s4, 48, %s75, [#allocation9]
    $region21: #{tpu_custom_call.1} parent=1 // pred_fallthru
      _
    // Predicated region
    $region22: #{tpu_custom_call.1} parent=1 // pred_check
      _
    $region23: #{tpu_custom_call.1} parent=1 // pred_check_branch
      %79 = sbr.rel (0) target = $region25
    $region24: #{tpu_custom_call.1} parent=1 // pred_region
      %s81 = ssub.s32 48, 48
      %82 = vsyncadd [#allocation12], %s81
      %s84 = sshll.u32 [#allocation11], 4
      %s85 = int_to_ptr.vmem [resolvable:$true] %s84
      %87 = dma.hbm_to_vmem [thread:$0]  %s5, 48, %s85, [#allocation12]
    $region25: #{tpu_custom_call.1} parent=1 // pred_fallthru
      _
    // Predicated region
    $region26: #{tpu_custom_call.1} parent=1 // pred_check
      _
    $region27: #{tpu_custom_call.1} parent=1 // pred_check_branch
      %89 = sbr.rel (0) target = $region29
    $region28: #{tpu_custom_call.1} parent=1 // pred_region
      %s91 = ssub.s32 48, 48
      %92 = vsyncadd [#allocation12], %s91
      %s94 = sshll.u32 [#allocation13], 4
      %s95 = int_to_ptr.vmem [resolvable:$true] %s94
      %97 = dma.hbm_to_vmem [thread:$0]  %s6, 48, %s95, [#allocation12]
    $region29: #{tpu_custom_call.1} parent=1 // pred_fallthru
      _
    // Predicated region
    $region30: #{tpu_custom_call.1} parent=1 // pred_check
      _
    $region31: #{tpu_custom_call.1} parent=1 // pred_check_branch
      %99 = sbr.rel (0) target = $region33
    $region32: #{tpu_custom_call.1} parent=1 // pred_region
      %s101 = ssub.s32 48, 48
      %102 = vsyncadd [#allocation15], %s101
      %s104 = sshll.u32 [#allocation14], 4
      %s105 = int_to_ptr.vmem [resolvable:$true] %s104
      %107 = dma.hbm_to_vmem [thread:$0]  %s7, 48, %s105, [#allocation15]
    $region33: #{tpu_custom_call.1} parent=1 // pred_fallthru
      _
    // Predicated region
    $region34: #{tpu_custom_call.1} parent=1 // pred_check
      _
    $region35: #{tpu_custom_call.1} parent=1 // pred_check_branch
      %109 = sbr.rel (0) target = $region37
    $region36: #{tpu_custom_call.1} parent=1 // pred_region
      %s111 = ssub.s32 64, 64
      %112 = vsyncadd [#allocation15], %s111
      %s114 = sshll.u32 [#allocation16], 4
      %s115 = int_to_ptr.vmem [resolvable:$true] %s114
      %117 = dma.hbm_to_vmem [thread:$0]  %s8, 64, %s115, [#allocation15]
    $region37: #{tpu_custom_call.1} parent=1 // pred_fallthru
      _
    // Predicated region
    $region38: #{tpu_custom_call.1} parent=1 // pred_check
      _
    $region39: #{tpu_custom_call.1} parent=1 // pred_check_branch
      %119 = sbr.rel (0) target = $region41
    $region40: #{tpu_custom_call.1} parent=1 // pred_region
      %s121 = ssub.s32 64, 64
      %122 = vsyncadd [#allocation18], %s121
      %s124 = sshll.u32 [#allocation17], 4
      %s125 = int_to_ptr.vmem [resolvable:$true] %s124
      %127 = dma.hbm_to_vmem [thread:$0]  %s9, 64, %s125, [#allocation18]
    $region41: #{tpu_custom_call.1} parent=1 // pred_fallthru
      _
    // Predicated region
    $region42: #{tpu_custom_call.1} parent=1 // pred_check
      _
    $region43: #{tpu_custom_call.1} parent=1 // pred_check_branch
      %129 = sbr.rel (0) target = $region45
    $region44: #{tpu_custom_call.1} parent=1 // pred_region
      %130 = dma.done [#allocation3], 4096
    $region45: #{tpu_custom_call.1} parent=1 // pred_fallthru
      _
    // Predicated region
    $region46: #{tpu_custom_call.1} parent=1 // pred_check
      _
    $region47: #{tpu_custom_call.1} parent=1 // pred_check_branch
      %132 = sbr.rel (0) target = $region49
    $region48: #{tpu_custom_call.1} parent=1 // pred_region
      %133 = dma.done [#allocation6], 96
    $region49: #{tpu_custom_call.1} parent=1 // pred_fallthru
      _
    // Predicated region
    $region50: #{tpu_custom_call.1} parent=1 // pred_check
      _
    $region51: #{tpu_custom_call.1} parent=1 // pred_check_branch
      %135 = sbr.rel (0) target = $region53
    $region52: #{tpu_custom_call.1} parent=1 // pred_region
      %136 = dma.done [#allocation6], 96
    $region53: #{tpu_custom_call.1} parent=1 // pred_fallthru
      _
    // Predicated region
    $region54: #{tpu_custom_call.1} parent=1 // pred_check
      _
    $region55: #{tpu_custom_call.1} parent=1 // pred_check_branch
      %138 = sbr.rel (0) target = $region57
    $region56: #{tpu_custom_call.1} parent=1 // pred_region
      %139 = dma.done [#allocation9], 128
    $region57: #{tpu_custom_call.1} parent=1 // pred_fallthru
      _
    // Predicated region
    $region58: #{tpu_custom_call.1} parent=1 // pred_check
      _
    $region59: #{tpu_custom_call.1} parent=1 // pred_check_branch
      %141 = sbr.rel (0) target = $region61
    $region60: #{tpu_custom_call.1} parent=1 // pred_region
      %142 = dma.done [#allocation9], 48
    $region61: #{tpu_custom_call.1} parent=1 // pred_fallthru
      _
    // Predicated region
    $region62: #{tpu_custom_call.1} parent=1 // pred_check
      _
    $region63: #{tpu_custom_call.1} parent=1 // pred_check_branch
      %144 = sbr.rel (0) target = $region65
    $region64: #{tpu_custom_call.1} parent=1 // pred_region
      %145 = dma.done [#allocation12], 48
    $region65: #{tpu_custom_call.1} parent=1 // pred_fallthru
      _
    // Predicated region
    $region66: #{tpu_custom_call.1} parent=1 // pred_check
      _
    $region67: #{tpu_custom_call.1} parent=1 // pred_check_branch
      %147 = sbr.rel (0) target = $region69
    $region68: #{tpu_custom_call.1} parent=1 // pred_region
      %148 = dma.done [#allocation12], 48
    $region69: #{tpu_custom_call.1} parent=1 // pred_fallthru
      _
    // Predicated region
    $region70: #{tpu_custom_call.1} parent=1 // pred_check
      _
    $region71: #{tpu_custom_call.1} parent=1 // pred_check_branch
      %150 = sbr.rel (0) target = $region73
    $region72: #{tpu_custom_call.1} parent=1 // pred_region
      %151 = dma.done [#allocation15], 48
    $region73: #{tpu_custom_call.1} parent=1 // pred_fallthru
      _
    // Predicated region
    $region74: #{tpu_custom_call.1} parent=1 // pred_check
      _
    $region75: #{tpu_custom_call.1} parent=1 // pred_check_branch
      %153 = sbr.rel (0) target = $region77
    $region76: #{tpu_custom_call.1} parent=1 // pred_region
      %154 = dma.done [#allocation15], 64
    $region77: #{tpu_custom_call.1} parent=1 // pred_fallthru
      _
    // Predicated region
    $region78: #{tpu_custom_call.1} parent=1 // pred_check
      _
    $region79: #{tpu_custom_call.1} parent=1 // pred_check_branch
      %156 = sbr.rel (0) target = $region81
    $region80: #{tpu_custom_call.1} parent=1 // pred_region
      %157 = dma.done [#allocation18], 64
    $region81: #{tpu_custom_call.1} parent=1 // pred_fallthru
      _
    %v159 = vld [vmem:[#allocation2] sm:$0xf]
    %v160 = vld [vmem:[#allocation2 + $0x4] sm:$0xf]
    %v161 = vld [vmem:[#allocation2 + $0x8] sm:$0xf]
    %v162 = vld [vmem:[#allocation2 + $0xc] sm:$0xf]
    %v163 = vld [vmem:[#allocation2 + $0x10] sm:$0xf]
    %v164 = vld [vmem:[#allocation2 + $0x14] sm:$0xf]
    %v165 = vld [vmem:[#allocation2 + $0x18] sm:$0xf]
    %v166 = vld [vmem:[#allocation2 + $0x1c] sm:$0xf]
    %v167 = vld [vmem:[#allocation2 + $0x20] sm:$0xf]
    %v168 = vld [vmem:[#allocation2 + $0x24] sm:$0xf]
    %v169 = vld [vmem:[#allocation2 + $0x28] sm:$0xf]
    %v170 = vld [vmem:[#allocation2 + $0x2c] sm:$0xf]
    %v171 = vld [vmem:[#allocation2 + $0x30] sm:$0xf]
    %v172 = vld [vmem:[#allocation2 + $0x34] sm:$0xf]
    %v173 = vld [vmem:[#allocation2 + $0x38] sm:$0xf]
    %v174 = vld [vmem:[#allocation2 + $0x3c] sm:$0xf]
    %v175 = vld [vmem:[#allocation2 + $0x40] sm:$0xf]
    %v176 = vld [vmem:[#allocation2 + $0x44] sm:$0xf]
    %v177 = vld [vmem:[#allocation2 + $0x48] sm:$0xf]
    %v178 = vld [vmem:[#allocation2 + $0x4c] sm:$0xf]
    %v179 = vld [vmem:[#allocation2 + $0x50] sm:$0xf]
    %v180 = vld [vmem:[#allocation2 + $0x54] sm:$0xf]
    %v181 = vld [vmem:[#allocation2 + $0x58] sm:$0xf]
    %v182 = vld [vmem:[#allocation2 + $0x5c] sm:$0xf]
    %v183 = vld [vmem:[#allocation2 + $0x60] sm:$0xf]
    %v184 = vld [vmem:[#allocation2 + $0x64] sm:$0xf]
    %v185 = vld [vmem:[#allocation2 + $0x68] sm:$0xf]
    %v186 = vld [vmem:[#allocation2 + $0x6c] sm:$0xf]
    %v187 = vld [vmem:[#allocation2 + $0x70] sm:$0xf]
    %v188 = vld [vmem:[#allocation2 + $0x74] sm:$0xf]
    %v189 = vld [vmem:[#allocation2 + $0x78] sm:$0xf]
    %v190 = vld [vmem:[#allocation2 + $0x7c] sm:$0xf]
    %v191 = vld [vmem:[#allocation2 + $0x80] sm:$0xf]
    %v192 = vld [vmem:[#allocation2 + $0x84] sm:$0xf]
    %v193 = vld [vmem:[#allocation2 + $0x88] sm:$0xf]
    %v194 = vld [vmem:[#allocation2 + $0x8c] sm:$0xf]
    %v195 = vld [vmem:[#allocation2 + $0x90] sm:$0xf]
    %v196 = vld [vmem:[#allocation2 + $0x94] sm:$0xf]
    %v197 = vld [vmem:[#allocation2 + $0x98] sm:$0xf]
    %v198 = vld [vmem:[#allocation2 + $0x9c] sm:$0xf]
    %v199 = vld [vmem:[#allocation2 + $0xa0] sm:$0xf]
    %v200 = vld [vmem:[#allocation2 + $0xa4] sm:$0xf]
    %v201 = vld [vmem:[#allocation2 + $0xa8] sm:$0xf]
    %v202 = vld [vmem:[#allocation2 + $0xac] sm:$0xf]
    %v203 = vld [vmem:[#allocation2 + $0xb0] sm:$0xf]
    %v204 = vld [vmem:[#allocation2 + $0xb4] sm:$0xf]
    %v205 = vld [vmem:[#allocation2 + $0xb8] sm:$0xf]
    %v206 = vld [vmem:[#allocation2 + $0xbc] sm:$0xf]
    %v207 = vld [vmem:[#allocation2 + $0xc0] sm:$0xf]
    %v208 = vld [vmem:[#allocation2 + $0xc4] sm:$0xf]
    %v209 = vld [vmem:[#allocation2 + $0xc8] sm:$0xf]
    %v210 = vld [vmem:[#allocation2 + $0xcc] sm:$0xf]
    %v211 = vld [vmem:[#allocation2 + $0xd0] sm:$0xf]
    %v212 = vld [vmem:[#allocation2 + $0xd4] sm:$0xf]
    %v213 = vld [vmem:[#allocation2 + $0xd8] sm:$0xf]
    %v214 = vld [vmem:[#allocation2 + $0xdc] sm:$0xf]
    %v215 = vld [vmem:[#allocation2 + $0xe0] sm:$0xf]
    %v216 = vld [vmem:[#allocation2 + $0xe4] sm:$0xf]
    %v217 = vld [vmem:[#allocation2 + $0xe8] sm:$0xf]
    %v218 = vld [vmem:[#allocation2 + $0xec] sm:$0xf]
    %v219 = vld [vmem:[#allocation2 + $0xf0] sm:$0xf]
    %v220 = vld [vmem:[#allocation2 + $0xf4] sm:$0xf]
    %v221 = vld [vmem:[#allocation2 + $0xf8] sm:$0xf]
    %v222 = vld [vmem:[#allocation2 + $0xfc] sm:$0xf]
    %v223 = vld [vmem:[#allocation5] sm:$0x3f]
    %v288 = vunpack.c.l.b16 %v159
    %v289 = vunpack.c.l.b16 %v160
    %v290 = vunpack.c.l.b16 %v161
    %v291 = vunpack.c.l.b16 %v162
    %v292 = vunpack.c.l.b16 %v163
    %v293 = vunpack.c.l.b16 %v164
    %v294 = vunpack.c.l.b16 %v165
    %v295 = vunpack.c.l.b16 %v166
    %v296 = vunpack.c.l.b16 %v167
    %v297 = vunpack.c.l.b16 %v168
    %v298 = vunpack.c.l.b16 %v169
    %v299 = vunpack.c.l.b16 %v170
    %v300 = vunpack.c.l.b16 %v171
    %v301 = vunpack.c.l.b16 %v172
    %v302 = vunpack.c.l.b16 %v173
    %v303 = vunpack.c.l.b16 %v174
    %v304 = vunpack.c.l.b16 %v175
    %v305 = vunpack.c.l.b16 %v176
    %v306 = vunpack.c.l.b16 %v177
    %v307 = vunpack.c.l.b16 %v178
    %v308 = vunpack.c.l.b16 %v179
    %v309 = vunpack.c.l.b16 %v180
    %v310 = vunpack.c.l.b16 %v181
    %v311 = vunpack.c.l.b16 %v182
    %v312 = vunpack.c.l.b16 %v183
    %v313 = vunpack.c.l.b16 %v184
    %v314 = vunpack.c.l.b16 %v185
    %v315 = vunpack.c.l.b16 %v186
    %v316 = vunpack.c.l.b16 %v187
    %v317 = vunpack.c.l.b16 %v188
    %v318 = vunpack.c.l.b16 %v189
    %v319 = vunpack.c.l.b16 %v190
    %v320 = vunpack.c.l.b16 %v191
    %v321 = vunpack.c.l.b16 %v192
    %v322 = vunpack.c.l.b16 %v193
    %v323 = vunpack.c.l.b16 %v194
    %v324 = vunpack.c.l.b16 %v195
    %v325 = vunpack.c.l.b16 %v196
    %v326 = vunpack.c.l.b16 %v197
    %v327 = vunpack.c.l.b16 %v198
    %v328 = vunpack.c.l.b16 %v199
    %v329 = vunpack.c.l.b16 %v200
    %v330 = vunpack.c.l.b16 %v201
    %v331 = vunpack.c.l.b16 %v202
    %v332 = vunpack.c.l.b16 %v203
    %v333 = vunpack.c.l.b16 %v204
    %v334 = vunpack.c.l.b16 %v205
    %v335 = vunpack.c.l.b16 %v206
    %v336 = vunpack.c.l.b16 %v207
    %v337 = vunpack.c.l.b16 %v208
    %v338 = vunpack.c.l.b16 %v209
    %v339 = vunpack.c.l.b16 %v210
    %v340 = vunpack.c.l.b16 %v211
    %v341 = vunpack.c.l.b16 %v212
    %v342 = vunpack.c.l.b16 %v213
    %v343 = vunpack.c.l.b16 %v214
    %v344 = vunpack.c.l.b16 %v215
    %v345 = vunpack.c.l.b16 %v216
    %v346 = vunpack.c.l.b16 %v217
    %v347 = vunpack.c.l.b16 %v218
    %v348 = vunpack.c.l.b16 %v219
    %v349 = vunpack.c.l.b16 %v220
    %v350 = vunpack.c.l.b16 %v221
    %v351 = vunpack.c.l.b16 %v222
    %v352 = vpack.c.b16 %v289, %v288
    %v353 = vpack.c.b16 %v291, %v290
    %v354 = vpack.c.b16 %v293, %v292
    %v355 = vpack.c.b16 %v295, %v294
    %v356 = vpack.c.b16 %v297, %v296
    %v357 = vpack.c.b16 %v299, %v298
    %v358 = vpack.c.b16 %v301, %v300
    %v359 = vpack.c.b16 %v303, %v302
    %v360 = vpack.c.b16 %v305, %v304
    %v361 = vpack.c.b16 %v307, %v306
    %v362 = vpack.c.b16 %v309, %v308
    %v363 = vpack.c.b16 %v311, %v310
    %v364 = vpack.c.b16 %v313, %v312
    %v365 = vpack.c.b16 %v315, %v314
    %v366 = vpack.c.b16 %v317, %v316
    %v367 = vpack.c.b16 %v319, %v318
    %v368 = vpack.c.b16 %v321, %v320
    %v369 = vpack.c.b16 %v323, %v322
    %v370 = vpack.c.b16 %v325, %v324
    %v371 = vpack.c.b16 %v327, %v326
    %v372 = vpack.c.b16 %v329, %v328
    %v373 = vpack.c.b16 %v331, %v330
    %v374 = vpack.c.b16 %v333, %v332
    %v375 = vpack.c.b16 %v335, %v334
    %v376 = vpack.c.b16 %v337, %v336
    %v377 = vpack.c.b16 %v339, %v338
    %v378 = vpack.c.b16 %v341, %v340
    %v379 = vpack.c.b16 %v343, %v342
    %v380 = vpack.c.b16 %v345, %v344
    %v381 = vpack.c.b16 %v347, %v346
    %v382 = vpack.c.b16 %v349, %v348
    %v383 = vpack.c.b16 %v351, %v350
    %v385 = vcombine.high %v223, %v223
    %v387 = vunpack.c.l.s4 1983009808
    %v388 = vunpack.c.0.s8 %v387
    %v389 = vlaneseq
    %v390 = vshrl.u32 %v389, 7
    %v391 = vsub.s32 %v388, %v390
    %v392 = vrot.slane %v223, %v391
    %v394 = vunpack.c.l.s4 1983009808
    %v395 = vunpack.c.0.s8 %v394
    %v396 = vlaneseq
    %v397 = vshrl.u32 %v396, 7
    %v398 = vsub.s32 %v395, %v397
    %v399 = vrot.slane %v385, %v398
    %v400 = vcombine.high %v392, %v392
    %vm401 = vcmask 31744
    %v403 = vsel %vm401, %v352, 0
    %v406 = vsel %vm401, %v353, 0
    %v409 = vsel %vm401, %v354, 0
    %v412 = vsel %vm401, %v355, 0
    %v415 = vsel %vm401, %v356, 0
    %v418 = vsel %vm401, %v357, 0
    %v421 = vsel %vm401, %v358, 0
    %v424 = vsel %vm401, %v359, 0
    %v427 = vsel %vm401, %v360, 0
    %v430 = vsel %vm401, %v361, 0
    %v433 = vsel %vm401, %v362, 0
    %v436 = vsel %vm401, %v363, 0
    %v439 = vsel %vm401, %v364, 0
    %v442 = vsel %vm401, %v365, 0
    %v445 = vsel %vm401, %v366, 0
    %v448 = vsel %vm401, %v367, 0
    %v451 = vsel %vm401, %v368, 0
    %v454 = vsel %vm401, %v369, 0
    %v457 = vsel %vm401, %v370, 0
    %v460 = vsel %vm401, %v371, 0
    %v463 = vsel %vm401, %v372, 0
    %v466 = vsel %vm401, %v373, 0
    %v469 = vsel %vm401, %v374, 0
    %v472 = vsel %vm401, %v375, 0
    %v475 = vsel %vm401, %v376, 0
    %v478 = vsel %vm401, %v377, 0
    %v481 = vsel %vm401, %v378, 0
    %v484 = vsel %vm401, %v379, 0
    %v487 = vsel %vm401, %v380, 0
    %v490 = vsel %vm401, %v381, 0
    %v493 = vsel %vm401, %v382, 0
    %v496 = vsel %vm401, %v383, 0
    %vm498 = vcmask 1041408
    %v500 = vsel %vm498, %v392, 0
    %v503 = vsel %vm498, %v400, 0
    %v506 = vsel %vm498, %v399, 0
    %508 = vmatprep.subr.bf16.mxu0 %v503
    %509 = vmatpush1.bf16.msra.mxu0 %v500
    %510 = vmatprep.subr.bf16.mxu0 0
    %511 = vmatpush1.bf16.msra.mxu0 0
    %512 = vmatprep.subr.bf16.mxu0 0
    %513 = vmatpush1.bf16.msra.mxu0 0
    %514 = vmatprep.subr.bf16.mxu0 0
    %515 = vmatpush1.bf16.msra.mxu0 0
    %516 = vmatprep.subr.bf16.mxu0 0
    %517 = vmatpush1.bf16.msra.mxu0 0
    %518 = vmatprep.subr.bf16.mxu0 0
    %519 = vmatpush1.bf16.msra.mxu0 0
    %520 = vmatprep.subr.bf16.mxu0 0
    %521 = vmatpush1.bf16.msra.mxu0 0
    %522 = vmatprep.subr.bf16.mxu0 0
    %523 = vmatpush1.bf16.msra.mxu0 0
    %524 = vmatprep.subr.bf16.mxu0 0
    %525 = vmatpush1.bf16.msra.mxu0 0
    %526 = vmatprep.subr.bf16.mxu0 0
    %527 = vmatpush1.bf16.msra.mxu0 0
    %528 = vmatprep.subr.bf16.mxu0 0
    %529 = vmatpush1.bf16.msra.mxu0 0
    %530 = vmatprep.subr.bf16.mxu0 0
    %531 = vmatpush1.bf16.msra.mxu0 0
    %532 = vmatprep.subr.bf16.mxu0 0
    %533 = vmatpush1.bf16.msra.mxu0 0
    %534 = vmatprep.subr.bf16.mxu0 0
    %535 = vmatpush1.bf16.msra.mxu0 0
    %536 = vmatprep.subr.bf16.mxu0 0
    %537 = vmatpush1.bf16.msra.mxu0 0
    %538 = vmatprep.subr.bf16.mxu0 0
    %539 = vmatpush1.bf16.msra.mxu0 0
    %540 = vmatprep.mubr.bf16.mxu0 0
    %541 = vmatmul.mubr.bf16.gmra.mrb[0].mxu0 %v403
    %v542 = vpop.f32.mrb[0].mxu0
    %v543 = vadd.f32 0.0, %v542
    %v544 = vpop.f32.mrb[0].mxu0
    %v545 = vadd.f32 0.0, %v544
    %v546 = vpop.f32.mrb[0].mxu0
    %v547 = vadd.f32 0.0, %v546
    %v548 = vpop.f32.mrb[0].mxu0
    %v549 = vadd.f32 0.0, %v548
    %550 = vmatprep.mubr.bf16.mxu0 0
    %551 = vmatmul.mubr.bf16.gmra.mrb[0].mxu0 %v406
    %v552 = vpop.f32.mrb[0].mxu0
    %v553 = vadd.f32 0.0, %v552
    %v554 = vpop.f32.mrb[0].mxu0
    %v555 = vadd.f32 0.0, %v554
    %v556 = vpop.f32.mrb[0].mxu0
    %v557 = vadd.f32 0.0, %v556
    %v558 = vpop.f32.mrb[0].mxu0
    %v559 = vadd.f32 0.0, %v558
    %560 = vmatprep.mubr.bf16.mxu0 0
    %561 = vmatmul.mubr.bf16.gmra.mrb[0].mxu0 %v409
    %v562 = vpop.f32.mrb[0].mxu0
    %v563 = vadd.f32 0.0, %v562
    %v564 = vpop.f32.mrb[0].mxu0
    %v565 = vadd.f32 0.0, %v564
    %v566 = vpop.f32.mrb[0].mxu0
    %v567 = vadd.f32 0.0, %v566
    %v568 = vpop.f32.mrb[0].mxu0
    %v569 = vadd.f32 0.0, %v568
    %570 = vmatprep.mubr.bf16.mxu0 0
    %571 = vmatmul.mubr.bf16.gmra.mrb[0].mxu0 %v412
    %v572 = vpop.f32.mrb[0].mxu0
    %v573 = vadd.f32 0.0, %v572
    %v574 = vpop.f32.mrb[0].mxu0
    %v575 = vadd.f32 0.0, %v574
    %v576 = vpop.f32.mrb[0].mxu0
    %v577 = vadd.f32 0.0, %v576
    %v578 = vpop.f32.mrb[0].mxu0
    %v579 = vadd.f32 0.0, %v578
    %580 = vmatprep.mubr.bf16.mxu0 0
    %581 = vmatmul.mubr.bf16.gmra.mrb[0].mxu0 %v415
    %v582 = vpop.f32.mrb[0].mxu0
    %v583 = vadd.f32 0.0, %v582
    %v584 = vpop.f32.mrb[0].mxu0
    %v585 = vadd.f32 0.0, %v584
    %v586 = vpop.f32.mrb[0].mxu0
    %v587 = vadd.f32 0.0, %v586
    %v588 = vpop.f32.mrb[0].mxu0
    %v589 = vadd.f32 0.0, %v588
    %590 = vmatprep.mubr.bf16.mxu0 0
    %591 = vmatmul.mubr.bf16.gmra.mrb[0].mxu0 %v418
    %v592 = vpop.f32.mrb[0].mxu0
    %v593 = vadd.f32 0.0, %v592
    %v594 = vpop.f32.mrb[0].mxu0
    %v595 = vadd.f32 0.0, %v594
    %v596 = vpop.f32.mrb[0].mxu0
    %v597 = vadd.f32 0.0, %v596
    %v598 = vpop.f32.mrb[0].mxu0
    %v599 = vadd.f32 0.0, %v598
    %600 = vmatprep.mubr.bf16.mxu0 0
    %601 = vmatmul.mubr.bf16.gmra.mrb[0].mxu0 %v421
    %v602 = vpop.f32.mrb[0].mxu0
    %v603 = vadd.f32 0.0, %v602
    %v604 = vpop.f32.mrb[0].mxu0
    %v605 = vadd.f32 0.0, %v604
    %v606 = vpop.f32.mrb[0].mxu0
    %v607 = vadd.f32 0.0, %v606
    %v608 = vpop.f32.mrb[0].mxu0
    %v609 = vadd.f32 0.0, %v608
    %610 = vmatprep.mubr.bf16.mxu0 0
    %611 = vmatmul.mubr.bf16.gmra.mrb[0].mxu0 %v424
    %v612 = vpop.f32.mrb[0].mxu0
    %v613 = vadd.f32 0.0, %v612
    %v614 = vpop.f32.mrb[0].mxu0
    %v615 = vadd.f32 0.0, %v614
    %v616 = vpop.f32.mrb[0].mxu0
    %v617 = vadd.f32 0.0, %v616
    %v618 = vpop.f32.mrb[0].mxu0
    %v619 = vadd.f32 0.0, %v618
    %620 = vmatprep.mubr.bf16.mxu0 0
    %621 = vmatmul.mubr.bf16.gmra.mrb[0].mxu0 %v427
    %v622 = vpop.f32.mrb[0].mxu0
    %v623 = vadd.f32 0.0, %v622
    %v624 = vpop.f32.mrb[0].mxu0
    %v625 = vadd.f32 0.0, %v624
    %v626 = vpop.f32.mrb[0].mxu0
    %v627 = vadd.f32 0.0, %v626
    %v628 = vpop.f32.mrb[0].mxu0
    %v629 = vadd.f32 0.0, %v628
    %630 = vmatprep.mubr.bf16.mxu0 0
    %631 = vmatmul.mubr.bf16.gmra.mrb[0].mxu0 %v430
    %v632 = vpop.f32.mrb[0].mxu0
    %v633 = vadd.f32 0.0, %v632
    %v634 = vpop.f32.mrb[0].mxu0
    %v635 = vadd.f32 0.0, %v634
    %v636 = vpop.f32.mrb[0].mxu0
    %v637 = vadd.f32 0.0, %v636
    %v638 = vpop.f32.mrb[0].mxu0
    %v639 = vadd.f32 0.0, %v638
    %640 = vmatprep.mubr.bf16.mxu0 0
    %641 = vmatmul.mubr.bf16.gmra.mrb[0].mxu0 %v433
    %v642 = vpop.f32.mrb[0].mxu0
    %v643 = vadd.f32 0.0, %v642
    %v644 = vpop.f32.mrb[0].mxu0
    %v645 = vadd.f32 0.0, %v644
    %v646 = vpop.f32.mrb[0].mxu0
    %v647 = vadd.f32 0.0, %v646
    %v648 = vpop.f32.mrb[0].mxu0
    %v649 = vadd.f32 0.0, %v648
    %650 = vmatprep.mubr.bf16.mxu0 0
    %651 = vmatmul.mubr.bf16.gmra.mrb[0].mxu0 %v436
    %v652 = vpop.f32.mrb[0].mxu0
    %v653 = vadd.f32 0.0, %v652
    %v654 = vpop.f32.mrb[0].mxu0
    %v655 = vadd.f32 0.0, %v654
    %v656 = vpop.f32.mrb[0].mxu0
    %v657 = vadd.f32 0.0, %v656
    %v658 = vpop.f32.mrb[0].mxu0
    %v659 = vadd.f32 0.0, %v658
    %660 = vmatprep.mubr.bf16.mxu0 0
    %661 = vmatmul.mubr.bf16.gmra.mrb[0].mxu0 %v439
    %v662 = vpop.f32.mrb[0].mxu0
    %v663 = vadd.f32 0.0, %v662
    %v664 = vpop.f32.mrb[0].mxu0
    %v665 = vadd.f32 0.0, %v664
    %v666 = vpop.f32.mrb[0].mxu0
    %v667 = vadd.f32 0.0, %v666
    %v668 = vpop.f32.mrb[0].mxu0
    %v669 = vadd.f32 0.0, %v668
    %670 = vmatprep.mubr.bf16.mxu0 0
    %671 = vmatmul.mubr.bf16.gmra.mrb[0].mxu0 %v442
    %v672 = vpop.f32.mrb[0].mxu0
    %v673 = vadd.f32 0.0, %v672
    %v674 = vpop.f32.mrb[0].mxu0
    %v675 = vadd.f32 0.0, %v674
    %v676 = vpop.f32.mrb[0].mxu0
    %v677 = vadd.f32 0.0, %v676
    %v678 = vpop.f32.mrb[0].mxu0
    %v679 = vadd.f32 0.0, %v678
    %680 = vmatprep.mubr.bf16.mxu0 0
    %681 = vmatmul.mubr.bf16.gmra.mrb[0].mxu0 %v445
    %v682 = vpop.f32.mrb[0].mxu0
    %v683 = vadd.f32 0.0, %v682
    %v684 = vpop.f32.mrb[0].mxu0
    %v685 = vadd.f32 0.0, %v684
    %v686 = vpop.f32.mrb[0].mxu0
    %v687 = vadd.f32 0.0, %v686
    %v688 = vpop.f32.mrb[0].mxu0
    %v689 = vadd.f32 0.0, %v688
    %690 = vmatprep.mubr.bf16.mxu0 0
    %691 = vmatmul.mubr.bf16.gmra.mrb[0].mxu0 %v448
    %v692 = vpop.f32.mrb[0].mxu0
    %v693 = vadd.f32 0.0, %v692
    %v694 = vpop.f32.mrb[0].mxu0
    %v695 = vadd.f32 0.0, %v694
    %v696 = vpop.f32.mrb[0].mxu0
    %v697 = vadd.f32 0.0, %v696
    %v698 = vpop.f32.mrb[0].mxu0
    %v699 = vadd.f32 0.0, %v698
    %700 = vmatprep.mubr.bf16.mxu0 0
    %701 = vmatmul.mubr.bf16.gmra.mrb[0].mxu0 %v451
    %v702 = vpop.f32.mrb[0].mxu0
    %v703 = vadd.f32 0.0, %v702
    %v704 = vpop.f32.mrb[0].mxu0
    %v705 = vadd.f32 0.0, %v704
    %v706 = vpop.f32.mrb[0].mxu0
    %v707 = vadd.f32 0.0, %v706
    %v708 = vpop.f32.mrb[0].mxu0
    %v709 = vadd.f32 0.0, %v708
    %710 = vmatprep.mubr.bf16.mxu0 0
    %711 = vmatmul.mubr.bf16.gmra.mrb[0].mxu0 %v454
    %v712 = vpop.f32.mrb[0].mxu0
    %v713 = vadd.f32 0.0, %v712
    %v714 = vpop.f32.mrb[0].mxu0
    %v715 = vadd.f32 0.0, %v714
    %v716 = vpop.f32.mrb[0].mxu0
    %v717 = vadd.f32 0.0, %v716
    %v718 = vpop.f32.mrb[0].mxu0
    %v719 = vadd.f32 0.0, %v718
    %720 = vmatprep.mubr.bf16.mxu0 0
    %721 = vmatmul.mubr.bf16.gmra.mrb[0].mxu0 %v457
    %v722 = vpop.f32.mrb[0].mxu0
    %v723 = vadd.f32 0.0, %v722
    %v724 = vpop.f32.mrb[0].mxu0
    %v725 = vadd.f32 0.0, %v724
    %v726 = vpop.f32.mrb[0].mxu0
    %v727 = vadd.f32 0.0, %v726
    %v728 = vpop.f32.mrb[0].mxu0
    %v729 = vadd.f32 0.0, %v728
    %730 = vmatprep.mubr.bf16.mxu0 0
    %731 = vmatmul.mubr.bf16.gmra.mrb[0].mxu0 %v460
    %v732 = vpop.f32.mrb[0].mxu0
    %v733 = vadd.f32 0.0, %v732
    %v734 = vpop.f32.mrb[0].mxu0
    %v735 = vadd.f32 0.0, %v734
    %v736 = vpop.f32.mrb[0].mxu0
    %v737 = vadd.f32 0.0, %v736
    %v738 = vpop.f32.mrb[0].mxu0
    %v739 = vadd.f32 0.0, %v738
    %740 = vmatprep.mubr.bf16.mxu0 0
    %741 = vmatmul.mubr.bf16.gmra.mrb[0].mxu0 %v463
    %v742 = vpop.f32.mrb[0].mxu0
    %v743 = vadd.f32 0.0, %v742
    %v744 = vpop.f32.mrb[0].mxu0
    %v745 = vadd.f32 0.0, %v744
    %v746 = vpop.f32.mrb[0].mxu0
    %v747 = vadd.f32 0.0, %v746
    %v748 = vpop.f32.mrb[0].mxu0
    %v749 = vadd.f32 0.0, %v748
    %750 = vmatprep.mubr.bf16.mxu0 0
    %751 = vmatmul.mubr.bf16.gmra.mrb[0].mxu0 %v466
    %v752 = vpop.f32.mrb[0].mxu0
    %v753 = vadd.f32 0.0, %v752
    %v754 = vpop.f32.mrb[0].mxu0
    %v755 = vadd.f32 0.0, %v754
    %v756 = vpop.f32.mrb[0].mxu0
    %v757 = vadd.f32 0.0, %v756
    %v758 = vpop.f32.mrb[0].mxu0
    %v759 = vadd.f32 0.0, %v758
    %760 = vmatprep.mubr.bf16.mxu0 0
    %761 = vmatmul.mubr.bf16.gmra.mrb[0].mxu0 %v469
    %v762 = vpop.f32.mrb[0].mxu0
    %v763 = vadd.f32 0.0, %v762
    %v764 = vpop.f32.mrb[0].mxu0
    %v765 = vadd.f32 0.0, %v764
    %v766 = vpop.f32.mrb[0].mxu0
    %v767 = vadd.f32 0.0, %v766
    %v768 = vpop.f32.mrb[0].mxu0
    %v769 = vadd.f32 0.0, %v768
    %770 = vmatprep.mubr.bf16.mxu0 0
    %771 = vmatmul.mubr.bf16.gmra.mrb[0].mxu0 %v472
    %v772 = vpop.f32.mrb[0].mxu0
    %v773 = vadd.f32 0.0, %v772
    %v774 = vpop.f32.mrb[0].mxu0
    %v775 = vadd.f32 0.0, %v774
    %v776 = vpop.f32.mrb[0].mxu0
    %v777 = vadd.f32 0.0, %v776
    %v778 = vpop.f32.mrb[0].mxu0
    %v779 = vadd.f32 0.0, %v778
    %780 = vmatprep.mubr.bf16.mxu0 0
    %781 = vmatmul.mubr.bf16.gmra.mrb[0].mxu0 %v475
    %v782 = vpop.f32.mrb[0].mxu0
    %v783 = vadd.f32 0.0, %v782
    %v784 = vpop.f32.mrb[0].mxu0
    %v785 = vadd.f32 0.0, %v784
    %v786 = vpop.f32.mrb[0].mxu0
    %v787 = vadd.f32 0.0, %v786
    %v788 = vpop.f32.mrb[0].mxu0
    %v789 = vadd.f32 0.0, %v788
    %790 = vmatprep.mubr.bf16.mxu0 0
    %791 = vmatmul.mubr.bf16.gmra.mrb[0].mxu0 %v478
    %v792 = vpop.f32.mrb[0].mxu0
    %v793 = vadd.f32 0.0, %v792
    %v794 = vpop.f32.mrb[0].mxu0
    %v795 = vadd.f32 0.0, %v794
    %v796 = vpop.f32.mrb[0].mxu0
    %v797 = vadd.f32 0.0, %v796
    %v798 = vpop.f32.mrb[0].mxu0
    %v799 = vadd.f32 0.0, %v798
    %800 = vmatprep.mubr.bf16.mxu0 0
    %801 = vmatmul.mubr.bf16.gmra.mrb[0].mxu0 %v481
    %v802 = vpop.f32.mrb[0].mxu0
    %v803 = vadd.f32 0.0, %v802
    %v804 = vpop.f32.mrb[0].mxu0
    %v805 = vadd.f32 0.0, %v804
    %v806 = vpop.f32.mrb[0].mxu0
    %v807 = vadd.f32 0.0, %v806
    %v808 = vpop.f32.mrb[0].mxu0
    %v809 = vadd.f32 0.0, %v808
    %810 = vmatprep.mubr.bf16.mxu0 0
    %811 = vmatmul.mubr.bf16.gmra.mrb[0].mxu0 %v484
    %v812 = vpop.f32.mrb[0].mxu0
    %v813 = vadd.f32 0.0, %v812
    %v814 = vpop.f32.mrb[0].mxu0
    %v815 = vadd.f32 0.0, %v814
    %v816 = vpop.f32.mrb[0].mxu0
    %v817 = vadd.f32 0.0, %v816
    %v818 = vpop.f32.mrb[0].mxu0
    %v819 = vadd.f32 0.0, %v818
    %820 = vmatprep.mubr.bf16.mxu0 0
    %821 = vmatmul.mubr.bf16.gmra.mrb[0].mxu0 %v487
    %v822 = vpop.f32.mrb[0].mxu0
    %v823 = vadd.f32 0.0, %v822
    %v824 = vpop.f32.mrb[0].mxu0
    %v825 = vadd.f32 0.0, %v824
    %v826 = vpop.f32.mrb[0].mxu0
    %v827 = vadd.f32 0.0, %v826
    %v828 = vpop.f32.mrb[0].mxu0
    %v829 = vadd.f32 0.0, %v828
    %830 = vmatprep.mubr.bf16.mxu0 0
    %831 = vmatmul.mubr.bf16.gmra.mrb[0].mxu0 %v490
    %v832 = vpop.f32.mrb[0].mxu0
    %v833 = vadd.f32 0.0, %v832
    %v834 = vpop.f32.mrb[0].mxu0
    %v835 = vadd.f32 0.0, %v834
    %v836 = vpop.f32.mrb[0].mxu0
    %v837 = vadd.f32 0.0, %v836
    %v838 = vpop.f32.mrb[0].mxu0
    %v839 = vadd.f32 0.0, %v838
    %840 = vmatprep.mubr.bf16.mxu0 0
    %841 = vmatmul.mubr.bf16.gmra.mrb[0].mxu0 %v493
    %v842 = vpop.f32.mrb[0].mxu0
    %v843 = vadd.f32 0.0, %v842
    %v844 = vpop.f32.mrb[0].mxu0
    %v845 = vadd.f32 0.0, %v844
    %v846 = vpop.f32.mrb[0].mxu0
    %v847 = vadd.f32 0.0, %v846
    %v848 = vpop.f32.mrb[0].mxu0
    %v849 = vadd.f32 0.0, %v848
    %850 = vmatprep.mubr.bf16.mxu0 0
    %851 = vmatmul.mubr.bf16.gmra.mrb[0].mxu0 %v496
    %v852 = vpop.f32.mrb[0].mxu0
    %v853 = vadd.f32 0.0, %v852
    %v854 = vpop.f32.mrb[0].mxu0
    %v855 = vadd.f32 0.0, %v854
    %v856 = vpop.f32.mrb[0].mxu0
    %v857 = vadd.f32 0.0, %v856
    %v858 = vpop.f32.mrb[0].mxu0
    %v859 = vadd.f32 0.0, %v858
    %860 = vdwg.mxu0
    %861 = vmatprep.subr.bf16.mxu0 0
    %862 = vmatpush1.bf16.msra.mxu0 %v506
    %863 = vmatprep.subr.bf16.mxu0 0
    %864 = vmatpush1.bf16.msra.mxu0 0
    %865 = vmatprep.subr.bf16.mxu0 0
    %866 = vmatpush1.bf16.msra.mxu0 0
    %867 = vmatprep.subr.bf16.mxu0 0
    %868 = vmatpush1.bf16.msra.mxu0 0
    %869 = vmatprep.subr.bf16.mxu0 0
    %870 = vmatpush1.bf16.msra.mxu0 0
    %871 = vmatprep.subr.bf16.mxu0 0
    %872 = vmatpush1.bf16.msra.mxu0 0
    %873 = vmatprep.subr.bf16.mxu0 0
    %874 = vmatpush1.bf16.msra.mxu0 0
    %875 = vmatprep.subr.bf16.mxu0 0
    %876 = vmatpush1.bf16.msra.mxu0 0
    %877 = vmatprep.subr.bf16.mxu0 0
    %878 = vmatpush1.bf16.msra.mxu0 0
    %879 = vmatprep.subr.bf16.mxu0 0
    %880 = vmatpush1.bf16.msra.mxu0 0
    %881 = vmatprep.subr.bf16.mxu0 0
    %882 = vmatpush1.bf16.msra.mxu0 0
    %883 = vmatprep.subr.bf16.mxu0 0
    %884 = vmatpush1.bf16.msra.mxu0 0
    %885 = vmatprep.subr.bf16.mxu0 0
    %886 = vmatpush1.bf16.msra.mxu0 0
    %887 = vmatprep.subr.bf16.mxu0 0
    %888 = vmatpush1.bf16.msra.mxu0 0
    %889 = vmatprep.subr.bf16.mxu0 0
    %890 = vmatpush1.bf16.msra.mxu0 0
    %891 = vmatprep.subr.bf16.mxu0 0
    %892 = vmatpush1.bf16.msra.mxu0 0
    %893 = vmatprep.mubr.bf16.mxu0 0
    %894 = vmatmul.mubr.bf16.gmra.mrb[0].mxu0 %v403
    %v895 = vpop.f32.mrb[0].mxu0
    %v896 = vadd.f32 0.0, %v895
    %v897 = vpop.f32.mrb[0].mxu0
    %v898 = vpop.f32.mrb[0].mxu0
    %v899 = vadd.f32 0.0, %v898
    %v900 = vpop.f32.mrb[0].mxu0
    %901 = vmatprep.mubr.bf16.mxu0 0
    %902 = vmatmul.mubr.bf16.gmra.mrb[0].mxu0 %v406
    %v903 = vpop.f32.mrb[0].mxu0
    %v904 = vadd.f32 0.0, %v903
    %v905 = vpop.f32.mrb[0].mxu0
    %v906 = vpop.f32.mrb[0].mxu0
    %v907 = vadd.f32 0.0, %v906
    %v908 = vpop.f32.mrb[0].mxu0
    %909 = vmatprep.mubr.bf16.mxu0 0
    %910 = vmatmul.mubr.bf16.gmra.mrb[0].mxu0 %v409
    %v911 = vpop.f32.mrb[0].mxu0
    %v912 = vadd.f32 0.0, %v911
    %v913 = vpop.f32.mrb[0].mxu0
    %v914 = vpop.f32.mrb[0].mxu0
    %v915 = vadd.f32 0.0, %v914
    %v916 = vpop.f32.mrb[0].mxu0
    %917 = vmatprep.mubr.bf16.mxu0 0
    %918 = vmatmul.mubr.bf16.gmra.mrb[0].mxu0 %v412
    %v919 = vpop.f32.mrb[0].mxu0
    %v920 = vadd.f32 0.0, %v919
    %v921 = vpop.f32.mrb[0].mxu0
    %v922 = vpop.f32.mrb[0].mxu0
    %v923 = vadd.f32 0.0, %v922
    %v924 = vpop.f32.mrb[0].mxu0
    %925 = vmatprep.mubr.bf16.mxu0 0
    %926 = vmatmul.mubr.bf16.gmra.mrb[0].mxu0 %v415
    %v927 = vpop.f32.mrb[0].mxu0
    %v928 = vadd.f32 0.0, %v927
    %v929 = vpop.f32.mrb[0].mxu0
    %v930 = vpop.f32.mrb[0].mxu0
    %v931 = vadd.f32 0.0, %v930
    %v932 = vpop.f32.mrb[0].mxu0
    %933 = vmatprep.mubr.bf16.mxu0 0
    %934 = vmatmul.mubr.bf16.gmra.mrb[0].mxu0 %v418
    %v935 = vpop.f32.mrb[0].mxu0
    %v936 = vadd.f32 0.0, %v935
    %v937 = vpop.f32.mrb[0].mxu0
    %v938 = vpop.f32.mrb[0].mxu0
    %v939 = vadd.f32 0.0, %v938
    %v940 = vpop.f32.mrb[0].mxu0
    %941 = vmatprep.mubr.bf16.mxu0 0
    %942 = vmatmul.mubr.bf16.gmra.mrb[0].mxu0 %v421
    %v943 = vpop.f32.mrb[0].mxu0
    %v944 = vadd.f32 0.0, %v943
    %v945 = vpop.f32.mrb[0].mxu0
    %v946 = vpop.f32.mrb[0].mxu0
    %v947 = vadd.f32 0.0, %v946
    %v948 = vpop.f32.mrb[0].mxu0
    %949 = vmatprep.mubr.bf16.mxu0 0
    %950 = vmatmul.mubr.bf16.gmra.mrb[0].mxu0 %v424
    %v951 = vpop.f32.mrb[0].mxu0
    %v952 = vadd.f32 0.0, %v951
    %v953 = vpop.f32.mrb[0].mxu0
    %v954 = vpop.f32.mrb[0].mxu0
    %v955 = vadd.f32 0.0, %v954
    %v956 = vpop.f32.mrb[0].mxu0
    %957 = vmatprep.mubr.bf16.mxu0 0
    %958 = vmatmul.mubr.bf16.gmra.mrb[0].mxu0 %v427
    %v959 = vpop.f32.mrb[0].mxu0
    %v960 = vadd.f32 0.0, %v959
    %v961 = vpop.f32.mrb[0].mxu0
    %v962 = vpop.f32.mrb[0].mxu0
    %v963 = vadd.f32 0.0, %v962
    %v964 = vpop.f32.mrb[0].mxu0
    %965 = vmatprep.mubr.bf16.mxu0 0
    %966 = vmatmul.mubr.bf16.gmra.mrb[0].mxu0 %v430
    %v967 = vpop.f32.mrb[0].mxu0
    %v968 = vadd.f32 0.0, %v967
    %v969 = vpop.f32.mrb[0].mxu0
    %v970 = vpop.f32.mrb[0].mxu0
    %v971 = vadd.f32 0.0, %v970
    %v972 = vpop.f32.mrb[0].mxu0
    %973 = vmatprep.mubr.bf16.mxu0 0
    %974 = vmatmul.mubr.bf16.gmra.mrb[0].mxu0 %v433
    %v975 = vpop.f32.mrb[0].mxu0
    %v976 = vadd.f32 0.0, %v975
    %v977 = vpop.f32.mrb[0].mxu0
    %v978 = vpop.f32.mrb[0].mxu0
    %v979 = vadd.f32 0.0, %v978
    %v980 = vpop.f32.mrb[0].mxu0
    %981 = vmatprep.mubr.bf16.mxu0 0
    %982 = vmatmul.mubr.bf16.gmra.mrb[0].mxu0 %v436
    %v983 = vpop.f32.mrb[0].mxu0
    %v984 = vadd.f32 0.0, %v983
    %v985 = vpop.f32.mrb[0].mxu0
    %v986 = vpop.f32.mrb[0].mxu0
    %v987 = vadd.f32 0.0, %v986
    %v988 = vpop.f32.mrb[0].mxu0
    %989 = vmatprep.mubr.bf16.mxu0 0
    %990 = vmatmul.mubr.bf16.gmra.mrb[0].mxu0 %v439
    %v991 = vpop.f32.mrb[0].mxu0
    %v992 = vadd.f32 0.0, %v991
    %v993 = vpop.f32.mrb[0].mxu0
    %v994 = vpop.f32.mrb[0].mxu0
    %v995 = vadd.f32 0.0, %v994
    %v996 = vpop.f32.mrb[0].mxu0
    %997 = vmatprep.mubr.bf16.mxu0 0
    %998 = vmatmul.mubr.bf16.gmra.mrb[0].mxu0 %v442
    %v999 = vpop.f32.mrb[0].mxu0
    %v1000 = vadd.f32 0.0, %v999
    %v1001 = vpop.f32.mrb[0].mxu0
    %v1002 = vpop.f32.mrb[0].mxu0
    %v1003 = vadd.f32 0.0, %v1002
    %v1004 = vpop.f32.mrb[0].mxu0
    %1005 = vmatprep.mubr.bf16.mxu0 0
    %1006 = vmatmul.mubr.bf16.gmra.mrb[0].mxu0 %v445
    %v1007 = vpop.f32.mrb[0].mxu0
    %v1008 = vadd.f32 0.0, %v1007
    %v1009 = vpop.f32.mrb[0].mxu0
    %v1010 = vpop.f32.mrb[0].mxu0
    %v1011 = vadd.f32 0.0, %v1010
    %v1012 = vpop.f32.mrb[0].mxu0
    %1013 = vmatprep.mubr.bf16.mxu0 0
    %1014 = vmatmul.mubr.bf16.gmra.mrb[0].mxu0 %v448
    %v1015 = vpop.f32.mrb[0].mxu0
    %v1016 = vadd.f32 0.0, %v1015
    %v1017 = vpop.f32.mrb[0].mxu0
    %v1018 = vpop.f32.mrb[0].mxu0
    %v1019 = vadd.f32 0.0, %v1018
    %v1020 = vpop.f32.mrb[0].mxu0
    %1021 = vmatprep.mubr.bf16.mxu0 0
    %1022 = vmatmul.mubr.bf16.gmra.mrb[0].mxu0 %v451
    %v1023 = vpop.f32.mrb[0].mxu0
    %v1024 = vadd.f32 0.0, %v1023
    %v1025 = vpop.f32.mrb[0].mxu0
    %v1026 = vpop.f32.mrb[0].mxu0
    %v1027 = vadd.f32 0.0, %v1026
    %v1028 = vpop.f32.mrb[0].mxu0
    %1029 = vmatprep.mubr.bf16.mxu0 0
    %1030 = vmatmul.mubr.bf16.gmra.mrb[0].mxu0 %v454
    %v1031 = vpop.f32.mrb[0].mxu0
    %v1032 = vadd.f32 0.0, %v1031
    %v1033 = vpop.f32.mrb[0].mxu0
    %v1034 = vpop.f32.mrb[0].mxu0
    %v1035 = vadd.f32 0.0, %v1034
    %v1036 = vpop.f32.mrb[0].mxu0
    %1037 = vmatprep.mubr.bf16.mxu0 0
    %1038 = vmatmul.mubr.bf16.gmra.mrb[0].mxu0 %v457
    %v1039 = vpop.f32.mrb[0].mxu0
    %v1040 = vadd.f32 0.0, %v1039
    %v1041 = vpop.f32.mrb[0].mxu0
    %v1042 = vpop.f32.mrb[0].mxu0
    %v1043 = vadd.f32 0.0, %v1042
    %v1044 = vpop.f32.mrb[0].mxu0
    %1045 = vmatprep.mubr.bf16.mxu0 0
    %1046 = vmatmul.mubr.bf16.gmra.mrb[0].mxu0 %v460
    %v1047 = vpop.f32.mrb[0].mxu0
    %v1048 = vadd.f32 0.0, %v1047
    %v1049 = vpop.f32.mrb[0].mxu0
    %v1050 = vpop.f32.mrb[0].mxu0
    %v1051 = vadd.f32 0.0, %v1050
    %v1052 = vpop.f32.mrb[0].mxu0
    %1053 = vmatprep.mubr.bf16.mxu0 0
    %1054 = vmatmul.mubr.bf16.gmra.mrb[0].mxu0 %v463
    %v1055 = vpop.f32.mrb[0].mxu0
    %v1056 = vadd.f32 0.0, %v1055
    %v1057 = vpop.f32.mrb[0].mxu0
    %v1058 = vpop.f32.mrb[0].mxu0
    %v1059 = vadd.f32 0.0, %v1058
    %v1060 = vpop.f32.mrb[0].mxu0
    %1061 = vmatprep.mubr.bf16.mxu0 0
    %1062 = vmatmul.mubr.bf16.gmra.mrb[0].mxu0 %v466
    %v1063 = vpop.f32.mrb[0].mxu0
    %v1064 = vadd.f32 0.0, %v1063
    %v1065 = vpop.f32.mrb[0].mxu0
    %v1066 = vpop.f32.mrb[0].mxu0
    %v1067 = vadd.f32 0.0, %v1066
    %v1068 = vpop.f32.mrb[0].mxu0
    %1069 = vmatprep.mubr.bf16.mxu0 0
    %1070 = vmatmul.mubr.bf16.gmra.mrb[0].mxu0 %v469
    %v1071 = vpop.f32.mrb[0].mxu0
    %v1072 = vadd.f32 0.0, %v1071
    %v1073 = vpop.f32.mrb[0].mxu0
    %v1074 = vpop.f32.mrb[0].mxu0
    %v1075 = vadd.f32 0.0, %v1074
    %v1076 = vpop.f32.mrb[0].mxu0
    %1077 = vmatprep.mubr.bf16.mxu0 0
    %1078 = vmatmul.mubr.bf16.gmra.mrb[0].mxu0 %v472
    %v1079 = vpop.f32.mrb[0].mxu0
    %v1080 = vadd.f32 0.0, %v1079
    %v1081 = vpop.f32.mrb[0].mxu0
    %v1082 = vpop.f32.mrb[0].mxu0
    %v1083 = vadd.f32 0.0, %v1082
    %v1084 = vpop.f32.mrb[0].mxu0
    %1085 = vmatprep.mubr.bf16.mxu0 0
    %1086 = vmatmul.mubr.bf16.gmra.mrb[0].mxu0 %v475
    %v1087 = vpop.f32.mrb[0].mxu0
    %v1088 = vadd.f32 0.0, %v1087
    %v1089 = vpop.f32.mrb[0].mxu0
    %v1090 = vpop.f32.mrb[0].mxu0
    %v1091 = vadd.f32 0.0, %v1090
    %v1092 = vpop.f32.mrb[0].mxu0
    %1093 = vmatprep.mubr.bf16.mxu0 0
    %1094 = vmatmul.mubr.bf16.gmra.mrb[0].mxu0 %v478
    %v1095 = vpop.f32.mrb[0].mxu0
    %v1096 = vadd.f32 0.0, %v1095
    %v1097 = vpop.f32.mrb[0].mxu0
    %v1098 = vpop.f32.mrb[0].mxu0
    %v1099 = vadd.f32 0.0, %v1098
    %v1100 = vpop.f32.mrb[0].mxu0
    %1101 = vmatprep.mubr.bf16.mxu0 0
    %1102 = vmatmul.mubr.bf16.gmra.mrb[0].mxu0 %v481
    %v1103 = vpop.f32.mrb[0].mxu0
    %v1104 = vadd.f32 0.0, %v1103
    %v1105 = vpop.f32.mrb[0].mxu0
    %v1106 = vpop.f32.mrb[0].mxu0
    %v1107 = vadd.f32 0.0, %v1106
    %v1108 = vpop.f32.mrb[0].mxu0
    %1109 = vmatprep.mubr.bf16.mxu0 0
    %1110 = vmatmul.mubr.bf16.gmra.mrb[0].mxu0 %v484
    %v1111 = vpop.f32.mrb[0].mxu0
    %v1112 = vadd.f32 0.0, %v1111
    %v1113 = vpop.f32.mrb[0].mxu0
    %v1114 = vpop.f32.mrb[0].mxu0
    %v1115 = vadd.f32 0.0, %v1114
    %v1116 = vpop.f32.mrb[0].mxu0
    %1117 = vmatprep.mubr.bf16.mxu0 0
    %1118 = vmatmul.mubr.bf16.gmra.mrb[0].mxu0 %v487
    %v1119 = vpop.f32.mrb[0].mxu0
    %v1120 = vadd.f32 0.0, %v1119
    %v1121 = vpop.f32.mrb[0].mxu0
    %v1122 = vpop.f32.mrb[0].mxu0
    %v1123 = vadd.f32 0.0, %v1122
    %v1124 = vpop.f32.mrb[0].mxu0
    %1125 = vmatprep.mubr.bf16.mxu0 0
    %1126 = vmatmul.mubr.bf16.gmra.mrb[0].mxu0 %v490
    %v1127 = vpop.f32.mrb[0].mxu0
    %v1128 = vadd.f32 0.0, %v1127
    %v1129 = vpop.f32.mrb[0].mxu0
    %v1130 = vpop.f32.mrb[0].mxu0
    %v1131 = vadd.f32 0.0, %v1130
    %v1132 = vpop.f32.mrb[0].mxu0
    %1133 = vmatprep.mubr.bf16.mxu0 0
    %1134 = vmatmul.mubr.bf16.gmra.mrb[0].mxu0 %v493
    %v1135 = vpop.f32.mrb[0].mxu0
    %v1136 = vadd.f32 0.0, %v1135
    %v1137 = vpop.f32.mrb[0].mxu0
    %v1138 = vpop.f32.mrb[0].mxu0
    %v1139 = vadd.f32 0.0, %v1138
    %v1140 = vpop.f32.mrb[0].mxu0
    %1141 = vmatprep.mubr.bf16.mxu0 0
    %1142 = vmatmul.mubr.bf16.gmra.mrb[0].mxu0 %v496
    %v1143 = vpop.f32.mrb[0].mxu0
    %v1144 = vadd.f32 0.0, %v1143
    %v1145 = vpop.f32.mrb[0].mxu0
    %v1146 = vpop.f32.mrb[0].mxu0
    %v1147 = vadd.f32 0.0, %v1146
    %v1148 = vpop.f32.mrb[0].mxu0
    %1149 = vdwg.mxu0
    %v1150 = vld [vmem:[#allocation10] sm:$0x7]
    %v1151 = vld [vmem:[#allocation11] sm:$0x7]
    %v1152 = vadd.f32 %v543, %v547
    %v1153 = vadd.f32 %v1152, %v553
    %v1154 = vadd.f32 %v1153, %v557
    %v1155 = vadd.f32 %v1154, %v563
    %v1156 = vadd.f32 %v1155, %v567
    %v1157 = vadd.f32 %v1156, %v573
    %v1158 = vadd.f32 %v1157, %v577
    %v1159 = vadd.f32 %v1158, %v583
    %v1160 = vadd.f32 %v1159, %v587
    %v1161 = vadd.f32 %v1160, %v593
    %v1162 = vadd.f32 %v1161, %v597
    %v1163 = vadd.f32 %v1162, %v603
    %v1164 = vadd.f32 %v1163, %v607
    %v1165 = vadd.f32 %v1164, %v613
    %v1166 = vadd.f32 %v1165, %v617
    %v1167 = vadd.f32 %v1166, %v623
    %v1168 = vadd.f32 %v1167, %v627
    %v1169 = vadd.f32 %v1168, %v633
    %v1170 = vadd.f32 %v1169, %v637
    %v1171 = vadd.f32 %v1170, %v643
    %v1172 = vadd.f32 %v1171, %v647
    %v1173 = vadd.f32 %v1172, %v653
    %v1174 = vadd.f32 %v1173, %v657
    %v1175 = vadd.f32 %v1174, %v663
    %v1176 = vadd.f32 %v1175, %v667
    %v1177 = vadd.f32 %v1176, %v673
    %v1178 = vadd.f32 %v1177, %v677
    %v1179 = vadd.f32 %v1178, %v683
    %v1180 = vadd.f32 %v1179, %v687
    %v1181 = vadd.f32 %v1180, %v693
    %v1182 = vadd.f32 %v1181, %v697
    %v1183 = vadd.f32 %v1182, %v703
    %v1184 = vadd.f32 %v1183, %v707
    %v1185 = vadd.f32 %v1184, %v713
    %v1186 = vadd.f32 %v1185, %v717
    %v1187 = vadd.f32 %v1186, %v723
    %v1188 = vadd.f32 %v1187, %v727
    %v1189 = vadd.f32 %v1188, %v733
    %v1190 = vadd.f32 %v1189, %v737
    %v1191 = vadd.f32 %v1190, %v743
    %v1192 = vadd.f32 %v1191, %v747
    %v1193 = vadd.f32 %v1192, %v753
    %v1194 = vadd.f32 %v1193, %v757
    %v1195 = vadd.f32 %v1194, %v763
    %v1196 = vadd.f32 %v1195, %v767
    %v1197 = vadd.f32 %v1196, %v773
    %v1198 = vadd.f32 %v1197, %v777
    %v1199 = vadd.f32 %v1198, %v783
    %v1200 = vadd.f32 %v1199, %v787
    %v1201 = vadd.f32 %v1200, %v793
    %v1202 = vadd.f32 %v1201, %v797
    %v1203 = vadd.f32 %v1202, %v803
    %v1204 = vadd.f32 %v1203, %v807
    %v1205 = vadd.f32 %v1204, %v813
    %v1206 = vadd.f32 %v1205, %v817
    %v1207 = vadd.f32 %v1206, %v823
    %v1208 = vadd.f32 %v1207, %v827
    %v1209 = vadd.f32 %v1208, %v833
    %v1210 = vadd.f32 %v1209, %v837
    %v1211 = vadd.f32 %v1210, %v843
    %v1212 = vadd.f32 %v1211, %v847
    %v1213 = vadd.f32 %v1212, %v853
    %v1214 = vadd.f32 %v1213, %v857
    %v1215 = vrot.slane %v1214, 4
    %v1216 = vadd.f32 %v1214, %v1215
    %v1217 = vrot.slane %v1216, 2
    %v1218 = vadd.f32 %v1216, %v1217
    %v1219 = vrot.slane %v1218, 1
    %v1220 = vadd.f32 %v1218, %v1219
    %v1221 = vadd.f32 %v545, %v549
    %v1222 = vadd.f32 %v1221, %v555
    %v1223 = vadd.f32 %v1222, %v559
    %v1224 = vadd.f32 %v1223, %v565
    %v1225 = vadd.f32 %v1224, %v569
    %v1226 = vadd.f32 %v1225, %v575
    %v1227 = vadd.f32 %v1226, %v579
    %v1228 = vadd.f32 %v1227, %v585
    %v1229 = vadd.f32 %v1228, %v589
    %v1230 = vadd.f32 %v1229, %v595
    %v1231 = vadd.f32 %v1230, %v599
    %v1232 = vadd.f32 %v1231, %v605
    %v1233 = vadd.f32 %v1232, %v609
    %v1234 = vadd.f32 %v1233, %v615
    %v1235 = vadd.f32 %v1234, %v619
    %v1236 = vadd.f32 %v1235, %v625
    %v1237 = vadd.f32 %v1236, %v629
    %v1238 = vadd.f32 %v1237, %v635
    %v1239 = vadd.f32 %v1238, %v639
    %v1240 = vadd.f32 %v1239, %v645
    %v1241 = vadd.f32 %v1240, %v649
    %v1242 = vadd.f32 %v1241, %v655
    %v1243 = vadd.f32 %v1242, %v659
    %v1244 = vadd.f32 %v1243, %v665
    %v1245 = vadd.f32 %v1244, %v669
    %v1246 = vadd.f32 %v1245, %v675
    %v1247 = vadd.f32 %v1246, %v679
    %v1248 = vadd.f32 %v1247, %v685
    %v1249 = vadd.f32 %v1248, %v689
    %v1250 = vadd.f32 %v1249, %v695
    %v1251 = vadd.f32 %v1250, %v699
    %v1252 = vadd.f32 %v1251, %v705
    %v1253 = vadd.f32 %v1252, %v709
    %v1254 = vadd.f32 %v1253, %v715
    %v1255 = vadd.f32 %v1254, %v719
    %v1256 = vadd.f32 %v1255, %v725
    %v1257 = vadd.f32 %v1256, %v729
    %v1258 = vadd.f32 %v1257, %v735
    %v1259 = vadd.f32 %v1258, %v739
    %v1260 = vadd.f32 %v1259, %v745
    %v1261 = vadd.f32 %v1260, %v749
    %v1262 = vadd.f32 %v1261, %v755
    %v1263 = vadd.f32 %v1262, %v759
    %v1264 = vadd.f32 %v1263, %v765
    %v1265 = vadd.f32 %v1264, %v769
    %v1266 = vadd.f32 %v1265, %v775
    %v1267 = vadd.f32 %v1266, %v779
    %v1268 = vadd.f32 %v1267, %v785
    %v1269 = vadd.f32 %v1268, %v789
    %v1270 = vadd.f32 %v1269, %v795
    %v1271 = vadd.f32 %v1270, %v799
    %v1272 = vadd.f32 %v1271, %v805
    %v1273 = vadd.f32 %v1272, %v809
    %v1274 = vadd.f32 %v1273, %v815
    %v1275 = vadd.f32 %v1274, %v819
    %v1276 = vadd.f32 %v1275, %v825
    %v1277 = vadd.f32 %v1276, %v829
    %v1278 = vadd.f32 %v1277, %v835
    %v1279 = vadd.f32 %v1278, %v839
    %v1280 = vadd.f32 %v1279, %v845
    %v1281 = vadd.f32 %v1280, %v849
    %v1282 = vadd.f32 %v1281, %v855
    %v1283 = vadd.f32 %v1282, %v859
    %v1284 = vrot.slane %v1283, 4
    %v1285 = vadd.f32 %v1283, %v1284
    %v1286 = vrot.slane %v1285, 2
    %v1287 = vadd.f32 %v1285, %v1286
    %v1288 = vrot.slane %v1287, 1
    %v1289 = vadd.f32 %v1287, %v1288
    %vm1290 = vcmask 523264
    %v1291 = vsel %vm1290, %v896, 0.0
    %v1292 = vsel %vm1290, %v899, 0.0
    %v1293 = vadd.f32 %v1291, %v1292
    %v1294 = vsel %vm1290, %v904, 0.0
    %v1295 = vadd.f32 %v1293, %v1294
    %v1296 = vsel %vm1290, %v907, 0.0
    %v1297 = vadd.f32 %v1295, %v1296
    %v1298 = vsel %vm1290, %v912, 0.0
    %v1299 = vadd.f32 %v1297, %v1298
    %v1300 = vsel %vm1290, %v915, 0.0
    %v1301 = vadd.f32 %v1299, %v1300
    %v1302 = vsel %vm1290, %v920, 0.0
    %v1303 = vadd.f32 %v1301, %v1302
    %v1304 = vsel %vm1290, %v923, 0.0
    %v1305 = vadd.f32 %v1303, %v1304
    %v1306 = vsel %vm1290, %v928, 0.0
    %v1307 = vadd.f32 %v1305, %v1306
    %v1308 = vsel %vm1290, %v931, 0.0
    %v1309 = vadd.f32 %v1307, %v1308
    %v1310 = vsel %vm1290, %v936, 0.0
    %v1311 = vadd.f32 %v1309, %v1310
    %v1312 = vsel %vm1290, %v939, 0.0
    %v1313 = vadd.f32 %v1311, %v1312
    %v1314 = vsel %vm1290, %v944, 0.0
    %v1315 = vadd.f32 %v1313, %v1314
    %v1316 = vsel %vm1290, %v947, 0.0
    %v1317 = vadd.f32 %v1315, %v1316
    %v1318 = vsel %vm1290, %v952, 0.0
    %v1319 = vadd.f32 %v1317, %v1318
    %v1320 = vsel %vm1290, %v955, 0.0
    %v1321 = vadd.f32 %v1319, %v1320
    %v1322 = vsel %vm1290, %v960, 0.0
    %v1323 = vadd.f32 %v1321, %v1322
    %v1324 = vsel %vm1290, %v963, 0.0
    %v1325 = vadd.f32 %v1323, %v1324
    %v1326 = vsel %vm1290, %v968, 0.0
    %v1327 = vadd.f32 %v1325, %v1326
    %v1328 = vsel %vm1290, %v971, 0.0
    %v1329 = vadd.f32 %v1327, %v1328
    %v1330 = vsel %vm1290, %v976, 0.0
    %v1331 = vadd.f32 %v1329, %v1330
    %v1332 = vsel %vm1290, %v979, 0.0
    %v1333 = vadd.f32 %v1331, %v1332
    %v1334 = vsel %vm1290, %v984, 0.0
    %v1335 = vadd.f32 %v1333, %v1334
    %v1336 = vsel %vm1290, %v987, 0.0
    %v1337 = vadd.f32 %v1335, %v1336
    %v1338 = vsel %vm1290, %v992, 0.0
    %v1339 = vadd.f32 %v1337, %v1338
    %v1340 = vsel %vm1290, %v995, 0.0
    %v1341 = vadd.f32 %v1339, %v1340
    %v1342 = vsel %vm1290, %v1000, 0.0
    %v1343 = vadd.f32 %v1341, %v1342
    %v1344 = vsel %vm1290, %v1003, 0.0
    %v1345 = vadd.f32 %v1343, %v1344
    %v1346 = vsel %vm1290, %v1008, 0.0
    %v1347 = vadd.f32 %v1345, %v1346
    %v1348 = vsel %vm1290, %v1011, 0.0
    %v1349 = vadd.f32 %v1347, %v1348
    %v1350 = vsel %vm1290, %v1016, 0.0
    %v1351 = vadd.f32 %v1349, %v1350
    %v1352 = vsel %vm1290, %v1019, 0.0
    %v1353 = vadd.f32 %v1351, %v1352
    %v1354 = vsel %vm1290, %v1024, 0.0
    %v1355 = vadd.f32 %v1353, %v1354
    %v1356 = vsel %vm1290, %v1027, 0.0
    %v1357 = vadd.f32 %v1355, %v1356
    %v1358 = vsel %vm1290, %v1032, 0.0
    %v1359 = vadd.f32 %v1357, %v1358
    %v1360 = vsel %vm1290, %v1035, 0.0
    %v1361 = vadd.f32 %v1359, %v1360
    %v1362 = vsel %vm1290, %v1040, 0.0
    %v1363 = vadd.f32 %v1361, %v1362
    %v1364 = vsel %vm1290, %v1043, 0.0
    %v1365 = vadd.f32 %v1363, %v1364
    %v1366 = vsel %vm1290, %v1048, 0.0
    %v1367 = vadd.f32 %v1365, %v1366
    %v1368 = vsel %vm1290, %v1051, 0.0
    %v1369 = vadd.f32 %v1367, %v1368
    %v1370 = vsel %vm1290, %v1056, 0.0
    %v1371 = vadd.f32 %v1369, %v1370
    %v1372 = vsel %vm1290, %v1059, 0.0
    %v1373 = vadd.f32 %v1371, %v1372
    %v1374 = vsel %vm1290, %v1064, 0.0
    %v1375 = vadd.f32 %v1373, %v1374
    %v1376 = vsel %vm1290, %v1067, 0.0
    %v1377 = vadd.f32 %v1375, %v1376
    %v1378 = vsel %vm1290, %v1072, 0.0
    %v1379 = vadd.f32 %v1377, %v1378
    %v1380 = vsel %vm1290, %v1075, 0.0
    %v1381 = vadd.f32 %v1379, %v1380
    %v1382 = vsel %vm1290, %v1080, 0.0
    %v1383 = vadd.f32 %v1381, %v1382
    %v1384 = vsel %vm1290, %v1083, 0.0
    %v1385 = vadd.f32 %v1383, %v1384
    %v1386 = vsel %vm1290, %v1088, 0.0
    %v1387 = vadd.f32 %v1385, %v1386
    %v1388 = vsel %vm1290, %v1091, 0.0
    %v1389 = vadd.f32 %v1387, %v1388
    %v1390 = vsel %vm1290, %v1096, 0.0
    %v1391 = vadd.f32 %v1389, %v1390
    %v1392 = vsel %vm1290, %v1099, 0.0
    %v1393 = vadd.f32 %v1391, %v1392
    %v1394 = vsel %vm1290, %v1104, 0.0
    %v1395 = vadd.f32 %v1393, %v1394
    %v1396 = vsel %vm1290, %v1107, 0.0
    %v1397 = vadd.f32 %v1395, %v1396
    %v1398 = vsel %vm1290, %v1112, 0.0
    %v1399 = vadd.f32 %v1397, %v1398
    %v1400 = vsel %vm1290, %v1115, 0.0
    %v1401 = vadd.f32 %v1399, %v1400
    %v1402 = vsel %vm1290, %v1120, 0.0
    %v1403 = vadd.f32 %v1401, %v1402
    %v1404 = vsel %vm1290, %v1123, 0.0
    %v1405 = vadd.f32 %v1403, %v1404
    %v1406 = vsel %vm1290, %v1128, 0.0
    %v1407 = vadd.f32 %v1405, %v1406
    %v1408 = vsel %vm1290, %v1131, 0.0
    %v1409 = vadd.f32 %v1407, %v1408
    %v1410 = vsel %vm1290, %v1136, 0.0
    %v1411 = vadd.f32 %v1409, %v1410
    %v1412 = vsel %vm1290, %v1139, 0.0
    %v1413 = vadd.f32 %v1411, %v1412
    %v1414 = vsel %vm1290, %v1144, 0.0
    %v1415 = vadd.f32 %v1413, %v1414
    %v1416 = vsel %vm1290, %v1147, 0.0
    %v1417 = vadd.f32 %v1415, %v1416
    %v1418 = vrot.slane %v1417, 4
    %v1419 = vadd.f32 %v1417, %v1418
    %v1420 = vrot.slane %v1419, 2
    %v1421 = vadd.f32 %v1419, %v1420
    %v1422 = vrot.slane %v1421, 1
    %v1423 = vadd.f32 %v1421, %v1422
    %v1424 = vmul.f32 %v1220, 0.001953125
    %v1425 = vmul.f32 %v1289, 0.001953125
    %v1426 = vmul.f32 %v1423, 0.001953125
    %v1427 = vsub.f32 %v543, %v1424
    %v1428 = vsub.f32 %v545, %v1425
    %v1429 = vsub.f32 %v896, %v1426
    %v1430 = vsub.f32 %v547, %v1424
    %v1431 = vsub.f32 %v549, %v1425
    %v1432 = vsub.f32 %v899, %v1426
    %v1433 = vsub.f32 %v553, %v1424
    %v1434 = vsub.f32 %v555, %v1425
    %v1435 = vsub.f32 %v904, %v1426
    %v1436 = vsub.f32 %v557, %v1424
    %v1437 = vsub.f32 %v559, %v1425
    %v1438 = vsub.f32 %v907, %v1426
    %v1439 = vsub.f32 %v563, %v1424
    %v1440 = vsub.f32 %v565, %v1425
    %v1441 = vsub.f32 %v912, %v1426
    %v1442 = vsub.f32 %v567, %v1424
    %v1443 = vsub.f32 %v569, %v1425
    %v1444 = vsub.f32 %v915, %v1426
    %v1445 = vsub.f32 %v573, %v1424
    %v1446 = vsub.f32 %v575, %v1425
    %v1447 = vsub.f32 %v920, %v1426
    %v1448 = vsub.f32 %v577, %v1424
    %v1449 = vsub.f32 %v579, %v1425
    %v1450 = vsub.f32 %v923, %v1426
    %v1451 = vsub.f32 %v583, %v1424
    %v1452 = vsub.f32 %v585, %v1425
    %v1453 = vsub.f32 %v928, %v1426
    %v1454 = vsub.f32 %v587, %v1424
    %v1455 = vsub.f32 %v589, %v1425
    %v1456 = vsub.f32 %v931, %v1426
    %v1457 = vsub.f32 %v593, %v1424
    %v1458 = vsub.f32 %v595, %v1425
    %v1459 = vsub.f32 %v936, %v1426
    %v1460 = vsub.f32 %v597, %v1424
    %v1461 = vsub.f32 %v599, %v1425
    %v1462 = vsub.f32 %v939, %v1426
    %v1463 = vsub.f32 %v603, %v1424
    %v1464 = vsub.f32 %v605, %v1425
    %v1465 = vsub.f32 %v944, %v1426
    %v1466 = vsub.f32 %v607, %v1424
    %v1467 = vsub.f32 %v609, %v1425
    %v1468 = vsub.f32 %v947, %v1426
    %v1469 = vsub.f32 %v613, %v1424
    %v1470 = vsub.f32 %v615, %v1425
    %v1471 = vsub.f32 %v952, %v1426
    %v1472 = vsub.f32 %v617, %v1424
    %v1473 = vsub.f32 %v619, %v1425
    %v1474 = vsub.f32 %v955, %v1426
    %v1475 = vsub.f32 %v623, %v1424
    %v1476 = vsub.f32 %v625, %v1425
    %v1477 = vsub.f32 %v960, %v1426
    %v1478 = vsub.f32 %v627, %v1424
    %v1479 = vsub.f32 %v629, %v1425
    %v1480 = vsub.f32 %v963, %v1426
    %v1481 = vsub.f32 %v633, %v1424
    %v1482 = vsub.f32 %v635, %v1425
    %v1483 = vsub.f32 %v968, %v1426
    %v1484 = vsub.f32 %v637, %v1424
    %v1485 = vsub.f32 %v639, %v1425
    %v1486 = vsub.f32 %v971, %v1426
    %v1487 = vsub.f32 %v643, %v1424
    %v1488 = vsub.f32 %v645, %v1425
    %v1489 = vsub.f32 %v976, %v1426
    %v1490 = vsub.f32 %v647, %v1424
    %v1491 = vsub.f32 %v649, %v1425
    %v1492 = vsub.f32 %v979, %v1426
    %v1493 = vsub.f32 %v653, %v1424
    %v1494 = vsub.f32 %v655, %v1425
    %v1495 = vsub.f32 %v984, %v1426
    %v1496 = vsub.f32 %v657, %v1424
    %v1497 = vsub.f32 %v659, %v1425
    %v1498 = vsub.f32 %v987, %v1426
    %v1499 = vsub.f32 %v663, %v1424
    %v1500 = vsub.f32 %v665, %v1425
    %v1501 = vsub.f32 %v992, %v1426
    %v1502 = vsub.f32 %v667, %v1424
    %v1503 = vsub.f32 %v669, %v1425
    %v1504 = vsub.f32 %v995, %v1426
    %v1505 = vsub.f32 %v673, %v1424
    %v1506 = vsub.f32 %v675, %v1425
    %v1507 = vsub.f32 %v1000, %v1426
    %v1508 = vsub.f32 %v677, %v1424
    %v1509 = vsub.f32 %v679, %v1425
    %v1510 = vsub.f32 %v1003, %v1426
    %v1511 = vsub.f32 %v683, %v1424
    %v1512 = vsub.f32 %v685, %v1425
    %v1513 = vsub.f32 %v1008, %v1426
    %v1514 = vsub.f32 %v687, %v1424
    %v1515 = vsub.f32 %v689, %v1425
    %v1516 = vsub.f32 %v1011, %v1426
    %v1517 = vsub.f32 %v693, %v1424
    %v1518 = vsub.f32 %v695, %v1425
    %v1519 = vsub.f32 %v1016, %v1426
    %v1520 = vsub.f32 %v697, %v1424
    %v1521 = vsub.f32 %v699, %v1425
    %v1522 = vsub.f32 %v1019, %v1426
    %v1523 = vsub.f32 %v703, %v1424
    %v1524 = vsub.f32 %v705, %v1425
    %v1525 = vsub.f32 %v1024, %v1426
    %v1526 = vsub.f32 %v707, %v1424
    %v1527 = vsub.f32 %v709, %v1425
    %v1528 = vsub.f32 %v1027, %v1426
    %v1529 = vsub.f32 %v713, %v1424
    %v1530 = vsub.f32 %v715, %v1425
    %v1531 = vsub.f32 %v1032, %v1426
    %v1532 = vsub.f32 %v717, %v1424
    %v1533 = vsub.f32 %v719, %v1425
    %v1534 = vsub.f32 %v1035, %v1426
    %v1535 = vsub.f32 %v723, %v1424
    %v1536 = vsub.f32 %v725, %v1425
    %v1537 = vsub.f32 %v1040, %v1426
    %v1538 = vsub.f32 %v727, %v1424
    %v1539 = vsub.f32 %v729, %v1425
    %v1540 = vsub.f32 %v1043, %v1426
    %v1541 = vsub.f32 %v733, %v1424
    %v1542 = vsub.f32 %v735, %v1425
    %v1543 = vsub.f32 %v1048, %v1426
    %v1544 = vsub.f32 %v737, %v1424
    %v1545 = vsub.f32 %v739, %v1425
    %v1546 = vsub.f32 %v1051, %v1426
    %v1547 = vsub.f32 %v743, %v1424
    %v1548 = vsub.f32 %v745, %v1425
    %v1549 = vsub.f32 %v1056, %v1426
    %v1550 = vsub.f32 %v747, %v1424
    %v1551 = vsub.f32 %v749, %v1425
    %v1552 = vsub.f32 %v1059, %v1426
    %v1553 = vsub.f32 %v753, %v1424
    %v1554 = vsub.f32 %v755, %v1425
    %v1555 = vsub.f32 %v1064, %v1426
    %v1556 = vsub.f32 %v757, %v1424
    %v1557 = vsub.f32 %v759, %v1425
    %v1558 = vsub.f32 %v1067, %v1426
    %v1559 = vsub.f32 %v763, %v1424
    %v1560 = vsub.f32 %v765, %v1425
    %v1561 = vsub.f32 %v1072, %v1426
    %v1562 = vsub.f32 %v767, %v1424
    %v1563 = vsub.f32 %v769, %v1425
    %v1564 = vsub.f32 %v1075, %v1426
    %v1565 = vsub.f32 %v773, %v1424
    %v1566 = vsub.f32 %v775, %v1425
    %v1567 = vsub.f32 %v1080, %v1426
    %v1568 = vsub.f32 %v777, %v1424
    %v1569 = vsub.f32 %v779, %v1425
    %v1570 = vsub.f32 %v1083, %v1426
    %v1571 = vsub.f32 %v783, %v1424
    %v1572 = vsub.f32 %v785, %v1425
    %v1573 = vsub.f32 %v1088, %v1426
    %v1574 = vsub.f32 %v787, %v1424
    %v1575 = vsub.f32 %v789, %v1425
    %v1576 = vsub.f32 %v1091, %v1426
    %v1577 = vsub.f32 %v793, %v1424
    %v1578 = vsub.f32 %v795, %v1425
    %v1579 = vsub.f32 %v1096, %v1426
    %v1580 = vsub.f32 %v797, %v1424
    %v1581 = vsub.f32 %v799, %v1425
    %v1582 = vsub.f32 %v1099, %v1426
    %v1583 = vsub.f32 %v803, %v1424
    %v1584 = vsub.f32 %v805, %v1425
    %v1585 = vsub.f32 %v1104, %v1426
    %v1586 = vsub.f32 %v807, %v1424
    %v1587 = vsub.f32 %v809, %v1425
    %v1588 = vsub.f32 %v1107, %v1426
    %v1589 = vsub.f32 %v813, %v1424
    %v1590 = vsub.f32 %v815, %v1425
    %v1591 = vsub.f32 %v1112, %v1426
    %v1592 = vsub.f32 %v817, %v1424
    %v1593 = vsub.f32 %v819, %v1425
    %v1594 = vsub.f32 %v1115, %v1426
    %v1595 = vsub.f32 %v823, %v1424
    %v1596 = vsub.f32 %v825, %v1425
    %v1597 = vsub.f32 %v1120, %v1426
    %v1598 = vsub.f32 %v827, %v1424
    %v1599 = vsub.f32 %v829, %v1425
    %v1600 = vsub.f32 %v1123, %v1426
    %v1601 = vsub.f32 %v833, %v1424
    %v1602 = vsub.f32 %v835, %v1425
    %v1603 = vsub.f32 %v1128, %v1426
    %v1604 = vsub.f32 %v837, %v1424
    %v1605 = vsub.f32 %v839, %v1425
    %v1606 = vsub.f32 %v1131, %v1426
    %v1607 = vsub.f32 %v843, %v1424
    %v1608 = vsub.f32 %v845, %v1425
    %v1609 = vsub.f32 %v1136, %v1426
    %v1610 = vsub.f32 %v847, %v1424
    %v1611 = vsub.f32 %v849, %v1425
    %v1612 = vsub.f32 %v1139, %v1426
    %v1613 = vsub.f32 %v853, %v1424
    %v1614 = vsub.f32 %v855, %v1425
    %v1615 = vsub.f32 %v1144, %v1426
    %v1616 = vsub.f32 %v857, %v1424
    %v1617 = vsub.f32 %v859, %v1425
    %v1618 = vsub.f32 %v1147, %v1426
    %v1619 = vmul.f32 %v1427, %v1427
    %v1620 = vmul.f32 %v1428, %v1428
    %v1621 = vmul.f32 %v1429, %v1429
    %v1622 = vmul.f32 %v1430, %v1430
    %v1623 = vmul.f32 %v1431, %v1431
    %v1624 = vmul.f32 %v1432, %v1432
    %v1625 = vmul.f32 %v1433, %v1433
    %v1626 = vmul.f32 %v1434, %v1434
    %v1627 = vmul.f32 %v1435, %v1435
    %v1628 = vmul.f32 %v1436, %v1436
    %v1629 = vmul.f32 %v1437, %v1437
    %v1630 = vmul.f32 %v1438, %v1438
    %v1631 = vmul.f32 %v1439, %v1439
    %v1632 = vmul.f32 %v1440, %v1440
    %v1633 = vmul.f32 %v1441, %v1441
    %v1634 = vmul.f32 %v1442, %v1442
    %v1635 = vmul.f32 %v1443, %v1443
    %v1636 = vmul.f32 %v1444, %v1444
    %v1637 = vmul.f32 %v1445, %v1445
    %v1638 = vmul.f32 %v1446, %v1446
    %v1639 = vmul.f32 %v1447, %v1447
    %v1640 = vmul.f32 %v1448, %v1448
    %v1641 = vmul.f32 %v1449, %v1449
    %v1642 = vmul.f32 %v1450, %v1450
    %v1643 = vmul.f32 %v1451, %v1451
    %v1644 = vmul.f32 %v1452, %v1452
    %v1645 = vmul.f32 %v1453, %v1453
    %v1646 = vmul.f32 %v1454, %v1454
    %v1647 = vmul.f32 %v1455, %v1455
    %v1648 = vmul.f32 %v1456, %v1456
    %v1649 = vmul.f32 %v1457, %v1457
    %v1650 = vmul.f32 %v1458, %v1458
    %v1651 = vmul.f32 %v1459, %v1459
    %v1652 = vmul.f32 %v1460, %v1460
    %v1653 = vmul.f32 %v1461, %v1461
    %v1654 = vmul.f32 %v1462, %v1462
    %v1655 = vmul.f32 %v1463, %v1463
    %v1656 = vmul.f32 %v1464, %v1464
    %v1657 = vmul.f32 %v1465, %v1465
    %v1658 = vmul.f32 %v1466, %v1466
    %v1659 = vmul.f32 %v1467, %v1467
    %v1660 = vmul.f32 %v1468, %v1468
    %v1661 = vmul.f32 %v1469, %v1469
    %v1662 = vmul.f32 %v1470, %v1470
    %v1663 = vmul.f32 %v1471, %v1471
    %v1664 = vmul.f32 %v1472, %v1472
    %v1665 = vmul.f32 %v1473, %v1473
    %v1666 = vmul.f32 %v1474, %v1474
    %v1667 = vmul.f32 %v1475, %v1475
    %v1668 = vmul.f32 %v1476, %v1476
    %v1669 = vmul.f32 %v1477, %v1477
    %v1670 = vmul.f32 %v1478, %v1478
    %v1671 = vmul.f32 %v1479, %v1479
    %v1672 = vmul.f32 %v1480, %v1480
    %v1673 = vmul.f32 %v1481, %v1481
    %v1674 = vmul.f32 %v1482, %v1482
    %v1675 = vmul.f32 %v1483, %v1483
    %v1676 = vmul.f32 %v1484, %v1484
    %v1677 = vmul.f32 %v1485, %v1485
    %v1678 = vmul.f32 %v1486, %v1486
    %v1679 = vmul.f32 %v1487, %v1487
    %v1680 = vmul.f32 %v1488, %v1488
    %v1681 = vmul.f32 %v1489, %v1489
    %v1682 = vmul.f32 %v1490, %v1490
    %v1683 = vmul.f32 %v1491, %v1491
    %v1684 = vmul.f32 %v1492, %v1492
    %v1685 = vmul.f32 %v1493, %v1493
    %v1686 = vmul.f32 %v1494, %v1494
    %v1687 = vmul.f32 %v1495, %v1495
    %v1688 = vmul.f32 %v1496, %v1496
    %v1689 = vmul.f32 %v1497, %v1497
    %v1690 = vmul.f32 %v1498, %v1498
    %v1691 = vmul.f32 %v1499, %v1499
    %v1692 = vmul.f32 %v1500, %v1500
    %v1693 = vmul.f32 %v1501, %v1501
    %v1694 = vmul.f32 %v1502, %v1502
    %v1695 = vmul.f32 %v1503, %v1503
    %v1696 = vmul.f32 %v1504, %v1504
    %v1697 = vmul.f32 %v1505, %v1505
    %v1698 = vmul.f32 %v1506, %v1506
    %v1699 = vmul.f32 %v1507, %v1507
    %v1700 = vmul.f32 %v1508, %v1508
    %v1701 = vmul.f32 %v1509, %v1509
    %v1702 = vmul.f32 %v1510, %v1510
    %v1703 = vmul.f32 %v1511, %v1511
    %v1704 = vmul.f32 %v1512, %v1512
    %v1705 = vmul.f32 %v1513, %v1513
    %v1706 = vmul.f32 %v1514, %v1514
    %v1707 = vmul.f32 %v1515, %v1515
    %v1708 = vmul.f32 %v1516, %v1516
    %v1709 = vmul.f32 %v1517, %v1517
    %v1710 = vmul.f32 %v1518, %v1518
    %v1711 = vmul.f32 %v1519, %v1519
    %v1712 = vmul.f32 %v1520, %v1520
    %v1713 = vmul.f32 %v1521, %v1521
    %v1714 = vmul.f32 %v1522, %v1522
    %v1715 = vmul.f32 %v1523, %v1523
    %v1716 = vmul.f32 %v1524, %v1524
    %v1717 = vmul.f32 %v1525, %v1525
    %v1718 = vmul.f32 %v1526, %v1526
    %v1719 = vmul.f32 %v1527, %v1527
    %v1720 = vmul.f32 %v1528, %v1528
    %v1721 = vmul.f32 %v1529, %v1529
    %v1722 = vmul.f32 %v1530, %v1530
    %v1723 = vmul.f32 %v1531, %v1531
    %v1724 = vmul.f32 %v1532, %v1532
    %v1725 = vmul.f32 %v1533, %v1533
    %v1726 = vmul.f32 %v1534, %v1534
    %v1727 = vmul.f32 %v1535, %v1535
    %v1728 = vmul.f32 %v1536, %v1536
    %v1729 = vmul.f32 %v1537, %v1537
    %v1730 = vmul.f32 %v1538, %v1538
    %v1731 = vmul.f32 %v1539, %v1539
    %v1732 = vmul.f32 %v1540, %v1540
    %v1733 = vmul.f32 %v1541, %v1541
    %v1734 = vmul.f32 %v1542, %v1542
    %v1735 = vmul.f32 %v1543, %v1543
    %v1736 = vmul.f32 %v1544, %v1544
    %v1737 = vmul.f32 %v1545, %v1545
    %v1738 = vmul.f32 %v1546, %v1546
    %v1739 = vmul.f32 %v1547, %v1547
    %v1740 = vmul.f32 %v1548, %v1548
    %v1741 = vmul.f32 %v1549, %v1549
    %v1742 = vmul.f32 %v1550, %v1550
    %v1743 = vmul.f32 %v1551, %v1551
    %v1744 = vmul.f32 %v1552, %v1552
    %v1745 = vmul.f32 %v1553, %v1553
    %v1746 = vmul.f32 %v1554, %v1554
    %v1747 = vmul.f32 %v1555, %v1555
    %v1748 = vmul.f32 %v1556, %v1556
    %v1749 = vmul.f32 %v1557, %v1557
    %v1750 = vmul.f32 %v1558, %v1558
    %v1751 = vmul.f32 %v1559, %v1559
    %v1752 = vmul.f32 %v1560, %v1560
    %v1753 = vmul.f32 %v1561, %v1561
    %v1754 = vmul.f32 %v1562, %v1562
    %v1755 = vmul.f32 %v1563, %v1563
    %v1756 = vmul.f32 %v1564, %v1564
    %v1757 = vmul.f32 %v1565, %v1565
    %v1758 = vmul.f32 %v1566, %v1566
    %v1759 = vmul.f32 %v1567, %v1567
    %v1760 = vmul.f32 %v1568, %v1568
    %v1761 = vmul.f32 %v1569, %v1569
    %v1762 = vmul.f32 %v1570, %v1570
    %v1763 = vmul.f32 %v1571, %v1571
    %v1764 = vmul.f32 %v1572, %v1572
    %v1765 = vmul.f32 %v1573, %v1573
    %v1766 = vmul.f32 %v1574, %v1574
    %v1767 = vmul.f32 %v1575, %v1575
    %v1768 = vmul.f32 %v1576, %v1576
    %v1769 = vmul.f32 %v1577, %v1577
    %v1770 = vmul.f32 %v1578, %v1578
    %v1771 = vmul.f32 %v1579, %v1579
    %v1772 = vmul.f32 %v1580, %v1580
    %v1773 = vmul.f32 %v1581, %v1581
    %v1774 = vmul.f32 %v1582, %v1582
    %v1775 = vmul.f32 %v1583, %v1583
    %v1776 = vmul.f32 %v1584, %v1584
    %v1777 = vmul.f32 %v1585, %v1585
    %v1778 = vmul.f32 %v1586, %v1586
    %v1779 = vmul.f32 %v1587, %v1587
    %v1780 = vmul.f32 %v1588, %v1588
    %v1781 = vmul.f32 %v1589, %v1589
    %v1782 = vmul.f32 %v1590, %v1590
    %v1783 = vmul.f32 %v1591, %v1591
    %v1784 = vmul.f32 %v1592, %v1592
    %v1785 = vmul.f32 %v1593, %v1593
    %v1786 = vmul.f32 %v1594, %v1594
    %v1787 = vmul.f32 %v1595, %v1595
    %v1788 = vmul.f32 %v1596, %v1596
    %v1789 = vmul.f32 %v1597, %v1597
    %v1790 = vmul.f32 %v1598, %v1598
    %v1791 = vmul.f32 %v1599, %v1599
    %v1792 = vmul.f32 %v1600, %v1600
    %v1793 = vmul.f32 %v1601, %v1601
    %v1794 = vmul.f32 %v1602, %v1602
    %v1795 = vmul.f32 %v1603, %v1603
    %v1796 = vmul.f32 %v1604, %v1604
    %v1797 = vmul.f32 %v1605, %v1605
    %v1798 = vmul.f32 %v1606, %v1606
    %v1799 = vmul.f32 %v1607, %v1607
    %v1800 = vmul.f32 %v1608, %v1608
    %v1801 = vmul.f32 %v1609, %v1609
    %v1802 = vmul.f32 %v1610, %v1610
    %v1803 = vmul.f32 %v1611, %v1611
    %v1804 = vmul.f32 %v1612, %v1612
    %v1805 = vmul.f32 %v1613, %v1613
    %v1806 = vmul.f32 %v1614, %v1614
    %v1807 = vmul.f32 %v1615, %v1615
    %v1808 = vmul.f32 %v1616, %v1616
    %v1809 = vmul.f32 %v1617, %v1617
    %v1810 = vmul.f32 %v1618, %v1618
    %v1811 = vadd.f32 %v1619, %v1622
    %v1812 = vadd.f32 %v1811, %v1625
    %v1813 = vadd.f32 %v1812, %v1628
    %v1814 = vadd.f32 %v1813, %v1631
    %v1815 = vadd.f32 %v1814, %v1634
    %v1816 = vadd.f32 %v1815, %v1637
    %v1817 = vadd.f32 %v1816, %v1640
    %v1818 = vadd.f32 %v1817, %v1643
    %v1819 = vadd.f32 %v1818, %v1646
    %v1820 = vadd.f32 %v1819, %v1649
    %v1821 = vadd.f32 %v1820, %v1652
    %v1822 = vadd.f32 %v1821, %v1655
    %v1823 = vadd.f32 %v1822, %v1658
    %v1824 = vadd.f32 %v1823, %v1661
    %v1825 = vadd.f32 %v1824, %v1664
    %v1826 = vadd.f32 %v1825, %v1667
    %v1827 = vadd.f32 %v1826, %v1670
    %v1828 = vadd.f32 %v1827, %v1673
    %v1829 = vadd.f32 %v1828, %v1676
    %v1830 = vadd.f32 %v1829, %v1679
    %v1831 = vadd.f32 %v1830, %v1682
    %v1832 = vadd.f32 %v1831, %v1685
    %v1833 = vadd.f32 %v1832, %v1688
    %v1834 = vadd.f32 %v1833, %v1691
    %v1835 = vadd.f32 %v1834, %v1694
    %v1836 = vadd.f32 %v1835, %v1697
    %v1837 = vadd.f32 %v1836, %v1700
    %v1838 = vadd.f32 %v1837, %v1703
    %v1839 = vadd.f32 %v1838, %v1706
    %v1840 = vadd.f32 %v1839, %v1709
    %v1841 = vadd.f32 %v1840, %v1712
    %v1842 = vadd.f32 %v1841, %v1715
    %v1843 = vadd.f32 %v1842, %v1718
    %v1844 = vadd.f32 %v1843, %v1721
    %v1845 = vadd.f32 %v1844, %v1724
    %v1846 = vadd.f32 %v1845, %v1727
    %v1847 = vadd.f32 %v1846, %v1730
    %v1848 = vadd.f32 %v1847, %v1733
    %v1849 = vadd.f32 %v1848, %v1736
    %v1850 = vadd.f32 %v1849, %v1739
    %v1851 = vadd.f32 %v1850, %v1742
    %v1852 = vadd.f32 %v1851, %v1745
    %v1853 = vadd.f32 %v1852, %v1748
    %v1854 = vadd.f32 %v1853, %v1751
    %v1855 = vadd.f32 %v1854, %v1754
    %v1856 = vadd.f32 %v1855, %v1757
    %v1857 = vadd.f32 %v1856, %v1760
    %v1858 = vadd.f32 %v1857, %v1763
    %v1859 = vadd.f32 %v1858, %v1766
    %v1860 = vadd.f32 %v1859, %v1769
    %v1861 = vadd.f32 %v1860, %v1772
    %v1862 = vadd.f32 %v1861, %v1775
    %v1863 = vadd.f32 %v1862, %v1778
    %v1864 = vadd.f32 %v1863, %v1781
    %v1865 = vadd.f32 %v1864, %v1784
    %v1866 = vadd.f32 %v1865, %v1787
    %v1867 = vadd.f32 %v1866, %v1790
    %v1868 = vadd.f32 %v1867, %v1793
    %v1869 = vadd.f32 %v1868, %v1796
    %v1870 = vadd.f32 %v1869, %v1799
    %v1871 = vadd.f32 %v1870, %v1802
    %v1872 = vadd.f32 %v1871, %v1805
    %v1873 = vadd.f32 %v1872, %v1808
    %v1874 = vrot.slane %v1873, 4
    %v1875 = vadd.f32 %v1873, %v1874
    %v1876 = vrot.slane %v1875, 2
    %v1877 = vadd.f32 %v1875, %v1876
    %v1878 = vrot.slane %v1877, 1
    %v1879 = vadd.f32 %v1877, %v1878
    %v1880 = vadd.f32 %v1620, %v1623
    %v1881 = vadd.f32 %v1880, %v1626
    %v1882 = vadd.f32 %v1881, %v1629
    %v1883 = vadd.f32 %v1882, %v1632
    %v1884 = vadd.f32 %v1883, %v1635
    %v1885 = vadd.f32 %v1884, %v1638
    %v1886 = vadd.f32 %v1885, %v1641
    %v1887 = vadd.f32 %v1886, %v1644
    %v1888 = vadd.f32 %v1887, %v1647
    %v1889 = vadd.f32 %v1888, %v1650
    %v1890 = vadd.f32 %v1889, %v1653
    %v1891 = vadd.f32 %v1890, %v1656
    %v1892 = vadd.f32 %v1891, %v1659
    %v1893 = vadd.f32 %v1892, %v1662
    %v1894 = vadd.f32 %v1893, %v1665
    %v1895 = vadd.f32 %v1894, %v1668
    %v1896 = vadd.f32 %v1895, %v1671
    %v1897 = vadd.f32 %v1896, %v1674
    %v1898 = vadd.f32 %v1897, %v1677
    %v1899 = vadd.f32 %v1898, %v1680
    %v1900 = vadd.f32 %v1899, %v1683
    %v1901 = vadd.f32 %v1900, %v1686
    %v1902 = vadd.f32 %v1901, %v1689
    %v1903 = vadd.f32 %v1902, %v1692
    %v1904 = vadd.f32 %v1903, %v1695
    %v1905 = vadd.f32 %v1904, %v1698
    %v1906 = vadd.f32 %v1905, %v1701
    %v1907 = vadd.f32 %v1906, %v1704
    %v1908 = vadd.f32 %v1907, %v1707
    %v1909 = vadd.f32 %v1908, %v1710
    %v1910 = vadd.f32 %v1909, %v1713
    %v1911 = vadd.f32 %v1910, %v1716
    %v1912 = vadd.f32 %v1911, %v1719
    %v1913 = vadd.f32 %v1912, %v1722
    %v1914 = vadd.f32 %v1913, %v1725
    %v1915 = vadd.f32 %v1914, %v1728
    %v1916 = vadd.f32 %v1915, %v1731
    %v1917 = vadd.f32 %v1916, %v1734
    %v1918 = vadd.f32 %v1917, %v1737
    %v1919 = vadd.f32 %v1918, %v1740
    %v1920 = vadd.f32 %v1919, %v1743
    %v1921 = vadd.f32 %v1920, %v1746
    %v1922 = vadd.f32 %v1921, %v1749
    %v1923 = vadd.f32 %v1922, %v1752
    %v1924 = vadd.f32 %v1923, %v1755
    %v1925 = vadd.f32 %v1924, %v1758
    %v1926 = vadd.f32 %v1925, %v1761
    %v1927 = vadd.f32 %v1926, %v1764
    %v1928 = vadd.f32 %v1927, %v1767
    %v1929 = vadd.f32 %v1928, %v1770
    %v1930 = vadd.f32 %v1929, %v1773
    %v1931 = vadd.f32 %v1930, %v1776
    %v1932 = vadd.f32 %v1931, %v1779
    %v1933 = vadd.f32 %v1932, %v1782
    %v1934 = vadd.f32 %v1933, %v1785
    %v1935 = vadd.f32 %v1934, %v1788
    %v1936 = vadd.f32 %v1935, %v1791
    %v1937 = vadd.f32 %v1936, %v1794
    %v1938 = vadd.f32 %v1937, %v1797
    %v1939 = vadd.f32 %v1938, %v1800
    %v1940 = vadd.f32 %v1939, %v1803
    %v1941 = vadd.f32 %v1940, %v1806
    %v1942 = vadd.f32 %v1941, %v1809
    %v1943 = vrot.slane %v1942, 4
    %v1944 = vadd.f32 %v1942, %v1943
    %v1945 = vrot.slane %v1944, 2
    %v1946 = vadd.f32 %v1944, %v1945
    %v1947 = vrot.slane %v1946, 1
    %v1948 = vadd.f32 %v1946, %v1947
    %v1949 = vsel %vm1290, %v1621, 0.0
    %v1950 = vsel %vm1290, %v1624, 0.0
    %v1951 = vadd.f32 %v1949, %v1950
    %v1952 = vsel %vm1290, %v1627, 0.0
    %v1953 = vadd.f32 %v1951, %v1952
    %v1954 = vsel %vm1290, %v1630, 0.0
    %v1955 = vadd.f32 %v1953, %v1954
    %v1956 = vsel %vm1290, %v1633, 0.0
    %v1957 = vadd.f32 %v1955, %v1956
    %v1958 = vsel %vm1290, %v1636, 0.0
    %v1959 = vadd.f32 %v1957, %v1958
    %v1960 = vsel %vm1290, %v1639, 0.0
    %v1961 = vadd.f32 %v1959, %v1960
    %v1962 = vsel %vm1290, %v1642, 0.0
    %v1963 = vadd.f32 %v1961, %v1962
    %v1964 = vsel %vm1290, %v1645, 0.0
    %v1965 = vadd.f32 %v1963, %v1964
    %v1966 = vsel %vm1290, %v1648, 0.0
    %v1967 = vadd.f32 %v1965, %v1966
    %v1968 = vsel %vm1290, %v1651, 0.0
    %v1969 = vadd.f32 %v1967, %v1968
    %v1970 = vsel %vm1290, %v1654, 0.0
    %v1971 = vadd.f32 %v1969, %v1970
    %v1972 = vsel %vm1290, %v1657, 0.0
    %v1973 = vadd.f32 %v1971, %v1972
    %v1974 = vsel %vm1290, %v1660, 0.0
    %v1975 = vadd.f32 %v1973, %v1974
    %v1976 = vsel %vm1290, %v1663, 0.0
    %v1977 = vadd.f32 %v1975, %v1976
    %v1978 = vsel %vm1290, %v1666, 0.0
    %v1979 = vadd.f32 %v1977, %v1978
    %v1980 = vsel %vm1290, %v1669, 0.0
    %v1981 = vadd.f32 %v1979, %v1980
    %v1982 = vsel %vm1290, %v1672, 0.0
    %v1983 = vadd.f32 %v1981, %v1982
    %v1984 = vsel %vm1290, %v1675, 0.0
    %v1985 = vadd.f32 %v1983, %v1984
    %v1986 = vsel %vm1290, %v1678, 0.0
    %v1987 = vadd.f32 %v1985, %v1986
    %v1988 = vsel %vm1290, %v1681, 0.0
    %v1989 = vadd.f32 %v1987, %v1988
    %v1990 = vsel %vm1290, %v1684, 0.0
    %v1991 = vadd.f32 %v1989, %v1990
    %v1992 = vsel %vm1290, %v1687, 0.0
    %v1993 = vadd.f32 %v1991, %v1992
    %v1994 = vsel %vm1290, %v1690, 0.0
    %v1995 = vadd.f32 %v1993, %v1994
    %v1996 = vsel %vm1290, %v1693, 0.0
    %v1997 = vadd.f32 %v1995, %v1996
    %v1998 = vsel %vm1290, %v1696, 0.0
    %v1999 = vadd.f32 %v1997, %v1998
    %v2000 = vsel %vm1290, %v1699, 0.0
    %v2001 = vadd.f32 %v1999, %v2000
    %v2002 = vsel %vm1290, %v1702, 0.0
    %v2003 = vadd.f32 %v2001, %v2002
    %v2004 = vsel %vm1290, %v1705, 0.0
    %v2005 = vadd.f32 %v2003, %v2004
    %v2006 = vsel %vm1290, %v1708, 0.0
    %v2007 = vadd.f32 %v2005, %v2006
    %v2008 = vsel %vm1290, %v1711, 0.0
    %v2009 = vadd.f32 %v2007, %v2008
    %v2010 = vsel %vm1290, %v1714, 0.0
    %v2011 = vadd.f32 %v2009, %v2010
    %v2012 = vsel %vm1290, %v1717, 0.0
    %v2013 = vadd.f32 %v2011, %v2012
    %v2014 = vsel %vm1290, %v1720, 0.0
    %v2015 = vadd.f32 %v2013, %v2014
    %v2016 = vsel %vm1290, %v1723, 0.0
    %v2017 = vadd.f32 %v2015, %v2016
    %v2018 = vsel %vm1290, %v1726, 0.0
    %v2019 = vadd.f32 %v2017, %v2018
    %v2020 = vsel %vm1290, %v1729, 0.0
    %v2021 = vadd.f32 %v2019, %v2020
    %v2022 = vsel %vm1290, %v1732, 0.0
    %v2023 = vadd.f32 %v2021, %v2022
    %v2024 = vsel %vm1290, %v1735, 0.0
    %v2025 = vadd.f32 %v2023, %v2024
    %v2026 = vsel %vm1290, %v1738, 0.0
    %v2027 = vadd.f32 %v2025, %v2026
    %v2028 = vsel %vm1290, %v1741, 0.0
    %v2029 = vadd.f32 %v2027, %v2028
    %v2030 = vsel %vm1290, %v1744, 0.0
    %v2031 = vadd.f32 %v2029, %v2030
    %v2032 = vsel %vm1290, %v1747, 0.0
    %v2033 = vadd.f32 %v2031, %v2032
    %v2034 = vsel %vm1290, %v1750, 0.0
    %v2035 = vadd.f32 %v2033, %v2034
    %v2036 = vsel %vm1290, %v1753, 0.0
    %v2037 = vadd.f32 %v2035, %v2036
    %v2038 = vsel %vm1290, %v1756, 0.0
    %v2039 = vadd.f32 %v2037, %v2038
    %v2040 = vsel %vm1290, %v1759, 0.0
    %v2041 = vadd.f32 %v2039, %v2040
    %v2042 = vsel %vm1290, %v1762, 0.0
    %v2043 = vadd.f32 %v2041, %v2042
    %v2044 = vsel %vm1290, %v1765, 0.0
    %v2045 = vadd.f32 %v2043, %v2044
    %v2046 = vsel %vm1290, %v1768, 0.0
    %v2047 = vadd.f32 %v2045, %v2046
    %v2048 = vsel %vm1290, %v1771, 0.0
    %v2049 = vadd.f32 %v2047, %v2048
    %v2050 = vsel %vm1290, %v1774, 0.0
    %v2051 = vadd.f32 %v2049, %v2050
    %v2052 = vsel %vm1290, %v1777, 0.0
    %v2053 = vadd.f32 %v2051, %v2052
    %v2054 = vsel %vm1290, %v1780, 0.0
    %v2055 = vadd.f32 %v2053, %v2054
    %v2056 = vsel %vm1290, %v1783, 0.0
    %v2057 = vadd.f32 %v2055, %v2056
    %v2058 = vsel %vm1290, %v1786, 0.0
    %v2059 = vadd.f32 %v2057, %v2058
    %v2060 = vsel %vm1290, %v1789, 0.0
    %v2061 = vadd.f32 %v2059, %v2060
    %v2062 = vsel %vm1290, %v1792, 0.0
    %v2063 = vadd.f32 %v2061, %v2062
    %v2064 = vsel %vm1290, %v1795, 0.0
    %v2065 = vadd.f32 %v2063, %v2064
    %v2066 = vsel %vm1290, %v1798, 0.0
    %v2067 = vadd.f32 %v2065, %v2066
    %v2068 = vsel %vm1290, %v1801, 0.0
    %v2069 = vadd.f32 %v2067, %v2068
    %v2070 = vsel %vm1290, %v1804, 0.0
    %v2071 = vadd.f32 %v2069, %v2070
    %v2072 = vsel %vm1290, %v1807, 0.0
    %v2073 = vadd.f32 %v2071, %v2072
    %v2074 = vsel %vm1290, %v1810, 0.0
    %v2075 = vadd.f32 %v2073, %v2074
    %v2076 = vrot.slane %v2075, 4
    %v2077 = vadd.f32 %v2075, %v2076
    %v2078 = vrot.slane %v2077, 2
    %v2079 = vadd.f32 %v2077, %v2078
    %v2080 = vrot.slane %v2079, 1
    %v2081 = vadd.f32 %v2079, %v2080
    %v2082 = vmul.f32 %v1879, 0.001953125
    %v2083 = vmul.f32 %v1948, 0.001953125
    %v2084 = vmul.f32 %v2081, 0.001953125
    %v2085 = vadd.f32 %v2082, 0.001
    %v2086 = vadd.f32 %v2083, 0.001
    %v2087 = vadd.f32 %v2084, 0.001
    %v2088 = vrsqrt.pop %v2085
    %v2089 = vrsqrt.pop %v2086
    %v2090 = vrsqrt.pop %v2087
    %v2091 = vmul.f32 %v1427, %v2088
    %v2092 = vmul.f32 %v1428, %v2089
    %v2093 = vmul.f32 %v1429, %v2090
    %v2094 = vmul.f32 %v1430, %v2088
    %v2095 = vmul.f32 %v1431, %v2089
    %v2096 = vmul.f32 %v1432, %v2090
    %v2097 = vmul.f32 %v1433, %v2088
    %v2098 = vmul.f32 %v1434, %v2089
    %v2099 = vmul.f32 %v1435, %v2090
    %v2100 = vmul.f32 %v1436, %v2088
    %v2101 = vmul.f32 %v1437, %v2089
    %v2102 = vmul.f32 %v1438, %v2090
    %v2103 = vmul.f32 %v1439, %v2088
    %v2104 = vmul.f32 %v1440, %v2089
    %v2105 = vmul.f32 %v1441, %v2090
    %v2106 = vmul.f32 %v1442, %v2088
    %v2107 = vmul.f32 %v1443, %v2089
    %v2108 = vmul.f32 %v1444, %v2090
    %v2109 = vmul.f32 %v1445, %v2088
    %v2110 = vmul.f32 %v1446, %v2089
    %v2111 = vmul.f32 %v1447, %v2090
    %v2112 = vmul.f32 %v1448, %v2088
    %v2113 = vmul.f32 %v1449, %v2089
    %v2114 = vmul.f32 %v1450, %v2090
    %v2115 = vmul.f32 %v1451, %v2088
    %v2116 = vmul.f32 %v1452, %v2089
    %v2117 = vmul.f32 %v1453, %v2090
    %v2118 = vmul.f32 %v1454, %v2088
    %v2119 = vmul.f32 %v1455, %v2089
    %v2120 = vmul.f32 %v1456, %v2090
    %v2121 = vmul.f32 %v1457, %v2088
    %v2122 = vmul.f32 %v1458, %v2089
    %v2123 = vmul.f32 %v1459, %v2090
    %v2124 = vmul.f32 %v1460, %v2088
    %v2125 = vmul.f32 %v1461, %v2089
    %v2126 = vmul.f32 %v1462, %v2090
    %v2127 = vmul.f32 %v1463, %v2088
    %v2128 = vmul.f32 %v1464, %v2089
    %v2129 = vmul.f32 %v1465, %v2090
    %v2130 = vmul.f32 %v1466, %v2088
    %v2131 = vmul.f32 %v1467, %v2089
    %v2132 = vmul.f32 %v1468, %v2090
    %v2133 = vmul.f32 %v1469, %v2088
    %v2134 = vmul.f32 %v1470, %v2089
    %v2135 = vmul.f32 %v1471, %v2090
    %v2136 = vmul.f32 %v1472, %v2088
    %v2137 = vmul.f32 %v1473, %v2089
    %v2138 = vmul.f32 %v1474, %v2090
    %v2139 = vmul.f32 %v1475, %v2088
    %v2140 = vmul.f32 %v1476, %v2089
    %v2141 = vmul.f32 %v1477, %v2090
    %v2142 = vmul.f32 %v1478, %v2088
    %v2143 = vmul.f32 %v1479, %v2089
    %v2144 = vmul.f32 %v1480, %v2090
    %v2145 = vmul.f32 %v1481, %v2088
    %v2146 = vmul.f32 %v1482, %v2089
    %v2147 = vmul.f32 %v1483, %v2090
    %v2148 = vmul.f32 %v1484, %v2088
    %v2149 = vmul.f32 %v1485, %v2089
    %v2150 = vmul.f32 %v1486, %v2090
    %v2151 = vmul.f32 %v1487, %v2088
    %v2152 = vmul.f32 %v1488, %v2089
    %v2153 = vmul.f32 %v1489, %v2090
    %v2154 = vmul.f32 %v1490, %v2088
    %v2155 = vmul.f32 %v1491, %v2089
    %v2156 = vmul.f32 %v1492, %v2090
    %v2157 = vmul.f32 %v1493, %v2088
    %v2158 = vmul.f32 %v1494, %v2089
    %v2159 = vmul.f32 %v1495, %v2090
    %v2160 = vmul.f32 %v1496, %v2088
    %v2161 = vmul.f32 %v1497, %v2089
    %v2162 = vmul.f32 %v1498, %v2090
    %v2163 = vmul.f32 %v1499, %v2088
    %v2164 = vmul.f32 %v1500, %v2089
    %v2165 = vmul.f32 %v1501, %v2090
    %v2166 = vmul.f32 %v1502, %v2088
    %v2167 = vmul.f32 %v1503, %v2089
    %v2168 = vmul.f32 %v1504, %v2090
    %v2169 = vmul.f32 %v1505, %v2088
    %v2170 = vmul.f32 %v1506, %v2089
    %v2171 = vmul.f32 %v1507, %v2090
    %v2172 = vmul.f32 %v1508, %v2088
    %v2173 = vmul.f32 %v1509, %v2089
    %v2174 = vmul.f32 %v1510, %v2090
    %v2175 = vmul.f32 %v1511, %v2088
    %v2176 = vmul.f32 %v1512, %v2089
    %v2177 = vmul.f32 %v1513, %v2090
    %v2178 = vmul.f32 %v1514, %v2088
    %v2179 = vmul.f32 %v1515, %v2089
    %v2180 = vmul.f32 %v1516, %v2090
    %v2181 = vmul.f32 %v1517, %v2088
    %v2182 = vmul.f32 %v1518, %v2089
    %v2183 = vmul.f32 %v1519, %v2090
    %v2184 = vmul.f32 %v1520, %v2088
    %v2185 = vmul.f32 %v1521, %v2089
    %v2186 = vmul.f32 %v1522, %v2090
    %v2187 = vmul.f32 %v1523, %v2088
    %v2188 = vmul.f32 %v1524, %v2089
    %v2189 = vmul.f32 %v1525, %v2090
    %v2190 = vmul.f32 %v1526, %v2088
    %v2191 = vmul.f32 %v1527, %v2089
    %v2192 = vmul.f32 %v1528, %v2090
    %v2193 = vmul.f32 %v1529, %v2088
    %v2194 = vmul.f32 %v1530, %v2089
    %v2195 = vmul.f32 %v1531, %v2090
    %v2196 = vmul.f32 %v1532, %v2088
    %v2197 = vmul.f32 %v1533, %v2089
    %v2198 = vmul.f32 %v1534, %v2090
    %v2199 = vmul.f32 %v1535, %v2088
    %v2200 = vmul.f32 %v1536, %v2089
    %v2201 = vmul.f32 %v1537, %v2090
    %v2202 = vmul.f32 %v1538, %v2088
    %v2203 = vmul.f32 %v1539, %v2089
    %v2204 = vmul.f32 %v1540, %v2090
    %v2205 = vmul.f32 %v1541, %v2088
    %v2206 = vmul.f32 %v1542, %v2089
    %v2207 = vmul.f32 %v1543, %v2090
    %v2208 = vmul.f32 %v1544, %v2088
    %v2209 = vmul.f32 %v1545, %v2089
    %v2210 = vmul.f32 %v1546, %v2090
    %v2211 = vmul.f32 %v1547, %v2088
    %v2212 = vmul.f32 %v1548, %v2089
    %v2213 = vmul.f32 %v1549, %v2090
    %v2214 = vmul.f32 %v1550, %v2088
    %v2215 = vmul.f32 %v1551, %v2089
    %v2216 = vmul.f32 %v1552, %v2090
    %v2217 = vmul.f32 %v1553, %v2088
    %v2218 = vmul.f32 %v1554, %v2089
    %v2219 = vmul.f32 %v1555, %v2090
    %v2220 = vmul.f32 %v1556, %v2088
    %v2221 = vmul.f32 %v1557, %v2089
    %v2222 = vmul.f32 %v1558, %v2090
    %v2223 = vmul.f32 %v1559, %v2088
    %v2224 = vmul.f32 %v1560, %v2089
    %v2225 = vmul.f32 %v1561, %v2090
    %v2226 = vmul.f32 %v1562, %v2088
    %v2227 = vmul.f32 %v1563, %v2089
    %v2228 = vmul.f32 %v1564, %v2090
    %v2229 = vmul.f32 %v1565, %v2088
    %v2230 = vmul.f32 %v1566, %v2089
    %v2231 = vmul.f32 %v1567, %v2090
    %v2232 = vmul.f32 %v1568, %v2088
    %v2233 = vmul.f32 %v1569, %v2089
    %v2234 = vmul.f32 %v1570, %v2090
    %v2235 = vmul.f32 %v1571, %v2088
    %v2236 = vmul.f32 %v1572, %v2089
    %v2237 = vmul.f32 %v1573, %v2090
    %v2238 = vmul.f32 %v1574, %v2088
    %v2239 = vmul.f32 %v1575, %v2089
    %v2240 = vmul.f32 %v1576, %v2090
    %v2241 = vmul.f32 %v1577, %v2088
    %v2242 = vmul.f32 %v1578, %v2089
    %v2243 = vmul.f32 %v1579, %v2090
    %v2244 = vmul.f32 %v1580, %v2088
    %v2245 = vmul.f32 %v1581, %v2089
    %v2246 = vmul.f32 %v1582, %v2090
    %v2247 = vmul.f32 %v1583, %v2088
    %v2248 = vmul.f32 %v1584, %v2089
    %v2249 = vmul.f32 %v1585, %v2090
    %v2250 = vmul.f32 %v1586, %v2088
    %v2251 = vmul.f32 %v1587, %v2089
    %v2252 = vmul.f32 %v1588, %v2090
    %v2253 = vmul.f32 %v1589, %v2088
    %v2254 = vmul.f32 %v1590, %v2089
    %v2255 = vmul.f32 %v1591, %v2090
    %v2256 = vmul.f32 %v1592, %v2088
    %v2257 = vmul.f32 %v1593, %v2089
    %v2258 = vmul.f32 %v1594, %v2090
    %v2259 = vmul.f32 %v1595, %v2088
    %v2260 = vmul.f32 %v1596, %v2089
    %v2261 = vmul.f32 %v1597, %v2090
    %v2262 = vmul.f32 %v1598, %v2088
    %v2263 = vmul.f32 %v1599, %v2089
    %v2264 = vmul.f32 %v1600, %v2090
    %v2265 = vmul.f32 %v1601, %v2088
    %v2266 = vmul.f32 %v1602, %v2089
    %v2267 = vmul.f32 %v1603, %v2090
    %v2268 = vmul.f32 %v1604, %v2088
    %v2269 = vmul.f32 %v1605, %v2089
    %v2270 = vmul.f32 %v1606, %v2090
    %v2271 = vmul.f32 %v1607, %v2088
    %v2272 = vmul.f32 %v1608, %v2089
    %v2273 = vmul.f32 %v1609, %v2090
    %v2274 = vmul.f32 %v1610, %v2088
    %v2275 = vmul.f32 %v1611, %v2089
    %v2276 = vmul.f32 %v1612, %v2090
    %v2277 = vmul.f32 %v1613, %v2088
    %v2278 = vmul.f32 %v1614, %v2089
    %v2279 = vmul.f32 %v1615, %v2090
    %v2280 = vmul.f32 %v1616, %v2088
    %v2281 = vmul.f32 %v1617, %v2089
    %v2282 = vmul.f32 %v1618, %v2090
    %v2284 = vlaneseq
    %v2285 = vshrl.u32 %v2284, 7
    %v2286 = vsub.s32 0, %v2285
    %v2287 = vrot.slane %v1150, %v2286
    %v2288 = vlaneseq
    %v2289 = vshrl.u32 %v2288, 7
    %v2290 = vsub.s32 1, %v2289
    %v2291 = vrot.slane %v1150, %v2290
    %v2292 = vlaneseq
    %v2293 = vshrl.u32 %v2292, 7
    %v2294 = vsub.s32 2, %v2293
    %v2295 = vrot.slane %v1150, %v2294
    %v2299 = vmul.f32 %v2091, %v2287
    %v2300 = vmul.f32 %v2092, %v2291
    %v2301 = vmul.f32 %v2093, %v2295
    %v2302 = vmul.f32 %v2094, %v2287
    %v2303 = vmul.f32 %v2095, %v2291
    %v2304 = vmul.f32 %v2096, %v2295
    %v2305 = vmul.f32 %v2097, %v2287
    %v2306 = vmul.f32 %v2098, %v2291
    %v2307 = vmul.f32 %v2099, %v2295
    %v2308 = vmul.f32 %v2100, %v2287
    %v2309 = vmul.f32 %v2101, %v2291
    %v2310 = vmul.f32 %v2102, %v2295
    %v2311 = vmul.f32 %v2103, %v2287
    %v2312 = vmul.f32 %v2104, %v2291
    %v2313 = vmul.f32 %v2105, %v2295
    %v2314 = vmul.f32 %v2106, %v2287
    %v2315 = vmul.f32 %v2107, %v2291
    %v2316 = vmul.f32 %v2108, %v2295
    %v2317 = vmul.f32 %v2109, %v2287
    %v2318 = vmul.f32 %v2110, %v2291
    %v2319 = vmul.f32 %v2111, %v2295
    %v2320 = vmul.f32 %v2112, %v2287
    %v2321 = vmul.f32 %v2113, %v2291
    %v2322 = vmul.f32 %v2114, %v2295
    %v2323 = vmul.f32 %v2115, %v2287
    %v2324 = vmul.f32 %v2116, %v2291
    %v2325 = vmul.f32 %v2117, %v2295
    %v2326 = vmul.f32 %v2118, %v2287
    %v2327 = vmul.f32 %v2119, %v2291
    %v2328 = vmul.f32 %v2120, %v2295
    %v2329 = vmul.f32 %v2121, %v2287
    %v2330 = vmul.f32 %v2122, %v2291
    %v2331 = vmul.f32 %v2123, %v2295
    %v2332 = vmul.f32 %v2124, %v2287
    %v2333 = vmul.f32 %v2125, %v2291
    %v2334 = vmul.f32 %v2126, %v2295
    %v2335 = vmul.f32 %v2127, %v2287
    %v2336 = vmul.f32 %v2128, %v2291
    %v2337 = vmul.f32 %v2129, %v2295
    %v2338 = vmul.f32 %v2130, %v2287
    %v2339 = vmul.f32 %v2131, %v2291
    %v2340 = vmul.f32 %v2132, %v2295
    %v2341 = vmul.f32 %v2133, %v2287
    %v2342 = vmul.f32 %v2134, %v2291
    %v2343 = vmul.f32 %v2135, %v2295
    %v2344 = vmul.f32 %v2136, %v2287
    %v2345 = vmul.f32 %v2137, %v2291
    %v2346 = vmul.f32 %v2138, %v2295
    %v2347 = vmul.f32 %v2139, %v2287
    %v2348 = vmul.f32 %v2140, %v2291
    %v2349 = vmul.f32 %v2141, %v2295
    %v2350 = vmul.f32 %v2142, %v2287
    %v2351 = vmul.f32 %v2143, %v2291
    %v2352 = vmul.f32 %v2144, %v2295
    %v2353 = vmul.f32 %v2145, %v2287
    %v2354 = vmul.f32 %v2146, %v2291
    %v2355 = vmul.f32 %v2147, %v2295
    %v2356 = vmul.f32 %v2148, %v2287
    %v2357 = vmul.f32 %v2149, %v2291
    %v2358 = vmul.f32 %v2150, %v2295
    %v2359 = vmul.f32 %v2151, %v2287
    %v2360 = vmul.f32 %v2152, %v2291
    %v2361 = vmul.f32 %v2153, %v2295
    %v2362 = vmul.f32 %v2154, %v2287
    %v2363 = vmul.f32 %v2155, %v2291
    %v2364 = vmul.f32 %v2156, %v2295
    %v2365 = vmul.f32 %v2157, %v2287
    %v2366 = vmul.f32 %v2158, %v2291
    %v2367 = vmul.f32 %v2159, %v2295
    %v2368 = vmul.f32 %v2160, %v2287
    %v2369 = vmul.f32 %v2161, %v2291
    %v2370 = vmul.f32 %v2162, %v2295
    %v2371 = vmul.f32 %v2163, %v2287
    %v2372 = vmul.f32 %v2164, %v2291
    %v2373 = vmul.f32 %v2165, %v2295
    %v2374 = vmul.f32 %v2166, %v2287
    %v2375 = vmul.f32 %v2167, %v2291
    %v2376 = vmul.f32 %v2168, %v2295
    %v2377 = vmul.f32 %v2169, %v2287
    %v2378 = vmul.f32 %v2170, %v2291
    %v2379 = vmul.f32 %v2171, %v2295
    %v2380 = vmul.f32 %v2172, %v2287
    %v2381 = vmul.f32 %v2173, %v2291
    %v2382 = vmul.f32 %v2174, %v2295
    %v2383 = vmul.f32 %v2175, %v2287
    %v2384 = vmul.f32 %v2176, %v2291
    %v2385 = vmul.f32 %v2177, %v2295
    %v2386 = vmul.f32 %v2178, %v2287
    %v2387 = vmul.f32 %v2179, %v2291
    %v2388 = vmul.f32 %v2180, %v2295
    %v2389 = vmul.f32 %v2181, %v2287
    %v2390 = vmul.f32 %v2182, %v2291
    %v2391 = vmul.f32 %v2183, %v2295
    %v2392 = vmul.f32 %v2184, %v2287
    %v2393 = vmul.f32 %v2185, %v2291
    %v2394 = vmul.f32 %v2186, %v2295
    %v2395 = vmul.f32 %v2187, %v2287
    %v2396 = vmul.f32 %v2188, %v2291
    %v2397 = vmul.f32 %v2189, %v2295
    %v2398 = vmul.f32 %v2190, %v2287
    %v2399 = vmul.f32 %v2191, %v2291
    %v2400 = vmul.f32 %v2192, %v2295
    %v2401 = vmul.f32 %v2193, %v2287
    %v2402 = vmul.f32 %v2194, %v2291
    %v2403 = vmul.f32 %v2195, %v2295
    %v2404 = vmul.f32 %v2196, %v2287
    %v2405 = vmul.f32 %v2197, %v2291
    %v2406 = vmul.f32 %v2198, %v2295
    %v2407 = vmul.f32 %v2199, %v2287
    %v2408 = vmul.f32 %v2200, %v2291
    %v2409 = vmul.f32 %v2201, %v2295
    %v2410 = vmul.f32 %v2202, %v2287
    %v2411 = vmul.f32 %v2203, %v2291
    %v2412 = vmul.f32 %v2204, %v2295
    %v2413 = vmul.f32 %v2205, %v2287
    %v2414 = vmul.f32 %v2206, %v2291
    %v2415 = vmul.f32 %v2207, %v2295
    %v2416 = vmul.f32 %v2208, %v2287
    %v2417 = vmul.f32 %v2209, %v2291
    %v2418 = vmul.f32 %v2210, %v2295
    %v2419 = vmul.f32 %v2211, %v2287
    %v2420 = vmul.f32 %v2212, %v2291
    %v2421 = vmul.f32 %v2213, %v2295
    %v2422 = vmul.f32 %v2214, %v2287
    %v2423 = vmul.f32 %v2215, %v2291
    %v2424 = vmul.f32 %v2216, %v2295
    %v2425 = vmul.f32 %v2217, %v2287
    %v2426 = vmul.f32 %v2218, %v2291
    %v2427 = vmul.f32 %v2219, %v2295
    %v2428 = vmul.f32 %v2220, %v2287
    %v2429 = vmul.f32 %v2221, %v2291
    %v2430 = vmul.f32 %v2222, %v2295
    %v2431 = vmul.f32 %v2223, %v2287
    %v2432 = vmul.f32 %v2224, %v2291
    %v2433 = vmul.f32 %v2225, %v2295
    %v2434 = vmul.f32 %v2226, %v2287
    %v2435 = vmul.f32 %v2227, %v2291
    %v2436 = vmul.f32 %v2228, %v2295
    %v2437 = vmul.f32 %v2229, %v2287
    %v2438 = vmul.f32 %v2230, %v2291
    %v2439 = vmul.f32 %v2231, %v2295
    %v2440 = vmul.f32 %v2232, %v2287
    %v2441 = vmul.f32 %v2233, %v2291
    %v2442 = vmul.f32 %v2234, %v2295
    %v2443 = vmul.f32 %v2235, %v2287
    %v2444 = vmul.f32 %v2236, %v2291
    %v2445 = vmul.f32 %v2237, %v2295
    %v2446 = vmul.f32 %v2238, %v2287
    %v2447 = vmul.f32 %v2239, %v2291
    %v2448 = vmul.f32 %v2240, %v2295
    %v2449 = vmul.f32 %v2241, %v2287
    %v2450 = vmul.f32 %v2242, %v2291
    %v2451 = vmul.f32 %v2243, %v2295
    %v2452 = vmul.f32 %v2244, %v2287
    %v2453 = vmul.f32 %v2245, %v2291
    %v2454 = vmul.f32 %v2246, %v2295
    %v2455 = vmul.f32 %v2247, %v2287
    %v2456 = vmul.f32 %v2248, %v2291
    %v2457 = vmul.f32 %v2249, %v2295
    %v2458 = vmul.f32 %v2250, %v2287
    %v2459 = vmul.f32 %v2251, %v2291
    %v2460 = vmul.f32 %v2252, %v2295
    %v2461 = vmul.f32 %v2253, %v2287
    %v2462 = vmul.f32 %v2254, %v2291
    %v2463 = vmul.f32 %v2255, %v2295
    %v2464 = vmul.f32 %v2256, %v2287
    %v2465 = vmul.f32 %v2257, %v2291
    %v2466 = vmul.f32 %v2258, %v2295
    %v2467 = vmul.f32 %v2259, %v2287
    %v2468 = vmul.f32 %v2260, %v2291
    %v2469 = vmul.f32 %v2261, %v2295
    %v2470 = vmul.f32 %v2262, %v2287
    %v2471 = vmul.f32 %v2263, %v2291
    %v2472 = vmul.f32 %v2264, %v2295
    %v2473 = vmul.f32 %v2265, %v2287
    %v2474 = vmul.f32 %v2266, %v2291
    %v2475 = vmul.f32 %v2267, %v2295
    %v2476 = vmul.f32 %v2268, %v2287
    %v2477 = vmul.f32 %v2269, %v2291
    %v2478 = vmul.f32 %v2270, %v2295
    %v2479 = vmul.f32 %v2271, %v2287
    %v2480 = vmul.f32 %v2272, %v2291
    %v2481 = vmul.f32 %v2273, %v2295
    %v2482 = vmul.f32 %v2274, %v2287
    %v2483 = vmul.f32 %v2275, %v2291
    %v2484 = vmul.f32 %v2276, %v2295
    %v2485 = vmul.f32 %v2277, %v2287
    %v2486 = vmul.f32 %v2278, %v2291
    %v2487 = vmul.f32 %v2279, %v2295
    %v2488 = vmul.f32 %v2280, %v2287
    %v2489 = vmul.f32 %v2281, %v2291
    %v2490 = vmul.f32 %v2282, %v2295
    %v2492 = vlaneseq
    %v2493 = vshrl.u32 %v2492, 7
    %v2494 = vsub.s32 0, %v2493
    %v2495 = vrot.slane %v1151, %v2494
    %v2496 = vlaneseq
    %v2497 = vshrl.u32 %v2496, 7
    %v2498 = vsub.s32 1, %v2497
    %v2499 = vrot.slane %v1151, %v2498
    %v2500 = vlaneseq
    %v2501 = vshrl.u32 %v2500, 7
    %v2502 = vsub.s32 2, %v2501
    %v2503 = vrot.slane %v1151, %v2502
    %v2507 = vadd.f32 %v2299, %v2495
    %v2508 = vadd.f32 %v2300, %v2499
    %v2509 = vadd.f32 %v2301, %v2503
    %v2510 = vadd.f32 %v2302, %v2495
    %v2511 = vadd.f32 %v2303, %v2499
    %v2512 = vadd.f32 %v2304, %v2503
    %v2513 = vadd.f32 %v2305, %v2495
    %v2514 = vadd.f32 %v2306, %v2499
    %v2515 = vadd.f32 %v2307, %v2503
    %v2516 = vadd.f32 %v2308, %v2495
    %v2517 = vadd.f32 %v2309, %v2499
    %v2518 = vadd.f32 %v2310, %v2503
    %v2519 = vadd.f32 %v2311, %v2495
    %v2520 = vadd.f32 %v2312, %v2499
    %v2521 = vadd.f32 %v2313, %v2503
    %v2522 = vadd.f32 %v2314, %v2495
    %v2523 = vadd.f32 %v2315, %v2499
    %v2524 = vadd.f32 %v2316, %v2503
    %v2525 = vadd.f32 %v2317, %v2495
    %v2526 = vadd.f32 %v2318, %v2499
    %v2527 = vadd.f32 %v2319, %v2503
    %v2528 = vadd.f32 %v2320, %v2495
    %v2529 = vadd.f32 %v2321, %v2499
    %v2530 = vadd.f32 %v2322, %v2503
    %v2531 = vadd.f32 %v2323, %v2495
    %v2532 = vadd.f32 %v2324, %v2499
    %v2533 = vadd.f32 %v2325, %v2503
    %v2534 = vadd.f32 %v2326, %v2495
    %v2535 = vadd.f32 %v2327, %v2499
    %v2536 = vadd.f32 %v2328, %v2503
    %v2537 = vadd.f32 %v2329, %v2495
    %v2538 = vadd.f32 %v2330, %v2499
    %v2539 = vadd.f32 %v2331, %v2503
    %v2540 = vadd.f32 %v2332, %v2495
    %v2541 = vadd.f32 %v2333, %v2499
    %v2542 = vadd.f32 %v2334, %v2503
    %v2543 = vadd.f32 %v2335, %v2495
    %v2544 = vadd.f32 %v2336, %v2499
    %v2545 = vadd.f32 %v2337, %v2503
    %v2546 = vadd.f32 %v2338, %v2495
    %v2547 = vadd.f32 %v2339, %v2499
    %v2548 = vadd.f32 %v2340, %v2503
    %v2549 = vadd.f32 %v2341, %v2495
    %v2550 = vadd.f32 %v2342, %v2499
    %v2551 = vadd.f32 %v2343, %v2503
    %v2552 = vadd.f32 %v2344, %v2495
    %v2553 = vadd.f32 %v2345, %v2499
    %v2554 = vadd.f32 %v2346, %v2503
    %v2555 = vadd.f32 %v2347, %v2495
    %v2556 = vadd.f32 %v2348, %v2499
    %v2557 = vadd.f32 %v2349, %v2503
    %v2558 = vadd.f32 %v2350, %v2495
    %v2559 = vadd.f32 %v2351, %v2499
    %v2560 = vadd.f32 %v2352, %v2503
    %v2561 = vadd.f32 %v2353, %v2495
    %v2562 = vadd.f32 %v2354, %v2499
    %v2563 = vadd.f32 %v2355, %v2503
    %v2564 = vadd.f32 %v2356, %v2495
    %v2565 = vadd.f32 %v2357, %v2499
    %v2566 = vadd.f32 %v2358, %v2503
    %v2567 = vadd.f32 %v2359, %v2495
    %v2568 = vadd.f32 %v2360, %v2499
    %v2569 = vadd.f32 %v2361, %v2503
    %v2570 = vadd.f32 %v2362, %v2495
    %v2571 = vadd.f32 %v2363, %v2499
    %v2572 = vadd.f32 %v2364, %v2503
    %v2573 = vadd.f32 %v2365, %v2495
    %v2574 = vadd.f32 %v2366, %v2499
    %v2575 = vadd.f32 %v2367, %v2503
    %v2576 = vadd.f32 %v2368, %v2495
    %v2577 = vadd.f32 %v2369, %v2499
    %v2578 = vadd.f32 %v2370, %v2503
    %v2579 = vadd.f32 %v2371, %v2495
    %v2580 = vadd.f32 %v2372, %v2499
    %v2581 = vadd.f32 %v2373, %v2503
    %v2582 = vadd.f32 %v2374, %v2495
    %v2583 = vadd.f32 %v2375, %v2499
    %v2584 = vadd.f32 %v2376, %v2503
    %v2585 = vadd.f32 %v2377, %v2495
    %v2586 = vadd.f32 %v2378, %v2499
    %v2587 = vadd.f32 %v2379, %v2503
    %v2588 = vadd.f32 %v2380, %v2495
    %v2589 = vadd.f32 %v2381, %v2499
    %v2590 = vadd.f32 %v2382, %v2503
    %v2591 = vadd.f32 %v2383, %v2495
    %v2592 = vadd.f32 %v2384, %v2499
    %v2593 = vadd.f32 %v2385, %v2503
    %v2594 = vadd.f32 %v2386, %v2495
    %v2595 = vadd.f32 %v2387, %v2499
    %v2596 = vadd.f32 %v2388, %v2503
    %v2597 = vadd.f32 %v2389, %v2495
    %v2598 = vadd.f32 %v2390, %v2499
    %v2599 = vadd.f32 %v2391, %v2503
    %v2600 = vadd.f32 %v2392, %v2495
    %v2601 = vadd.f32 %v2393, %v2499
    %v2602 = vadd.f32 %v2394, %v2503
    %v2603 = vadd.f32 %v2395, %v2495
    %v2604 = vadd.f32 %v2396, %v2499
    %v2605 = vadd.f32 %v2397, %v2503
    %v2606 = vadd.f32 %v2398, %v2495
    %v2607 = vadd.f32 %v2399, %v2499
    %v2608 = vadd.f32 %v2400, %v2503
    %v2609 = vadd.f32 %v2401, %v2495
    %v2610 = vadd.f32 %v2402, %v2499
    %v2611 = vadd.f32 %v2403, %v2503
    %v2612 = vadd.f32 %v2404, %v2495
    %v2613 = vadd.f32 %v2405, %v2499
    %v2614 = vadd.f32 %v2406, %v2503
    %v2615 = vadd.f32 %v2407, %v2495
    %v2616 = vadd.f32 %v2408, %v2499
    %v2617 = vadd.f32 %v2409, %v2503
    %v2618 = vadd.f32 %v2410, %v2495
    %v2619 = vadd.f32 %v2411, %v2499
    %v2620 = vadd.f32 %v2412, %v2503
    %v2621 = vadd.f32 %v2413, %v2495
    %v2622 = vadd.f32 %v2414, %v2499
    %v2623 = vadd.f32 %v2415, %v2503
    %v2624 = vadd.f32 %v2416, %v2495
    %v2625 = vadd.f32 %v2417, %v2499
    %v2626 = vadd.f32 %v2418, %v2503
    %v2627 = vadd.f32 %v2419, %v2495
    %v2628 = vadd.f32 %v2420, %v2499
    %v2629 = vadd.f32 %v2421, %v2503
    %v2630 = vadd.f32 %v2422, %v2495
    %v2631 = vadd.f32 %v2423, %v2499
    %v2632 = vadd.f32 %v2424, %v2503
    %v2633 = vadd.f32 %v2425, %v2495
    %v2634 = vadd.f32 %v2426, %v2499
    %v2635 = vadd.f32 %v2427, %v2503
    %v2636 = vadd.f32 %v2428, %v2495
    %v2637 = vadd.f32 %v2429, %v2499
    %v2638 = vadd.f32 %v2430, %v2503
    %v2639 = vadd.f32 %v2431, %v2495
    %v2640 = vadd.f32 %v2432, %v2499
    %v2641 = vadd.f32 %v2433, %v2503
    %v2642 = vadd.f32 %v2434, %v2495
    %v2643 = vadd.f32 %v2435, %v2499
    %v2644 = vadd.f32 %v2436, %v2503
    %v2645 = vadd.f32 %v2437, %v2495
    %v2646 = vadd.f32 %v2438, %v2499
    %v2647 = vadd.f32 %v2439, %v2503
    %v2648 = vadd.f32 %v2440, %v2495
    %v2649 = vadd.f32 %v2441, %v2499
    %v2650 = vadd.f32 %v2442, %v2503
    %v2651 = vadd.f32 %v2443, %v2495
    %v2652 = vadd.f32 %v2444, %v2499
    %v2653 = vadd.f32 %v2445, %v2503
    %v2654 = vadd.f32 %v2446, %v2495
    %v2655 = vadd.f32 %v2447, %v2499
    %v2656 = vadd.f32 %v2448, %v2503
    %v2657 = vadd.f32 %v2449, %v2495
    %v2658 = vadd.f32 %v2450, %v2499
    %v2659 = vadd.f32 %v2451, %v2503
    %v2660 = vadd.f32 %v2452, %v2495
    %v2661 = vadd.f32 %v2453, %v2499
    %v2662 = vadd.f32 %v2454, %v2503
    %v2663 = vadd.f32 %v2455, %v2495
    %v2664 = vadd.f32 %v2456, %v2499
    %v2665 = vadd.f32 %v2457, %v2503
    %v2666 = vadd.f32 %v2458, %v2495
    %v2667 = vadd.f32 %v2459, %v2499
    %v2668 = vadd.f32 %v2460, %v2503
    %v2669 = vadd.f32 %v2461, %v2495
    %v2670 = vadd.f32 %v2462, %v2499
    %v2671 = vadd.f32 %v2463, %v2503
    %v2672 = vadd.f32 %v2464, %v2495
    %v2673 = vadd.f32 %v2465, %v2499
    %v2674 = vadd.f32 %v2466, %v2503
    %v2675 = vadd.f32 %v2467, %v2495
    %v2676 = vadd.f32 %v2468, %v2499
    %v2677 = vadd.f32 %v2469, %v2503
    %v2678 = vadd.f32 %v2470, %v2495
    %v2679 = vadd.f32 %v2471, %v2499
    %v2680 = vadd.f32 %v2472, %v2503
    %v2681 = vadd.f32 %v2473, %v2495
    %v2682 = vadd.f32 %v2474, %v2499
    %v2683 = vadd.f32 %v2475, %v2503
    %v2684 = vadd.f32 %v2476, %v2495
    %v2685 = vadd.f32 %v2477, %v2499
    %v2686 = vadd.f32 %v2478, %v2503
    %v2687 = vadd.f32 %v2479, %v2495
    %v2688 = vadd.f32 %v2480, %v2499
    %v2689 = vadd.f32 %v2481, %v2503
    %v2690 = vadd.f32 %v2482, %v2495
    %v2691 = vadd.f32 %v2483, %v2499
    %v2692 = vadd.f32 %v2484, %v2503
    %v2693 = vadd.f32 %v2485, %v2495
    %v2694 = vadd.f32 %v2486, %v2499
    %v2695 = vadd.f32 %v2487, %v2503
    %v2696 = vadd.f32 %v2488, %v2495
    %v2697 = vadd.f32 %v2489, %v2499
    %v2698 = vadd.f32 %v2490, %v2503
    %v2699 = vmax.f32 %v2507, 0.0
    %v2700 = vmax.f32 %v2508, 0.0
    %v2701 = vmax.f32 %v2509, 0.0
    %v2702 = vmax.f32 %v2510, 0.0
    %v2703 = vmax.f32 %v2511, 0.0
    %v2704 = vmax.f32 %v2512, 0.0
    %v2705 = vmax.f32 %v2513, 0.0
    %v2706 = vmax.f32 %v2514, 0.0
    %v2707 = vmax.f32 %v2515, 0.0
    %v2708 = vmax.f32 %v2516, 0.0
    %v2709 = vmax.f32 %v2517, 0.0
    %v2710 = vmax.f32 %v2518, 0.0
    %v2711 = vmax.f32 %v2519, 0.0
    %v2712 = vmax.f32 %v2520, 0.0
    %v2713 = vmax.f32 %v2521, 0.0
    %v2714 = vmax.f32 %v2522, 0.0
    %v2715 = vmax.f32 %v2523, 0.0
    %v2716 = vmax.f32 %v2524, 0.0
    %v2717 = vmax.f32 %v2525, 0.0
    %v2718 = vmax.f32 %v2526, 0.0
    %v2719 = vmax.f32 %v2527, 0.0
    %v2720 = vmax.f32 %v2528, 0.0
    %v2721 = vmax.f32 %v2529, 0.0
    %v2722 = vmax.f32 %v2530, 0.0
    %v2723 = vmax.f32 %v2531, 0.0
    %v2724 = vmax.f32 %v2532, 0.0
    %v2725 = vmax.f32 %v2533, 0.0
    %v2726 = vmax.f32 %v2534, 0.0
    %v2727 = vmax.f32 %v2535, 0.0
    %v2728 = vmax.f32 %v2536, 0.0
    %v2729 = vmax.f32 %v2537, 0.0
    %v2730 = vmax.f32 %v2538, 0.0
    %v2731 = vmax.f32 %v2539, 0.0
    %v2732 = vmax.f32 %v2540, 0.0
    %v2733 = vmax.f32 %v2541, 0.0
    %v2734 = vmax.f32 %v2542, 0.0
    %v2735 = vmax.f32 %v2543, 0.0
    %v2736 = vmax.f32 %v2544, 0.0
    %v2737 = vmax.f32 %v2545, 0.0
    %v2738 = vmax.f32 %v2546, 0.0
    %v2739 = vmax.f32 %v2547, 0.0
    %v2740 = vmax.f32 %v2548, 0.0
    %v2741 = vmax.f32 %v2549, 0.0
    %v2742 = vmax.f32 %v2550, 0.0
    %v2743 = vmax.f32 %v2551, 0.0
    %v2744 = vmax.f32 %v2552, 0.0
    %v2745 = vmax.f32 %v2553, 0.0
    %v2746 = vmax.f32 %v2554, 0.0
    %v2747 = vmax.f32 %v2555, 0.0
    %v2748 = vmax.f32 %v2556, 0.0
    %v2749 = vmax.f32 %v2557, 0.0
    %v2750 = vmax.f32 %v2558, 0.0
    %v2751 = vmax.f32 %v2559, 0.0
    %v2752 = vmax.f32 %v2560, 0.0
    %v2753 = vmax.f32 %v2561, 0.0
    %v2754 = vmax.f32 %v2562, 0.0
    %v2755 = vmax.f32 %v2563, 0.0
    %v2756 = vmax.f32 %v2564, 0.0
    %v2757 = vmax.f32 %v2565, 0.0
    %v2758 = vmax.f32 %v2566, 0.0
    %v2759 = vmax.f32 %v2567, 0.0
    %v2760 = vmax.f32 %v2568, 0.0
    %v2761 = vmax.f32 %v2569, 0.0
    %v2762 = vmax.f32 %v2570, 0.0
    %v2763 = vmax.f32 %v2571, 0.0
    %v2764 = vmax.f32 %v2572, 0.0
    %v2765 = vmax.f32 %v2573, 0.0
    %v2766 = vmax.f32 %v2574, 0.0
    %v2767 = vmax.f32 %v2575, 0.0
    %v2768 = vmax.f32 %v2576, 0.0
    %v2769 = vmax.f32 %v2577, 0.0
    %v2770 = vmax.f32 %v2578, 0.0
    %v2771 = vmax.f32 %v2579, 0.0
    %v2772 = vmax.f32 %v2580, 0.0
    %v2773 = vmax.f32 %v2581, 0.0
    %v2774 = vmax.f32 %v2582, 0.0
    %v2775 = vmax.f32 %v2583, 0.0
    %v2776 = vmax.f32 %v2584, 0.0
    %v2777 = vmax.f32 %v2585, 0.0
    %v2778 = vmax.f32 %v2586, 0.0
    %v2779 = vmax.f32 %v2587, 0.0
    %v2780 = vmax.f32 %v2588, 0.0
    %v2781 = vmax.f32 %v2589, 0.0
    %v2782 = vmax.f32 %v2590, 0.0
    %v2783 = vmax.f32 %v2591, 0.0
    %v2784 = vmax.f32 %v2592, 0.0
    %v2785 = vmax.f32 %v2593, 0.0
    %v2786 = vmax.f32 %v2594, 0.0
    %v2787 = vmax.f32 %v2595, 0.0
    %v2788 = vmax.f32 %v2596, 0.0
    %v2789 = vmax.f32 %v2597, 0.0
    %v2790 = vmax.f32 %v2598, 0.0
    %v2791 = vmax.f32 %v2599, 0.0
    %v2792 = vmax.f32 %v2600, 0.0
    %v2793 = vmax.f32 %v2601, 0.0
    %v2794 = vmax.f32 %v2602, 0.0
    %v2795 = vmax.f32 %v2603, 0.0
    %v2796 = vmax.f32 %v2604, 0.0
    %v2797 = vmax.f32 %v2605, 0.0
    %v2798 = vmax.f32 %v2606, 0.0
    %v2799 = vmax.f32 %v2607, 0.0
    %v2800 = vmax.f32 %v2608, 0.0
    %v2801 = vmax.f32 %v2609, 0.0
    %v2802 = vmax.f32 %v2610, 0.0
    %v2803 = vmax.f32 %v2611, 0.0
    %v2804 = vmax.f32 %v2612, 0.0
    %v2805 = vmax.f32 %v2613, 0.0
    %v2806 = vmax.f32 %v2614, 0.0
    %v2807 = vmax.f32 %v2615, 0.0
    %v2808 = vmax.f32 %v2616, 0.0
    %v2809 = vmax.f32 %v2617, 0.0
    %v2810 = vmax.f32 %v2618, 0.0
    %v2811 = vmax.f32 %v2619, 0.0
    %v2812 = vmax.f32 %v2620, 0.0
    %v2813 = vmax.f32 %v2621, 0.0
    %v2814 = vmax.f32 %v2622, 0.0
    %v2815 = vmax.f32 %v2623, 0.0
    %v2816 = vmax.f32 %v2624, 0.0
    %v2817 = vmax.f32 %v2625, 0.0
    %v2818 = vmax.f32 %v2626, 0.0
    %v2819 = vmax.f32 %v2627, 0.0
    %v2820 = vmax.f32 %v2628, 0.0
    %v2821 = vmax.f32 %v2629, 0.0
    %v2822 = vmax.f32 %v2630, 0.0
    %v2823 = vmax.f32 %v2631, 0.0
    %v2824 = vmax.f32 %v2632, 0.0
    %v2825 = vmax.f32 %v2633, 0.0
    %v2826 = vmax.f32 %v2634, 0.0
    %v2827 = vmax.f32 %v2635, 0.0
    %v2828 = vmax.f32 %v2636, 0.0
    %v2829 = vmax.f32 %v2637, 0.0
    %v2830 = vmax.f32 %v2638, 0.0
    %v2831 = vmax.f32 %v2639, 0.0
    %v2832 = vmax.f32 %v2640, 0.0
    %v2833 = vmax.f32 %v2641, 0.0
    %v2834 = vmax.f32 %v2642, 0.0
    %v2835 = vmax.f32 %v2643, 0.0
    %v2836 = vmax.f32 %v2644, 0.0
    %v2837 = vmax.f32 %v2645, 0.0
    %v2838 = vmax.f32 %v2646, 0.0
    %v2839 = vmax.f32 %v2647, 0.0
    %v2840 = vmax.f32 %v2648, 0.0
    %v2841 = vmax.f32 %v2649, 0.0
    %v2842 = vmax.f32 %v2650, 0.0
    %v2843 = vmax.f32 %v2651, 0.0
    %v2844 = vmax.f32 %v2652, 0.0
    %v2845 = vmax.f32 %v2653, 0.0
    %v2846 = vmax.f32 %v2654, 0.0
    %v2847 = vmax.f32 %v2655, 0.0
    %v2848 = vmax.f32 %v2656, 0.0
    %v2849 = vmax.f32 %v2657, 0.0
    %v2850 = vmax.f32 %v2658, 0.0
    %v2851 = vmax.f32 %v2659, 0.0
    %v2852 = vmax.f32 %v2660, 0.0
    %v2853 = vmax.f32 %v2661, 0.0
    %v2854 = vmax.f32 %v2662, 0.0
    %v2855 = vmax.f32 %v2663, 0.0
    %v2856 = vmax.f32 %v2664, 0.0
    %v2857 = vmax.f32 %v2665, 0.0
    %v2858 = vmax.f32 %v2666, 0.0
    %v2859 = vmax.f32 %v2667, 0.0
    %v2860 = vmax.f32 %v2668, 0.0
    %v2861 = vmax.f32 %v2669, 0.0
    %v2862 = vmax.f32 %v2670, 0.0
    %v2863 = vmax.f32 %v2671, 0.0
    %v2864 = vmax.f32 %v2672, 0.0
    %v2865 = vmax.f32 %v2673, 0.0
    %v2866 = vmax.f32 %v2674, 0.0
    %v2867 = vmax.f32 %v2675, 0.0
    %v2868 = vmax.f32 %v2676, 0.0
    %v2869 = vmax.f32 %v2677, 0.0
    %v2870 = vmax.f32 %v2678, 0.0
    %v2871 = vmax.f32 %v2679, 0.0
    %v2872 = vmax.f32 %v2680, 0.0
    %v2873 = vmax.f32 %v2681, 0.0
    %v2874 = vmax.f32 %v2682, 0.0
    %v2875 = vmax.f32 %v2683, 0.0
    %v2876 = vmax.f32 %v2684, 0.0
    %v2877 = vmax.f32 %v2685, 0.0
    %v2878 = vmax.f32 %v2686, 0.0
    %v2879 = vmax.f32 %v2687, 0.0
    %v2880 = vmax.f32 %v2688, 0.0
    %v2881 = vmax.f32 %v2689, 0.0
    %v2882 = vmax.f32 %v2690, 0.0
    %v2883 = vmax.f32 %v2691, 0.0
    %v2884 = vmax.f32 %v2692, 0.0
    %v2885 = vmax.f32 %v2693, 0.0
    %v2886 = vmax.f32 %v2694, 0.0
    %v2887 = vmax.f32 %v2695, 0.0
    %v2888 = vmax.f32 %v2696, 0.0
    %v2889 = vmax.f32 %v2697, 0.0
    %v2890 = vmax.f32 %v2698, 0.0
    %2891 = vst [vmem:[#allocation19] sm:$0xff] %v2699
    %2892 = vst [vmem:[#allocation19 + $0x8] sm:$0xff] %v2700
    %2893 = vst.msk [vmem:[#allocation19 + $0x10] sm:$0xff] %vm1290, %v2701
    %2894 = vst [vmem:[#allocation19 + $0x18] sm:$0xff] %v2702
    %2895 = vst [vmem:[#allocation19 + $0x20] sm:$0xff] %v2703
    %2896 = vst.msk [vmem:[#allocation19 + $0x28] sm:$0xff] %vm1290, %v2704
    %2897 = vst [vmem:[#allocation19 + $0x30] sm:$0xff] %v2705
    %2898 = vst [vmem:[#allocation19 + $0x38] sm:$0xff] %v2706
    %2899 = vst.msk [vmem:[#allocation19 + $0x40] sm:$0xff] %vm1290, %v2707
    %2900 = vst [vmem:[#allocation19 + $0x48] sm:$0xff] %v2708
    %2901 = vst [vmem:[#allocation19 + $0x50] sm:$0xff] %v2709
    %2902 = vst.msk [vmem:[#allocation19 + $0x58] sm:$0xff] %vm1290, %v2710
    %2903 = vst [vmem:[#allocation19 + $0x60] sm:$0xff] %v2711
    %2904 = vst [vmem:[#allocation19 + $0x68] sm:$0xff] %v2712
    %2905 = vst.msk [vmem:[#allocation19 + $0x70] sm:$0xff] %vm1290, %v2713
    %2906 = vst [vmem:[#allocation19 + $0x78] sm:$0xff] %v2714
    %2907 = vst [vmem:[#allocation19 + $0x80] sm:$0xff] %v2715
    %2908 = vst.msk [vmem:[#allocation19 + $0x88] sm:$0xff] %vm1290, %v2716
    %2909 = vst [vmem:[#allocation19 + $0x90] sm:$0xff] %v2717
    %2910 = vst [vmem:[#allocation19 + $0x98] sm:$0xff] %v2718
    %2911 = vst.msk [vmem:[#allocation19 + $0xa0] sm:$0xff] %vm1290, %v2719
    %2912 = vst [vmem:[#allocation19 + $0xa8] sm:$0xff] %v2720
    %2913 = vst [vmem:[#allocation19 + $0xb0] sm:$0xff] %v2721
    %2914 = vst.msk [vmem:[#allocation19 + $0xb8] sm:$0xff] %vm1290, %v2722
    %2915 = vst [vmem:[#allocation19 + $0xc0] sm:$0xff] %v2723
    %2916 = vst [vmem:[#allocation19 + $0xc8] sm:$0xff] %v2724
    %2917 = vst.msk [vmem:[#allocation19 + $0xd0] sm:$0xff] %vm1290, %v2725
    %2918 = vst [vmem:[#allocation19 + $0xd8] sm:$0xff] %v2726
    %2919 = vst [vmem:[#allocation19 + $0xe0] sm:$0xff] %v2727
    %2920 = vst.msk [vmem:[#allocation19 + $0xe8] sm:$0xff] %vm1290, %v2728
    %2921 = vst [vmem:[#allocation19 + $0xf0] sm:$0xff] %v2729
    %2922 = vst [vmem:[#allocation19 + $0xf8] sm:$0xff] %v2730
    %2923 = vst.msk [vmem:[#allocation19 + $0x100] sm:$0xff] %vm1290, %v2731
    %2924 = vst [vmem:[#allocation19 + $0x108] sm:$0xff] %v2732
    %2925 = vst [vmem:[#allocation19 + $0x110] sm:$0xff] %v2733
    %2926 = vst.msk [vmem:[#allocation19 + $0x118] sm:$0xff] %vm1290, %v2734
    %2927 = vst [vmem:[#allocation19 + $0x120] sm:$0xff] %v2735
    %2928 = vst [vmem:[#allocation19 + $0x128] sm:$0xff] %v2736
    %2929 = vst.msk [vmem:[#allocation19 + $0x130] sm:$0xff] %vm1290, %v2737
    %2930 = vst [vmem:[#allocation19 + $0x138] sm:$0xff] %v2738
    %2931 = vst [vmem:[#allocation19 + $0x140] sm:$0xff] %v2739
    %2932 = vst.msk [vmem:[#allocation19 + $0x148] sm:$0xff] %vm1290, %v2740
    %2933 = vst [vmem:[#allocation19 + $0x150] sm:$0xff] %v2741
    %2934 = vst [vmem:[#allocation19 + $0x158] sm:$0xff] %v2742
    %2935 = vst.msk [vmem:[#allocation19 + $0x160] sm:$0xff] %vm1290, %v2743
    %2936 = vst [vmem:[#allocation19 + $0x168] sm:$0xff] %v2744
    %2937 = vst [vmem:[#allocation19 + $0x170] sm:$0xff] %v2745
    %2938 = vst.msk [vmem:[#allocation19 + $0x178] sm:$0xff] %vm1290, %v2746
    %2939 = vst [vmem:[#allocation19 + $0x180] sm:$0xff] %v2747
    %2940 = vst [vmem:[#allocation19 + $0x188] sm:$0xff] %v2748
    %2941 = vst.msk [vmem:[#allocation19 + $0x190] sm:$0xff] %vm1290, %v2749
    %2942 = vst [vmem:[#allocation19 + $0x198] sm:$0xff] %v2750
    %2943 = vst [vmem:[#allocation19 + $0x1a0] sm:$0xff] %v2751
    %2944 = vst.msk [vmem:[#allocation19 + $0x1a8] sm:$0xff] %vm1290, %v2752
    %2945 = vst [vmem:[#allocation19 + $0x1b0] sm:$0xff] %v2753
    %2946 = vst [vmem:[#allocation19 + $0x1b8] sm:$0xff] %v2754
    %2947 = vst.msk [vmem:[#allocation19 + $0x1c0] sm:$0xff] %vm1290, %v2755
    %2948 = vst [vmem:[#allocation19 + $0x1c8] sm:$0xff] %v2756
    %2949 = vst [vmem:[#allocation19 + $0x1d0] sm:$0xff] %v2757
    %2950 = vst.msk [vmem:[#allocation19 + $0x1d8] sm:$0xff] %vm1290, %v2758
    %2951 = vst [vmem:[#allocation19 + $0x1e0] sm:$0xff] %v2759
    %2952 = vst [vmem:[#allocation19 + $0x1e8] sm:$0xff] %v2760
    %2953 = vst.msk [vmem:[#allocation19 + $0x1f0] sm:$0xff] %vm1290, %v2761
    %2954 = vst [vmem:[#allocation19 + $0x1f8] sm:$0xff] %v2762
    %2955 = vst [vmem:[#allocation19 + $0x200] sm:$0xff] %v2763
    %2956 = vst.msk [vmem:[#allocation19 + $0x208] sm:$0xff] %vm1290, %v2764
    %2957 = vst [vmem:[#allocation19 + $0x210] sm:$0xff] %v2765
    %2958 = vst [vmem:[#allocation19 + $0x218] sm:$0xff] %v2766
    %2959 = vst.msk [vmem:[#allocation19 + $0x220] sm:$0xff] %vm1290, %v2767
    %2960 = vst [vmem:[#allocation19 + $0x228] sm:$0xff] %v2768
    %2961 = vst [vmem:[#allocation19 + $0x230] sm:$0xff] %v2769
    %2962 = vst.msk [vmem:[#allocation19 + $0x238] sm:$0xff] %vm1290, %v2770
    %2963 = vst [vmem:[#allocation19 + $0x240] sm:$0xff] %v2771
    %2964 = vst [vmem:[#allocation19 + $0x248] sm:$0xff] %v2772
    %2965 = vst.msk [vmem:[#allocation19 + $0x250] sm:$0xff] %vm1290, %v2773
    %2966 = vst [vmem:[#allocation19 + $0x258] sm:$0xff] %v2774
    %2967 = vst [vmem:[#allocation19 + $0x260] sm:$0xff] %v2775
    %2968 = vst.msk [vmem:[#allocation19 + $0x268] sm:$0xff] %vm1290, %v2776
    %2969 = vst [vmem:[#allocation19 + $0x270] sm:$0xff] %v2777
    %2970 = vst [vmem:[#allocation19 + $0x278] sm:$0xff] %v2778
    %2971 = vst.msk [vmem:[#allocation19 + $0x280] sm:$0xff] %vm1290, %v2779
    %2972 = vst [vmem:[#allocation19 + $0x288] sm:$0xff] %v2780
    %2973 = vst [vmem:[#allocation19 + $0x290] sm:$0xff] %v2781
    %2974 = vst.msk [vmem:[#allocation19 + $0x298] sm:$0xff] %vm1290, %v2782
    %2975 = vst [vmem:[#allocation19 + $0x2a0] sm:$0xff] %v2783
    %2976 = vst [vmem:[#allocation19 + $0x2a8] sm:$0xff] %v2784
    %2977 = vst.msk [vmem:[#allocation19 + $0x2b0] sm:$0xff] %vm1290, %v2785
    %2978 = vst [vmem:[#allocation19 + $0x2b8] sm:$0xff] %v2786
    %2979 = vst [vmem:[#allocation19 + $0x2c0] sm:$0xff] %v2787
    %2980 = vst.msk [vmem:[#allocation19 + $0x2c8] sm:$0xff] %vm1290, %v2788
    %2981 = vst [vmem:[#allocation19 + $0x2d0] sm:$0xff] %v2789
    %2982 = vst [vmem:[#allocation19 + $0x2d8] sm:$0xff] %v2790
    %2983 = vst.msk [vmem:[#allocation19 + $0x2e0] sm:$0xff] %vm1290, %v2791
    %2984 = vst [vmem:[#allocation19 + $0x2e8] sm:$0xff] %v2792
    %2985 = vst [vmem:[#allocation19 + $0x2f0] sm:$0xff] %v2793
    %2986 = vst.msk [vmem:[#allocation19 + $0x2f8] sm:$0xff] %vm1290, %v2794
    %2987 = vst [vmem:[#allocation19 + $0x300] sm:$0xff] %v2795
    %2988 = vst [vmem:[#allocation19 + $0x308] sm:$0xff] %v2796
    %2989 = vst.msk [vmem:[#allocation19 + $0x310] sm:$0xff] %vm1290, %v2797
    %2990 = vst [vmem:[#allocation19 + $0x318] sm:$0xff] %v2798
    %2991 = vst [vmem:[#allocation19 + $0x320] sm:$0xff] %v2799
    %2992 = vst.msk [vmem:[#allocation19 + $0x328] sm:$0xff] %vm1290, %v2800
    %2993 = vst [vmem:[#allocation19 + $0x330] sm:$0xff] %v2801
    %2994 = vst [vmem:[#allocation19 + $0x338] sm:$0xff] %v2802
    %2995 = vst.msk [vmem:[#allocation19 + $0x340] sm:$0xff] %vm1290, %v2803
    %2996 = vst [vmem:[#allocation19 + $0x348] sm:$0xff] %v2804
    %2997 = vst [vmem:[#allocation19 + $0x350] sm:$0xff] %v2805
    %2998 = vst.msk [vmem:[#allocation19 + $0x358] sm:$0xff] %vm1290, %v2806
    %2999 = vst [vmem:[#allocation19 + $0x360] sm:$0xff] %v2807
    %3000 = vst [vmem:[#allocation19 + $0x368] sm:$0xff] %v2808
    %3001 = vst.msk [vmem:[#allocation19 + $0x370] sm:$0xff] %vm1290, %v2809
    %3002 = vst [vmem:[#allocation19 + $0x378] sm:$0xff] %v2810
    %3003 = vst [vmem:[#allocation19 + $0x380] sm:$0xff] %v2811
    %3004 = vst.msk [vmem:[#allocation19 + $0x388] sm:$0xff] %vm1290, %v2812
    %3005 = vst [vmem:[#allocation19 + $0x390] sm:$0xff] %v2813
    %3006 = vst [vmem:[#allocation19 + $0x398] sm:$0xff] %v2814
    %3007 = vst.msk [vmem:[#allocation19 + $0x3a0] sm:$0xff] %vm1290, %v2815
    %3008 = vst [vmem:[#allocation19 + $0x3a8] sm:$0xff] %v2816
    %3009 = vst [vmem:[#allocation19 + $0x3b0] sm:$0xff] %v2817
    %3010 = vst.msk [vmem:[#allocation19 + $0x3b8] sm:$0xff] %vm1290, %v2818
    %3011 = vst [vmem:[#allocation19 + $0x3c0] sm:$0xff] %v2819
    %3012 = vst [vmem:[#allocation19 + $0x3c8] sm:$0xff] %v2820
    %3013 = vst.msk [vmem:[#allocation19 + $0x3d0] sm:$0xff] %vm1290, %v2821
    %3014 = vst [vmem:[#allocation19 + $0x3d8] sm:$0xff] %v2822
    %3015 = vst [vmem:[#allocation19 + $0x3e0] sm:$0xff] %v2823
    %3016 = vst.msk [vmem:[#allocation19 + $0x3e8] sm:$0xff] %vm1290, %v2824
    %3017 = vst [vmem:[#allocation19 + $0x3f0] sm:$0xff] %v2825
    %3018 = vst [vmem:[#allocation19 + $0x3f8] sm:$0xff] %v2826
    %3019 = vst.msk [vmem:[#allocation19 + $0x400] sm:$0xff] %vm1290, %v2827
    %3020 = vst [vmem:[#allocation19 + $0x408] sm:$0xff] %v2828
    %3021 = vst [vmem:[#allocation19 + $0x410] sm:$0xff] %v2829
    %3022 = vst.msk [vmem:[#allocation19 + $0x418] sm:$0xff] %vm1290, %v2830
    %3023 = vst [vmem:[#allocation19 + $0x420] sm:$0xff] %v2831
    %3024 = vst [vmem:[#allocation19 + $0x428] sm:$0xff] %v2832
    %3025 = vst.msk [vmem:[#allocation19 + $0x430] sm:$0xff] %vm1290, %v2833
    %3026 = vst [vmem:[#allocation19 + $0x438] sm:$0xff] %v2834
    %3027 = vst [vmem:[#allocation19 + $0x440] sm:$0xff] %v2835
    %3028 = vst.msk [vmem:[#allocation19 + $0x448] sm:$0xff] %vm1290, %v2836
    %3029 = vst [vmem:[#allocation19 + $0x450] sm:$0xff] %v2837
    %3030 = vst [vmem:[#allocation19 + $0x458] sm:$0xff] %v2838
    %3031 = vst.msk [vmem:[#allocation19 + $0x460] sm:$0xff] %vm1290, %v2839
    %3032 = vst [vmem:[#allocation19 + $0x468] sm:$0xff] %v2840
    %3033 = vst [vmem:[#allocation19 + $0x470] sm:$0xff] %v2841
    %3034 = vst.msk [vmem:[#allocation19 + $0x478] sm:$0xff] %vm1290, %v2842
    %3035 = vst [vmem:[#allocation19 + $0x480] sm:$0xff] %v2843
    %3036 = vst [vmem:[#allocation19 + $0x488] sm:$0xff] %v2844
    %3037 = vst.msk [vmem:[#allocation19 + $0x490] sm:$0xff] %vm1290, %v2845
    %3038 = vst [vmem:[#allocation19 + $0x498] sm:$0xff] %v2846
    %3039 = vst [vmem:[#allocation19 + $0x4a0] sm:$0xff] %v2847
    %3040 = vst.msk [vmem:[#allocation19 + $0x4a8] sm:$0xff] %vm1290, %v2848
    %3041 = vst [vmem:[#allocation19 + $0x4b0] sm:$0xff] %v2849
    %3042 = vst [vmem:[#allocation19 + $0x4b8] sm:$0xff] %v2850
    %3043 = vst.msk [vmem:[#allocation19 + $0x4c0] sm:$0xff] %vm1290, %v2851
    %3044 = vst [vmem:[#allocation19 + $0x4c8] sm:$0xff] %v2852
    %3045 = vst [vmem:[#allocation19 + $0x4d0] sm:$0xff] %v2853
    %3046 = vst.msk [vmem:[#allocation19 + $0x4d8] sm:$0xff] %vm1290, %v2854
    %3047 = vst [vmem:[#allocation19 + $0x4e0] sm:$0xff] %v2855
    %3048 = vst [vmem:[#allocation19 + $0x4e8] sm:$0xff] %v2856
    %3049 = vst.msk [vmem:[#allocation19 + $0x4f0] sm:$0xff] %vm1290, %v2857
    %3050 = vst [vmem:[#allocation19 + $0x4f8] sm:$0xff] %v2858
    %3051 = vst [vmem:[#allocation19 + $0x500] sm:$0xff] %v2859
    %3052 = vst.msk [vmem:[#allocation19 + $0x508] sm:$0xff] %vm1290, %v2860
    %3053 = vst [vmem:[#allocation19 + $0x510] sm:$0xff] %v2861
    %3054 = vst [vmem:[#allocation19 + $0x518] sm:$0xff] %v2862
    %3055 = vst.msk [vmem:[#allocation19 + $0x520] sm:$0xff] %vm1290, %v2863
    %3056 = vst [vmem:[#allocation19 + $0x528] sm:$0xff] %v2864
    %3057 = vst [vmem:[#allocation19 + $0x530] sm:$0xff] %v2865
    %3058 = vst.msk [vmem:[#allocation19 + $0x538] sm:$0xff] %vm1290, %v2866
    %3059 = vst [vmem:[#allocation19 + $0x540] sm:$0xff] %v2867
    %3060 = vst [vmem:[#allocation19 + $0x548] sm:$0xff] %v2868
    %3061 = vst.msk [vmem:[#allocation19 + $0x550] sm:$0xff] %vm1290, %v2869
    %3062 = vst [vmem:[#allocation19 + $0x558] sm:$0xff] %v2870
    %3063 = vst [vmem:[#allocation19 + $0x560] sm:$0xff] %v2871
    %3064 = vst.msk [vmem:[#allocation19 + $0x568] sm:$0xff] %vm1290, %v2872
    %3065 = vst [vmem:[#allocation19 + $0x570] sm:$0xff] %v2873
    %3066 = vst [vmem:[#allocation19 + $0x578] sm:$0xff] %v2874
    %3067 = vst.msk [vmem:[#allocation19 + $0x580] sm:$0xff] %vm1290, %v2875
    %3068 = vst [vmem:[#allocation19 + $0x588] sm:$0xff] %v2876
    %3069 = vst [vmem:[#allocation19 + $0x590] sm:$0xff] %v2877
    %3070 = vst.msk [vmem:[#allocation19 + $0x598] sm:$0xff] %vm1290, %v2878
    %3071 = vst [vmem:[#allocation19 + $0x5a0] sm:$0xff] %v2879
    %3072 = vst [vmem:[#allocation19 + $0x5a8] sm:$0xff] %v2880
    %3073 = vst.msk [vmem:[#allocation19 + $0x5b0] sm:$0xff] %vm1290, %v2881
    %3074 = vst [vmem:[#allocation19 + $0x5b8] sm:$0xff] %v2882
    %3075 = vst [vmem:[#allocation19 + $0x5c0] sm:$0xff] %v2883
    %3076 = vst.msk [vmem:[#allocation19 + $0x5c8] sm:$0xff] %vm1290, %v2884
    %3077 = vst [vmem:[#allocation19 + $0x5d0] sm:$0xff] %v2885
    %3078 = vst [vmem:[#allocation19 + $0x5d8] sm:$0xff] %v2886
    %3079 = vst.msk [vmem:[#allocation19 + $0x5e0] sm:$0xff] %vm1290, %v2887
    %3080 = vst [vmem:[#allocation19 + $0x5e8] sm:$0xff] %v2888
    %3081 = vst [vmem:[#allocation19 + $0x5f0] sm:$0xff] %v2889
    %3082 = vst.msk [vmem:[#allocation19 + $0x5f8] sm:$0xff] %vm1290, %v2890
    %v3083 = vld [vmem:[#allocation7] sm:$0x3f]
    %v3085 = vcombine.high %v3083, %v3083
    %v3087 = vunpack.c.l.s4 1983009808
    %v3088 = vunpack.c.0.s8 %v3087
    %v3089 = vlaneseq
    %v3090 = vshrl.u32 %v3089, 7
    %v3091 = vsub.s32 %v3088, %v3090
    %v3092 = vrot.slane %v3083, %v3091
    %v3094 = vunpack.c.l.s4 1983009808
    %v3095 = vunpack.c.0.s8 %v3094
    %v3096 = vlaneseq
    %v3097 = vshrl.u32 %v3096, 7
    %v3098 = vsub.s32 %v3095, %v3097
    %v3099 = vrot.slane %v3085, %v3098
    %v3100 = vcombine.high %v3092, %v3092
    %v3102 = vsel %vm498, %v3092, 0
    %v3105 = vsel %vm498, %v3100, 0
    %v3108 = vsel %vm498, %v3099, 0
    %3110 = vmatprep.subr.bf16.mxu0 %v3105
    %3111 = vmatpush1.bf16.msra.mxu0 %v3102
    %3112 = vmatprep.subr.bf16.mxu0 0
    %3113 = vmatpush1.bf16.msra.mxu0 0
    %3114 = vmatprep.subr.bf16.mxu0 0
    %3115 = vmatpush1.bf16.msra.mxu0 0
    %3116 = vmatprep.subr.bf16.mxu0 0
    %3117 = vmatpush1.bf16.msra.mxu0 0
    %3118 = vmatprep.subr.bf16.mxu0 0
    %3119 = vmatpush1.bf16.msra.mxu0 0
    %3120 = vmatprep.subr.bf16.mxu0 0
    %3121 = vmatpush1.bf16.msra.mxu0 0
    %3122 = vmatprep.subr.bf16.mxu0 0
    %3123 = vmatpush1.bf16.msra.mxu0 0
    %3124 = vmatprep.subr.bf16.mxu0 0
    %3125 = vmatpush1.bf16.msra.mxu0 0
    %3126 = vmatprep.subr.bf16.mxu0 0
    %3127 = vmatpush1.bf16.msra.mxu0 0
    %3128 = vmatprep.subr.bf16.mxu0 0
    %3129 = vmatpush1.bf16.msra.mxu0 0
    %3130 = vmatprep.subr.bf16.mxu0 0
    %3131 = vmatpush1.bf16.msra.mxu0 0
    %3132 = vmatprep.subr.bf16.mxu0 0
    %3133 = vmatpush1.bf16.msra.mxu0 0
    %3134 = vmatprep.subr.bf16.mxu0 0
    %3135 = vmatpush1.bf16.msra.mxu0 0
    %3136 = vmatprep.subr.bf16.mxu0 0
    %3137 = vmatpush1.bf16.msra.mxu0 0
    %3138 = vmatprep.subr.bf16.mxu0 0
    %3139 = vmatpush1.bf16.msra.mxu0 0
    %3140 = vmatprep.subr.bf16.mxu0 0
    %3141 = vmatpush1.bf16.msra.mxu0 0
    %3142 = vmatprep.mubr.bf16.mxu0 0
    %3143 = vmatmul.mubr.bf16.gmra.mrb[0].mxu0 %v403
    %v3144 = vpop.f32.mrb[0].mxu0
    %v3145 = vadd.f32 0.0, %v3144
    %v3146 = vpop.f32.mrb[0].mxu0
    %v3147 = vadd.f32 0.0, %v3146
    %v3148 = vpop.f32.mrb[0].mxu0
    %v3149 = vadd.f32 0.0, %v3148
    %v3150 = vpop.f32.mrb[0].mxu0
    %v3151 = vadd.f32 0.0, %v3150
    %3152 = vmatprep.mubr.bf16.mxu0 0
    %3153 = vmatmul.mubr.bf16.gmra.mrb[0].mxu0 %v406
    %v3154 = vpop.f32.mrb[0].mxu0
    %v3155 = vadd.f32 0.0, %v3154
    %v3156 = vpop.f32.mrb[0].mxu0
    %v3157 = vadd.f32 0.0, %v3156
    %v3158 = vpop.f32.mrb[0].mxu0
    %v3159 = vadd.f32 0.0, %v3158
    %v3160 = vpop.f32.mrb[0].mxu0
    %v3161 = vadd.f32 0.0, %v3160
    %3162 = vmatprep.mubr.bf16.mxu0 0
    %3163 = vmatmul.mubr.bf16.gmra.mrb[0].mxu0 %v409
    %v3164 = vpop.f32.mrb[0].mxu0
    %v3165 = vadd.f32 0.0, %v3164
    %v3166 = vpop.f32.mrb[0].mxu0
    %v3167 = vadd.f32 0.0, %v3166
    %v3168 = vpop.f32.mrb[0].mxu0
    %v3169 = vadd.f32 0.0, %v3168
    %v3170 = vpop.f32.mrb[0].mxu0
    %v3171 = vadd.f32 0.0, %v3170
    %3172 = vmatprep.mubr.bf16.mxu0 0
    %3173 = vmatmul.mubr.bf16.gmra.mrb[0].mxu0 %v412
    %v3174 = vpop.f32.mrb[0].mxu0
    %v3175 = vadd.f32 0.0, %v3174
    %v3176 = vpop.f32.mrb[0].mxu0
    %v3177 = vadd.f32 0.0, %v3176
    %v3178 = vpop.f32.mrb[0].mxu0
    %v3179 = vadd.f32 0.0, %v3178
    %v3180 = vpop.f32.mrb[0].mxu0
    %v3181 = vadd.f32 0.0, %v3180
    %3182 = vmatprep.mubr.bf16.mxu0 0
    %3183 = vmatmul.mubr.bf16.gmra.mrb[0].mxu0 %v415
    %v3184 = vpop.f32.mrb[0].mxu0
    %v3185 = vadd.f32 0.0, %v3184
    %v3186 = vpop.f32.mrb[0].mxu0
    %v3187 = vadd.f32 0.0, %v3186
    %v3188 = vpop.f32.mrb[0].mxu0
    %v3189 = vadd.f32 0.0, %v3188
    %v3190 = vpop.f32.mrb[0].mxu0
    %v3191 = vadd.f32 0.0, %v3190
    %3192 = vmatprep.mubr.bf16.mxu0 0
    %3193 = vmatmul.mubr.bf16.gmra.mrb[0].mxu0 %v418
    %v3194 = vpop.f32.mrb[0].mxu0
    %v3195 = vadd.f32 0.0, %v3194
    %v3196 = vpop.f32.mrb[0].mxu0
    %v3197 = vadd.f32 0.0, %v3196
    %v3198 = vpop.f32.mrb[0].mxu0
    %v3199 = vadd.f32 0.0, %v3198
    %v3200 = vpop.f32.mrb[0].mxu0
    %v3201 = vadd.f32 0.0, %v3200
    %3202 = vmatprep.mubr.bf16.mxu0 0
    %3203 = vmatmul.mubr.bf16.gmra.mrb[0].mxu0 %v421
    %v3204 = vpop.f32.mrb[0].mxu0
    %v3205 = vadd.f32 0.0, %v3204
    %v3206 = vpop.f32.mrb[0].mxu0
    %v3207 = vadd.f32 0.0, %v3206
    %v3208 = vpop.f32.mrb[0].mxu0
    %v3209 = vadd.f32 0.0, %v3208
    %v3210 = vpop.f32.mrb[0].mxu0
    %v3211 = vadd.f32 0.0, %v3210
    %3212 = vmatprep.mubr.bf16.mxu0 0
    %3213 = vmatmul.mubr.bf16.gmra.mrb[0].mxu0 %v424
    %v3214 = vpop.f32.mrb[0].mxu0
    %v3215 = vadd.f32 0.0, %v3214
    %v3216 = vpop.f32.mrb[0].mxu0
    %v3217 = vadd.f32 0.0, %v3216
    %v3218 = vpop.f32.mrb[0].mxu0
    %v3219 = vadd.f32 0.0, %v3218
    %v3220 = vpop.f32.mrb[0].mxu0
    %v3221 = vadd.f32 0.0, %v3220
    %3222 = vmatprep.mubr.bf16.mxu0 0
    %3223 = vmatmul.mubr.bf16.gmra.mrb[0].mxu0 %v427
    %v3224 = vpop.f32.mrb[0].mxu0
    %v3225 = vadd.f32 0.0, %v3224
    %v3226 = vpop.f32.mrb[0].mxu0
    %v3227 = vadd.f32 0.0, %v3226
    %v3228 = vpop.f32.mrb[0].mxu0
    %v3229 = vadd.f32 0.0, %v3228
    %v3230 = vpop.f32.mrb[0].mxu0
    %v3231 = vadd.f32 0.0, %v3230
    %3232 = vmatprep.mubr.bf16.mxu0 0
    %3233 = vmatmul.mubr.bf16.gmra.mrb[0].mxu0 %v430
    %v3234 = vpop.f32.mrb[0].mxu0
    %v3235 = vadd.f32 0.0, %v3234
    %v3236 = vpop.f32.mrb[0].mxu0
    %v3237 = vadd.f32 0.0, %v3236
    %v3238 = vpop.f32.mrb[0].mxu0
    %v3239 = vadd.f32 0.0, %v3238
    %v3240 = vpop.f32.mrb[0].mxu0
    %v3241 = vadd.f32 0.0, %v3240
    %3242 = vmatprep.mubr.bf16.mxu0 0
    %3243 = vmatmul.mubr.bf16.gmra.mrb[0].mxu0 %v433
    %v3244 = vpop.f32.mrb[0].mxu0
    %v3245 = vadd.f32 0.0, %v3244
    %v3246 = vpop.f32.mrb[0].mxu0
    %v3247 = vadd.f32 0.0, %v3246
    %v3248 = vpop.f32.mrb[0].mxu0
    %v3249 = vadd.f32 0.0, %v3248
    %v3250 = vpop.f32.mrb[0].mxu0
    %v3251 = vadd.f32 0.0, %v3250
    %3252 = vmatprep.mubr.bf16.mxu0 0
    %3253 = vmatmul.mubr.bf16.gmra.mrb[0].mxu0 %v436
    %v3254 = vpop.f32.mrb[0].mxu0
    %v3255 = vadd.f32 0.0, %v3254
    %v3256 = vpop.f32.mrb[0].mxu0
    %v3257 = vadd.f32 0.0, %v3256
    %v3258 = vpop.f32.mrb[0].mxu0
    %v3259 = vadd.f32 0.0, %v3258
    %v3260 = vpop.f32.mrb[0].mxu0
    %v3261 = vadd.f32 0.0, %v3260
    %3262 = vmatprep.mubr.bf16.mxu0 0
    %3263 = vmatmul.mubr.bf16.gmra.mrb[0].mxu0 %v439
    %v3264 = vpop.f32.mrb[0].mxu0
    %v3265 = vadd.f32 0.0, %v3264
    %v3266 = vpop.f32.mrb[0].mxu0
    %v3267 = vadd.f32 0.0, %v3266
    %v3268 = vpop.f32.mrb[0].mxu0
    %v3269 = vadd.f32 0.0, %v3268
    %v3270 = vpop.f32.mrb[0].mxu0
    %v3271 = vadd.f32 0.0, %v3270
    %3272 = vmatprep.mubr.bf16.mxu0 0
    %3273 = vmatmul.mubr.bf16.gmra.mrb[0].mxu0 %v442
    %v3274 = vpop.f32.mrb[0].mxu0
    %v3275 = vadd.f32 0.0, %v3274
    %v3276 = vpop.f32.mrb[0].mxu0
    %v3277 = vadd.f32 0.0, %v3276
    %v3278 = vpop.f32.mrb[0].mxu0
    %v3279 = vadd.f32 0.0, %v3278
    %v3280 = vpop.f32.mrb[0].mxu0
    %v3281 = vadd.f32 0.0, %v3280
    %3282 = vmatprep.mubr.bf16.mxu0 0
    %3283 = vmatmul.mubr.bf16.gmra.mrb[0].mxu0 %v445
    %v3284 = vpop.f32.mrb[0].mxu0
    %v3285 = vadd.f32 0.0, %v3284
    %v3286 = vpop.f32.mrb[0].mxu0
    %v3287 = vadd.f32 0.0, %v3286
    %v3288 = vpop.f32.mrb[0].mxu0
    %v3289 = vadd.f32 0.0, %v3288
    %v3290 = vpop.f32.mrb[0].mxu0
    %v3291 = vadd.f32 0.0, %v3290
    %3292 = vmatprep.mubr.bf16.mxu0 0
    %3293 = vmatmul.mubr.bf16.gmra.mrb[0].mxu0 %v448
    %v3294 = vpop.f32.mrb[0].mxu0
    %v3295 = vadd.f32 0.0, %v3294
    %v3296 = vpop.f32.mrb[0].mxu0
    %v3297 = vadd.f32 0.0, %v3296
    %v3298 = vpop.f32.mrb[0].mxu0
    %v3299 = vadd.f32 0.0, %v3298
    %v3300 = vpop.f32.mrb[0].mxu0
    %v3301 = vadd.f32 0.0, %v3300
    %3302 = vmatprep.mubr.bf16.mxu0 0
    %3303 = vmatmul.mubr.bf16.gmra.mrb[0].mxu0 %v451
    %v3304 = vpop.f32.mrb[0].mxu0
    %v3305 = vadd.f32 0.0, %v3304
    %v3306 = vpop.f32.mrb[0].mxu0
    %v3307 = vadd.f32 0.0, %v3306
    %v3308 = vpop.f32.mrb[0].mxu0
    %v3309 = vadd.f32 0.0, %v3308
    %v3310 = vpop.f32.mrb[0].mxu0
    %v3311 = vadd.f32 0.0, %v3310
    %3312 = vmatprep.mubr.bf16.mxu0 0
    %3313 = vmatmul.mubr.bf16.gmra.mrb[0].mxu0 %v454
    %v3314 = vpop.f32.mrb[0].mxu0
    %v3315 = vadd.f32 0.0, %v3314
    %v3316 = vpop.f32.mrb[0].mxu0
    %v3317 = vadd.f32 0.0, %v3316
    %v3318 = vpop.f32.mrb[0].mxu0
    %v3319 = vadd.f32 0.0, %v3318
    %v3320 = vpop.f32.mrb[0].mxu0
    %v3321 = vadd.f32 0.0, %v3320
    %3322 = vmatprep.mubr.bf16.mxu0 0
    %3323 = vmatmul.mubr.bf16.gmra.mrb[0].mxu0 %v457
    %v3324 = vpop.f32.mrb[0].mxu0
    %v3325 = vadd.f32 0.0, %v3324
    %v3326 = vpop.f32.mrb[0].mxu0
    %v3327 = vadd.f32 0.0, %v3326
    %v3328 = vpop.f32.mrb[0].mxu0
    %v3329 = vadd.f32 0.0, %v3328
    %v3330 = vpop.f32.mrb[0].mxu0
    %v3331 = vadd.f32 0.0, %v3330
    %3332 = vmatprep.mubr.bf16.mxu0 0
    %3333 = vmatmul.mubr.bf16.gmra.mrb[0].mxu0 %v460
    %v3334 = vpop.f32.mrb[0].mxu0
    %v3335 = vadd.f32 0.0, %v3334
    %v3336 = vpop.f32.mrb[0].mxu0
    %v3337 = vadd.f32 0.0, %v3336
    %v3338 = vpop.f32.mrb[0].mxu0
    %v3339 = vadd.f32 0.0, %v3338
    %v3340 = vpop.f32.mrb[0].mxu0
    %v3341 = vadd.f32 0.0, %v3340
    %3342 = vmatprep.mubr.bf16.mxu0 0
    %3343 = vmatmul.mubr.bf16.gmra.mrb[0].mxu0 %v463
    %v3344 = vpop.f32.mrb[0].mxu0
    %v3345 = vadd.f32 0.0, %v3344
    %v3346 = vpop.f32.mrb[0].mxu0
    %v3347 = vadd.f32 0.0, %v3346
    %v3348 = vpop.f32.mrb[0].mxu0
    %v3349 = vadd.f32 0.0, %v3348
    %v3350 = vpop.f32.mrb[0].mxu0
    %v3351 = vadd.f32 0.0, %v3350
    %3352 = vmatprep.mubr.bf16.mxu0 0
    %3353 = vmatmul.mubr.bf16.gmra.mrb[0].mxu0 %v466
    %v3354 = vpop.f32.mrb[0].mxu0
    %v3355 = vadd.f32 0.0, %v3354
    %v3356 = vpop.f32.mrb[0].mxu0
    %v3357 = vadd.f32 0.0, %v3356
    %v3358 = vpop.f32.mrb[0].mxu0
    %v3359 = vadd.f32 0.0, %v3358
    %v3360 = vpop.f32.mrb[0].mxu0
    %v3361 = vadd.f32 0.0, %v3360
    %3362 = vmatprep.mubr.bf16.mxu0 0
    %3363 = vmatmul.mubr.bf16.gmra.mrb[0].mxu0 %v469
    %v3364 = vpop.f32.mrb[0].mxu0
    %v3365 = vadd.f32 0.0, %v3364
    %v3366 = vpop.f32.mrb[0].mxu0
    %v3367 = vadd.f32 0.0, %v3366
    %v3368 = vpop.f32.mrb[0].mxu0
    %v3369 = vadd.f32 0.0, %v3368
    %v3370 = vpop.f32.mrb[0].mxu0
    %v3371 = vadd.f32 0.0, %v3370
    %3372 = vmatprep.mubr.bf16.mxu0 0
    %3373 = vmatmul.mubr.bf16.gmra.mrb[0].mxu0 %v472
    %v3374 = vpop.f32.mrb[0].mxu0
    %v3375 = vadd.f32 0.0, %v3374
    %v3376 = vpop.f32.mrb[0].mxu0
    %v3377 = vadd.f32 0.0, %v3376
    %v3378 = vpop.f32.mrb[0].mxu0
    %v3379 = vadd.f32 0.0, %v3378
    %v3380 = vpop.f32.mrb[0].mxu0
    %v3381 = vadd.f32 0.0, %v3380
    %3382 = vmatprep.mubr.bf16.mxu0 0
    %3383 = vmatmul.mubr.bf16.gmra.mrb[0].mxu0 %v475
    %v3384 = vpop.f32.mrb[0].mxu0
    %v3385 = vadd.f32 0.0, %v3384
    %v3386 = vpop.f32.mrb[0].mxu0
    %v3387 = vadd.f32 0.0, %v3386
    %v3388 = vpop.f32.mrb[0].mxu0
    %v3389 = vadd.f32 0.0, %v3388
    %v3390 = vpop.f32.mrb[0].mxu0
    %v3391 = vadd.f32 0.0, %v3390
    %3392 = vmatprep.mubr.bf16.mxu0 0
    %3393 = vmatmul.mubr.bf16.gmra.mrb[0].mxu0 %v478
    %v3394 = vpop.f32.mrb[0].mxu0
    %v3395 = vadd.f32 0.0, %v3394
    %v3396 = vpop.f32.mrb[0].mxu0
    %v3397 = vadd.f32 0.0, %v3396
    %v3398 = vpop.f32.mrb[0].mxu0
    %v3399 = vadd.f32 0.0, %v3398
    %v3400 = vpop.f32.mrb[0].mxu0
    %v3401 = vadd.f32 0.0, %v3400
    %3402 = vmatprep.mubr.bf16.mxu0 0
    %3403 = vmatmul.mubr.bf16.gmra.mrb[0].mxu0 %v481
    %v3404 = vpop.f32.mrb[0].mxu0
    %v3405 = vadd.f32 0.0, %v3404
    %v3406 = vpop.f32.mrb[0].mxu0
    %v3407 = vadd.f32 0.0, %v3406
    %v3408 = vpop.f32.mrb[0].mxu0
    %v3409 = vadd.f32 0.0, %v3408
    %v3410 = vpop.f32.mrb[0].mxu0
    %v3411 = vadd.f32 0.0, %v3410
    %3412 = vmatprep.mubr.bf16.mxu0 0
    %3413 = vmatmul.mubr.bf16.gmra.mrb[0].mxu0 %v484
    %v3414 = vpop.f32.mrb[0].mxu0
    %v3415 = vadd.f32 0.0, %v3414
    %v3416 = vpop.f32.mrb[0].mxu0
    %v3417 = vadd.f32 0.0, %v3416
    %v3418 = vpop.f32.mrb[0].mxu0
    %v3419 = vadd.f32 0.0, %v3418
    %v3420 = vpop.f32.mrb[0].mxu0
    %v3421 = vadd.f32 0.0, %v3420
    %3422 = vmatprep.mubr.bf16.mxu0 0
    %3423 = vmatmul.mubr.bf16.gmra.mrb[0].mxu0 %v487
    %v3424 = vpop.f32.mrb[0].mxu0
    %v3425 = vadd.f32 0.0, %v3424
    %v3426 = vpop.f32.mrb[0].mxu0
    %v3427 = vadd.f32 0.0, %v3426
    %v3428 = vpop.f32.mrb[0].mxu0
    %v3429 = vadd.f32 0.0, %v3428
    %v3430 = vpop.f32.mrb[0].mxu0
    %v3431 = vadd.f32 0.0, %v3430
    %3432 = vmatprep.mubr.bf16.mxu0 0
    %3433 = vmatmul.mubr.bf16.gmra.mrb[0].mxu0 %v490
    %v3434 = vpop.f32.mrb[0].mxu0
    %v3435 = vadd.f32 0.0, %v3434
    %v3436 = vpop.f32.mrb[0].mxu0
    %v3437 = vadd.f32 0.0, %v3436
    %v3438 = vpop.f32.mrb[0].mxu0
    %v3439 = vadd.f32 0.0, %v3438
    %v3440 = vpop.f32.mrb[0].mxu0
    %v3441 = vadd.f32 0.0, %v3440
    %3442 = vmatprep.mubr.bf16.mxu0 0
    %3443 = vmatmul.mubr.bf16.gmra.mrb[0].mxu0 %v493
    %v3444 = vpop.f32.mrb[0].mxu0
    %v3445 = vadd.f32 0.0, %v3444
    %v3446 = vpop.f32.mrb[0].mxu0
    %v3447 = vadd.f32 0.0, %v3446
    %v3448 = vpop.f32.mrb[0].mxu0
    %v3449 = vadd.f32 0.0, %v3448
    %v3450 = vpop.f32.mrb[0].mxu0
    %v3451 = vadd.f32 0.0, %v3450
    %3452 = vmatprep.mubr.bf16.mxu0 0
    %3453 = vmatmul.mubr.bf16.gmra.mrb[0].mxu0 %v496
    %v3454 = vpop.f32.mrb[0].mxu0
    %v3455 = vadd.f32 0.0, %v3454
    %v3456 = vpop.f32.mrb[0].mxu0
    %v3457 = vadd.f32 0.0, %v3456
    %v3458 = vpop.f32.mrb[0].mxu0
    %v3459 = vadd.f32 0.0, %v3458
    %v3460 = vpop.f32.mrb[0].mxu0
    %v3461 = vadd.f32 0.0, %v3460
    %3462 = vdwg.mxu0
    %3463 = vmatprep.subr.bf16.mxu0 0
    %3464 = vmatpush1.bf16.msra.mxu0 %v3108
    %3465 = vmatprep.subr.bf16.mxu0 0
    %3466 = vmatpush1.bf16.msra.mxu0 0
    %3467 = vmatprep.subr.bf16.mxu0 0
    %3468 = vmatpush1.bf16.msra.mxu0 0
    %3469 = vmatprep.subr.bf16.mxu0 0
    %3470 = vmatpush1.bf16.msra.mxu0 0
    %3471 = vmatprep.subr.bf16.mxu0 0
    %3472 = vmatpush1.bf16.msra.mxu0 0
    %3473 = vmatprep.subr.bf16.mxu0 0
    %3474 = vmatpush1.bf16.msra.mxu0 0
    %3475 = vmatprep.subr.bf16.mxu0 0
    %3476 = vmatpush1.bf16.msra.mxu0 0
    %3477 = vmatprep.subr.bf16.mxu0 0
    %3478 = vmatpush1.bf16.msra.mxu0 0
    %3479 = vmatprep.subr.bf16.mxu0 0
    %3480 = vmatpush1.bf16.msra.mxu0 0
    %3481 = vmatprep.subr.bf16.mxu0 0
    %3482 = vmatpush1.bf16.msra.mxu0 0
    %3483 = vmatprep.subr.bf16.mxu0 0
    %3484 = vmatpush1.bf16.msra.mxu0 0
    %3485 = vmatprep.subr.bf16.mxu0 0
    %3486 = vmatpush1.bf16.msra.mxu0 0
    %3487 = vmatprep.subr.bf16.mxu0 0
    %3488 = vmatpush1.bf16.msra.mxu0 0
    %3489 = vmatprep.subr.bf16.mxu0 0
    %3490 = vmatpush1.bf16.msra.mxu0 0
    %3491 = vmatprep.subr.bf16.mxu0 0
    %3492 = vmatpush1.bf16.msra.mxu0 0
    %3493 = vmatprep.subr.bf16.mxu0 0
    %3494 = vmatpush1.bf16.msra.mxu0 0
    %3495 = vmatprep.mubr.bf16.mxu0 0
    %3496 = vmatmul.mubr.bf16.gmra.mrb[0].mxu0 %v403
    %v3497 = vpop.f32.mrb[0].mxu0
    %v3498 = vadd.f32 0.0, %v3497
    %v3499 = vpop.f32.mrb[0].mxu0
    %v3500 = vpop.f32.mrb[0].mxu0
    %v3501 = vadd.f32 0.0, %v3500
    %v3502 = vpop.f32.mrb[0].mxu0
    %3503 = vmatprep.mubr.bf16.mxu0 0
    %3504 = vmatmul.mubr.bf16.gmra.mrb[0].mxu0 %v406
    %v3505 = vpop.f32.mrb[0].mxu0
    %v3506 = vadd.f32 0.0, %v3505
    %v3507 = vpop.f32.mrb[0].mxu0
    %v3508 = vpop.f32.mrb[0].mxu0
    %v3509 = vadd.f32 0.0, %v3508
    %v3510 = vpop.f32.mrb[0].mxu0
    %3511 = vmatprep.mubr.bf16.mxu0 0
    %3512 = vmatmul.mubr.bf16.gmra.mrb[0].mxu0 %v409
    %v3513 = vpop.f32.mrb[0].mxu0
    %v3514 = vadd.f32 0.0, %v3513
    %v3515 = vpop.f32.mrb[0].mxu0
    %v3516 = vpop.f32.mrb[0].mxu0
    %v3517 = vadd.f32 0.0, %v3516
    %v3518 = vpop.f32.mrb[0].mxu0
    %3519 = vmatprep.mubr.bf16.mxu0 0
    %3520 = vmatmul.mubr.bf16.gmra.mrb[0].mxu0 %v412
    %v3521 = vpop.f32.mrb[0].mxu0
    %v3522 = vadd.f32 0.0, %v3521
    %v3523 = vpop.f32.mrb[0].mxu0
    %v3524 = vpop.f32.mrb[0].mxu0
    %v3525 = vadd.f32 0.0, %v3524
    %v3526 = vpop.f32.mrb[0].mxu0
    %3527 = vmatprep.mubr.bf16.mxu0 0
    %3528 = vmatmul.mubr.bf16.gmra.mrb[0].mxu0 %v415
    %v3529 = vpop.f32.mrb[0].mxu0
    %v3530 = vadd.f32 0.0, %v3529
    %v3531 = vpop.f32.mrb[0].mxu0
    %v3532 = vpop.f32.mrb[0].mxu0
    %v3533 = vadd.f32 0.0, %v3532
    %v3534 = vpop.f32.mrb[0].mxu0
    %3535 = vmatprep.mubr.bf16.mxu0 0
    %3536 = vmatmul.mubr.bf16.gmra.mrb[0].mxu0 %v418
    %v3537 = vpop.f32.mrb[0].mxu0
    %v3538 = vadd.f32 0.0, %v3537
    %v3539 = vpop.f32.mrb[0].mxu0
    %v3540 = vpop.f32.mrb[0].mxu0
    %v3541 = vadd.f32 0.0, %v3540
    %v3542 = vpop.f32.mrb[0].mxu0
    %3543 = vmatprep.mubr.bf16.mxu0 0
    %3544 = vmatmul.mubr.bf16.gmra.mrb[0].mxu0 %v421
    %v3545 = vpop.f32.mrb[0].mxu0
    %v3546 = vadd.f32 0.0, %v3545
    %v3547 = vpop.f32.mrb[0].mxu0
    %v3548 = vpop.f32.mrb[0].mxu0
    %v3549 = vadd.f32 0.0, %v3548
    %v3550 = vpop.f32.mrb[0].mxu0
    %3551 = vmatprep.mubr.bf16.mxu0 0
    %3552 = vmatmul.mubr.bf16.gmra.mrb[0].mxu0 %v424
    %v3553 = vpop.f32.mrb[0].mxu0
    %v3554 = vadd.f32 0.0, %v3553
    %v3555 = vpop.f32.mrb[0].mxu0
    %v3556 = vpop.f32.mrb[0].mxu0
    %v3557 = vadd.f32 0.0, %v3556
    %v3558 = vpop.f32.mrb[0].mxu0
    %3559 = vmatprep.mubr.bf16.mxu0 0
    %3560 = vmatmul.mubr.bf16.gmra.mrb[0].mxu0 %v427
    %v3561 = vpop.f32.mrb[0].mxu0
    %v3562 = vadd.f32 0.0, %v3561
    %v3563 = vpop.f32.mrb[0].mxu0
    %v3564 = vpop.f32.mrb[0].mxu0
    %v3565 = vadd.f32 0.0, %v3564
    %v3566 = vpop.f32.mrb[0].mxu0
    %3567 = vmatprep.mubr.bf16.mxu0 0
    %3568 = vmatmul.mubr.bf16.gmra.mrb[0].mxu0 %v430
    %v3569 = vpop.f32.mrb[0].mxu0
    %v3570 = vadd.f32 0.0, %v3569
    %v3571 = vpop.f32.mrb[0].mxu0
    %v3572 = vpop.f32.mrb[0].mxu0
    %v3573 = vadd.f32 0.0, %v3572
    %v3574 = vpop.f32.mrb[0].mxu0
    %3575 = vmatprep.mubr.bf16.mxu0 0
    %3576 = vmatmul.mubr.bf16.gmra.mrb[0].mxu0 %v433
    %v3577 = vpop.f32.mrb[0].mxu0
    %v3578 = vadd.f32 0.0, %v3577
    %v3579 = vpop.f32.mrb[0].mxu0
    %v3580 = vpop.f32.mrb[0].mxu0
    %v3581 = vadd.f32 0.0, %v3580
    %v3582 = vpop.f32.mrb[0].mxu0
    %3583 = vmatprep.mubr.bf16.mxu0 0
    %3584 = vmatmul.mubr.bf16.gmra.mrb[0].mxu0 %v436
    %v3585 = vpop.f32.mrb[0].mxu0
    %v3586 = vadd.f32 0.0, %v3585
    %v3587 = vpop.f32.mrb[0].mxu0
    %v3588 = vpop.f32.mrb[0].mxu0
    %v3589 = vadd.f32 0.0, %v3588
    %v3590 = vpop.f32.mrb[0].mxu0
    %3591 = vmatprep.mubr.bf16.mxu0 0
    %3592 = vmatmul.mubr.bf16.gmra.mrb[0].mxu0 %v439
    %v3593 = vpop.f32.mrb[0].mxu0
    %v3594 = vadd.f32 0.0, %v3593
    %v3595 = vpop.f32.mrb[0].mxu0
    %v3596 = vpop.f32.mrb[0].mxu0
    %v3597 = vadd.f32 0.0, %v3596
    %v3598 = vpop.f32.mrb[0].mxu0
    %3599 = vmatprep.mubr.bf16.mxu0 0
    %3600 = vmatmul.mubr.bf16.gmra.mrb[0].mxu0 %v442
    %v3601 = vpop.f32.mrb[0].mxu0
    %v3602 = vadd.f32 0.0, %v3601
    %v3603 = vpop.f32.mrb[0].mxu0
    %v3604 = vpop.f32.mrb[0].mxu0
    %v3605 = vadd.f32 0.0, %v3604
    %v3606 = vpop.f32.mrb[0].mxu0
    %3607 = vmatprep.mubr.bf16.mxu0 0
    %3608 = vmatmul.mubr.bf16.gmra.mrb[0].mxu0 %v445
    %v3609 = vpop.f32.mrb[0].mxu0
    %v3610 = vadd.f32 0.0, %v3609
    %v3611 = vpop.f32.mrb[0].mxu0
    %v3612 = vpop.f32.mrb[0].mxu0
    %v3613 = vadd.f32 0.0, %v3612
    %v3614 = vpop.f32.mrb[0].mxu0
    %3615 = vmatprep.mubr.bf16.mxu0 0
    %3616 = vmatmul.mubr.bf16.gmra.mrb[0].mxu0 %v448
    %v3617 = vpop.f32.mrb[0].mxu0
    %v3618 = vadd.f32 0.0, %v3617
    %v3619 = vpop.f32.mrb[0].mxu0
    %v3620 = vpop.f32.mrb[0].mxu0
    %v3621 = vadd.f32 0.0, %v3620
    %v3622 = vpop.f32.mrb[0].mxu0
    %3623 = vmatprep.mubr.bf16.mxu0 0
    %3624 = vmatmul.mubr.bf16.gmra.mrb[0].mxu0 %v451
    %v3625 = vpop.f32.mrb[0].mxu0
    %v3626 = vadd.f32 0.0, %v3625
    %v3627 = vpop.f32.mrb[0].mxu0
    %v3628 = vpop.f32.mrb[0].mxu0
    %v3629 = vadd.f32 0.0, %v3628
    %v3630 = vpop.f32.mrb[0].mxu0
    %3631 = vmatprep.mubr.bf16.mxu0 0
    %3632 = vmatmul.mubr.bf16.gmra.mrb[0].mxu0 %v454
    %v3633 = vpop.f32.mrb[0].mxu0
    %v3634 = vadd.f32 0.0, %v3633
    %v3635 = vpop.f32.mrb[0].mxu0
    %v3636 = vpop.f32.mrb[0].mxu0
    %v3637 = vadd.f32 0.0, %v3636
    %v3638 = vpop.f32.mrb[0].mxu0
    %3639 = vmatprep.mubr.bf16.mxu0 0
    %3640 = vmatmul.mubr.bf16.gmra.mrb[0].mxu0 %v457
    %v3641 = vpop.f32.mrb[0].mxu0
    %v3642 = vadd.f32 0.0, %v3641
    %v3643 = vpop.f32.mrb[0].mxu0
    %v3644 = vpop.f32.mrb[0].mxu0
    %v3645 = vadd.f32 0.0, %v3644
    %v3646 = vpop.f32.mrb[0].mxu0
    %3647 = vmatprep.mubr.bf16.mxu0 0
    %3648 = vmatmul.mubr.bf16.gmra.mrb[0].mxu0 %v460
    %v3649 = vpop.f32.mrb[0].mxu0
    %v3650 = vadd.f32 0.0, %v3649
    %v3651 = vpop.f32.mrb[0].mxu0
    %v3652 = vpop.f32.mrb[0].mxu0
    %v3653 = vadd.f32 0.0, %v3652
    %v3654 = vpop.f32.mrb[0].mxu0
    %3655 = vmatprep.mubr.bf16.mxu0 0
    %3656 = vmatmul.mubr.bf16.gmra.mrb[0].mxu0 %v463
    %v3657 = vpop.f32.mrb[0].mxu0
    %v3658 = vadd.f32 0.0, %v3657
    %v3659 = vpop.f32.mrb[0].mxu0
    %v3660 = vpop.f32.mrb[0].mxu0
    %v3661 = vadd.f32 0.0, %v3660
    %v3662 = vpop.f32.mrb[0].mxu0
    %3663 = vmatprep.mubr.bf16.mxu0 0
    %3664 = vmatmul.mubr.bf16.gmra.mrb[0].mxu0 %v466
    %v3665 = vpop.f32.mrb[0].mxu0
    %v3666 = vadd.f32 0.0, %v3665
    %v3667 = vpop.f32.mrb[0].mxu0
    %v3668 = vpop.f32.mrb[0].mxu0
    %v3669 = vadd.f32 0.0, %v3668
    %v3670 = vpop.f32.mrb[0].mxu0
    %3671 = vmatprep.mubr.bf16.mxu0 0
    %3672 = vmatmul.mubr.bf16.gmra.mrb[0].mxu0 %v469
    %v3673 = vpop.f32.mrb[0].mxu0
    %v3674 = vadd.f32 0.0, %v3673
    %v3675 = vpop.f32.mrb[0].mxu0
    %v3676 = vpop.f32.mrb[0].mxu0
    %v3677 = vadd.f32 0.0, %v3676
    %v3678 = vpop.f32.mrb[0].mxu0
    %3679 = vmatprep.mubr.bf16.mxu0 0
    %3680 = vmatmul.mubr.bf16.gmra.mrb[0].mxu0 %v472
    %v3681 = vpop.f32.mrb[0].mxu0
    %v3682 = vadd.f32 0.0, %v3681
    %v3683 = vpop.f32.mrb[0].mxu0
    %v3684 = vpop.f32.mrb[0].mxu0
    %v3685 = vadd.f32 0.0, %v3684
    %v3686 = vpop.f32.mrb[0].mxu0
    %3687 = vmatprep.mubr.bf16.mxu0 0
    %3688 = vmatmul.mubr.bf16.gmra.mrb[0].mxu0 %v475
    %v3689 = vpop.f32.mrb[0].mxu0
    %v3690 = vadd.f32 0.0, %v3689
    %v3691 = vpop.f32.mrb[0].mxu0
    %v3692 = vpop.f32.mrb[0].mxu0
    %v3693 = vadd.f32 0.0, %v3692
    %v3694 = vpop.f32.mrb[0].mxu0
    %3695 = vmatprep.mubr.bf16.mxu0 0
    %3696 = vmatmul.mubr.bf16.gmra.mrb[0].mxu0 %v478
    %v3697 = vpop.f32.mrb[0].mxu0
    %v3698 = vadd.f32 0.0, %v3697
    %v3699 = vpop.f32.mrb[0].mxu0
    %v3700 = vpop.f32.mrb[0].mxu0
    %v3701 = vadd.f32 0.0, %v3700
    %v3702 = vpop.f32.mrb[0].mxu0
    %3703 = vmatprep.mubr.bf16.mxu0 0
    %3704 = vmatmul.mubr.bf16.gmra.mrb[0].mxu0 %v481
    %v3705 = vpop.f32.mrb[0].mxu0
    %v3706 = vadd.f32 0.0, %v3705
    %v3707 = vpop.f32.mrb[0].mxu0
    %v3708 = vpop.f32.mrb[0].mxu0
    %v3709 = vadd.f32 0.0, %v3708
    %v3710 = vpop.f32.mrb[0].mxu0
    %3711 = vmatprep.mubr.bf16.mxu0 0
    %3712 = vmatmul.mubr.bf16.gmra.mrb[0].mxu0 %v484
    %v3713 = vpop.f32.mrb[0].mxu0
    %v3714 = vadd.f32 0.0, %v3713
    %v3715 = vpop.f32.mrb[0].mxu0
    %v3716 = vpop.f32.mrb[0].mxu0
    %v3717 = vadd.f32 0.0, %v3716
    %v3718 = vpop.f32.mrb[0].mxu0
    %3719 = vmatprep.mubr.bf16.mxu0 0
    %3720 = vmatmul.mubr.bf16.gmra.mrb[0].mxu0 %v487
    %v3721 = vpop.f32.mrb[0].mxu0
    %v3722 = vadd.f32 0.0, %v3721
    %v3723 = vpop.f32.mrb[0].mxu0
    %v3724 = vpop.f32.mrb[0].mxu0
    %v3725 = vadd.f32 0.0, %v3724
    %v3726 = vpop.f32.mrb[0].mxu0
    %3727 = vmatprep.mubr.bf16.mxu0 0
    %3728 = vmatmul.mubr.bf16.gmra.mrb[0].mxu0 %v490
    %v3729 = vpop.f32.mrb[0].mxu0
    %v3730 = vadd.f32 0.0, %v3729
    %v3731 = vpop.f32.mrb[0].mxu0
    %v3732 = vpop.f32.mrb[0].mxu0
    %v3733 = vadd.f32 0.0, %v3732
    %v3734 = vpop.f32.mrb[0].mxu0
    %3735 = vmatprep.mubr.bf16.mxu0 0
    %3736 = vmatmul.mubr.bf16.gmra.mrb[0].mxu0 %v493
    %v3737 = vpop.f32.mrb[0].mxu0
    %v3738 = vadd.f32 0.0, %v3737
    %v3739 = vpop.f32.mrb[0].mxu0
    %v3740 = vpop.f32.mrb[0].mxu0
    %v3741 = vadd.f32 0.0, %v3740
    %v3742 = vpop.f32.mrb[0].mxu0
    %3743 = vmatprep.mubr.bf16.mxu0 0
    %3744 = vmatmul.mubr.bf16.gmra.mrb[0].mxu0 %v496
    %v3745 = vpop.f32.mrb[0].mxu0
    %v3746 = vadd.f32 0.0, %v3745
    %v3747 = vpop.f32.mrb[0].mxu0
    %v3748 = vpop.f32.mrb[0].mxu0
    %v3749 = vadd.f32 0.0, %v3748
    %v3750 = vpop.f32.mrb[0].mxu0
    %3751 = vdwg.mxu0
    %v3752 = vld [vmem:[#allocation13] sm:$0x7]
    %v3753 = vld [vmem:[#allocation14] sm:$0x7]
    %v3754 = vadd.f32 %v3145, %v3149
    %v3755 = vadd.f32 %v3754, %v3155
    %v3756 = vadd.f32 %v3755, %v3159
    %v3757 = vadd.f32 %v3756, %v3165
    %v3758 = vadd.f32 %v3757, %v3169
    %v3759 = vadd.f32 %v3758, %v3175
    %v3760 = vadd.f32 %v3759, %v3179
    %v3761 = vadd.f32 %v3760, %v3185
    %v3762 = vadd.f32 %v3761, %v3189
    %v3763 = vadd.f32 %v3762, %v3195
    %v3764 = vadd.f32 %v3763, %v3199
    %v3765 = vadd.f32 %v3764, %v3205
    %v3766 = vadd.f32 %v3765, %v3209
    %v3767 = vadd.f32 %v3766, %v3215
    %v3768 = vadd.f32 %v3767, %v3219
    %v3769 = vadd.f32 %v3768, %v3225
    %v3770 = vadd.f32 %v3769, %v3229
    %v3771 = vadd.f32 %v3770, %v3235
    %v3772 = vadd.f32 %v3771, %v3239
    %v3773 = vadd.f32 %v3772, %v3245
    %v3774 = vadd.f32 %v3773, %v3249
    %v3775 = vadd.f32 %v3774, %v3255
    %v3776 = vadd.f32 %v3775, %v3259
    %v3777 = vadd.f32 %v3776, %v3265
    %v3778 = vadd.f32 %v3777, %v3269
    %v3779 = vadd.f32 %v3778, %v3275
    %v3780 = vadd.f32 %v3779, %v3279
    %v3781 = vadd.f32 %v3780, %v3285
    %v3782 = vadd.f32 %v3781, %v3289
    %v3783 = vadd.f32 %v3782, %v3295
    %v3784 = vadd.f32 %v3783, %v3299
    %v3785 = vadd.f32 %v3784, %v3305
    %v3786 = vadd.f32 %v3785, %v3309
    %v3787 = vadd.f32 %v3786, %v3315
    %v3788 = vadd.f32 %v3787, %v3319
    %v3789 = vadd.f32 %v3788, %v3325
    %v3790 = vadd.f32 %v3789, %v3329
    %v3791 = vadd.f32 %v3790, %v3335
    %v3792 = vadd.f32 %v3791, %v3339
    %v3793 = vadd.f32 %v3792, %v3345
    %v3794 = vadd.f32 %v3793, %v3349
    %v3795 = vadd.f32 %v3794, %v3355
    %v3796 = vadd.f32 %v3795, %v3359
    %v3797 = vadd.f32 %v3796, %v3365
    %v3798 = vadd.f32 %v3797, %v3369
    %v3799 = vadd.f32 %v3798, %v3375
    %v3800 = vadd.f32 %v3799, %v3379
    %v3801 = vadd.f32 %v3800, %v3385
    %v3802 = vadd.f32 %v3801, %v3389
    %v3803 = vadd.f32 %v3802, %v3395
    %v3804 = vadd.f32 %v3803, %v3399
    %v3805 = vadd.f32 %v3804, %v3405
    %v3806 = vadd.f32 %v3805, %v3409
    %v3807 = vadd.f32 %v3806, %v3415
    %v3808 = vadd.f32 %v3807, %v3419
    %v3809 = vadd.f32 %v3808, %v3425
    %v3810 = vadd.f32 %v3809, %v3429
    %v3811 = vadd.f32 %v3810, %v3435
    %v3812 = vadd.f32 %v3811, %v3439
    %v3813 = vadd.f32 %v3812, %v3445
    %v3814 = vadd.f32 %v3813, %v3449
    %v3815 = vadd.f32 %v3814, %v3455
    %v3816 = vadd.f32 %v3815, %v3459
    %v3817 = vrot.slane %v3816, 4
    %v3818 = vadd.f32 %v3816, %v3817
    %v3819 = vrot.slane %v3818, 2
    %v3820 = vadd.f32 %v3818, %v3819
    %v3821 = vrot.slane %v3820, 1
    %v3822 = vadd.f32 %v3820, %v3821
    %v3823 = vadd.f32 %v3147, %v3151
    %v3824 = vadd.f32 %v3823, %v3157
    %v3825 = vadd.f32 %v3824, %v3161
    %v3826 = vadd.f32 %v3825, %v3167
    %v3827 = vadd.f32 %v3826, %v3171
    %v3828 = vadd.f32 %v3827, %v3177
    %v3829 = vadd.f32 %v3828, %v3181
    %v3830 = vadd.f32 %v3829, %v3187
    %v3831 = vadd.f32 %v3830, %v3191
    %v3832 = vadd.f32 %v3831, %v3197
    %v3833 = vadd.f32 %v3832, %v3201
    %v3834 = vadd.f32 %v3833, %v3207
    %v3835 = vadd.f32 %v3834, %v3211
    %v3836 = vadd.f32 %v3835, %v3217
    %v3837 = vadd.f32 %v3836, %v3221
    %v3838 = vadd.f32 %v3837, %v3227
    %v3839 = vadd.f32 %v3838, %v3231
    %v3840 = vadd.f32 %v3839, %v3237
    %v3841 = vadd.f32 %v3840, %v3241
    %v3842 = vadd.f32 %v3841, %v3247
    %v3843 = vadd.f32 %v3842, %v3251
    %v3844 = vadd.f32 %v3843, %v3257
    %v3845 = vadd.f32 %v3844, %v3261
    %v3846 = vadd.f32 %v3845, %v3267
    %v3847 = vadd.f32 %v3846, %v3271
    %v3848 = vadd.f32 %v3847, %v3277
    %v3849 = vadd.f32 %v3848, %v3281
    %v3850 = vadd.f32 %v3849, %v3287
    %v3851 = vadd.f32 %v3850, %v3291
    %v3852 = vadd.f32 %v3851, %v3297
    %v3853 = vadd.f32 %v3852, %v3301
    %v3854 = vadd.f32 %v3853, %v3307
    %v3855 = vadd.f32 %v3854, %v3311
    %v3856 = vadd.f32 %v3855, %v3317
    %v3857 = vadd.f32 %v3856, %v3321
    %v3858 = vadd.f32 %v3857, %v3327
    %v3859 = vadd.f32 %v3858, %v3331
    %v3860 = vadd.f32 %v3859, %v3337
    %v3861 = vadd.f32 %v3860, %v3341
    %v3862 = vadd.f32 %v3861, %v3347
    %v3863 = vadd.f32 %v3862, %v3351
    %v3864 = vadd.f32 %v3863, %v3357
    %v3865 = vadd.f32 %v3864, %v3361
    %v3866 = vadd.f32 %v3865, %v3367
    %v3867 = vadd.f32 %v3866, %v3371
    %v3868 = vadd.f32 %v3867, %v3377
    %v3869 = vadd.f32 %v3868, %v3381
    %v3870 = vadd.f32 %v3869, %v3387
    %v3871 = vadd.f32 %v3870, %v3391
    %v3872 = vadd.f32 %v3871, %v3397
    %v3873 = vadd.f32 %v3872, %v3401
    %v3874 = vadd.f32 %v3873, %v3407
    %v3875 = vadd.f32 %v3874, %v3411
    %v3876 = vadd.f32 %v3875, %v3417
    %v3877 = vadd.f32 %v3876, %v3421
    %v3878 = vadd.f32 %v3877, %v3427
    %v3879 = vadd.f32 %v3878, %v3431
    %v3880 = vadd.f32 %v3879, %v3437
    %v3881 = vadd.f32 %v3880, %v3441
    %v3882 = vadd.f32 %v3881, %v3447
    %v3883 = vadd.f32 %v3882, %v3451
    %v3884 = vadd.f32 %v3883, %v3457
    %v3885 = vadd.f32 %v3884, %v3461
    %v3886 = vrot.slane %v3885, 4
    %v3887 = vadd.f32 %v3885, %v3886
    %v3888 = vrot.slane %v3887, 2
    %v3889 = vadd.f32 %v3887, %v3888
    %v3890 = vrot.slane %v3889, 1
    %v3891 = vadd.f32 %v3889, %v3890
    %v3892 = vadd.f32 %v3498, %v3501
    %v3893 = vadd.f32 %v3892, %v3506
    %v3894 = vadd.f32 %v3893, %v3509
    %v3895 = vadd.f32 %v3894, %v3514
    %v3896 = vadd.f32 %v3895, %v3517
    %v3897 = vadd.f32 %v3896, %v3522
    %v3898 = vadd.f32 %v3897, %v3525
    %v3899 = vadd.f32 %v3898, %v3530
    %v3900 = vadd.f32 %v3899, %v3533
    %v3901 = vadd.f32 %v3900, %v3538
    %v3902 = vadd.f32 %v3901, %v3541
    %v3903 = vadd.f32 %v3902, %v3546
    %v3904 = vadd.f32 %v3903, %v3549
    %v3905 = vadd.f32 %v3904, %v3554
    %v3906 = vadd.f32 %v3905, %v3557
    %v3907 = vadd.f32 %v3906, %v3562
    %v3908 = vadd.f32 %v3907, %v3565
    %v3909 = vadd.f32 %v3908, %v3570
    %v3910 = vadd.f32 %v3909, %v3573
    %v3911 = vadd.f32 %v3910, %v3578
    %v3912 = vadd.f32 %v3911, %v3581
    %v3913 = vadd.f32 %v3912, %v3586
    %v3914 = vadd.f32 %v3913, %v3589
    %v3915 = vadd.f32 %v3914, %v3594
    %v3916 = vadd.f32 %v3915, %v3597
    %v3917 = vadd.f32 %v3916, %v3602
    %v3918 = vadd.f32 %v3917, %v3605
    %v3919 = vadd.f32 %v3918, %v3610
    %v3920 = vadd.f32 %v3919, %v3613
    %v3921 = vadd.f32 %v3920, %v3618
    %v3922 = vadd.f32 %v3921, %v3621
    %v3923 = vadd.f32 %v3922, %v3626
    %v3924 = vadd.f32 %v3923, %v3629
    %v3925 = vadd.f32 %v3924, %v3634
    %v3926 = vadd.f32 %v3925, %v3637
    %v3927 = vadd.f32 %v3926, %v3642
    %v3928 = vadd.f32 %v3927, %v3645
    %v3929 = vadd.f32 %v3928, %v3650
    %v3930 = vadd.f32 %v3929, %v3653
    %v3931 = vadd.f32 %v3930, %v3658
    %v3932 = vadd.f32 %v3931, %v3661
    %v3933 = vadd.f32 %v3932, %v3666
    %v3934 = vadd.f32 %v3933, %v3669
    %v3935 = vadd.f32 %v3934, %v3674
    %v3936 = vadd.f32 %v3935, %v3677
    %v3937 = vadd.f32 %v3936, %v3682
    %v3938 = vadd.f32 %v3937, %v3685
    %v3939 = vadd.f32 %v3938, %v3690
    %v3940 = vadd.f32 %v3939, %v3693
    %v3941 = vadd.f32 %v3940, %v3698
    %v3942 = vadd.f32 %v3941, %v3701
    %v3943 = vadd.f32 %v3942, %v3706
    %v3944 = vadd.f32 %v3943, %v3709
    %v3945 = vadd.f32 %v3944, %v3714
    %v3946 = vadd.f32 %v3945, %v3717
    %v3947 = vadd.f32 %v3946, %v3722
    %v3948 = vadd.f32 %v3947, %v3725
    %v3949 = vadd.f32 %v3948, %v3730
    %v3950 = vadd.f32 %v3949, %v3733
    %v3951 = vadd.f32 %v3950, %v3738
    %v3952 = vadd.f32 %v3951, %v3741
    %v3953 = vadd.f32 %v3952, %v3746
    %v3954 = vadd.f32 %v3953, %v3749
    %v3955 = vrot.slane %v3954, 4
    %v3956 = vadd.f32 %v3954, %v3955
    %v3957 = vrot.slane %v3956, 2
    %v3958 = vadd.f32 %v3956, %v3957
    %v3959 = vrot.slane %v3958, 1
    %v3960 = vadd.f32 %v3958, %v3959
    %v3961 = vmul.f32 %v3822, 0.001953125
    %v3962 = vmul.f32 %v3891, 0.001953125
    %v3963 = vmul.f32 %v3960, 0.001953125
    %v3964 = vsub.f32 %v3145, %v3961
    %v3965 = vsub.f32 %v3147, %v3962
    %v3966 = vsub.f32 %v3498, %v3963
    %v3967 = vsub.f32 %v3149, %v3961
    %v3968 = vsub.f32 %v3151, %v3962
    %v3969 = vsub.f32 %v3501, %v3963
    %v3970 = vsub.f32 %v3155, %v3961
    %v3971 = vsub.f32 %v3157, %v3962
    %v3972 = vsub.f32 %v3506, %v3963
    %v3973 = vsub.f32 %v3159, %v3961
    %v3974 = vsub.f32 %v3161, %v3962
    %v3975 = vsub.f32 %v3509, %v3963
    %v3976 = vsub.f32 %v3165, %v3961
    %v3977 = vsub.f32 %v3167, %v3962
    %v3978 = vsub.f32 %v3514, %v3963
    %v3979 = vsub.f32 %v3169, %v3961
    %v3980 = vsub.f32 %v3171, %v3962
    %v3981 = vsub.f32 %v3517, %v3963
    %v3982 = vsub.f32 %v3175, %v3961
    %v3983 = vsub.f32 %v3177, %v3962
    %v3984 = vsub.f32 %v3522, %v3963
    %v3985 = vsub.f32 %v3179, %v3961
    %v3986 = vsub.f32 %v3181, %v3962
    %v3987 = vsub.f32 %v3525, %v3963
    %v3988 = vsub.f32 %v3185, %v3961
    %v3989 = vsub.f32 %v3187, %v3962
    %v3990 = vsub.f32 %v3530, %v3963
    %v3991 = vsub.f32 %v3189, %v3961
    %v3992 = vsub.f32 %v3191, %v3962
    %v3993 = vsub.f32 %v3533, %v3963
    %v3994 = vsub.f32 %v3195, %v3961
    %v3995 = vsub.f32 %v3197, %v3962
    %v3996 = vsub.f32 %v3538, %v3963
    %v3997 = vsub.f32 %v3199, %v3961
    %v3998 = vsub.f32 %v3201, %v3962
    %v3999 = vsub.f32 %v3541, %v3963
    %v4000 = vsub.f32 %v3205, %v3961
    %v4001 = vsub.f32 %v3207, %v3962
    %v4002 = vsub.f32 %v3546, %v3963
    %v4003 = vsub.f32 %v3209, %v3961
    %v4004 = vsub.f32 %v3211, %v3962
    %v4005 = vsub.f32 %v3549, %v3963
    %v4006 = vsub.f32 %v3215, %v3961
    %v4007 = vsub.f32 %v3217, %v3962
    %v4008 = vsub.f32 %v3554, %v3963
    %v4009 = vsub.f32 %v3219, %v3961
    %v4010 = vsub.f32 %v3221, %v3962
    %v4011 = vsub.f32 %v3557, %v3963
    %v4012 = vsub.f32 %v3225, %v3961
    %v4013 = vsub.f32 %v3227, %v3962
    %v4014 = vsub.f32 %v3562, %v3963
    %v4015 = vsub.f32 %v3229, %v3961
    %v4016 = vsub.f32 %v3231, %v3962
    %v4017 = vsub.f32 %v3565, %v3963
    %v4018 = vsub.f32 %v3235, %v3961
    %v4019 = vsub.f32 %v3237, %v3962
    %v4020 = vsub.f32 %v3570, %v3963
    %v4021 = vsub.f32 %v3239, %v3961
    %v4022 = vsub.f32 %v3241, %v3962
    %v4023 = vsub.f32 %v3573, %v3963
    %v4024 = vsub.f32 %v3245, %v3961
    %v4025 = vsub.f32 %v3247, %v3962
    %v4026 = vsub.f32 %v3578, %v3963
    %v4027 = vsub.f32 %v3249, %v3961
    %v4028 = vsub.f32 %v3251, %v3962
    %v4029 = vsub.f32 %v3581, %v3963
    %v4030 = vsub.f32 %v3255, %v3961
    %v4031 = vsub.f32 %v3257, %v3962
    %v4032 = vsub.f32 %v3586, %v3963
    %v4033 = vsub.f32 %v3259, %v3961
    %v4034 = vsub.f32 %v3261, %v3962
    %v4035 = vsub.f32 %v3589, %v3963
    %v4036 = vsub.f32 %v3265, %v3961
    %v4037 = vsub.f32 %v3267, %v3962
    %v4038 = vsub.f32 %v3594, %v3963
    %v4039 = vsub.f32 %v3269, %v3961
    %v4040 = vsub.f32 %v3271, %v3962
    %v4041 = vsub.f32 %v3597, %v3963
    %v4042 = vsub.f32 %v3275, %v3961
    %v4043 = vsub.f32 %v3277, %v3962
    %v4044 = vsub.f32 %v3602, %v3963
    %v4045 = vsub.f32 %v3279, %v3961
    %v4046 = vsub.f32 %v3281, %v3962
    %v4047 = vsub.f32 %v3605, %v3963
    %v4048 = vsub.f32 %v3285, %v3961
    %v4049 = vsub.f32 %v3287, %v3962
    %v4050 = vsub.f32 %v3610, %v3963
    %v4051 = vsub.f32 %v3289, %v3961
    %v4052 = vsub.f32 %v3291, %v3962
    %v4053 = vsub.f32 %v3613, %v3963
    %v4054 = vsub.f32 %v3295, %v3961
    %v4055 = vsub.f32 %v3297, %v3962
    %v4056 = vsub.f32 %v3618, %v3963
    %v4057 = vsub.f32 %v3299, %v3961
    %v4058 = vsub.f32 %v3301, %v3962
    %v4059 = vsub.f32 %v3621, %v3963
    %v4060 = vsub.f32 %v3305, %v3961
    %v4061 = vsub.f32 %v3307, %v3962
    %v4062 = vsub.f32 %v3626, %v3963
    %v4063 = vsub.f32 %v3309, %v3961
    %v4064 = vsub.f32 %v3311, %v3962
    %v4065 = vsub.f32 %v3629, %v3963
    %v4066 = vsub.f32 %v3315, %v3961
    %v4067 = vsub.f32 %v3317, %v3962
    %v4068 = vsub.f32 %v3634, %v3963
    %v4069 = vsub.f32 %v3319, %v3961
    %v4070 = vsub.f32 %v3321, %v3962
    %v4071 = vsub.f32 %v3637, %v3963
    %v4072 = vsub.f32 %v3325, %v3961
    %v4073 = vsub.f32 %v3327, %v3962
    %v4074 = vsub.f32 %v3642, %v3963
    %v4075 = vsub.f32 %v3329, %v3961
    %v4076 = vsub.f32 %v3331, %v3962
    %v4077 = vsub.f32 %v3645, %v3963
    %v4078 = vsub.f32 %v3335, %v3961
    %v4079 = vsub.f32 %v3337, %v3962
    %v4080 = vsub.f32 %v3650, %v3963
    %v4081 = vsub.f32 %v3339, %v3961
    %v4082 = vsub.f32 %v3341, %v3962
    %v4083 = vsub.f32 %v3653, %v3963
    %v4084 = vsub.f32 %v3345, %v3961
    %v4085 = vsub.f32 %v3347, %v3962
    %v4086 = vsub.f32 %v3658, %v3963
    %v4087 = vsub.f32 %v3349, %v3961
    %v4088 = vsub.f32 %v3351, %v3962
    %v4089 = vsub.f32 %v3661, %v3963
    %v4090 = vsub.f32 %v3355, %v3961
    %v4091 = vsub.f32 %v3357, %v3962
    %v4092 = vsub.f32 %v3666, %v3963
    %v4093 = vsub.f32 %v3359, %v3961
    %v4094 = vsub.f32 %v3361, %v3962
    %v4095 = vsub.f32 %v3669, %v3963
    %v4096 = vsub.f32 %v3365, %v3961
    %v4097 = vsub.f32 %v3367, %v3962
    %v4098 = vsub.f32 %v3674, %v3963
    %v4099 = vsub.f32 %v3369, %v3961
    %v4100 = vsub.f32 %v3371, %v3962
    %v4101 = vsub.f32 %v3677, %v3963
    %v4102 = vsub.f32 %v3375, %v3961
    %v4103 = vsub.f32 %v3377, %v3962
    %v4104 = vsub.f32 %v3682, %v3963
    %v4105 = vsub.f32 %v3379, %v3961
    %v4106 = vsub.f32 %v3381, %v3962
    %v4107 = vsub.f32 %v3685, %v3963
    %v4108 = vsub.f32 %v3385, %v3961
    %v4109 = vsub.f32 %v3387, %v3962
    %v4110 = vsub.f32 %v3690, %v3963
    %v4111 = vsub.f32 %v3389, %v3961
    %v4112 = vsub.f32 %v3391, %v3962
    %v4113 = vsub.f32 %v3693, %v3963
    %v4114 = vsub.f32 %v3395, %v3961
    %v4115 = vsub.f32 %v3397, %v3962
    %v4116 = vsub.f32 %v3698, %v3963
    %v4117 = vsub.f32 %v3399, %v3961
    %v4118 = vsub.f32 %v3401, %v3962
    %v4119 = vsub.f32 %v3701, %v3963
    %v4120 = vsub.f32 %v3405, %v3961
    %v4121 = vsub.f32 %v3407, %v3962
    %v4122 = vsub.f32 %v3706, %v3963
    %v4123 = vsub.f32 %v3409, %v3961
    %v4124 = vsub.f32 %v3411, %v3962
    %v4125 = vsub.f32 %v3709, %v3963
    %v4126 = vsub.f32 %v3415, %v3961
    %v4127 = vsub.f32 %v3417, %v3962
    %v4128 = vsub.f32 %v3714, %v3963
    %v4129 = vsub.f32 %v3419, %v3961
    %v4130 = vsub.f32 %v3421, %v3962
    %v4131 = vsub.f32 %v3717, %v3963
    %v4132 = vsub.f32 %v3425, %v3961
    %v4133 = vsub.f32 %v3427, %v3962
    %v4134 = vsub.f32 %v3722, %v3963
    %v4135 = vsub.f32 %v3429, %v3961
    %v4136 = vsub.f32 %v3431, %v3962
    %v4137 = vsub.f32 %v3725, %v3963
    %v4138 = vsub.f32 %v3435, %v3961
    %v4139 = vsub.f32 %v3437, %v3962
    %v4140 = vsub.f32 %v3730, %v3963
    %v4141 = vsub.f32 %v3439, %v3961
    %v4142 = vsub.f32 %v3441, %v3962
    %v4143 = vsub.f32 %v3733, %v3963
    %v4144 = vsub.f32 %v3445, %v3961
    %v4145 = vsub.f32 %v3447, %v3962
    %v4146 = vsub.f32 %v3738, %v3963
    %v4147 = vsub.f32 %v3449, %v3961
    %v4148 = vsub.f32 %v3451, %v3962
    %v4149 = vsub.f32 %v3741, %v3963
    %v4150 = vsub.f32 %v3455, %v3961
    %v4151 = vsub.f32 %v3457, %v3962
    %v4152 = vsub.f32 %v3746, %v3963
    %v4153 = vsub.f32 %v3459, %v3961
    %v4154 = vsub.f32 %v3461, %v3962
    %v4155 = vsub.f32 %v3749, %v3963
    %v4156 = vmul.f32 %v3964, %v3964
    %v4157 = vmul.f32 %v3965, %v3965
    %v4158 = vmul.f32 %v3966, %v3966
    %v4159 = vmul.f32 %v3967, %v3967
    %v4160 = vmul.f32 %v3968, %v3968
    %v4161 = vmul.f32 %v3969, %v3969
    %v4162 = vmul.f32 %v3970, %v3970
    %v4163 = vmul.f32 %v3971, %v3971
    %v4164 = vmul.f32 %v3972, %v3972
    %v4165 = vmul.f32 %v3973, %v3973
    %v4166 = vmul.f32 %v3974, %v3974
    %v4167 = vmul.f32 %v3975, %v3975
    %v4168 = vmul.f32 %v3976, %v3976
    %v4169 = vmul.f32 %v3977, %v3977
    %v4170 = vmul.f32 %v3978, %v3978
    %v4171 = vmul.f32 %v3979, %v3979
    %v4172 = vmul.f32 %v3980, %v3980
    %v4173 = vmul.f32 %v3981, %v3981
    %v4174 = vmul.f32 %v3982, %v3982
    %v4175 = vmul.f32 %v3983, %v3983
    %v4176 = vmul.f32 %v3984, %v3984
    %v4177 = vmul.f32 %v3985, %v3985
    %v4178 = vmul.f32 %v3986, %v3986
    %v4179 = vmul.f32 %v3987, %v3987
    %v4180 = vmul.f32 %v3988, %v3988
    %v4181 = vmul.f32 %v3989, %v3989
    %v4182 = vmul.f32 %v3990, %v3990
    %v4183 = vmul.f32 %v3991, %v3991
    %v4184 = vmul.f32 %v3992, %v3992
    %v4185 = vmul.f32 %v3993, %v3993
    %v4186 = vmul.f32 %v3994, %v3994
    %v4187 = vmul.f32 %v3995, %v3995
    %v4188 = vmul.f32 %v3996, %v3996
    %v4189 = vmul.f32 %v3997, %v3997
    %v4190 = vmul.f32 %v3998, %v3998
    %v4191 = vmul.f32 %v3999, %v3999
    %v4192 = vmul.f32 %v4000, %v4000
    %v4193 = vmul.f32 %v4001, %v4001
    %v4194 = vmul.f32 %v4002, %v4002
    %v4195 = vmul.f32 %v4003, %v4003
    %v4196 = vmul.f32 %v4004, %v4004
    %v4197 = vmul.f32 %v4005, %v4005
    %v4198 = vmul.f32 %v4006, %v4006
    %v4199 = vmul.f32 %v4007, %v4007
    %v4200 = vmul.f32 %v4008, %v4008
    %v4201 = vmul.f32 %v4009, %v4009
    %v4202 = vmul.f32 %v4010, %v4010
    %v4203 = vmul.f32 %v4011, %v4011
    %v4204 = vmul.f32 %v4012, %v4012
    %v4205 = vmul.f32 %v4013, %v4013
    %v4206 = vmul.f32 %v4014, %v4014
    %v4207 = vmul.f32 %v4015, %v4015
    %v4208 = vmul.f32 %v4016, %v4016
    %v4209 = vmul.f32 %v4017, %v4017
    %v4210 = vmul.f32 %v4018, %v4018
    %v4211 = vmul.f32 %v4019, %v4019
    %v4212 = vmul.f32 %v4020, %v4020
    %v4213 = vmul.f32 %v4021, %v4021
    %v4214 = vmul.f32 %v4022, %v4022
    %v4215 = vmul.f32 %v4023, %v4023
    %v4216 = vmul.f32 %v4024, %v4024
    %v4217 = vmul.f32 %v4025, %v4025
    %v4218 = vmul.f32 %v4026, %v4026
    %v4219 = vmul.f32 %v4027, %v4027
    %v4220 = vmul.f32 %v4028, %v4028
    %v4221 = vmul.f32 %v4029, %v4029
    %v4222 = vmul.f32 %v4030, %v4030
    %v4223 = vmul.f32 %v4031, %v4031
    %v4224 = vmul.f32 %v4032, %v4032
    %v4225 = vmul.f32 %v4033, %v4033
    %v4226 = vmul.f32 %v4034, %v4034
    %v4227 = vmul.f32 %v4035, %v4035
    %v4228 = vmul.f32 %v4036, %v4036
    %v4229 = vmul.f32 %v4037, %v4037
    %v4230 = vmul.f32 %v4038, %v4038
    %v4231 = vmul.f32 %v4039, %v4039
    %v4232 = vmul.f32 %v4040, %v4040
    %v4233 = vmul.f32 %v4041, %v4041
    %v4234 = vmul.f32 %v4042, %v4042
    %v4235 = vmul.f32 %v4043, %v4043
    %v4236 = vmul.f32 %v4044, %v4044
    %v4237 = vmul.f32 %v4045, %v4045
    %v4238 = vmul.f32 %v4046, %v4046
    %v4239 = vmul.f32 %v4047, %v4047
    %v4240 = vmul.f32 %v4048, %v4048
    %v4241 = vmul.f32 %v4049, %v4049
    %v4242 = vmul.f32 %v4050, %v4050
    %v4243 = vmul.f32 %v4051, %v4051
    %v4244 = vmul.f32 %v4052, %v4052
    %v4245 = vmul.f32 %v4053, %v4053
    %v4246 = vmul.f32 %v4054, %v4054
    %v4247 = vmul.f32 %v4055, %v4055
    %v4248 = vmul.f32 %v4056, %v4056
    %v4249 = vmul.f32 %v4057, %v4057
    %v4250 = vmul.f32 %v4058, %v4058
    %v4251 = vmul.f32 %v4059, %v4059
    %v4252 = vmul.f32 %v4060, %v4060
    %v4253 = vmul.f32 %v4061, %v4061
    %v4254 = vmul.f32 %v4062, %v4062
    %v4255 = vmul.f32 %v4063, %v4063
    %v4256 = vmul.f32 %v4064, %v4064
    %v4257 = vmul.f32 %v4065, %v4065
    %v4258 = vmul.f32 %v4066, %v4066
    %v4259 = vmul.f32 %v4067, %v4067
    %v4260 = vmul.f32 %v4068, %v4068
    %v4261 = vmul.f32 %v4069, %v4069
    %v4262 = vmul.f32 %v4070, %v4070
    %v4263 = vmul.f32 %v4071, %v4071
    %v4264 = vmul.f32 %v4072, %v4072
    %v4265 = vmul.f32 %v4073, %v4073
    %v4266 = vmul.f32 %v4074, %v4074
    %v4267 = vmul.f32 %v4075, %v4075
    %v4268 = vmul.f32 %v4076, %v4076
    %v4269 = vmul.f32 %v4077, %v4077
    %v4270 = vmul.f32 %v4078, %v4078
    %v4271 = vmul.f32 %v4079, %v4079
    %v4272 = vmul.f32 %v4080, %v4080
    %v4273 = vmul.f32 %v4081, %v4081
    %v4274 = vmul.f32 %v4082, %v4082
    %v4275 = vmul.f32 %v4083, %v4083
    %v4276 = vmul.f32 %v4084, %v4084
    %v4277 = vmul.f32 %v4085, %v4085
    %v4278 = vmul.f32 %v4086, %v4086
    %v4279 = vmul.f32 %v4087, %v4087
    %v4280 = vmul.f32 %v4088, %v4088
    %v4281 = vmul.f32 %v4089, %v4089
    %v4282 = vmul.f32 %v4090, %v4090
    %v4283 = vmul.f32 %v4091, %v4091
    %v4284 = vmul.f32 %v4092, %v4092
    %v4285 = vmul.f32 %v4093, %v4093
    %v4286 = vmul.f32 %v4094, %v4094
    %v4287 = vmul.f32 %v4095, %v4095
    %v4288 = vmul.f32 %v4096, %v4096
    %v4289 = vmul.f32 %v4097, %v4097
    %v4290 = vmul.f32 %v4098, %v4098
    %v4291 = vmul.f32 %v4099, %v4099
    %v4292 = vmul.f32 %v4100, %v4100
    %v4293 = vmul.f32 %v4101, %v4101
    %v4294 = vmul.f32 %v4102, %v4102
    %v4295 = vmul.f32 %v4103, %v4103
    %v4296 = vmul.f32 %v4104, %v4104
    %v4297 = vmul.f32 %v4105, %v4105
    %v4298 = vmul.f32 %v4106, %v4106
    %v4299 = vmul.f32 %v4107, %v4107
    %v4300 = vmul.f32 %v4108, %v4108
    %v4301 = vmul.f32 %v4109, %v4109
    %v4302 = vmul.f32 %v4110, %v4110
    %v4303 = vmul.f32 %v4111, %v4111
    %v4304 = vmul.f32 %v4112, %v4112
    %v4305 = vmul.f32 %v4113, %v4113
    %v4306 = vmul.f32 %v4114, %v4114
    %v4307 = vmul.f32 %v4115, %v4115
    %v4308 = vmul.f32 %v4116, %v4116
    %v4309 = vmul.f32 %v4117, %v4117
    %v4310 = vmul.f32 %v4118, %v4118
    %v4311 = vmul.f32 %v4119, %v4119
    %v4312 = vmul.f32 %v4120, %v4120
    %v4313 = vmul.f32 %v4121, %v4121
    %v4314 = vmul.f32 %v4122, %v4122
    %v4315 = vmul.f32 %v4123, %v4123
    %v4316 = vmul.f32 %v4124, %v4124
    %v4317 = vmul.f32 %v4125, %v4125
    %v4318 = vmul.f32 %v4126, %v4126
    %v4319 = vmul.f32 %v4127, %v4127
    %v4320 = vmul.f32 %v4128, %v4128
    %v4321 = vmul.f32 %v4129, %v4129
    %v4322 = vmul.f32 %v4130, %v4130
    %v4323 = vmul.f32 %v4131, %v4131
    %v4324 = vmul.f32 %v4132, %v4132
    %v4325 = vmul.f32 %v4133, %v4133
    %v4326 = vmul.f32 %v4134, %v4134
    %v4327 = vmul.f32 %v4135, %v4135
    %v4328 = vmul.f32 %v4136, %v4136
    %v4329 = vmul.f32 %v4137, %v4137
    %v4330 = vmul.f32 %v4138, %v4138
    %v4331 = vmul.f32 %v4139, %v4139
    %v4332 = vmul.f32 %v4140, %v4140
    %v4333 = vmul.f32 %v4141, %v4141
    %v4334 = vmul.f32 %v4142, %v4142
    %v4335 = vmul.f32 %v4143, %v4143
    %v4336 = vmul.f32 %v4144, %v4144
    %v4337 = vmul.f32 %v4145, %v4145
    %v4338 = vmul.f32 %v4146, %v4146
    %v4339 = vmul.f32 %v4147, %v4147
    %v4340 = vmul.f32 %v4148, %v4148
    %v4341 = vmul.f32 %v4149, %v4149
    %v4342 = vmul.f32 %v4150, %v4150
    %v4343 = vmul.f32 %v4151, %v4151
    %v4344 = vmul.f32 %v4152, %v4152
    %v4345 = vmul.f32 %v4153, %v4153
    %v4346 = vmul.f32 %v4154, %v4154
    %v4347 = vmul.f32 %v4155, %v4155
    %v4348 = vadd.f32 %v4156, %v4159
    %v4349 = vadd.f32 %v4348, %v4162
    %v4350 = vadd.f32 %v4349, %v4165
    %v4351 = vadd.f32 %v4350, %v4168
    %v4352 = vadd.f32 %v4351, %v4171
    %v4353 = vadd.f32 %v4352, %v4174
    %v4354 = vadd.f32 %v4353, %v4177
    %v4355 = vadd.f32 %v4354, %v4180
    %v4356 = vadd.f32 %v4355, %v4183
    %v4357 = vadd.f32 %v4356, %v4186
    %v4358 = vadd.f32 %v4357, %v4189
    %v4359 = vadd.f32 %v4358, %v4192
    %v4360 = vadd.f32 %v4359, %v4195
    %v4361 = vadd.f32 %v4360, %v4198
    %v4362 = vadd.f32 %v4361, %v4201
    %v4363 = vadd.f32 %v4362, %v4204
    %v4364 = vadd.f32 %v4363, %v4207
    %v4365 = vadd.f32 %v4364, %v4210
    %v4366 = vadd.f32 %v4365, %v4213
    %v4367 = vadd.f32 %v4366, %v4216
    %v4368 = vadd.f32 %v4367, %v4219
    %v4369 = vadd.f32 %v4368, %v4222
    %v4370 = vadd.f32 %v4369, %v4225
    %v4371 = vadd.f32 %v4370, %v4228
    %v4372 = vadd.f32 %v4371, %v4231
    %v4373 = vadd.f32 %v4372, %v4234
    %v4374 = vadd.f32 %v4373, %v4237
    %v4375 = vadd.f32 %v4374, %v4240
    %v4376 = vadd.f32 %v4375, %v4243
    %v4377 = vadd.f32 %v4376, %v4246
    %v4378 = vadd.f32 %v4377, %v4249
    %v4379 = vadd.f32 %v4378, %v4252
    %v4380 = vadd.f32 %v4379, %v4255
    %v4381 = vadd.f32 %v4380, %v4258
    %v4382 = vadd.f32 %v4381, %v4261
    %v4383 = vadd.f32 %v4382, %v4264
    %v4384 = vadd.f32 %v4383, %v4267
    %v4385 = vadd.f32 %v4384, %v4270
    %v4386 = vadd.f32 %v4385, %v4273
    %v4387 = vadd.f32 %v4386, %v4276
    %v4388 = vadd.f32 %v4387, %v4279
    %v4389 = vadd.f32 %v4388, %v4282
    %v4390 = vadd.f32 %v4389, %v4285
    %v4391 = vadd.f32 %v4390, %v4288
    %v4392 = vadd.f32 %v4391, %v4291
    %v4393 = vadd.f32 %v4392, %v4294
    %v4394 = vadd.f32 %v4393, %v4297
    %v4395 = vadd.f32 %v4394, %v4300
    %v4396 = vadd.f32 %v4395, %v4303
    %v4397 = vadd.f32 %v4396, %v4306
    %v4398 = vadd.f32 %v4397, %v4309
    %v4399 = vadd.f32 %v4398, %v4312
    %v4400 = vadd.f32 %v4399, %v4315
    %v4401 = vadd.f32 %v4400, %v4318
    %v4402 = vadd.f32 %v4401, %v4321
    %v4403 = vadd.f32 %v4402, %v4324
    %v4404 = vadd.f32 %v4403, %v4327
    %v4405 = vadd.f32 %v4404, %v4330
    %v4406 = vadd.f32 %v4405, %v4333
    %v4407 = vadd.f32 %v4406, %v4336
    %v4408 = vadd.f32 %v4407, %v4339
    %v4409 = vadd.f32 %v4408, %v4342
    %v4410 = vadd.f32 %v4409, %v4345
    %v4411 = vrot.slane %v4410, 4
    %v4412 = vadd.f32 %v4410, %v4411
    %v4413 = vrot.slane %v4412, 2
    %v4414 = vadd.f32 %v4412, %v4413
    %v4415 = vrot.slane %v4414, 1
    %v4416 = vadd.f32 %v4414, %v4415
    %v4417 = vadd.f32 %v4157, %v4160
    %v4418 = vadd.f32 %v4417, %v4163
    %v4419 = vadd.f32 %v4418, %v4166
    %v4420 = vadd.f32 %v4419, %v4169
    %v4421 = vadd.f32 %v4420, %v4172
    %v4422 = vadd.f32 %v4421, %v4175
    %v4423 = vadd.f32 %v4422, %v4178
    %v4424 = vadd.f32 %v4423, %v4181
    %v4425 = vadd.f32 %v4424, %v4184
    %v4426 = vadd.f32 %v4425, %v4187
    %v4427 = vadd.f32 %v4426, %v4190
    %v4428 = vadd.f32 %v4427, %v4193
    %v4429 = vadd.f32 %v4428, %v4196
    %v4430 = vadd.f32 %v4429, %v4199
    %v4431 = vadd.f32 %v4430, %v4202
    %v4432 = vadd.f32 %v4431, %v4205
    %v4433 = vadd.f32 %v4432, %v4208
    %v4434 = vadd.f32 %v4433, %v4211
    %v4435 = vadd.f32 %v4434, %v4214
    %v4436 = vadd.f32 %v4435, %v4217
    %v4437 = vadd.f32 %v4436, %v4220
    %v4438 = vadd.f32 %v4437, %v4223
    %v4439 = vadd.f32 %v4438, %v4226
    %v4440 = vadd.f32 %v4439, %v4229
    %v4441 = vadd.f32 %v4440, %v4232
    %v4442 = vadd.f32 %v4441, %v4235
    %v4443 = vadd.f32 %v4442, %v4238
    %v4444 = vadd.f32 %v4443, %v4241
    %v4445 = vadd.f32 %v4444, %v4244
    %v4446 = vadd.f32 %v4445, %v4247
    %v4447 = vadd.f32 %v4446, %v4250
    %v4448 = vadd.f32 %v4447, %v4253
    %v4449 = vadd.f32 %v4448, %v4256
    %v4450 = vadd.f32 %v4449, %v4259
    %v4451 = vadd.f32 %v4450, %v4262
    %v4452 = vadd.f32 %v4451, %v4265
    %v4453 = vadd.f32 %v4452, %v4268
    %v4454 = vadd.f32 %v4453, %v4271
    %v4455 = vadd.f32 %v4454, %v4274
    %v4456 = vadd.f32 %v4455, %v4277
    %v4457 = vadd.f32 %v4456, %v4280
    %v4458 = vadd.f32 %v4457, %v4283
    %v4459 = vadd.f32 %v4458, %v4286
    %v4460 = vadd.f32 %v4459, %v4289
    %v4461 = vadd.f32 %v4460, %v4292
    %v4462 = vadd.f32 %v4461, %v4295
    %v4463 = vadd.f32 %v4462, %v4298
    %v4464 = vadd.f32 %v4463, %v4301
    %v4465 = vadd.f32 %v4464, %v4304
    %v4466 = vadd.f32 %v4465, %v4307
    %v4467 = vadd.f32 %v4466, %v4310
    %v4468 = vadd.f32 %v4467, %v4313
    %v4469 = vadd.f32 %v4468, %v4316
    %v4470 = vadd.f32 %v4469, %v4319
    %v4471 = vadd.f32 %v4470, %v4322
    %v4472 = vadd.f32 %v4471, %v4325
    %v4473 = vadd.f32 %v4472, %v4328
    %v4474 = vadd.f32 %v4473, %v4331
    %v4475 = vadd.f32 %v4474, %v4334
    %v4476 = vadd.f32 %v4475, %v4337
    %v4477 = vadd.f32 %v4476, %v4340
    %v4478 = vadd.f32 %v4477, %v4343
    %v4479 = vadd.f32 %v4478, %v4346
    %v4480 = vrot.slane %v4479, 4
    %v4481 = vadd.f32 %v4479, %v4480
    %v4482 = vrot.slane %v4481, 2
    %v4483 = vadd.f32 %v4481, %v4482
    %v4484 = vrot.slane %v4483, 1
    %v4485 = vadd.f32 %v4483, %v4484
    %v4486 = vadd.f32 %v4158, %v4161
    %v4487 = vadd.f32 %v4486, %v4164
    %v4488 = vadd.f32 %v4487, %v4167
    %v4489 = vadd.f32 %v4488, %v4170
    %v4490 = vadd.f32 %v4489, %v4173
    %v4491 = vadd.f32 %v4490, %v4176
    %v4492 = vadd.f32 %v4491, %v4179
    %v4493 = vadd.f32 %v4492, %v4182
    %v4494 = vadd.f32 %v4493, %v4185
    %v4495 = vadd.f32 %v4494, %v4188
    %v4496 = vadd.f32 %v4495, %v4191
    %v4497 = vadd.f32 %v4496, %v4194
    %v4498 = vadd.f32 %v4497, %v4197
    %v4499 = vadd.f32 %v4498, %v4200
    %v4500 = vadd.f32 %v4499, %v4203
    %v4501 = vadd.f32 %v4500, %v4206
    %v4502 = vadd.f32 %v4501, %v4209
    %v4503 = vadd.f32 %v4502, %v4212
    %v4504 = vadd.f32 %v4503, %v4215
    %v4505 = vadd.f32 %v4504, %v4218
    %v4506 = vadd.f32 %v4505, %v4221
    %v4507 = vadd.f32 %v4506, %v4224
    %v4508 = vadd.f32 %v4507, %v4227
    %v4509 = vadd.f32 %v4508, %v4230
    %v4510 = vadd.f32 %v4509, %v4233
    %v4511 = vadd.f32 %v4510, %v4236
    %v4512 = vadd.f32 %v4511, %v4239
    %v4513 = vadd.f32 %v4512, %v4242
    %v4514 = vadd.f32 %v4513, %v4245
    %v4515 = vadd.f32 %v4514, %v4248
    %v4516 = vadd.f32 %v4515, %v4251
    %v4517 = vadd.f32 %v4516, %v4254
    %v4518 = vadd.f32 %v4517, %v4257
    %v4519 = vadd.f32 %v4518, %v4260
    %v4520 = vadd.f32 %v4519, %v4263
    %v4521 = vadd.f32 %v4520, %v4266
    %v4522 = vadd.f32 %v4521, %v4269
    %v4523 = vadd.f32 %v4522, %v4272
    %v4524 = vadd.f32 %v4523, %v4275
    %v4525 = vadd.f32 %v4524, %v4278
    %v4526 = vadd.f32 %v4525, %v4281
    %v4527 = vadd.f32 %v4526, %v4284
    %v4528 = vadd.f32 %v4527, %v4287
    %v4529 = vadd.f32 %v4528, %v4290
    %v4530 = vadd.f32 %v4529, %v4293
    %v4531 = vadd.f32 %v4530, %v4296
    %v4532 = vadd.f32 %v4531, %v4299
    %v4533 = vadd.f32 %v4532, %v4302
    %v4534 = vadd.f32 %v4533, %v4305
    %v4535 = vadd.f32 %v4534, %v4308
    %v4536 = vadd.f32 %v4535, %v4311
    %v4537 = vadd.f32 %v4536, %v4314
    %v4538 = vadd.f32 %v4537, %v4317
    %v4539 = vadd.f32 %v4538, %v4320
    %v4540 = vadd.f32 %v4539, %v4323
    %v4541 = vadd.f32 %v4540, %v4326
    %v4542 = vadd.f32 %v4541, %v4329
    %v4543 = vadd.f32 %v4542, %v4332
    %v4544 = vadd.f32 %v4543, %v4335
    %v4545 = vadd.f32 %v4544, %v4338
    %v4546 = vadd.f32 %v4545, %v4341
    %v4547 = vadd.f32 %v4546, %v4344
    %v4548 = vadd.f32 %v4547, %v4347
    %v4549 = vrot.slane %v4548, 4
    %v4550 = vadd.f32 %v4548, %v4549
    %v4551 = vrot.slane %v4550, 2
    %v4552 = vadd.f32 %v4550, %v4551
    %v4553 = vrot.slane %v4552, 1
    %v4554 = vadd.f32 %v4552, %v4553
    %v4555 = vmul.f32 %v4416, 0.001953125
    %v4556 = vmul.f32 %v4485, 0.001953125
    %v4557 = vmul.f32 %v4554, 0.001953125
    %v4558 = vadd.f32 %v4555, 0.001
    %v4559 = vadd.f32 %v4556, 0.001
    %v4560 = vadd.f32 %v4557, 0.001
    %v4561 = vrsqrt.pop %v4558
    %v4562 = vrsqrt.pop %v4559
    %v4563 = vrsqrt.pop %v4560
    %v4564 = vmul.f32 %v3964, %v4561
    %v4565 = vmul.f32 %v3965, %v4562
    %v4566 = vmul.f32 %v3966, %v4563
    %v4567 = vmul.f32 %v3967, %v4561
    %v4568 = vmul.f32 %v3968, %v4562
    %v4569 = vmul.f32 %v3969, %v4563
    %v4570 = vmul.f32 %v3970, %v4561
    %v4571 = vmul.f32 %v3971, %v4562
    %v4572 = vmul.f32 %v3972, %v4563
    %v4573 = vmul.f32 %v3973, %v4561
    %v4574 = vmul.f32 %v3974, %v4562
    %v4575 = vmul.f32 %v3975, %v4563
    %v4576 = vmul.f32 %v3976, %v4561
    %v4577 = vmul.f32 %v3977, %v4562
    %v4578 = vmul.f32 %v3978, %v4563
    %v4579 = vmul.f32 %v3979, %v4561
    %v4580 = vmul.f32 %v3980, %v4562
    %v4581 = vmul.f32 %v3981, %v4563
    %v4582 = vmul.f32 %v3982, %v4561
    %v4583 = vmul.f32 %v3983, %v4562
    %v4584 = vmul.f32 %v3984, %v4563
    %v4585 = vmul.f32 %v3985, %v4561
    %v4586 = vmul.f32 %v3986, %v4562
    %v4587 = vmul.f32 %v3987, %v4563
    %v4588 = vmul.f32 %v3988, %v4561
    %v4589 = vmul.f32 %v3989, %v4562
    %v4590 = vmul.f32 %v3990, %v4563
    %v4591 = vmul.f32 %v3991, %v4561
    %v4592 = vmul.f32 %v3992, %v4562
    %v4593 = vmul.f32 %v3993, %v4563
    %v4594 = vmul.f32 %v3994, %v4561
    %v4595 = vmul.f32 %v3995, %v4562
    %v4596 = vmul.f32 %v3996, %v4563
    %v4597 = vmul.f32 %v3997, %v4561
    %v4598 = vmul.f32 %v3998, %v4562
    %v4599 = vmul.f32 %v3999, %v4563
    %v4600 = vmul.f32 %v4000, %v4561
    %v4601 = vmul.f32 %v4001, %v4562
    %v4602 = vmul.f32 %v4002, %v4563
    %v4603 = vmul.f32 %v4003, %v4561
    %v4604 = vmul.f32 %v4004, %v4562
    %v4605 = vmul.f32 %v4005, %v4563
    %v4606 = vmul.f32 %v4006, %v4561
    %v4607 = vmul.f32 %v4007, %v4562
    %v4608 = vmul.f32 %v4008, %v4563
    %v4609 = vmul.f32 %v4009, %v4561
    %v4610 = vmul.f32 %v4010, %v4562
    %v4611 = vmul.f32 %v4011, %v4563
    %v4612 = vmul.f32 %v4012, %v4561
    %v4613 = vmul.f32 %v4013, %v4562
    %v4614 = vmul.f32 %v4014, %v4563
    %v4615 = vmul.f32 %v4015, %v4561
    %v4616 = vmul.f32 %v4016, %v4562
    %v4617 = vmul.f32 %v4017, %v4563
    %v4618 = vmul.f32 %v4018, %v4561
    %v4619 = vmul.f32 %v4019, %v4562
    %v4620 = vmul.f32 %v4020, %v4563
    %v4621 = vmul.f32 %v4021, %v4561
    %v4622 = vmul.f32 %v4022, %v4562
    %v4623 = vmul.f32 %v4023, %v4563
    %v4624 = vmul.f32 %v4024, %v4561
    %v4625 = vmul.f32 %v4025, %v4562
    %v4626 = vmul.f32 %v4026, %v4563
    %v4627 = vmul.f32 %v4027, %v4561
    %v4628 = vmul.f32 %v4028, %v4562
    %v4629 = vmul.f32 %v4029, %v4563
    %v4630 = vmul.f32 %v4030, %v4561
    %v4631 = vmul.f32 %v4031, %v4562
    %v4632 = vmul.f32 %v4032, %v4563
    %v4633 = vmul.f32 %v4033, %v4561
    %v4634 = vmul.f32 %v4034, %v4562
    %v4635 = vmul.f32 %v4035, %v4563
    %v4636 = vmul.f32 %v4036, %v4561
    %v4637 = vmul.f32 %v4037, %v4562
    %v4638 = vmul.f32 %v4038, %v4563
    %v4639 = vmul.f32 %v4039, %v4561
    %v4640 = vmul.f32 %v4040, %v4562
    %v4641 = vmul.f32 %v4041, %v4563
    %v4642 = vmul.f32 %v4042, %v4561
    %v4643 = vmul.f32 %v4043, %v4562
    %v4644 = vmul.f32 %v4044, %v4563
    %v4645 = vmul.f32 %v4045, %v4561
    %v4646 = vmul.f32 %v4046, %v4562
    %v4647 = vmul.f32 %v4047, %v4563
    %v4648 = vmul.f32 %v4048, %v4561
    %v4649 = vmul.f32 %v4049, %v4562
    %v4650 = vmul.f32 %v4050, %v4563
    %v4651 = vmul.f32 %v4051, %v4561
    %v4652 = vmul.f32 %v4052, %v4562
    %v4653 = vmul.f32 %v4053, %v4563
    %v4654 = vmul.f32 %v4054, %v4561
    %v4655 = vmul.f32 %v4055, %v4562
    %v4656 = vmul.f32 %v4056, %v4563
    %v4657 = vmul.f32 %v4057, %v4561
    %v4658 = vmul.f32 %v4058, %v4562
    %v4659 = vmul.f32 %v4059, %v4563
    %v4660 = vmul.f32 %v4060, %v4561
    %v4661 = vmul.f32 %v4061, %v4562
    %v4662 = vmul.f32 %v4062, %v4563
    %v4663 = vmul.f32 %v4063, %v4561
    %v4664 = vmul.f32 %v4064, %v4562
    %v4665 = vmul.f32 %v4065, %v4563
    %v4666 = vmul.f32 %v4066, %v4561
    %v4667 = vmul.f32 %v4067, %v4562
    %v4668 = vmul.f32 %v4068, %v4563
    %v4669 = vmul.f32 %v4069, %v4561
    %v4670 = vmul.f32 %v4070, %v4562
    %v4671 = vmul.f32 %v4071, %v4563
    %v4672 = vmul.f32 %v4072, %v4561
    %v4673 = vmul.f32 %v4073, %v4562
    %v4674 = vmul.f32 %v4074, %v4563
    %v4675 = vmul.f32 %v4075, %v4561
    %v4676 = vmul.f32 %v4076, %v4562
    %v4677 = vmul.f32 %v4077, %v4563
    %v4678 = vmul.f32 %v4078, %v4561
    %v4679 = vmul.f32 %v4079, %v4562
    %v4680 = vmul.f32 %v4080, %v4563
    %v4681 = vmul.f32 %v4081, %v4561
    %v4682 = vmul.f32 %v4082, %v4562
    %v4683 = vmul.f32 %v4083, %v4563
    %v4684 = vmul.f32 %v4084, %v4561
    %v4685 = vmul.f32 %v4085, %v4562
    %v4686 = vmul.f32 %v4086, %v4563
    %v4687 = vmul.f32 %v4087, %v4561
    %v4688 = vmul.f32 %v4088, %v4562
    %v4689 = vmul.f32 %v4089, %v4563
    %v4690 = vmul.f32 %v4090, %v4561
    %v4691 = vmul.f32 %v4091, %v4562
    %v4692 = vmul.f32 %v4092, %v4563
    %v4693 = vmul.f32 %v4093, %v4561
    %v4694 = vmul.f32 %v4094, %v4562
    %v4695 = vmul.f32 %v4095, %v4563
    %v4696 = vmul.f32 %v4096, %v4561
    %v4697 = vmul.f32 %v4097, %v4562
    %v4698 = vmul.f32 %v4098, %v4563
    %v4699 = vmul.f32 %v4099, %v4561
    %v4700 = vmul.f32 %v4100, %v4562
    %v4701 = vmul.f32 %v4101, %v4563
    %v4702 = vmul.f32 %v4102, %v4561
    %v4703 = vmul.f32 %v4103, %v4562
    %v4704 = vmul.f32 %v4104, %v4563
    %v4705 = vmul.f32 %v4105, %v4561
    %v4706 = vmul.f32 %v4106, %v4562
    %v4707 = vmul.f32 %v4107, %v4563
    %v4708 = vmul.f32 %v4108, %v4561
    %v4709 = vmul.f32 %v4109, %v4562
    %v4710 = vmul.f32 %v4110, %v4563
    %v4711 = vmul.f32 %v4111, %v4561
    %v4712 = vmul.f32 %v4112, %v4562
    %v4713 = vmul.f32 %v4113, %v4563
    %v4714 = vmul.f32 %v4114, %v4561
    %v4715 = vmul.f32 %v4115, %v4562
    %v4716 = vmul.f32 %v4116, %v4563
    %v4717 = vmul.f32 %v4117, %v4561
    %v4718 = vmul.f32 %v4118, %v4562
    %v4719 = vmul.f32 %v4119, %v4563
    %v4720 = vmul.f32 %v4120, %v4561
    %v4721 = vmul.f32 %v4121, %v4562
    %v4722 = vmul.f32 %v4122, %v4563
    %v4723 = vmul.f32 %v4123, %v4561
    %v4724 = vmul.f32 %v4124, %v4562
    %v4725 = vmul.f32 %v4125, %v4563
    %v4726 = vmul.f32 %v4126, %v4561
    %v4727 = vmul.f32 %v4127, %v4562
    %v4728 = vmul.f32 %v4128, %v4563
    %v4729 = vmul.f32 %v4129, %v4561
    %v4730 = vmul.f32 %v4130, %v4562
    %v4731 = vmul.f32 %v4131, %v4563
    %v4732 = vmul.f32 %v4132, %v4561
    %v4733 = vmul.f32 %v4133, %v4562
    %v4734 = vmul.f32 %v4134, %v4563
    %v4735 = vmul.f32 %v4135, %v4561
    %v4736 = vmul.f32 %v4136, %v4562
    %v4737 = vmul.f32 %v4137, %v4563
    %v4738 = vmul.f32 %v4138, %v4561
    %v4739 = vmul.f32 %v4139, %v4562
    %v4740 = vmul.f32 %v4140, %v4563
    %v4741 = vmul.f32 %v4141, %v4561
    %v4742 = vmul.f32 %v4142, %v4562
    %v4743 = vmul.f32 %v4143, %v4563
    %v4744 = vmul.f32 %v4144, %v4561
    %v4745 = vmul.f32 %v4145, %v4562
    %v4746 = vmul.f32 %v4146, %v4563
    %v4747 = vmul.f32 %v4147, %v4561
    %v4748 = vmul.f32 %v4148, %v4562
    %v4749 = vmul.f32 %v4149, %v4563
    %v4750 = vmul.f32 %v4150, %v4561
    %v4751 = vmul.f32 %v4151, %v4562
    %v4752 = vmul.f32 %v4152, %v4563
    %v4753 = vmul.f32 %v4153, %v4561
    %v4754 = vmul.f32 %v4154, %v4562
    %v4755 = vmul.f32 %v4155, %v4563
    %v4757 = vlaneseq
    %v4758 = vshrl.u32 %v4757, 7
    %v4759 = vsub.s32 0, %v4758
    %v4760 = vrot.slane %v3752, %v4759
    %v4761 = vlaneseq
    %v4762 = vshrl.u32 %v4761, 7
    %v4763 = vsub.s32 1, %v4762
    %v4764 = vrot.slane %v3752, %v4763
    %v4765 = vlaneseq
    %v4766 = vshrl.u32 %v4765, 7
    %v4767 = vsub.s32 2, %v4766
    %v4768 = vrot.slane %v3752, %v4767
    %v4772 = vmul.f32 %v4564, %v4760
    %v4773 = vmul.f32 %v4565, %v4764
    %v4774 = vmul.f32 %v4566, %v4768
    %v4775 = vmul.f32 %v4567, %v4760
    %v4776 = vmul.f32 %v4568, %v4764
    %v4777 = vmul.f32 %v4569, %v4768
    %v4778 = vmul.f32 %v4570, %v4760
    %v4779 = vmul.f32 %v4571, %v4764
    %v4780 = vmul.f32 %v4572, %v4768
    %v4781 = vmul.f32 %v4573, %v4760
    %v4782 = vmul.f32 %v4574, %v4764
    %v4783 = vmul.f32 %v4575, %v4768
    %v4784 = vmul.f32 %v4576, %v4760
    %v4785 = vmul.f32 %v4577, %v4764
    %v4786 = vmul.f32 %v4578, %v4768
    %v4787 = vmul.f32 %v4579, %v4760
    %v4788 = vmul.f32 %v4580, %v4764
    %v4789 = vmul.f32 %v4581, %v4768
    %v4790 = vmul.f32 %v4582, %v4760
    %v4791 = vmul.f32 %v4583, %v4764
    %v4792 = vmul.f32 %v4584, %v4768
    %v4793 = vmul.f32 %v4585, %v4760
    %v4794 = vmul.f32 %v4586, %v4764
    %v4795 = vmul.f32 %v4587, %v4768
    %v4796 = vmul.f32 %v4588, %v4760
    %v4797 = vmul.f32 %v4589, %v4764
    %v4798 = vmul.f32 %v4590, %v4768
    %v4799 = vmul.f32 %v4591, %v4760
    %v4800 = vmul.f32 %v4592, %v4764
    %v4801 = vmul.f32 %v4593, %v4768
    %v4802 = vmul.f32 %v4594, %v4760
    %v4803 = vmul.f32 %v4595, %v4764
    %v4804 = vmul.f32 %v4596, %v4768
    %v4805 = vmul.f32 %v4597, %v4760
    %v4806 = vmul.f32 %v4598, %v4764
    %v4807 = vmul.f32 %v4599, %v4768
    %v4808 = vmul.f32 %v4600, %v4760
    %v4809 = vmul.f32 %v4601, %v4764
    %v4810 = vmul.f32 %v4602, %v4768
    %v4811 = vmul.f32 %v4603, %v4760
    %v4812 = vmul.f32 %v4604, %v4764
    %v4813 = vmul.f32 %v4605, %v4768
    %v4814 = vmul.f32 %v4606, %v4760
    %v4815 = vmul.f32 %v4607, %v4764
    %v4816 = vmul.f32 %v4608, %v4768
    %v4817 = vmul.f32 %v4609, %v4760
    %v4818 = vmul.f32 %v4610, %v4764
    %v4819 = vmul.f32 %v4611, %v4768
    %v4820 = vmul.f32 %v4612, %v4760
    %v4821 = vmul.f32 %v4613, %v4764
    %v4822 = vmul.f32 %v4614, %v4768
    %v4823 = vmul.f32 %v4615, %v4760
    %v4824 = vmul.f32 %v4616, %v4764
    %v4825 = vmul.f32 %v4617, %v4768
    %v4826 = vmul.f32 %v4618, %v4760
    %v4827 = vmul.f32 %v4619, %v4764
    %v4828 = vmul.f32 %v4620, %v4768
    %v4829 = vmul.f32 %v4621, %v4760
    %v4830 = vmul.f32 %v4622, %v4764
    %v4831 = vmul.f32 %v4623, %v4768
    %v4832 = vmul.f32 %v4624, %v4760
    %v4833 = vmul.f32 %v4625, %v4764
    %v4834 = vmul.f32 %v4626, %v4768
    %v4835 = vmul.f32 %v4627, %v4760
    %v4836 = vmul.f32 %v4628, %v4764
    %v4837 = vmul.f32 %v4629, %v4768
    %v4838 = vmul.f32 %v4630, %v4760
    %v4839 = vmul.f32 %v4631, %v4764
    %v4840 = vmul.f32 %v4632, %v4768
    %v4841 = vmul.f32 %v4633, %v4760
    %v4842 = vmul.f32 %v4634, %v4764
    %v4843 = vmul.f32 %v4635, %v4768
    %v4844 = vmul.f32 %v4636, %v4760
    %v4845 = vmul.f32 %v4637, %v4764
    %v4846 = vmul.f32 %v4638, %v4768
    %v4847 = vmul.f32 %v4639, %v4760
    %v4848 = vmul.f32 %v4640, %v4764
    %v4849 = vmul.f32 %v4641, %v4768
    %v4850 = vmul.f32 %v4642, %v4760
    %v4851 = vmul.f32 %v4643, %v4764
    %v4852 = vmul.f32 %v4644, %v4768
    %v4853 = vmul.f32 %v4645, %v4760
    %v4854 = vmul.f32 %v4646, %v4764
    %v4855 = vmul.f32 %v4647, %v4768
    %v4856 = vmul.f32 %v4648, %v4760
    %v4857 = vmul.f32 %v4649, %v4764
    %v4858 = vmul.f32 %v4650, %v4768
    %v4859 = vmul.f32 %v4651, %v4760
    %v4860 = vmul.f32 %v4652, %v4764
    %v4861 = vmul.f32 %v4653, %v4768
    %v4862 = vmul.f32 %v4654, %v4760
    %v4863 = vmul.f32 %v4655, %v4764
    %v4864 = vmul.f32 %v4656, %v4768
    %v4865 = vmul.f32 %v4657, %v4760
    %v4866 = vmul.f32 %v4658, %v4764
    %v4867 = vmul.f32 %v4659, %v4768
    %v4868 = vmul.f32 %v4660, %v4760
    %v4869 = vmul.f32 %v4661, %v4764
    %v4870 = vmul.f32 %v4662, %v4768
    %v4871 = vmul.f32 %v4663, %v4760
    %v4872 = vmul.f32 %v4664, %v4764
    %v4873 = vmul.f32 %v4665, %v4768
    %v4874 = vmul.f32 %v4666, %v4760
    %v4875 = vmul.f32 %v4667, %v4764
    %v4876 = vmul.f32 %v4668, %v4768
    %v4877 = vmul.f32 %v4669, %v4760
    %v4878 = vmul.f32 %v4670, %v4764
    %v4879 = vmul.f32 %v4671, %v4768
    %v4880 = vmul.f32 %v4672, %v4760
    %v4881 = vmul.f32 %v4673, %v4764
    %v4882 = vmul.f32 %v4674, %v4768
    %v4883 = vmul.f32 %v4675, %v4760
    %v4884 = vmul.f32 %v4676, %v4764
    %v4885 = vmul.f32 %v4677, %v4768
    %v4886 = vmul.f32 %v4678, %v4760
    %v4887 = vmul.f32 %v4679, %v4764
    %v4888 = vmul.f32 %v4680, %v4768
    %v4889 = vmul.f32 %v4681, %v4760
    %v4890 = vmul.f32 %v4682, %v4764
    %v4891 = vmul.f32 %v4683, %v4768
    %v4892 = vmul.f32 %v4684, %v4760
    %v4893 = vmul.f32 %v4685, %v4764
    %v4894 = vmul.f32 %v4686, %v4768
    %v4895 = vmul.f32 %v4687, %v4760
    %v4896 = vmul.f32 %v4688, %v4764
    %v4897 = vmul.f32 %v4689, %v4768
    %v4898 = vmul.f32 %v4690, %v4760
    %v4899 = vmul.f32 %v4691, %v4764
    %v4900 = vmul.f32 %v4692, %v4768
    %v4901 = vmul.f32 %v4693, %v4760
    %v4902 = vmul.f32 %v4694, %v4764
    %v4903 = vmul.f32 %v4695, %v4768
    %v4904 = vmul.f32 %v4696, %v4760
    %v4905 = vmul.f32 %v4697, %v4764
    %v4906 = vmul.f32 %v4698, %v4768
    %v4907 = vmul.f32 %v4699, %v4760
    %v4908 = vmul.f32 %v4700, %v4764
    %v4909 = vmul.f32 %v4701, %v4768
    %v4910 = vmul.f32 %v4702, %v4760
    %v4911 = vmul.f32 %v4703, %v4764
    %v4912 = vmul.f32 %v4704, %v4768
    %v4913 = vmul.f32 %v4705, %v4760
    %v4914 = vmul.f32 %v4706, %v4764
    %v4915 = vmul.f32 %v4707, %v4768
    %v4916 = vmul.f32 %v4708, %v4760
    %v4917 = vmul.f32 %v4709, %v4764
    %v4918 = vmul.f32 %v4710, %v4768
    %v4919 = vmul.f32 %v4711, %v4760
    %v4920 = vmul.f32 %v4712, %v4764
    %v4921 = vmul.f32 %v4713, %v4768
    %v4922 = vmul.f32 %v4714, %v4760
    %v4923 = vmul.f32 %v4715, %v4764
    %v4924 = vmul.f32 %v4716, %v4768
    %v4925 = vmul.f32 %v4717, %v4760
    %v4926 = vmul.f32 %v4718, %v4764
    %v4927 = vmul.f32 %v4719, %v4768
    %v4928 = vmul.f32 %v4720, %v4760
    %v4929 = vmul.f32 %v4721, %v4764
    %v4930 = vmul.f32 %v4722, %v4768
    %v4931 = vmul.f32 %v4723, %v4760
    %v4932 = vmul.f32 %v4724, %v4764
    %v4933 = vmul.f32 %v4725, %v4768
    %v4934 = vmul.f32 %v4726, %v4760
    %v4935 = vmul.f32 %v4727, %v4764
    %v4936 = vmul.f32 %v4728, %v4768
    %v4937 = vmul.f32 %v4729, %v4760
    %v4938 = vmul.f32 %v4730, %v4764
    %v4939 = vmul.f32 %v4731, %v4768
    %v4940 = vmul.f32 %v4732, %v4760
    %v4941 = vmul.f32 %v4733, %v4764
    %v4942 = vmul.f32 %v4734, %v4768
    %v4943 = vmul.f32 %v4735, %v4760
    %v4944 = vmul.f32 %v4736, %v4764
    %v4945 = vmul.f32 %v4737, %v4768
    %v4946 = vmul.f32 %v4738, %v4760
    %v4947 = vmul.f32 %v4739, %v4764
    %v4948 = vmul.f32 %v4740, %v4768
    %v4949 = vmul.f32 %v4741, %v4760
    %v4950 = vmul.f32 %v4742, %v4764
    %v4951 = vmul.f32 %v4743, %v4768
    %v4952 = vmul.f32 %v4744, %v4760
    %v4953 = vmul.f32 %v4745, %v4764
    %v4954 = vmul.f32 %v4746, %v4768
    %v4955 = vmul.f32 %v4747, %v4760
    %v4956 = vmul.f32 %v4748, %v4764
    %v4957 = vmul.f32 %v4749, %v4768
    %v4958 = vmul.f32 %v4750, %v4760
    %v4959 = vmul.f32 %v4751, %v4764
    %v4960 = vmul.f32 %v4752, %v4768
    %v4961 = vmul.f32 %v4753, %v4760
    %v4962 = vmul.f32 %v4754, %v4764
    %v4963 = vmul.f32 %v4755, %v4768
    %v4965 = vlaneseq
    %v4966 = vshrl.u32 %v4965, 7
    %v4967 = vsub.s32 0, %v4966
    %v4968 = vrot.slane %v3753, %v4967
    %v4969 = vlaneseq
    %v4970 = vshrl.u32 %v4969, 7
    %v4971 = vsub.s32 1, %v4970
    %v4972 = vrot.slane %v3753, %v4971
    %v4973 = vlaneseq
    %v4974 = vshrl.u32 %v4973, 7
    %v4975 = vsub.s32 2, %v4974
    %v4976 = vrot.slane %v3753, %v4975
    %v4980 = vadd.f32 %v4772, %v4968
    %v4981 = vadd.f32 %v4773, %v4972
    %v4982 = vadd.f32 %v4774, %v4976
    %v4983 = vadd.f32 %v4775, %v4968
    %v4984 = vadd.f32 %v4776, %v4972
    %v4985 = vadd.f32 %v4777, %v4976
    %v4986 = vadd.f32 %v4778, %v4968
    %v4987 = vadd.f32 %v4779, %v4972
    %v4988 = vadd.f32 %v4780, %v4976
    %v4989 = vadd.f32 %v4781, %v4968
    %v4990 = vadd.f32 %v4782, %v4972
    %v4991 = vadd.f32 %v4783, %v4976
    %v4992 = vadd.f32 %v4784, %v4968
    %v4993 = vadd.f32 %v4785, %v4972
    %v4994 = vadd.f32 %v4786, %v4976
    %v4995 = vadd.f32 %v4787, %v4968
    %v4996 = vadd.f32 %v4788, %v4972
    %v4997 = vadd.f32 %v4789, %v4976
    %v4998 = vadd.f32 %v4790, %v4968
    %v4999 = vadd.f32 %v4791, %v4972
    %v5000 = vadd.f32 %v4792, %v4976
    %v5001 = vadd.f32 %v4793, %v4968
    %v5002 = vadd.f32 %v4794, %v4972
    %v5003 = vadd.f32 %v4795, %v4976
    %v5004 = vadd.f32 %v4796, %v4968
    %v5005 = vadd.f32 %v4797, %v4972
    %v5006 = vadd.f32 %v4798, %v4976
    %v5007 = vadd.f32 %v4799, %v4968
    %v5008 = vadd.f32 %v4800, %v4972
    %v5009 = vadd.f32 %v4801, %v4976
    %v5010 = vadd.f32 %v4802, %v4968
    %v5011 = vadd.f32 %v4803, %v4972
    %v5012 = vadd.f32 %v4804, %v4976
    %v5013 = vadd.f32 %v4805, %v4968
    %v5014 = vadd.f32 %v4806, %v4972
    %v5015 = vadd.f32 %v4807, %v4976
    %v5016 = vadd.f32 %v4808, %v4968
    %v5017 = vadd.f32 %v4809, %v4972
    %v5018 = vadd.f32 %v4810, %v4976
    %v5019 = vadd.f32 %v4811, %v4968
    %v5020 = vadd.f32 %v4812, %v4972
    %v5021 = vadd.f32 %v4813, %v4976
    %v5022 = vadd.f32 %v4814, %v4968
    %v5023 = vadd.f32 %v4815, %v4972
    %v5024 = vadd.f32 %v4816, %v4976
    %v5025 = vadd.f32 %v4817, %v4968
    %v5026 = vadd.f32 %v4818, %v4972
    %v5027 = vadd.f32 %v4819, %v4976
    %v5028 = vadd.f32 %v4820, %v4968
    %v5029 = vadd.f32 %v4821, %v4972
    %v5030 = vadd.f32 %v4822, %v4976
    %v5031 = vadd.f32 %v4823, %v4968
    %v5032 = vadd.f32 %v4824, %v4972
    %v5033 = vadd.f32 %v4825, %v4976
    %v5034 = vadd.f32 %v4826, %v4968
    %v5035 = vadd.f32 %v4827, %v4972
    %v5036 = vadd.f32 %v4828, %v4976
    %v5037 = vadd.f32 %v4829, %v4968
    %v5038 = vadd.f32 %v4830, %v4972
    %v5039 = vadd.f32 %v4831, %v4976
    %v5040 = vadd.f32 %v4832, %v4968
    %v5041 = vadd.f32 %v4833, %v4972
    %v5042 = vadd.f32 %v4834, %v4976
    %v5043 = vadd.f32 %v4835, %v4968
    %v5044 = vadd.f32 %v4836, %v4972
    %v5045 = vadd.f32 %v4837, %v4976
    %v5046 = vadd.f32 %v4838, %v4968
    %v5047 = vadd.f32 %v4839, %v4972
    %v5048 = vadd.f32 %v4840, %v4976
    %v5049 = vadd.f32 %v4841, %v4968
    %v5050 = vadd.f32 %v4842, %v4972
    %v5051 = vadd.f32 %v4843, %v4976
    %v5052 = vadd.f32 %v4844, %v4968
    %v5053 = vadd.f32 %v4845, %v4972
    %v5054 = vadd.f32 %v4846, %v4976
    %v5055 = vadd.f32 %v4847, %v4968
    %v5056 = vadd.f32 %v4848, %v4972
    %v5057 = vadd.f32 %v4849, %v4976
    %v5058 = vadd.f32 %v4850, %v4968
    %v5059 = vadd.f32 %v4851, %v4972
    %v5060 = vadd.f32 %v4852, %v4976
    %v5061 = vadd.f32 %v4853, %v4968
    %v5062 = vadd.f32 %v4854, %v4972
    %v5063 = vadd.f32 %v4855, %v4976
    %v5064 = vadd.f32 %v4856, %v4968
    %v5065 = vadd.f32 %v4857, %v4972
    %v5066 = vadd.f32 %v4858, %v4976
    %v5067 = vadd.f32 %v4859, %v4968
    %v5068 = vadd.f32 %v4860, %v4972
    %v5069 = vadd.f32 %v4861, %v4976
    %v5070 = vadd.f32 %v4862, %v4968
    %v5071 = vadd.f32 %v4863, %v4972
    %v5072 = vadd.f32 %v4864, %v4976
    %v5073 = vadd.f32 %v4865, %v4968
    %v5074 = vadd.f32 %v4866, %v4972
    %v5075 = vadd.f32 %v4867, %v4976
    %v5076 = vadd.f32 %v4868, %v4968
    %v5077 = vadd.f32 %v4869, %v4972
    %v5078 = vadd.f32 %v4870, %v4976
    %v5079 = vadd.f32 %v4871, %v4968
    %v5080 = vadd.f32 %v4872, %v4972
    %v5081 = vadd.f32 %v4873, %v4976
    %v5082 = vadd.f32 %v4874, %v4968
    %v5083 = vadd.f32 %v4875, %v4972
    %v5084 = vadd.f32 %v4876, %v4976
    %v5085 = vadd.f32 %v4877, %v4968
    %v5086 = vadd.f32 %v4878, %v4972
    %v5087 = vadd.f32 %v4879, %v4976
    %v5088 = vadd.f32 %v4880, %v4968
    %v5089 = vadd.f32 %v4881, %v4972
    %v5090 = vadd.f32 %v4882, %v4976
    %v5091 = vadd.f32 %v4883, %v4968
    %v5092 = vadd.f32 %v4884, %v4972
    %v5093 = vadd.f32 %v4885, %v4976
    %v5094 = vadd.f32 %v4886, %v4968
    %v5095 = vadd.f32 %v4887, %v4972
    %v5096 = vadd.f32 %v4888, %v4976
    %v5097 = vadd.f32 %v4889, %v4968
    %v5098 = vadd.f32 %v4890, %v4972
    %v5099 = vadd.f32 %v4891, %v4976
    %v5100 = vadd.f32 %v4892, %v4968
    %v5101 = vadd.f32 %v4893, %v4972
    %v5102 = vadd.f32 %v4894, %v4976
    %v5103 = vadd.f32 %v4895, %v4968
    %v5104 = vadd.f32 %v4896, %v4972
    %v5105 = vadd.f32 %v4897, %v4976
    %v5106 = vadd.f32 %v4898, %v4968
    %v5107 = vadd.f32 %v4899, %v4972
    %v5108 = vadd.f32 %v4900, %v4976
    %v5109 = vadd.f32 %v4901, %v4968
    %v5110 = vadd.f32 %v4902, %v4972
    %v5111 = vadd.f32 %v4903, %v4976
    %v5112 = vadd.f32 %v4904, %v4968
    %v5113 = vadd.f32 %v4905, %v4972
    %v5114 = vadd.f32 %v4906, %v4976
    %v5115 = vadd.f32 %v4907, %v4968
    %v5116 = vadd.f32 %v4908, %v4972
    %v5117 = vadd.f32 %v4909, %v4976
    %v5118 = vadd.f32 %v4910, %v4968
    %v5119 = vadd.f32 %v4911, %v4972
    %v5120 = vadd.f32 %v4912, %v4976
    %v5121 = vadd.f32 %v4913, %v4968
    %v5122 = vadd.f32 %v4914, %v4972
    %v5123 = vadd.f32 %v4915, %v4976
    %v5124 = vadd.f32 %v4916, %v4968
    %v5125 = vadd.f32 %v4917, %v4972
    %v5126 = vadd.f32 %v4918, %v4976
    %v5127 = vadd.f32 %v4919, %v4968
    %v5128 = vadd.f32 %v4920, %v4972
    %v5129 = vadd.f32 %v4921, %v4976
    %v5130 = vadd.f32 %v4922, %v4968
    %v5131 = vadd.f32 %v4923, %v4972
    %v5132 = vadd.f32 %v4924, %v4976
    %v5133 = vadd.f32 %v4925, %v4968
    %v5134 = vadd.f32 %v4926, %v4972
    %v5135 = vadd.f32 %v4927, %v4976
    %v5136 = vadd.f32 %v4928, %v4968
    %v5137 = vadd.f32 %v4929, %v4972
    %v5138 = vadd.f32 %v4930, %v4976
    %v5139 = vadd.f32 %v4931, %v4968
    %v5140 = vadd.f32 %v4932, %v4972
    %v5141 = vadd.f32 %v4933, %v4976
    %v5142 = vadd.f32 %v4934, %v4968
    %v5143 = vadd.f32 %v4935, %v4972
    %v5144 = vadd.f32 %v4936, %v4976
    %v5145 = vadd.f32 %v4937, %v4968
    %v5146 = vadd.f32 %v4938, %v4972
    %v5147 = vadd.f32 %v4939, %v4976
    %v5148 = vadd.f32 %v4940, %v4968
    %v5149 = vadd.f32 %v4941, %v4972
    %v5150 = vadd.f32 %v4942, %v4976
    %v5151 = vadd.f32 %v4943, %v4968
    %v5152 = vadd.f32 %v4944, %v4972
    %v5153 = vadd.f32 %v4945, %v4976
    %v5154 = vadd.f32 %v4946, %v4968
    %v5155 = vadd.f32 %v4947, %v4972
    %v5156 = vadd.f32 %v4948, %v4976
    %v5157 = vadd.f32 %v4949, %v4968
    %v5158 = vadd.f32 %v4950, %v4972
    %v5159 = vadd.f32 %v4951, %v4976
    %v5160 = vadd.f32 %v4952, %v4968
    %v5161 = vadd.f32 %v4953, %v4972
    %v5162 = vadd.f32 %v4954, %v4976
    %v5163 = vadd.f32 %v4955, %v4968
    %v5164 = vadd.f32 %v4956, %v4972
    %v5165 = vadd.f32 %v4957, %v4976
    %v5166 = vadd.f32 %v4958, %v4968
    %v5167 = vadd.f32 %v4959, %v4972
    %v5168 = vadd.f32 %v4960, %v4976
    %v5169 = vadd.f32 %v4961, %v4968
    %v5170 = vadd.f32 %v4962, %v4972
    %v5171 = vadd.f32 %v4963, %v4976
    %v5172 = vmax.f32 %v4980, 0.0
    %v5173 = vmax.f32 %v4981, 0.0
    %v5174 = vmax.f32 %v4982, 0.0
    %v5175 = vmax.f32 %v4983, 0.0
    %v5176 = vmax.f32 %v4984, 0.0
    %v5177 = vmax.f32 %v4985, 0.0
    %v5178 = vmax.f32 %v4986, 0.0
    %v5179 = vmax.f32 %v4987, 0.0
    %v5180 = vmax.f32 %v4988, 0.0
    %v5181 = vmax.f32 %v4989, 0.0
    %v5182 = vmax.f32 %v4990, 0.0
    %v5183 = vmax.f32 %v4991, 0.0
    %v5184 = vmax.f32 %v4992, 0.0
    %v5185 = vmax.f32 %v4993, 0.0
    %v5186 = vmax.f32 %v4994, 0.0
    %v5187 = vmax.f32 %v4995, 0.0
    %v5188 = vmax.f32 %v4996, 0.0
    %v5189 = vmax.f32 %v4997, 0.0
    %v5190 = vmax.f32 %v4998, 0.0
    %v5191 = vmax.f32 %v4999, 0.0
    %v5192 = vmax.f32 %v5000, 0.0
    %v5193 = vmax.f32 %v5001, 0.0
    %v5194 = vmax.f32 %v5002, 0.0
    %v5195 = vmax.f32 %v5003, 0.0
    %v5196 = vmax.f32 %v5004, 0.0
    %v5197 = vmax.f32 %v5005, 0.0
    %v5198 = vmax.f32 %v5006, 0.0
    %v5199 = vmax.f32 %v5007, 0.0
    %v5200 = vmax.f32 %v5008, 0.0
    %v5201 = vmax.f32 %v5009, 0.0
    %v5202 = vmax.f32 %v5010, 0.0
    %v5203 = vmax.f32 %v5011, 0.0
    %v5204 = vmax.f32 %v5012, 0.0
    %v5205 = vmax.f32 %v5013, 0.0
    %v5206 = vmax.f32 %v5014, 0.0
    %v5207 = vmax.f32 %v5015, 0.0
    %v5208 = vmax.f32 %v5016, 0.0
    %v5209 = vmax.f32 %v5017, 0.0
    %v5210 = vmax.f32 %v5018, 0.0
    %v5211 = vmax.f32 %v5019, 0.0
    %v5212 = vmax.f32 %v5020, 0.0
    %v5213 = vmax.f32 %v5021, 0.0
    %v5214 = vmax.f32 %v5022, 0.0
    %v5215 = vmax.f32 %v5023, 0.0
    %v5216 = vmax.f32 %v5024, 0.0
    %v5217 = vmax.f32 %v5025, 0.0
    %v5218 = vmax.f32 %v5026, 0.0
    %v5219 = vmax.f32 %v5027, 0.0
    %v5220 = vmax.f32 %v5028, 0.0
    %v5221 = vmax.f32 %v5029, 0.0
    %v5222 = vmax.f32 %v5030, 0.0
    %v5223 = vmax.f32 %v5031, 0.0
    %v5224 = vmax.f32 %v5032, 0.0
    %v5225 = vmax.f32 %v5033, 0.0
    %v5226 = vmax.f32 %v5034, 0.0
    %v5227 = vmax.f32 %v5035, 0.0
    %v5228 = vmax.f32 %v5036, 0.0
    %v5229 = vmax.f32 %v5037, 0.0
    %v5230 = vmax.f32 %v5038, 0.0
    %v5231 = vmax.f32 %v5039, 0.0
    %v5232 = vmax.f32 %v5040, 0.0
    %v5233 = vmax.f32 %v5041, 0.0
    %v5234 = vmax.f32 %v5042, 0.0
    %v5235 = vmax.f32 %v5043, 0.0
    %v5236 = vmax.f32 %v5044, 0.0
    %v5237 = vmax.f32 %v5045, 0.0
    %v5238 = vmax.f32 %v5046, 0.0
    %v5239 = vmax.f32 %v5047, 0.0
    %v5240 = vmax.f32 %v5048, 0.0
    %v5241 = vmax.f32 %v5049, 0.0
    %v5242 = vmax.f32 %v5050, 0.0
    %v5243 = vmax.f32 %v5051, 0.0
    %v5244 = vmax.f32 %v5052, 0.0
    %v5245 = vmax.f32 %v5053, 0.0
    %v5246 = vmax.f32 %v5054, 0.0
    %v5247 = vmax.f32 %v5055, 0.0
    %v5248 = vmax.f32 %v5056, 0.0
    %v5249 = vmax.f32 %v5057, 0.0
    %v5250 = vmax.f32 %v5058, 0.0
    %v5251 = vmax.f32 %v5059, 0.0
    %v5252 = vmax.f32 %v5060, 0.0
    %v5253 = vmax.f32 %v5061, 0.0
    %v5254 = vmax.f32 %v5062, 0.0
    %v5255 = vmax.f32 %v5063, 0.0
    %v5256 = vmax.f32 %v5064, 0.0
    %v5257 = vmax.f32 %v5065, 0.0
    %v5258 = vmax.f32 %v5066, 0.0
    %v5259 = vmax.f32 %v5067, 0.0
    %v5260 = vmax.f32 %v5068, 0.0
    %v5261 = vmax.f32 %v5069, 0.0
    %v5262 = vmax.f32 %v5070, 0.0
    %v5263 = vmax.f32 %v5071, 0.0
    %v5264 = vmax.f32 %v5072, 0.0
    %v5265 = vmax.f32 %v5073, 0.0
    %v5266 = vmax.f32 %v5074, 0.0
    %v5267 = vmax.f32 %v5075, 0.0
    %v5268 = vmax.f32 %v5076, 0.0
    %v5269 = vmax.f32 %v5077, 0.0
    %v5270 = vmax.f32 %v5078, 0.0
    %v5271 = vmax.f32 %v5079, 0.0
    %v5272 = vmax.f32 %v5080, 0.0
    %v5273 = vmax.f32 %v5081, 0.0
    %v5274 = vmax.f32 %v5082, 0.0
    %v5275 = vmax.f32 %v5083, 0.0
    %v5276 = vmax.f32 %v5084, 0.0
    %v5277 = vmax.f32 %v5085, 0.0
    %v5278 = vmax.f32 %v5086, 0.0
    %v5279 = vmax.f32 %v5087, 0.0
    %v5280 = vmax.f32 %v5088, 0.0
    %v5281 = vmax.f32 %v5089, 0.0
    %v5282 = vmax.f32 %v5090, 0.0
    %v5283 = vmax.f32 %v5091, 0.0
    %v5284 = vmax.f32 %v5092, 0.0
    %v5285 = vmax.f32 %v5093, 0.0
    %v5286 = vmax.f32 %v5094, 0.0
    %v5287 = vmax.f32 %v5095, 0.0
    %v5288 = vmax.f32 %v5096, 0.0
    %v5289 = vmax.f32 %v5097, 0.0
    %v5290 = vmax.f32 %v5098, 0.0
    %v5291 = vmax.f32 %v5099, 0.0
    %v5292 = vmax.f32 %v5100, 0.0
    %v5293 = vmax.f32 %v5101, 0.0
    %v5294 = vmax.f32 %v5102, 0.0
    %v5295 = vmax.f32 %v5103, 0.0
    %v5296 = vmax.f32 %v5104, 0.0
    %v5297 = vmax.f32 %v5105, 0.0
    %v5298 = vmax.f32 %v5106, 0.0
    %v5299 = vmax.f32 %v5107, 0.0
    %v5300 = vmax.f32 %v5108, 0.0
    %v5301 = vmax.f32 %v5109, 0.0
    %v5302 = vmax.f32 %v5110, 0.0
    %v5303 = vmax.f32 %v5111, 0.0
    %v5304 = vmax.f32 %v5112, 0.0
    %v5305 = vmax.f32 %v5113, 0.0
    %v5306 = vmax.f32 %v5114, 0.0
    %v5307 = vmax.f32 %v5115, 0.0
    %v5308 = vmax.f32 %v5116, 0.0
    %v5309 = vmax.f32 %v5117, 0.0
    %v5310 = vmax.f32 %v5118, 0.0
    %v5311 = vmax.f32 %v5119, 0.0
    %v5312 = vmax.f32 %v5120, 0.0
    %v5313 = vmax.f32 %v5121, 0.0
    %v5314 = vmax.f32 %v5122, 0.0
    %v5315 = vmax.f32 %v5123, 0.0
    %v5316 = vmax.f32 %v5124, 0.0
    %v5317 = vmax.f32 %v5125, 0.0
    %v5318 = vmax.f32 %v5126, 0.0
    %v5319 = vmax.f32 %v5127, 0.0
    %v5320 = vmax.f32 %v5128, 0.0
    %v5321 = vmax.f32 %v5129, 0.0
    %v5322 = vmax.f32 %v5130, 0.0
    %v5323 = vmax.f32 %v5131, 0.0
    %v5324 = vmax.f32 %v5132, 0.0
    %v5325 = vmax.f32 %v5133, 0.0
    %v5326 = vmax.f32 %v5134, 0.0
    %v5327 = vmax.f32 %v5135, 0.0
    %v5328 = vmax.f32 %v5136, 0.0
    %v5329 = vmax.f32 %v5137, 0.0
    %v5330 = vmax.f32 %v5138, 0.0
    %v5331 = vmax.f32 %v5139, 0.0
    %v5332 = vmax.f32 %v5140, 0.0
    %v5333 = vmax.f32 %v5141, 0.0
    %v5334 = vmax.f32 %v5142, 0.0
    %v5335 = vmax.f32 %v5143, 0.0
    %v5336 = vmax.f32 %v5144, 0.0
    %v5337 = vmax.f32 %v5145, 0.0
    %v5338 = vmax.f32 %v5146, 0.0
    %v5339 = vmax.f32 %v5147, 0.0
    %v5340 = vmax.f32 %v5148, 0.0
    %v5341 = vmax.f32 %v5149, 0.0
    %v5342 = vmax.f32 %v5150, 0.0
    %v5343 = vmax.f32 %v5151, 0.0
    %v5344 = vmax.f32 %v5152, 0.0
    %v5345 = vmax.f32 %v5153, 0.0
    %v5346 = vmax.f32 %v5154, 0.0
    %v5347 = vmax.f32 %v5155, 0.0
    %v5348 = vmax.f32 %v5156, 0.0
    %v5349 = vmax.f32 %v5157, 0.0
    %v5350 = vmax.f32 %v5158, 0.0
    %v5351 = vmax.f32 %v5159, 0.0
    %v5352 = vmax.f32 %v5160, 0.0
    %v5353 = vmax.f32 %v5161, 0.0
    %v5354 = vmax.f32 %v5162, 0.0
    %v5355 = vmax.f32 %v5163, 0.0
    %v5356 = vmax.f32 %v5164, 0.0
    %v5357 = vmax.f32 %v5165, 0.0
    %v5358 = vmax.f32 %v5166, 0.0
    %v5359 = vmax.f32 %v5167, 0.0
    %v5360 = vmax.f32 %v5168, 0.0
    %v5361 = vmax.f32 %v5169, 0.0
    %v5362 = vmax.f32 %v5170, 0.0
    %v5363 = vmax.f32 %v5171, 0.0
    %v5364 = vpack.c.bf16 %v5175, %v5172
    %v5365 = vpack.c.bf16 %v5176, %v5173
    %v5366 = vpack.c.bf16 %v5177, %v5174
    %v5367 = vpack.c.bf16 %v5181, %v5178
    %v5368 = vpack.c.bf16 %v5182, %v5179
    %v5369 = vpack.c.bf16 %v5183, %v5180
    %v5370 = vpack.c.bf16 %v5187, %v5184
    %v5371 = vpack.c.bf16 %v5188, %v5185
    %v5372 = vpack.c.bf16 %v5189, %v5186
    %v5373 = vpack.c.bf16 %v5193, %v5190
    %v5374 = vpack.c.bf16 %v5194, %v5191
    %v5375 = vpack.c.bf16 %v5195, %v5192
    %v5376 = vpack.c.bf16 %v5199, %v5196
    %v5377 = vpack.c.bf16 %v5200, %v5197
    %v5378 = vpack.c.bf16 %v5201, %v5198
    %v5379 = vpack.c.bf16 %v5205, %v5202
    %v5380 = vpack.c.bf16 %v5206, %v5203
    %v5381 = vpack.c.bf16 %v5207, %v5204
    %v5382 = vpack.c.bf16 %v5211, %v5208
    %v5383 = vpack.c.bf16 %v5212, %v5209
    %v5384 = vpack.c.bf16 %v5213, %v5210
    %v5385 = vpack.c.bf16 %v5217, %v5214
    %v5386 = vpack.c.bf16 %v5218, %v5215
    %v5387 = vpack.c.bf16 %v5219, %v5216
    %v5388 = vpack.c.bf16 %v5223, %v5220
    %v5389 = vpack.c.bf16 %v5224, %v5221
    %v5390 = vpack.c.bf16 %v5225, %v5222
    %v5391 = vpack.c.bf16 %v5229, %v5226
    %v5392 = vpack.c.bf16 %v5230, %v5227
    %v5393 = vpack.c.bf16 %v5231, %v5228
    %v5394 = vpack.c.bf16 %v5235, %v5232
    %v5395 = vpack.c.bf16 %v5236, %v5233
    %v5396 = vpack.c.bf16 %v5237, %v5234
    %v5397 = vpack.c.bf16 %v5241, %v5238
    %v5398 = vpack.c.bf16 %v5242, %v5239
    %v5399 = vpack.c.bf16 %v5243, %v5240
    %v5400 = vpack.c.bf16 %v5247, %v5244
    %v5401 = vpack.c.bf16 %v5248, %v5245
    %v5402 = vpack.c.bf16 %v5249, %v5246
    %v5403 = vpack.c.bf16 %v5253, %v5250
    %v5404 = vpack.c.bf16 %v5254, %v5251
    %v5405 = vpack.c.bf16 %v5255, %v5252
    %v5406 = vpack.c.bf16 %v5259, %v5256
    %v5407 = vpack.c.bf16 %v5260, %v5257
    %v5408 = vpack.c.bf16 %v5261, %v5258
    %v5409 = vpack.c.bf16 %v5265, %v5262
    %v5410 = vpack.c.bf16 %v5266, %v5263
    %v5411 = vpack.c.bf16 %v5267, %v5264
    %v5412 = vpack.c.bf16 %v5271, %v5268
    %v5413 = vpack.c.bf16 %v5272, %v5269
    %v5414 = vpack.c.bf16 %v5273, %v5270
    %v5415 = vpack.c.bf16 %v5277, %v5274
    %v5416 = vpack.c.bf16 %v5278, %v5275
    %v5417 = vpack.c.bf16 %v5279, %v5276
    %v5418 = vpack.c.bf16 %v5283, %v5280
    %v5419 = vpack.c.bf16 %v5284, %v5281
    %v5420 = vpack.c.bf16 %v5285, %v5282
    %v5421 = vpack.c.bf16 %v5289, %v5286
    %v5422 = vpack.c.bf16 %v5290, %v5287
    %v5423 = vpack.c.bf16 %v5291, %v5288
    %v5424 = vpack.c.bf16 %v5295, %v5292
    %v5425 = vpack.c.bf16 %v5296, %v5293
    %v5426 = vpack.c.bf16 %v5297, %v5294
    %v5427 = vpack.c.bf16 %v5301, %v5298
    %v5428 = vpack.c.bf16 %v5302, %v5299
    %v5429 = vpack.c.bf16 %v5303, %v5300
    %v5430 = vpack.c.bf16 %v5307, %v5304
    %v5431 = vpack.c.bf16 %v5308, %v5305
    %v5432 = vpack.c.bf16 %v5309, %v5306
    %v5433 = vpack.c.bf16 %v5313, %v5310
    %v5434 = vpack.c.bf16 %v5314, %v5311
    %v5435 = vpack.c.bf16 %v5315, %v5312
    %v5436 = vpack.c.bf16 %v5319, %v5316
    %v5437 = vpack.c.bf16 %v5320, %v5317
    %v5438 = vpack.c.bf16 %v5321, %v5318
    %v5439 = vpack.c.bf16 %v5325, %v5322
    %v5440 = vpack.c.bf16 %v5326, %v5323
    %v5441 = vpack.c.bf16 %v5327, %v5324
    %v5442 = vpack.c.bf16 %v5331, %v5328
    %v5443 = vpack.c.bf16 %v5332, %v5329
    %v5444 = vpack.c.bf16 %v5333, %v5330
    %v5445 = vpack.c.bf16 %v5337, %v5334
    %v5446 = vpack.c.bf16 %v5338, %v5335
    %v5447 = vpack.c.bf16 %v5339, %v5336
    %v5448 = vpack.c.bf16 %v5343, %v5340
    %v5449 = vpack.c.bf16 %v5344, %v5341
    %v5450 = vpack.c.bf16 %v5345, %v5342
    %v5451 = vpack.c.bf16 %v5349, %v5346
    %v5452 = vpack.c.bf16 %v5350, %v5347
    %v5453 = vpack.c.bf16 %v5351, %v5348
    %v5454 = vpack.c.bf16 %v5355, %v5352
    %v5455 = vpack.c.bf16 %v5356, %v5353
    %v5456 = vpack.c.bf16 %v5357, %v5354
    %v5457 = vpack.c.bf16 %v5361, %v5358
    %v5458 = vpack.c.bf16 %v5362, %v5359
    %v5459 = vpack.c.bf16 %v5363, %v5360
    %v5556 = vunpack.c.l.b16 %v5364
    %v5557 = vunpack.c.l.b16 %v5365
    %v5558 = vunpack.c.l.b16 %v5366
    %v5559 = vunpack.c.h.b16 %v5364
    %v5560 = vunpack.c.h.b16 %v5365
    %v5561 = vunpack.c.h.b16 %v5366
    %v5562 = vunpack.c.l.b16 %v5367
    %v5563 = vunpack.c.l.b16 %v5368
    %v5564 = vunpack.c.l.b16 %v5369
    %v5565 = vunpack.c.h.b16 %v5367
    %v5566 = vunpack.c.h.b16 %v5368
    %v5567 = vunpack.c.h.b16 %v5369
    %v5568 = vunpack.c.l.b16 %v5370
    %v5569 = vunpack.c.l.b16 %v5371
    %v5570 = vunpack.c.l.b16 %v5372
    %v5571 = vunpack.c.h.b16 %v5370
    %v5572 = vunpack.c.h.b16 %v5371
    %v5573 = vunpack.c.h.b16 %v5372
    %v5574 = vunpack.c.l.b16 %v5373
    %v5575 = vunpack.c.l.b16 %v5374
    %v5576 = vunpack.c.l.b16 %v5375
    %v5577 = vunpack.c.h.b16 %v5373
    %v5578 = vunpack.c.h.b16 %v5374
    %v5579 = vunpack.c.h.b16 %v5375
    %v5580 = vunpack.c.l.b16 %v5376
    %v5581 = vunpack.c.l.b16 %v5377
    %v5582 = vunpack.c.l.b16 %v5378
    %v5583 = vunpack.c.h.b16 %v5376
    %v5584 = vunpack.c.h.b16 %v5377
    %v5585 = vunpack.c.h.b16 %v5378
    %v5586 = vunpack.c.l.b16 %v5379
    %v5587 = vunpack.c.l.b16 %v5380
    %v5588 = vunpack.c.l.b16 %v5381
    %v5589 = vunpack.c.h.b16 %v5379
    %v5590 = vunpack.c.h.b16 %v5380
    %v5591 = vunpack.c.h.b16 %v5381
    %v5592 = vunpack.c.l.b16 %v5382
    %v5593 = vunpack.c.l.b16 %v5383
    %v5594 = vunpack.c.l.b16 %v5384
    %v5595 = vunpack.c.h.b16 %v5382
    %v5596 = vunpack.c.h.b16 %v5383
    %v5597 = vunpack.c.h.b16 %v5384
    %v5598 = vunpack.c.l.b16 %v5385
    %v5599 = vunpack.c.l.b16 %v5386
    %v5600 = vunpack.c.l.b16 %v5387
    %v5601 = vunpack.c.h.b16 %v5385
    %v5602 = vunpack.c.h.b16 %v5386
    %v5603 = vunpack.c.h.b16 %v5387
    %v5604 = vunpack.c.l.b16 %v5388
    %v5605 = vunpack.c.l.b16 %v5389
    %v5606 = vunpack.c.l.b16 %v5390
    %v5607 = vunpack.c.h.b16 %v5388
    %v5608 = vunpack.c.h.b16 %v5389
    %v5609 = vunpack.c.h.b16 %v5390
    %v5610 = vunpack.c.l.b16 %v5391
    %v5611 = vunpack.c.l.b16 %v5392
    %v5612 = vunpack.c.l.b16 %v5393
    %v5613 = vunpack.c.h.b16 %v5391
    %v5614 = vunpack.c.h.b16 %v5392
    %v5615 = vunpack.c.h.b16 %v5393
    %v5616 = vunpack.c.l.b16 %v5394
    %v5617 = vunpack.c.l.b16 %v5395
    %v5618 = vunpack.c.l.b16 %v5396
    %v5619 = vunpack.c.h.b16 %v5394
    %v5620 = vunpack.c.h.b16 %v5395
    %v5621 = vunpack.c.h.b16 %v5396
    %v5622 = vunpack.c.l.b16 %v5397
    %v5623 = vunpack.c.l.b16 %v5398
    %v5624 = vunpack.c.l.b16 %v5399
    %v5625 = vunpack.c.h.b16 %v5397
    %v5626 = vunpack.c.h.b16 %v5398
    %v5627 = vunpack.c.h.b16 %v5399
    %v5628 = vunpack.c.l.b16 %v5400
    %v5629 = vunpack.c.l.b16 %v5401
    %v5630 = vunpack.c.l.b16 %v5402
    %v5631 = vunpack.c.h.b16 %v5400
    %v5632 = vunpack.c.h.b16 %v5401
    %v5633 = vunpack.c.h.b16 %v5402
    %v5634 = vunpack.c.l.b16 %v5403
    %v5635 = vunpack.c.l.b16 %v5404
    %v5636 = vunpack.c.l.b16 %v5405
    %v5637 = vunpack.c.h.b16 %v5403
    %v5638 = vunpack.c.h.b16 %v5404
    %v5639 = vunpack.c.h.b16 %v5405
    %v5640 = vunpack.c.l.b16 %v5406
    %v5641 = vunpack.c.l.b16 %v5407
    %v5642 = vunpack.c.l.b16 %v5408
    %v5643 = vunpack.c.h.b16 %v5406
    %v5644 = vunpack.c.h.b16 %v5407
    %v5645 = vunpack.c.h.b16 %v5408
    %v5646 = vunpack.c.l.b16 %v5409
    %v5647 = vunpack.c.l.b16 %v5410
    %v5648 = vunpack.c.l.b16 %v5411
    %v5649 = vunpack.c.h.b16 %v5409
    %v5650 = vunpack.c.h.b16 %v5410
    %v5651 = vunpack.c.h.b16 %v5411
    %v5652 = vunpack.c.l.b16 %v5412
    %v5653 = vunpack.c.l.b16 %v5413
    %v5654 = vunpack.c.l.b16 %v5414
    %v5655 = vunpack.c.h.b16 %v5412
    %v5656 = vunpack.c.h.b16 %v5413
    %v5657 = vunpack.c.h.b16 %v5414
    %v5658 = vunpack.c.l.b16 %v5415
    %v5659 = vunpack.c.l.b16 %v5416
    %v5660 = vunpack.c.l.b16 %v5417
    %v5661 = vunpack.c.h.b16 %v5415
    %v5662 = vunpack.c.h.b16 %v5416
    %v5663 = vunpack.c.h.b16 %v5417
    %v5664 = vunpack.c.l.b16 %v5418
    %v5665 = vunpack.c.l.b16 %v5419
    %v5666 = vunpack.c.l.b16 %v5420
    %v5667 = vunpack.c.h.b16 %v5418
    %v5668 = vunpack.c.h.b16 %v5419
    %v5669 = vunpack.c.h.b16 %v5420
    %v5670 = vunpack.c.l.b16 %v5421
    %v5671 = vunpack.c.l.b16 %v5422
    %v5672 = vunpack.c.l.b16 %v5423
    %v5673 = vunpack.c.h.b16 %v5421
    %v5674 = vunpack.c.h.b16 %v5422
    %v5675 = vunpack.c.h.b16 %v5423
    %v5676 = vunpack.c.l.b16 %v5424
    %v5677 = vunpack.c.l.b16 %v5425
    %v5678 = vunpack.c.l.b16 %v5426
    %v5679 = vunpack.c.h.b16 %v5424
    %v5680 = vunpack.c.h.b16 %v5425
    %v5681 = vunpack.c.h.b16 %v5426
    %v5682 = vunpack.c.l.b16 %v5427
    %v5683 = vunpack.c.l.b16 %v5428
    %v5684 = vunpack.c.l.b16 %v5429
    %v5685 = vunpack.c.h.b16 %v5427
    %v5686 = vunpack.c.h.b16 %v5428
    %v5687 = vunpack.c.h.b16 %v5429
    %v5688 = vunpack.c.l.b16 %v5430
    %v5689 = vunpack.c.l.b16 %v5431
    %v5690 = vunpack.c.l.b16 %v5432
    %v5691 = vunpack.c.h.b16 %v5430
    %v5692 = vunpack.c.h.b16 %v5431
    %v5693 = vunpack.c.h.b16 %v5432
    %v5694 = vunpack.c.l.b16 %v5433
    %v5695 = vunpack.c.l.b16 %v5434
    %v5696 = vunpack.c.l.b16 %v5435
    %v5697 = vunpack.c.h.b16 %v5433
    %v5698 = vunpack.c.h.b16 %v5434
    %v5699 = vunpack.c.h.b16 %v5435
    %v5700 = vunpack.c.l.b16 %v5436
    %v5701 = vunpack.c.l.b16 %v5437
    %v5702 = vunpack.c.l.b16 %v5438
    %v5703 = vunpack.c.h.b16 %v5436
    %v5704 = vunpack.c.h.b16 %v5437
    %v5705 = vunpack.c.h.b16 %v5438
    %v5706 = vunpack.c.l.b16 %v5439
    %v5707 = vunpack.c.l.b16 %v5440
    %v5708 = vunpack.c.l.b16 %v5441
    %v5709 = vunpack.c.h.b16 %v5439
    %v5710 = vunpack.c.h.b16 %v5440
    %v5711 = vunpack.c.h.b16 %v5441
    %v5712 = vunpack.c.l.b16 %v5442
    %v5713 = vunpack.c.l.b16 %v5443
    %v5714 = vunpack.c.l.b16 %v5444
    %v5715 = vunpack.c.h.b16 %v5442
    %v5716 = vunpack.c.h.b16 %v5443
    %v5717 = vunpack.c.h.b16 %v5444
    %v5718 = vunpack.c.l.b16 %v5445
    %v5719 = vunpack.c.l.b16 %v5446
    %v5720 = vunpack.c.l.b16 %v5447
    %v5721 = vunpack.c.h.b16 %v5445
    %v5722 = vunpack.c.h.b16 %v5446
    %v5723 = vunpack.c.h.b16 %v5447
    %v5724 = vunpack.c.l.b16 %v5448
    %v5725 = vunpack.c.l.b16 %v5449
    %v5726 = vunpack.c.l.b16 %v5450
    %v5727 = vunpack.c.h.b16 %v5448
    %v5728 = vunpack.c.h.b16 %v5449
    %v5729 = vunpack.c.h.b16 %v5450
    %v5730 = vunpack.c.l.b16 %v5451
    %v5731 = vunpack.c.l.b16 %v5452
    %v5732 = vunpack.c.l.b16 %v5453
    %v5733 = vunpack.c.h.b16 %v5451
    %v5734 = vunpack.c.h.b16 %v5452
    %v5735 = vunpack.c.h.b16 %v5453
    %v5736 = vunpack.c.l.b16 %v5454
    %v5737 = vunpack.c.l.b16 %v5455
    %v5738 = vunpack.c.l.b16 %v5456
    %v5739 = vunpack.c.h.b16 %v5454
    %v5740 = vunpack.c.h.b16 %v5455
    %v5741 = vunpack.c.h.b16 %v5456
    %v5742 = vunpack.c.l.b16 %v5457
    %v5743 = vunpack.c.l.b16 %v5458
    %v5744 = vunpack.c.l.b16 %v5459
    %v5745 = vunpack.c.h.b16 %v5457
    %v5746 = vunpack.c.h.b16 %v5458
    %v5747 = vunpack.c.h.b16 %v5459
    %v5748 = vpack.c.b16 %v5557, %v5556
    %v5749 = vpack.c.b16 %v5558, %v5558
    %v5750 = vpack.c.b16 %v5560, %v5559
    %v5751 = vpack.c.b16 %v5561, %v5561
    %v5752 = vpack.c.b16 %v5563, %v5562
    %v5753 = vpack.c.b16 %v5564, %v5564
    %v5754 = vpack.c.b16 %v5566, %v5565
    %v5755 = vpack.c.b16 %v5567, %v5567
    %v5756 = vpack.c.b16 %v5569, %v5568
    %v5757 = vpack.c.b16 %v5570, %v5570
    %v5758 = vpack.c.b16 %v5572, %v5571
    %v5759 = vpack.c.b16 %v5573, %v5573
    %v5760 = vpack.c.b16 %v5575, %v5574
    %v5761 = vpack.c.b16 %v5576, %v5576
    %v5762 = vpack.c.b16 %v5578, %v5577
    %v5763 = vpack.c.b16 %v5579, %v5579
    %v5764 = vpack.c.b16 %v5581, %v5580
    %v5765 = vpack.c.b16 %v5582, %v5582
    %v5766 = vpack.c.b16 %v5584, %v5583
    %v5767 = vpack.c.b16 %v5585, %v5585
    %v5768 = vpack.c.b16 %v5587, %v5586
    %v5769 = vpack.c.b16 %v5588, %v5588
    %v5770 = vpack.c.b16 %v5590, %v5589
    %v5771 = vpack.c.b16 %v5591, %v5591
    %v5772 = vpack.c.b16 %v5593, %v5592
    %v5773 = vpack.c.b16 %v5594, %v5594
    %v5774 = vpack.c.b16 %v5596, %v5595
    %v5775 = vpack.c.b16 %v5597, %v5597
    %v5776 = vpack.c.b16 %v5599, %v5598
    %v5777 = vpack.c.b16 %v5600, %v5600
    %v5778 = vpack.c.b16 %v5602, %v5601
    %v5779 = vpack.c.b16 %v5603, %v5603
    %v5780 = vpack.c.b16 %v5605, %v5604
    %v5781 = vpack.c.b16 %v5606, %v5606
    %v5782 = vpack.c.b16 %v5608, %v5607
    %v5783 = vpack.c.b16 %v5609, %v5609
    %v5784 = vpack.c.b16 %v5611, %v5610
    %v5785 = vpack.c.b16 %v5612, %v5612
    %v5786 = vpack.c.b16 %v5614, %v5613
    %v5787 = vpack.c.b16 %v5615, %v5615
    %v5788 = vpack.c.b16 %v5617, %v5616
    %v5789 = vpack.c.b16 %v5618, %v5618
    %v5790 = vpack.c.b16 %v5620, %v5619
    %v5791 = vpack.c.b16 %v5621, %v5621
    %v5792 = vpack.c.b16 %v5623, %v5622
    %v5793 = vpack.c.b16 %v5624, %v5624
    %v5794 = vpack.c.b16 %v5626, %v5625
    %v5795 = vpack.c.b16 %v5627, %v5627
    %v5796 = vpack.c.b16 %v5629, %v5628
    %v5797 = vpack.c.b16 %v5630, %v5630
    %v5798 = vpack.c.b16 %v5632, %v5631
    %v5799 = vpack.c.b16 %v5633, %v5633
    %v5800 = vpack.c.b16 %v5635, %v5634
    %v5801 = vpack.c.b16 %v5636, %v5636
    %v5802 = vpack.c.b16 %v5638, %v5637
    %v5803 = vpack.c.b16 %v5639, %v5639
    %v5804 = vpack.c.b16 %v5641, %v5640
    %v5805 = vpack.c.b16 %v5642, %v5642
    %v5806 = vpack.c.b16 %v5644, %v5643
    %v5807 = vpack.c.b16 %v5645, %v5645
    %v5808 = vpack.c.b16 %v5647, %v5646
    %v5809 = vpack.c.b16 %v5648, %v5648
    %v5810 = vpack.c.b16 %v5650, %v5649
    %v5811 = vpack.c.b16 %v5651, %v5651
    %v5812 = vpack.c.b16 %v5653, %v5652
    %v5813 = vpack.c.b16 %v5654, %v5654
    %v5814 = vpack.c.b16 %v5656, %v5655
    %v5815 = vpack.c.b16 %v5657, %v5657
    %v5816 = vpack.c.b16 %v5659, %v5658
    %v5817 = vpack.c.b16 %v5660, %v5660
    %v5818 = vpack.c.b16 %v5662, %v5661
    %v5819 = vpack.c.b16 %v5663, %v5663
    %v5820 = vpack.c.b16 %v5665, %v5664
    %v5821 = vpack.c.b16 %v5666, %v5666
    %v5822 = vpack.c.b16 %v5668, %v5667
    %v5823 = vpack.c.b16 %v5669, %v5669
    %v5824 = vpack.c.b16 %v5671, %v5670
    %v5825 = vpack.c.b16 %v5672, %v5672
    %v5826 = vpack.c.b16 %v5674, %v5673
    %v5827 = vpack.c.b16 %v5675, %v5675
    %v5828 = vpack.c.b16 %v5677, %v5676
    %v5829 = vpack.c.b16 %v5678, %v5678
    %v5830 = vpack.c.b16 %v5680, %v5679
    %v5831 = vpack.c.b16 %v5681, %v5681
    %v5832 = vpack.c.b16 %v5683, %v5682
    %v5833 = vpack.c.b16 %v5684, %v5684
    %v5834 = vpack.c.b16 %v5686, %v5685
    %v5835 = vpack.c.b16 %v5687, %v5687
    %v5836 = vpack.c.b16 %v5689, %v5688
    %v5837 = vpack.c.b16 %v5690, %v5690
    %v5838 = vpack.c.b16 %v5692, %v5691
    %v5839 = vpack.c.b16 %v5693, %v5693
    %v5840 = vpack.c.b16 %v5695, %v5694
    %v5841 = vpack.c.b16 %v5696, %v5696
    %v5842 = vpack.c.b16 %v5698, %v5697
    %v5843 = vpack.c.b16 %v5699, %v5699
    %v5844 = vpack.c.b16 %v5701, %v5700
    %v5845 = vpack.c.b16 %v5702, %v5702
    %v5846 = vpack.c.b16 %v5704, %v5703
    %v5847 = vpack.c.b16 %v5705, %v5705
    %v5848 = vpack.c.b16 %v5707, %v5706
    %v5849 = vpack.c.b16 %v5708, %v5708
    %v5850 = vpack.c.b16 %v5710, %v5709
    %v5851 = vpack.c.b16 %v5711, %v5711
    %v5852 = vpack.c.b16 %v5713, %v5712
    %v5853 = vpack.c.b16 %v5714, %v5714
    %v5854 = vpack.c.b16 %v5716, %v5715
    %v5855 = vpack.c.b16 %v5717, %v5717
    %v5856 = vpack.c.b16 %v5719, %v5718
    %v5857 = vpack.c.b16 %v5720, %v5720
    %v5858 = vpack.c.b16 %v5722, %v5721
    %v5859 = vpack.c.b16 %v5723, %v5723
    %v5860 = vpack.c.b16 %v5725, %v5724
    %v5861 = vpack.c.b16 %v5726, %v5726
    %v5862 = vpack.c.b16 %v5728, %v5727
    %v5863 = vpack.c.b16 %v5729, %v5729
    %v5864 = vpack.c.b16 %v5731, %v5730
    %v5865 = vpack.c.b16 %v5732, %v5732
    %v5866 = vpack.c.b16 %v5734, %v5733
    %v5867 = vpack.c.b16 %v5735, %v5735
    %v5868 = vpack.c.b16 %v5737, %v5736
    %v5869 = vpack.c.b16 %v5738, %v5738
    %v5870 = vpack.c.b16 %v5740, %v5739
    %v5871 = vpack.c.b16 %v5741, %v5741
    %v5872 = vpack.c.b16 %v5743, %v5742
    %v5873 = vpack.c.b16 %v5744, %v5744
    %v5874 = vpack.c.b16 %v5746, %v5745
    %v5875 = vpack.c.b16 %v5747, %v5747
    %6004 = vst [vmem:[#allocation20] sm:$0xff] %v5748
    %6005 = vst [vmem:[#allocation20 + $0x8] sm:$0xf] %v5749
    %6006 = vst [vmem:[#allocation20 + $0xc] sm:$0xff] %v5750
    %6007 = vst [vmem:[#allocation20 + $0x14] sm:$0xf] %v5751
    %6008 = vst [vmem:[#allocation20 + $0x18] sm:$0xff] %v5752
    %6009 = vst [vmem:[#allocation20 + $0x20] sm:$0xf] %v5753
    %6010 = vst [vmem:[#allocation20 + $0x24] sm:$0xff] %v5754
    %6011 = vst [vmem:[#allocation20 + $0x2c] sm:$0xf] %v5755
    %6012 = vst [vmem:[#allocation20 + $0x30] sm:$0xff] %v5756
    %6013 = vst [vmem:[#allocation20 + $0x38] sm:$0xf] %v5757
    %6014 = vst [vmem:[#allocation20 + $0x3c] sm:$0xff] %v5758
    %6015 = vst [vmem:[#allocation20 + $0x44] sm:$0xf] %v5759
    %6016 = vst [vmem:[#allocation20 + $0x48] sm:$0xff] %v5760
    %6017 = vst [vmem:[#allocation20 + $0x50] sm:$0xf] %v5761
    %6018 = vst [vmem:[#allocation20 + $0x54] sm:$0xff] %v5762
    %6019 = vst [vmem:[#allocation20 + $0x5c] sm:$0xf] %v5763
    %6020 = vst [vmem:[#allocation20 + $0x60] sm:$0xff] %v5764
    %6021 = vst [vmem:[#allocation20 + $0x68] sm:$0xf] %v5765
    %6022 = vst [vmem:[#allocation20 + $0x6c] sm:$0xff] %v5766
    %6023 = vst [vmem:[#allocation20 + $0x74] sm:$0xf] %v5767
    %6024 = vst [vmem:[#allocation20 + $0x78] sm:$0xff] %v5768
    %6025 = vst [vmem:[#allocation20 + $0x80] sm:$0xf] %v5769
    %6026 = vst [vmem:[#allocation20 + $0x84] sm:$0xff] %v5770
    %6027 = vst [vmem:[#allocation20 + $0x8c] sm:$0xf] %v5771
    %6028 = vst [vmem:[#allocation20 + $0x90] sm:$0xff] %v5772
    %6029 = vst [vmem:[#allocation20 + $0x98] sm:$0xf] %v5773
    %6030 = vst [vmem:[#allocation20 + $0x9c] sm:$0xff] %v5774
    %6031 = vst [vmem:[#allocation20 + $0xa4] sm:$0xf] %v5775
    %6032 = vst [vmem:[#allocation20 + $0xa8] sm:$0xff] %v5776
    %6033 = vst [vmem:[#allocation20 + $0xb0] sm:$0xf] %v5777
    %6034 = vst [vmem:[#allocation20 + $0xb4] sm:$0xff] %v5778
    %6035 = vst [vmem:[#allocation20 + $0xbc] sm:$0xf] %v5779
    %6036 = vst [vmem:[#allocation20 + $0xc0] sm:$0xff] %v5780
    %6037 = vst [vmem:[#allocation20 + $0xc8] sm:$0xf] %v5781
    %6038 = vst [vmem:[#allocation20 + $0xcc] sm:$0xff] %v5782
    %6039 = vst [vmem:[#allocation20 + $0xd4] sm:$0xf] %v5783
    %6040 = vst [vmem:[#allocation20 + $0xd8] sm:$0xff] %v5784
    %6041 = vst [vmem:[#allocation20 + $0xe0] sm:$0xf] %v5785
    %6042 = vst [vmem:[#allocation20 + $0xe4] sm:$0xff] %v5786
    %6043 = vst [vmem:[#allocation20 + $0xec] sm:$0xf] %v5787
    %6044 = vst [vmem:[#allocation20 + $0xf0] sm:$0xff] %v5788
    %6045 = vst [vmem:[#allocation20 + $0xf8] sm:$0xf] %v5789
    %6046 = vst [vmem:[#allocation20 + $0xfc] sm:$0xff] %v5790
    %6047 = vst [vmem:[#allocation20 + $0x104] sm:$0xf] %v5791
    %6048 = vst [vmem:[#allocation20 + $0x108] sm:$0xff] %v5792
    %6049 = vst [vmem:[#allocation20 + $0x110] sm:$0xf] %v5793
    %6050 = vst [vmem:[#allocation20 + $0x114] sm:$0xff] %v5794
    %6051 = vst [vmem:[#allocation20 + $0x11c] sm:$0xf] %v5795
    %6052 = vst [vmem:[#allocation20 + $0x120] sm:$0xff] %v5796
    %6053 = vst [vmem:[#allocation20 + $0x128] sm:$0xf] %v5797
    %6054 = vst [vmem:[#allocation20 + $0x12c] sm:$0xff] %v5798
    %6055 = vst [vmem:[#allocation20 + $0x134] sm:$0xf] %v5799
    %6056 = vst [vmem:[#allocation20 + $0x138] sm:$0xff] %v5800
    %6057 = vst [vmem:[#allocation20 + $0x140] sm:$0xf] %v5801
    %6058 = vst [vmem:[#allocation20 + $0x144] sm:$0xff] %v5802
    %6059 = vst [vmem:[#allocation20 + $0x14c] sm:$0xf] %v5803
    %6060 = vst [vmem:[#allocation20 + $0x150] sm:$0xff] %v5804
    %6061 = vst [vmem:[#allocation20 + $0x158] sm:$0xf] %v5805
    %6062 = vst [vmem:[#allocation20 + $0x15c] sm:$0xff] %v5806
    %6063 = vst [vmem:[#allocation20 + $0x164] sm:$0xf] %v5807
    %6064 = vst [vmem:[#allocation20 + $0x168] sm:$0xff] %v5808
    %6065 = vst [vmem:[#allocation20 + $0x170] sm:$0xf] %v5809
    %6066 = vst [vmem:[#allocation20 + $0x174] sm:$0xff] %v5810
    %6067 = vst [vmem:[#allocation20 + $0x17c] sm:$0xf] %v5811
    %6068 = vst [vmem:[#allocation20 + $0x180] sm:$0xff] %v5812
    %6069 = vst [vmem:[#allocation20 + $0x188] sm:$0xf] %v5813
    %6070 = vst [vmem:[#allocation20 + $0x18c] sm:$0xff] %v5814
    %6071 = vst [vmem:[#allocation20 + $0x194] sm:$0xf] %v5815
    %6072 = vst [vmem:[#allocation20 + $0x198] sm:$0xff] %v5816
    %6073 = vst [vmem:[#allocation20 + $0x1a0] sm:$0xf] %v5817
    %6074 = vst [vmem:[#allocation20 + $0x1a4] sm:$0xff] %v5818
    %6075 = vst [vmem:[#allocation20 + $0x1ac] sm:$0xf] %v5819
    %6076 = vst [vmem:[#allocation20 + $0x1b0] sm:$0xff] %v5820
    %6077 = vst [vmem:[#allocation20 + $0x1b8] sm:$0xf] %v5821
    %6078 = vst [vmem:[#allocation20 + $0x1bc] sm:$0xff] %v5822
    %6079 = vst [vmem:[#allocation20 + $0x1c4] sm:$0xf] %v5823
    %6080 = vst [vmem:[#allocation20 + $0x1c8] sm:$0xff] %v5824
    %6081 = vst [vmem:[#allocation20 + $0x1d0] sm:$0xf] %v5825
    %6082 = vst [vmem:[#allocation20 + $0x1d4] sm:$0xff] %v5826
    %6083 = vst [vmem:[#allocation20 + $0x1dc] sm:$0xf] %v5827
    %6084 = vst [vmem:[#allocation20 + $0x1e0] sm:$0xff] %v5828
    %6085 = vst [vmem:[#allocation20 + $0x1e8] sm:$0xf] %v5829
    %6086 = vst [vmem:[#allocation20 + $0x1ec] sm:$0xff] %v5830
    %6087 = vst [vmem:[#allocation20 + $0x1f4] sm:$0xf] %v5831
    %6088 = vst [vmem:[#allocation20 + $0x1f8] sm:$0xff] %v5832
    %6089 = vst [vmem:[#allocation20 + $0x200] sm:$0xf] %v5833
    %6090 = vst [vmem:[#allocation20 + $0x204] sm:$0xff] %v5834
    %6091 = vst [vmem:[#allocation20 + $0x20c] sm:$0xf] %v5835
    %6092 = vst [vmem:[#allocation20 + $0x210] sm:$0xff] %v5836
    %6093 = vst [vmem:[#allocation20 + $0x218] sm:$0xf] %v5837
    %6094 = vst [vmem:[#allocation20 + $0x21c] sm:$0xff] %v5838
    %6095 = vst [vmem:[#allocation20 + $0x224] sm:$0xf] %v5839
    %6096 = vst [vmem:[#allocation20 + $0x228] sm:$0xff] %v5840
    %6097 = vst [vmem:[#allocation20 + $0x230] sm:$0xf] %v5841
    %6098 = vst [vmem:[#allocation20 + $0x234] sm:$0xff] %v5842
    %6099 = vst [vmem:[#allocation20 + $0x23c] sm:$0xf] %v5843
    %6100 = vst [vmem:[#allocation20 + $0x240] sm:$0xff] %v5844
    %6101 = vst [vmem:[#allocation20 + $0x248] sm:$0xf] %v5845
    %6102 = vst [vmem:[#allocation20 + $0x24c] sm:$0xff] %v5846
    %6103 = vst [vmem:[#allocation20 + $0x254] sm:$0xf] %v5847
    %6104 = vst [vmem:[#allocation20 + $0x258] sm:$0xff] %v5848
    %6105 = vst [vmem:[#allocation20 + $0x260] sm:$0xf] %v5849
    %6106 = vst [vmem:[#allocation20 + $0x264] sm:$0xff] %v5850
    %6107 = vst [vmem:[#allocation20 + $0x26c] sm:$0xf] %v5851
    %6108 = vst [vmem:[#allocation20 + $0x270] sm:$0xff] %v5852
    %6109 = vst [vmem:[#allocation20 + $0x278] sm:$0xf] %v5853
    %6110 = vst [vmem:[#allocation20 + $0x27c] sm:$0xff] %v5854
    %6111 = vst [vmem:[#allocation20 + $0x284] sm:$0xf] %v5855
    %6112 = vst [vmem:[#allocation20 + $0x288] sm:$0xff] %v5856
    %6113 = vst [vmem:[#allocation20 + $0x290] sm:$0xf] %v5857
    %6114 = vst [vmem:[#allocation20 + $0x294] sm:$0xff] %v5858
    %6115 = vst [vmem:[#allocation20 + $0x29c] sm:$0xf] %v5859
    %6116 = vst [vmem:[#allocation20 + $0x2a0] sm:$0xff] %v5860
    %6117 = vst [vmem:[#allocation20 + $0x2a8] sm:$0xf] %v5861
    %6118 = vst [vmem:[#allocation20 + $0x2ac] sm:$0xff] %v5862
    %6119 = vst [vmem:[#allocation20 + $0x2b4] sm:$0xf] %v5863
    %6120 = vst [vmem:[#allocation20 + $0x2b8] sm:$0xff] %v5864
    %6121 = vst [vmem:[#allocation20 + $0x2c0] sm:$0xf] %v5865
    %6122 = vst [vmem:[#allocation20 + $0x2c4] sm:$0xff] %v5866
    %6123 = vst [vmem:[#allocation20 + $0x2cc] sm:$0xf] %v5867
    %6124 = vst [vmem:[#allocation20 + $0x2d0] sm:$0xff] %v5868
    %6125 = vst [vmem:[#allocation20 + $0x2d8] sm:$0xf] %v5869
    %6126 = vst [vmem:[#allocation20 + $0x2dc] sm:$0xff] %v5870
    %6127 = vst [vmem:[#allocation20 + $0x2e4] sm:$0xf] %v5871
    %6128 = vst [vmem:[#allocation20 + $0x2e8] sm:$0xff] %v5872
    %6129 = vst [vmem:[#allocation20 + $0x2f0] sm:$0xf] %v5873
    %6130 = vst [vmem:[#allocation20 + $0x2f4] sm:$0xff] %v5874
    %6131 = vst [vmem:[#allocation20 + $0x2fc] sm:$0xf] %v5875
    %v6132 = vld [vmem:[#allocation8] sm:$0xff]
    %v6134 = vcombine.high %v6132, %v6132
    %v6136 = vunpack.c.l.s4 1983009808
    %v6137 = vunpack.c.0.s8 %v6136
    %v6138 = vlaneseq
    %v6139 = vshrl.u32 %v6138, 7
    %v6140 = vsub.s32 %v6137, %v6139
    %v6141 = vrot.slane %v6132, %v6140
    %v6143 = vunpack.c.l.s4 1983009808
    %v6144 = vunpack.c.0.s8 %v6143
    %v6145 = vlaneseq
    %v6146 = vshrl.u32 %v6145, 7
    %v6147 = vsub.s32 %v6144, %v6146
    %v6148 = vrot.slane %v6134, %v6147
    %v6149 = vcombine.high %v6141, %v6141
    %v6150 = vcombine.high %v6148, %v6148
    %v6152 = vsel %vm498, %v6141, 0
    %v6155 = vsel %vm498, %v6149, 0
    %v6158 = vsel %vm498, %v6148, 0
    %v6161 = vsel %vm498, %v6150, 0
    %6163 = vmatprep.subr.bf16.mxu0 %v6155
    %6164 = vmatpush1.bf16.msra.mxu0 %v6152
    %6165 = vmatprep.subr.bf16.mxu0 0
    %6166 = vmatpush1.bf16.msra.mxu0 0
    %6167 = vmatprep.subr.bf16.mxu0 0
    %6168 = vmatpush1.bf16.msra.mxu0 0
    %6169 = vmatprep.subr.bf16.mxu0 0
    %6170 = vmatpush1.bf16.msra.mxu0 0
    %6171 = vmatprep.subr.bf16.mxu0 0
    %6172 = vmatpush1.bf16.msra.mxu0 0
    %6173 = vmatprep.subr.bf16.mxu0 0
    %6174 = vmatpush1.bf16.msra.mxu0 0
    %6175 = vmatprep.subr.bf16.mxu0 0
    %6176 = vmatpush1.bf16.msra.mxu0 0
    %6177 = vmatprep.subr.bf16.mxu0 0
    %6178 = vmatpush1.bf16.msra.mxu0 0
    %6179 = vmatprep.subr.bf16.mxu0 0
    %6180 = vmatpush1.bf16.msra.mxu0 0
    %6181 = vmatprep.subr.bf16.mxu0 0
    %6182 = vmatpush1.bf16.msra.mxu0 0
    %6183 = vmatprep.subr.bf16.mxu0 0
    %6184 = vmatpush1.bf16.msra.mxu0 0
    %6185 = vmatprep.subr.bf16.mxu0 0
    %6186 = vmatpush1.bf16.msra.mxu0 0
    %6187 = vmatprep.subr.bf16.mxu0 0
    %6188 = vmatpush1.bf16.msra.mxu0 0
    %6189 = vmatprep.subr.bf16.mxu0 0
    %6190 = vmatpush1.bf16.msra.mxu0 0
    %6191 = vmatprep.subr.bf16.mxu0 0
    %6192 = vmatpush1.bf16.msra.mxu0 0
    %6193 = vmatprep.subr.bf16.mxu0 0
    %6194 = vmatpush1.bf16.msra.mxu0 0
    %6195 = vmatprep.mubr.bf16.mxu0 0
    %6196 = vmatmul.mubr.bf16.gmra.mrb[0].mxu0 %v403
    %v6197 = vpop.f32.mrb[0].mxu0
    %v6198 = vadd.f32 0.0, %v6197
    %v6199 = vpop.f32.mrb[0].mxu0
    %v6200 = vadd.f32 0.0, %v6199
    %v6201 = vpop.f32.mrb[0].mxu0
    %v6202 = vadd.f32 0.0, %v6201
    %v6203 = vpop.f32.mrb[0].mxu0
    %v6204 = vadd.f32 0.0, %v6203
    %6205 = vmatprep.mubr.bf16.mxu0 0
    %6206 = vmatmul.mubr.bf16.gmra.mrb[0].mxu0 %v406
    %v6207 = vpop.f32.mrb[0].mxu0
    %v6208 = vadd.f32 0.0, %v6207
    %v6209 = vpop.f32.mrb[0].mxu0
    %v6210 = vadd.f32 0.0, %v6209
    %v6211 = vpop.f32.mrb[0].mxu0
    %v6212 = vadd.f32 0.0, %v6211
    %v6213 = vpop.f32.mrb[0].mxu0
    %v6214 = vadd.f32 0.0, %v6213
    %6215 = vmatprep.mubr.bf16.mxu0 0
    %6216 = vmatmul.mubr.bf16.gmra.mrb[0].mxu0 %v409
    %v6217 = vpop.f32.mrb[0].mxu0
    %v6218 = vadd.f32 0.0, %v6217
    %v6219 = vpop.f32.mrb[0].mxu0
    %v6220 = vadd.f32 0.0, %v6219
    %v6221 = vpop.f32.mrb[0].mxu0
    %v6222 = vadd.f32 0.0, %v6221
    %v6223 = vpop.f32.mrb[0].mxu0
    %v6224 = vadd.f32 0.0, %v6223
    %6225 = vmatprep.mubr.bf16.mxu0 0
    %6226 = vmatmul.mubr.bf16.gmra.mrb[0].mxu0 %v412
    %v6227 = vpop.f32.mrb[0].mxu0
    %v6228 = vadd.f32 0.0, %v6227
    %v6229 = vpop.f32.mrb[0].mxu0
    %v6230 = vadd.f32 0.0, %v6229
    %v6231 = vpop.f32.mrb[0].mxu0
    %v6232 = vadd.f32 0.0, %v6231
    %v6233 = vpop.f32.mrb[0].mxu0
    %v6234 = vadd.f32 0.0, %v6233
    %6235 = vmatprep.mubr.bf16.mxu0 0
    %6236 = vmatmul.mubr.bf16.gmra.mrb[0].mxu0 %v415
    %v6237 = vpop.f32.mrb[0].mxu0
    %v6238 = vadd.f32 0.0, %v6237
    %v6239 = vpop.f32.mrb[0].mxu0
    %v6240 = vadd.f32 0.0, %v6239
    %v6241 = vpop.f32.mrb[0].mxu0
    %v6242 = vadd.f32 0.0, %v6241
    %v6243 = vpop.f32.mrb[0].mxu0
    %v6244 = vadd.f32 0.0, %v6243
    %6245 = vmatprep.mubr.bf16.mxu0 0
    %6246 = vmatmul.mubr.bf16.gmra.mrb[0].mxu0 %v418
    %v6247 = vpop.f32.mrb[0].mxu0
    %v6248 = vadd.f32 0.0, %v6247
    %v6249 = vpop.f32.mrb[0].mxu0
    %v6250 = vadd.f32 0.0, %v6249
    %v6251 = vpop.f32.mrb[0].mxu0
    %v6252 = vadd.f32 0.0, %v6251
    %v6253 = vpop.f32.mrb[0].mxu0
    %v6254 = vadd.f32 0.0, %v6253
    %6255 = vmatprep.mubr.bf16.mxu0 0
    %6256 = vmatmul.mubr.bf16.gmra.mrb[0].mxu0 %v421
    %v6257 = vpop.f32.mrb[0].mxu0
    %v6258 = vadd.f32 0.0, %v6257
    %v6259 = vpop.f32.mrb[0].mxu0
    %v6260 = vadd.f32 0.0, %v6259
    %v6261 = vpop.f32.mrb[0].mxu0
    %v6262 = vadd.f32 0.0, %v6261
    %v6263 = vpop.f32.mrb[0].mxu0
    %v6264 = vadd.f32 0.0, %v6263
    %6265 = vmatprep.mubr.bf16.mxu0 0
    %6266 = vmatmul.mubr.bf16.gmra.mrb[0].mxu0 %v424
    %v6267 = vpop.f32.mrb[0].mxu0
    %v6268 = vadd.f32 0.0, %v6267
    %v6269 = vpop.f32.mrb[0].mxu0
    %v6270 = vadd.f32 0.0, %v6269
    %v6271 = vpop.f32.mrb[0].mxu0
    %v6272 = vadd.f32 0.0, %v6271
    %v6273 = vpop.f32.mrb[0].mxu0
    %v6274 = vadd.f32 0.0, %v6273
    %6275 = vmatprep.mubr.bf16.mxu0 0
    %6276 = vmatmul.mubr.bf16.gmra.mrb[0].mxu0 %v427
    %v6277 = vpop.f32.mrb[0].mxu0
    %v6278 = vadd.f32 0.0, %v6277
    %v6279 = vpop.f32.mrb[0].mxu0
    %v6280 = vadd.f32 0.0, %v6279
    %v6281 = vpop.f32.mrb[0].mxu0
    %v6282 = vadd.f32 0.0, %v6281
    %v6283 = vpop.f32.mrb[0].mxu0
    %v6284 = vadd.f32 0.0, %v6283
    %6285 = vmatprep.mubr.bf16.mxu0 0
    %6286 = vmatmul.mubr.bf16.gmra.mrb[0].mxu0 %v430
    %v6287 = vpop.f32.mrb[0].mxu0
    %v6288 = vadd.f32 0.0, %v6287
    %v6289 = vpop.f32.mrb[0].mxu0
    %v6290 = vadd.f32 0.0, %v6289
    %v6291 = vpop.f32.mrb[0].mxu0
    %v6292 = vadd.f32 0.0, %v6291
    %v6293 = vpop.f32.mrb[0].mxu0
    %v6294 = vadd.f32 0.0, %v6293
    %6295 = vmatprep.mubr.bf16.mxu0 0
    %6296 = vmatmul.mubr.bf16.gmra.mrb[0].mxu0 %v433
    %v6297 = vpop.f32.mrb[0].mxu0
    %v6298 = vadd.f32 0.0, %v6297
    %v6299 = vpop.f32.mrb[0].mxu0
    %v6300 = vadd.f32 0.0, %v6299
    %v6301 = vpop.f32.mrb[0].mxu0
    %v6302 = vadd.f32 0.0, %v6301
    %v6303 = vpop.f32.mrb[0].mxu0
    %v6304 = vadd.f32 0.0, %v6303
    %6305 = vmatprep.mubr.bf16.mxu0 0
    %6306 = vmatmul.mubr.bf16.gmra.mrb[0].mxu0 %v436
    %v6307 = vpop.f32.mrb[0].mxu0
    %v6308 = vadd.f32 0.0, %v6307
    %v6309 = vpop.f32.mrb[0].mxu0
    %v6310 = vadd.f32 0.0, %v6309
    %v6311 = vpop.f32.mrb[0].mxu0
    %v6312 = vadd.f32 0.0, %v6311
    %v6313 = vpop.f32.mrb[0].mxu0
    %v6314 = vadd.f32 0.0, %v6313
    %6315 = vmatprep.mubr.bf16.mxu0 0
    %6316 = vmatmul.mubr.bf16.gmra.mrb[0].mxu0 %v439
    %v6317 = vpop.f32.mrb[0].mxu0
    %v6318 = vadd.f32 0.0, %v6317
    %v6319 = vpop.f32.mrb[0].mxu0
    %v6320 = vadd.f32 0.0, %v6319
    %v6321 = vpop.f32.mrb[0].mxu0
    %v6322 = vadd.f32 0.0, %v6321
    %v6323 = vpop.f32.mrb[0].mxu0
    %v6324 = vadd.f32 0.0, %v6323
    %6325 = vmatprep.mubr.bf16.mxu0 0
    %6326 = vmatmul.mubr.bf16.gmra.mrb[0].mxu0 %v442
    %v6327 = vpop.f32.mrb[0].mxu0
    %v6328 = vadd.f32 0.0, %v6327
    %v6329 = vpop.f32.mrb[0].mxu0
    %v6330 = vadd.f32 0.0, %v6329
    %v6331 = vpop.f32.mrb[0].mxu0
    %v6332 = vadd.f32 0.0, %v6331
    %v6333 = vpop.f32.mrb[0].mxu0
    %v6334 = vadd.f32 0.0, %v6333
    %6335 = vmatprep.mubr.bf16.mxu0 0
    %6336 = vmatmul.mubr.bf16.gmra.mrb[0].mxu0 %v445
    %v6337 = vpop.f32.mrb[0].mxu0
    %v6338 = vadd.f32 0.0, %v6337
    %v6339 = vpop.f32.mrb[0].mxu0
    %v6340 = vadd.f32 0.0, %v6339
    %v6341 = vpop.f32.mrb[0].mxu0
    %v6342 = vadd.f32 0.0, %v6341
    %v6343 = vpop.f32.mrb[0].mxu0
    %v6344 = vadd.f32 0.0, %v6343
    %6345 = vmatprep.mubr.bf16.mxu0 0
    %6346 = vmatmul.mubr.bf16.gmra.mrb[0].mxu0 %v448
    %v6347 = vpop.f32.mrb[0].mxu0
    %v6348 = vadd.f32 0.0, %v6347
    %v6349 = vpop.f32.mrb[0].mxu0
    %v6350 = vadd.f32 0.0, %v6349
    %v6351 = vpop.f32.mrb[0].mxu0
    %v6352 = vadd.f32 0.0, %v6351
    %v6353 = vpop.f32.mrb[0].mxu0
    %v6354 = vadd.f32 0.0, %v6353
    %6355 = vmatprep.mubr.bf16.mxu0 0
    %6356 = vmatmul.mubr.bf16.gmra.mrb[0].mxu0 %v451
    %v6357 = vpop.f32.mrb[0].mxu0
    %v6358 = vadd.f32 0.0, %v6357
    %v6359 = vpop.f32.mrb[0].mxu0
    %v6360 = vadd.f32 0.0, %v6359
    %v6361 = vpop.f32.mrb[0].mxu0
    %v6362 = vadd.f32 0.0, %v6361
    %v6363 = vpop.f32.mrb[0].mxu0
    %v6364 = vadd.f32 0.0, %v6363
    %6365 = vmatprep.mubr.bf16.mxu0 0
    %6366 = vmatmul.mubr.bf16.gmra.mrb[0].mxu0 %v454
    %v6367 = vpop.f32.mrb[0].mxu0
    %v6368 = vadd.f32 0.0, %v6367
    %v6369 = vpop.f32.mrb[0].mxu0
    %v6370 = vadd.f32 0.0, %v6369
    %v6371 = vpop.f32.mrb[0].mxu0
    %v6372 = vadd.f32 0.0, %v6371
    %v6373 = vpop.f32.mrb[0].mxu0
    %v6374 = vadd.f32 0.0, %v6373
    %6375 = vmatprep.mubr.bf16.mxu0 0
    %6376 = vmatmul.mubr.bf16.gmra.mrb[0].mxu0 %v457
    %v6377 = vpop.f32.mrb[0].mxu0
    %v6378 = vadd.f32 0.0, %v6377
    %v6379 = vpop.f32.mrb[0].mxu0
    %v6380 = vadd.f32 0.0, %v6379
    %v6381 = vpop.f32.mrb[0].mxu0
    %v6382 = vadd.f32 0.0, %v6381
    %v6383 = vpop.f32.mrb[0].mxu0
    %v6384 = vadd.f32 0.0, %v6383
    %6385 = vmatprep.mubr.bf16.mxu0 0
    %6386 = vmatmul.mubr.bf16.gmra.mrb[0].mxu0 %v460
    %v6387 = vpop.f32.mrb[0].mxu0
    %v6388 = vadd.f32 0.0, %v6387
    %v6389 = vpop.f32.mrb[0].mxu0
    %v6390 = vadd.f32 0.0, %v6389
    %v6391 = vpop.f32.mrb[0].mxu0
    %v6392 = vadd.f32 0.0, %v6391
    %v6393 = vpop.f32.mrb[0].mxu0
    %v6394 = vadd.f32 0.0, %v6393
    %6395 = vmatprep.mubr.bf16.mxu0 0
    %6396 = vmatmul.mubr.bf16.gmra.mrb[0].mxu0 %v463
    %v6397 = vpop.f32.mrb[0].mxu0
    %v6398 = vadd.f32 0.0, %v6397
    %v6399 = vpop.f32.mrb[0].mxu0
    %v6400 = vadd.f32 0.0, %v6399
    %v6401 = vpop.f32.mrb[0].mxu0
    %v6402 = vadd.f32 0.0, %v6401
    %v6403 = vpop.f32.mrb[0].mxu0
    %v6404 = vadd.f32 0.0, %v6403
    %6405 = vmatprep.mubr.bf16.mxu0 0
    %6406 = vmatmul.mubr.bf16.gmra.mrb[0].mxu0 %v466
    %v6407 = vpop.f32.mrb[0].mxu0
    %v6408 = vadd.f32 0.0, %v6407
    %v6409 = vpop.f32.mrb[0].mxu0
    %v6410 = vadd.f32 0.0, %v6409
    %v6411 = vpop.f32.mrb[0].mxu0
    %v6412 = vadd.f32 0.0, %v6411
    %v6413 = vpop.f32.mrb[0].mxu0
    %v6414 = vadd.f32 0.0, %v6413
    %6415 = vmatprep.mubr.bf16.mxu0 0
    %6416 = vmatmul.mubr.bf16.gmra.mrb[0].mxu0 %v469
    %v6417 = vpop.f32.mrb[0].mxu0
    %v6418 = vadd.f32 0.0, %v6417
    %v6419 = vpop.f32.mrb[0].mxu0
    %v6420 = vadd.f32 0.0, %v6419
    %v6421 = vpop.f32.mrb[0].mxu0
    %v6422 = vadd.f32 0.0, %v6421
    %v6423 = vpop.f32.mrb[0].mxu0
    %v6424 = vadd.f32 0.0, %v6423
    %6425 = vmatprep.mubr.bf16.mxu0 0
    %6426 = vmatmul.mubr.bf16.gmra.mrb[0].mxu0 %v472
    %v6427 = vpop.f32.mrb[0].mxu0
    %v6428 = vadd.f32 0.0, %v6427
    %v6429 = vpop.f32.mrb[0].mxu0
    %v6430 = vadd.f32 0.0, %v6429
    %v6431 = vpop.f32.mrb[0].mxu0
    %v6432 = vadd.f32 0.0, %v6431
    %v6433 = vpop.f32.mrb[0].mxu0
    %v6434 = vadd.f32 0.0, %v6433
    %6435 = vmatprep.mubr.bf16.mxu0 0
    %6436 = vmatmul.mubr.bf16.gmra.mrb[0].mxu0 %v475
    %v6437 = vpop.f32.mrb[0].mxu0
    %v6438 = vadd.f32 0.0, %v6437
    %v6439 = vpop.f32.mrb[0].mxu0
    %v6440 = vadd.f32 0.0, %v6439
    %v6441 = vpop.f32.mrb[0].mxu0
    %v6442 = vadd.f32 0.0, %v6441
    %v6443 = vpop.f32.mrb[0].mxu0
    %v6444 = vadd.f32 0.0, %v6443
    %6445 = vmatprep.mubr.bf16.mxu0 0
    %6446 = vmatmul.mubr.bf16.gmra.mrb[0].mxu0 %v478
    %v6447 = vpop.f32.mrb[0].mxu0
    %v6448 = vadd.f32 0.0, %v6447
    %v6449 = vpop.f32.mrb[0].mxu0
    %v6450 = vadd.f32 0.0, %v6449
    %v6451 = vpop.f32.mrb[0].mxu0
    %v6452 = vadd.f32 0.0, %v6451
    %v6453 = vpop.f32.mrb[0].mxu0
    %v6454 = vadd.f32 0.0, %v6453
    %6455 = vmatprep.mubr.bf16.mxu0 0
    %6456 = vmatmul.mubr.bf16.gmra.mrb[0].mxu0 %v481
    %v6457 = vpop.f32.mrb[0].mxu0
    %v6458 = vadd.f32 0.0, %v6457
    %v6459 = vpop.f32.mrb[0].mxu0
    %v6460 = vadd.f32 0.0, %v6459
    %v6461 = vpop.f32.mrb[0].mxu0
    %v6462 = vadd.f32 0.0, %v6461
    %v6463 = vpop.f32.mrb[0].mxu0
    %v6464 = vadd.f32 0.0, %v6463
    %6465 = vmatprep.mubr.bf16.mxu0 0
    %6466 = vmatmul.mubr.bf16.gmra.mrb[0].mxu0 %v484
    %v6467 = vpop.f32.mrb[0].mxu0
    %v6468 = vadd.f32 0.0, %v6467
    %v6469 = vpop.f32.mrb[0].mxu0
    %v6470 = vadd.f32 0.0, %v6469
    %v6471 = vpop.f32.mrb[0].mxu0
    %v6472 = vadd.f32 0.0, %v6471
    %v6473 = vpop.f32.mrb[0].mxu0
    %v6474 = vadd.f32 0.0, %v6473
    %6475 = vmatprep.mubr.bf16.mxu0 0
    %6476 = vmatmul.mubr.bf16.gmra.mrb[0].mxu0 %v487
    %v6477 = vpop.f32.mrb[0].mxu0
    %v6478 = vadd.f32 0.0, %v6477
    %v6479 = vpop.f32.mrb[0].mxu0
    %v6480 = vadd.f32 0.0, %v6479
    %v6481 = vpop.f32.mrb[0].mxu0
    %v6482 = vadd.f32 0.0, %v6481
    %v6483 = vpop.f32.mrb[0].mxu0
    %v6484 = vadd.f32 0.0, %v6483
    %6485 = vmatprep.mubr.bf16.mxu0 0
    %6486 = vmatmul.mubr.bf16.gmra.mrb[0].mxu0 %v490
    %v6487 = vpop.f32.mrb[0].mxu0
    %v6488 = vadd.f32 0.0, %v6487
    %v6489 = vpop.f32.mrb[0].mxu0
    %v6490 = vadd.f32 0.0, %v6489
    %v6491 = vpop.f32.mrb[0].mxu0
    %v6492 = vadd.f32 0.0, %v6491
    %v6493 = vpop.f32.mrb[0].mxu0
    %v6494 = vadd.f32 0.0, %v6493
    %6495 = vmatprep.mubr.bf16.mxu0 0
    %6496 = vmatmul.mubr.bf16.gmra.mrb[0].mxu0 %v493
    %v6497 = vpop.f32.mrb[0].mxu0
    %v6498 = vadd.f32 0.0, %v6497
    %v6499 = vpop.f32.mrb[0].mxu0
    %v6500 = vadd.f32 0.0, %v6499
    %v6501 = vpop.f32.mrb[0].mxu0
    %v6502 = vadd.f32 0.0, %v6501
    %v6503 = vpop.f32.mrb[0].mxu0
    %v6504 = vadd.f32 0.0, %v6503
    %6505 = vmatprep.mubr.bf16.mxu0 0
    %6506 = vmatmul.mubr.bf16.gmra.mrb[0].mxu0 %v496
    %v6507 = vpop.f32.mrb[0].mxu0
    %v6508 = vadd.f32 0.0, %v6507
    %v6509 = vpop.f32.mrb[0].mxu0
    %v6510 = vadd.f32 0.0, %v6509
    %v6511 = vpop.f32.mrb[0].mxu0
    %v6512 = vadd.f32 0.0, %v6511
    %v6513 = vpop.f32.mrb[0].mxu0
    %v6514 = vadd.f32 0.0, %v6513
    %6515 = vdwg.mxu0
    %6516 = vmatprep.subr.bf16.mxu0 %v6161
    %6517 = vmatpush1.bf16.msra.mxu0 %v6158
    %6518 = vmatprep.subr.bf16.mxu0 0
    %6519 = vmatpush1.bf16.msra.mxu0 0
    %6520 = vmatprep.subr.bf16.mxu0 0
    %6521 = vmatpush1.bf16.msra.mxu0 0
    %6522 = vmatprep.subr.bf16.mxu0 0
    %6523 = vmatpush1.bf16.msra.mxu0 0
    %6524 = vmatprep.subr.bf16.mxu0 0
    %6525 = vmatpush1.bf16.msra.mxu0 0
    %6526 = vmatprep.subr.bf16.mxu0 0
    %6527 = vmatpush1.bf16.msra.mxu0 0
    %6528 = vmatprep.subr.bf16.mxu0 0
    %6529 = vmatpush1.bf16.msra.mxu0 0
    %6530 = vmatprep.subr.bf16.mxu0 0
    %6531 = vmatpush1.bf16.msra.mxu0 0
    %6532 = vmatprep.subr.bf16.mxu0 0
    %6533 = vmatpush1.bf16.msra.mxu0 0
    %6534 = vmatprep.subr.bf16.mxu0 0
    %6535 = vmatpush1.bf16.msra.mxu0 0
    %6536 = vmatprep.subr.bf16.mxu0 0
    %6537 = vmatpush1.bf16.msra.mxu0 0
    %6538 = vmatprep.subr.bf16.mxu0 0
    %6539 = vmatpush1.bf16.msra.mxu0 0
    %6540 = vmatprep.subr.bf16.mxu0 0
    %6541 = vmatpush1.bf16.msra.mxu0 0
    %6542 = vmatprep.subr.bf16.mxu0 0
    %6543 = vmatpush1.bf16.msra.mxu0 0
    %6544 = vmatprep.subr.bf16.mxu0 0
    %6545 = vmatpush1.bf16.msra.mxu0 0
    %6546 = vmatprep.subr.bf16.mxu0 0
    %6547 = vmatpush1.bf16.msra.mxu0 0
    %6548 = vmatprep.mubr.bf16.mxu0 0
    %6549 = vmatmul.mubr.bf16.gmra.mrb[0].mxu0 %v403
    %v6550 = vpop.f32.mrb[0].mxu0
    %v6551 = vadd.f32 0.0, %v6550
    %v6552 = vpop.f32.mrb[0].mxu0
    %v6553 = vadd.f32 0.0, %v6552
    %v6554 = vpop.f32.mrb[0].mxu0
    %v6555 = vadd.f32 0.0, %v6554
    %v6556 = vpop.f32.mrb[0].mxu0
    %v6557 = vadd.f32 0.0, %v6556
    %6558 = vmatprep.mubr.bf16.mxu0 0
    %6559 = vmatmul.mubr.bf16.gmra.mrb[0].mxu0 %v406
    %v6560 = vpop.f32.mrb[0].mxu0
    %v6561 = vadd.f32 0.0, %v6560
    %v6562 = vpop.f32.mrb[0].mxu0
    %v6563 = vadd.f32 0.0, %v6562
    %v6564 = vpop.f32.mrb[0].mxu0
    %v6565 = vadd.f32 0.0, %v6564
    %v6566 = vpop.f32.mrb[0].mxu0
    %v6567 = vadd.f32 0.0, %v6566
    %6568 = vmatprep.mubr.bf16.mxu0 0
    %6569 = vmatmul.mubr.bf16.gmra.mrb[0].mxu0 %v409
    %v6570 = vpop.f32.mrb[0].mxu0
    %v6571 = vadd.f32 0.0, %v6570
    %v6572 = vpop.f32.mrb[0].mxu0
    %v6573 = vadd.f32 0.0, %v6572
    %v6574 = vpop.f32.mrb[0].mxu0
    %v6575 = vadd.f32 0.0, %v6574
    %v6576 = vpop.f32.mrb[0].mxu0
    %v6577 = vadd.f32 0.0, %v6576
    %6578 = vmatprep.mubr.bf16.mxu0 0
    %6579 = vmatmul.mubr.bf16.gmra.mrb[0].mxu0 %v412
    %v6580 = vpop.f32.mrb[0].mxu0
    %v6581 = vadd.f32 0.0, %v6580
    %v6582 = vpop.f32.mrb[0].mxu0
    %v6583 = vadd.f32 0.0, %v6582
    %v6584 = vpop.f32.mrb[0].mxu0
    %v6585 = vadd.f32 0.0, %v6584
    %v6586 = vpop.f32.mrb[0].mxu0
    %v6587 = vadd.f32 0.0, %v6586
    %6588 = vmatprep.mubr.bf16.mxu0 0
    %6589 = vmatmul.mubr.bf16.gmra.mrb[0].mxu0 %v415
    %v6590 = vpop.f32.mrb[0].mxu0
    %v6591 = vadd.f32 0.0, %v6590
    %v6592 = vpop.f32.mrb[0].mxu0
    %v6593 = vadd.f32 0.0, %v6592
    %v6594 = vpop.f32.mrb[0].mxu0
    %v6595 = vadd.f32 0.0, %v6594
    %v6596 = vpop.f32.mrb[0].mxu0
    %v6597 = vadd.f32 0.0, %v6596
    %6598 = vmatprep.mubr.bf16.mxu0 0
    %6599 = vmatmul.mubr.bf16.gmra.mrb[0].mxu0 %v418
    %v6600 = vpop.f32.mrb[0].mxu0
    %v6601 = vadd.f32 0.0, %v6600
    %v6602 = vpop.f32.mrb[0].mxu0
    %v6603 = vadd.f32 0.0, %v6602
    %v6604 = vpop.f32.mrb[0].mxu0
    %v6605 = vadd.f32 0.0, %v6604
    %v6606 = vpop.f32.mrb[0].mxu0
    %v6607 = vadd.f32 0.0, %v6606
    %6608 = vmatprep.mubr.bf16.mxu0 0
    %6609 = vmatmul.mubr.bf16.gmra.mrb[0].mxu0 %v421
    %v6610 = vpop.f32.mrb[0].mxu0
    %v6611 = vadd.f32 0.0, %v6610
    %v6612 = vpop.f32.mrb[0].mxu0
    %v6613 = vadd.f32 0.0, %v6612
    %v6614 = vpop.f32.mrb[0].mxu0
    %v6615 = vadd.f32 0.0, %v6614
    %v6616 = vpop.f32.mrb[0].mxu0
    %v6617 = vadd.f32 0.0, %v6616
    %6618 = vmatprep.mubr.bf16.mxu0 0
    %6619 = vmatmul.mubr.bf16.gmra.mrb[0].mxu0 %v424
    %v6620 = vpop.f32.mrb[0].mxu0
    %v6621 = vadd.f32 0.0, %v6620
    %v6622 = vpop.f32.mrb[0].mxu0
    %v6623 = vadd.f32 0.0, %v6622
    %v6624 = vpop.f32.mrb[0].mxu0
    %v6625 = vadd.f32 0.0, %v6624
    %v6626 = vpop.f32.mrb[0].mxu0
    %v6627 = vadd.f32 0.0, %v6626
    %6628 = vmatprep.mubr.bf16.mxu0 0
    %6629 = vmatmul.mubr.bf16.gmra.mrb[0].mxu0 %v427
    %v6630 = vpop.f32.mrb[0].mxu0
    %v6631 = vadd.f32 0.0, %v6630
    %v6632 = vpop.f32.mrb[0].mxu0
    %v6633 = vadd.f32 0.0, %v6632
    %v6634 = vpop.f32.mrb[0].mxu0
    %v6635 = vadd.f32 0.0, %v6634
    %v6636 = vpop.f32.mrb[0].mxu0
    %v6637 = vadd.f32 0.0, %v6636
    %6638 = vmatprep.mubr.bf16.mxu0 0
    %6639 = vmatmul.mubr.bf16.gmra.mrb[0].mxu0 %v430
    %v6640 = vpop.f32.mrb[0].mxu0
    %v6641 = vadd.f32 0.0, %v6640
    %v6642 = vpop.f32.mrb[0].mxu0
    %v6643 = vadd.f32 0.0, %v6642
    %v6644 = vpop.f32.mrb[0].mxu0
    %v6645 = vadd.f32 0.0, %v6644
    %v6646 = vpop.f32.mrb[0].mxu0
    %v6647 = vadd.f32 0.0, %v6646
    %6648 = vmatprep.mubr.bf16.mxu0 0
    %6649 = vmatmul.mubr.bf16.gmra.mrb[0].mxu0 %v433
    %v6650 = vpop.f32.mrb[0].mxu0
    %v6651 = vadd.f32 0.0, %v6650
    %v6652 = vpop.f32.mrb[0].mxu0
    %v6653 = vadd.f32 0.0, %v6652
    %v6654 = vpop.f32.mrb[0].mxu0
    %v6655 = vadd.f32 0.0, %v6654
    %v6656 = vpop.f32.mrb[0].mxu0
    %v6657 = vadd.f32 0.0, %v6656
    %6658 = vmatprep.mubr.bf16.mxu0 0
    %6659 = vmatmul.mubr.bf16.gmra.mrb[0].mxu0 %v436
    %v6660 = vpop.f32.mrb[0].mxu0
    %v6661 = vadd.f32 0.0, %v6660
    %v6662 = vpop.f32.mrb[0].mxu0
    %v6663 = vadd.f32 0.0, %v6662
    %v6664 = vpop.f32.mrb[0].mxu0
    %v6665 = vadd.f32 0.0, %v6664
    %v6666 = vpop.f32.mrb[0].mxu0
    %v6667 = vadd.f32 0.0, %v6666
    %6668 = vmatprep.mubr.bf16.mxu0 0
    %6669 = vmatmul.mubr.bf16.gmra.mrb[0].mxu0 %v439
    %v6670 = vpop.f32.mrb[0].mxu0
    %v6671 = vadd.f32 0.0, %v6670
    %v6672 = vpop.f32.mrb[0].mxu0
    %v6673 = vadd.f32 0.0, %v6672
    %v6674 = vpop.f32.mrb[0].mxu0
    %v6675 = vadd.f32 0.0, %v6674
    %v6676 = vpop.f32.mrb[0].mxu0
    %v6677 = vadd.f32 0.0, %v6676
    %6678 = vmatprep.mubr.bf16.mxu0 0
    %6679 = vmatmul.mubr.bf16.gmra.mrb[0].mxu0 %v442
    %v6680 = vpop.f32.mrb[0].mxu0
    %v6681 = vadd.f32 0.0, %v6680
    %v6682 = vpop.f32.mrb[0].mxu0
    %v6683 = vadd.f32 0.0, %v6682
    %v6684 = vpop.f32.mrb[0].mxu0
    %v6685 = vadd.f32 0.0, %v6684
    %v6686 = vpop.f32.mrb[0].mxu0
    %v6687 = vadd.f32 0.0, %v6686
    %6688 = vmatprep.mubr.bf16.mxu0 0
    %6689 = vmatmul.mubr.bf16.gmra.mrb[0].mxu0 %v445
    %v6690 = vpop.f32.mrb[0].mxu0
    %v6691 = vadd.f32 0.0, %v6690
    %v6692 = vpop.f32.mrb[0].mxu0
    %v6693 = vadd.f32 0.0, %v6692
    %v6694 = vpop.f32.mrb[0].mxu0
    %v6695 = vadd.f32 0.0, %v6694
    %v6696 = vpop.f32.mrb[0].mxu0
    %v6697 = vadd.f32 0.0, %v6696
    %6698 = vmatprep.mubr.bf16.mxu0 0
    %6699 = vmatmul.mubr.bf16.gmra.mrb[0].mxu0 %v448
    %v6700 = vpop.f32.mrb[0].mxu0
    %v6701 = vadd.f32 0.0, %v6700
    %v6702 = vpop.f32.mrb[0].mxu0
    %v6703 = vadd.f32 0.0, %v6702
    %v6704 = vpop.f32.mrb[0].mxu0
    %v6705 = vadd.f32 0.0, %v6704
    %v6706 = vpop.f32.mrb[0].mxu0
    %v6707 = vadd.f32 0.0, %v6706
    %6708 = vmatprep.mubr.bf16.mxu0 0
    %6709 = vmatmul.mubr.bf16.gmra.mrb[0].mxu0 %v451
    %v6710 = vpop.f32.mrb[0].mxu0
    %v6711 = vadd.f32 0.0, %v6710
    %v6712 = vpop.f32.mrb[0].mxu0
    %v6713 = vadd.f32 0.0, %v6712
    %v6714 = vpop.f32.mrb[0].mxu0
    %v6715 = vadd.f32 0.0, %v6714
    %v6716 = vpop.f32.mrb[0].mxu0
    %v6717 = vadd.f32 0.0, %v6716
    %6718 = vmatprep.mubr.bf16.mxu0 0
    %6719 = vmatmul.mubr.bf16.gmra.mrb[0].mxu0 %v454
    %v6720 = vpop.f32.mrb[0].mxu0
    %v6721 = vadd.f32 0.0, %v6720
    %v6722 = vpop.f32.mrb[0].mxu0
    %v6723 = vadd.f32 0.0, %v6722
    %v6724 = vpop.f32.mrb[0].mxu0
    %v6725 = vadd.f32 0.0, %v6724
    %v6726 = vpop.f32.mrb[0].mxu0
    %v6727 = vadd.f32 0.0, %v6726
    %6728 = vmatprep.mubr.bf16.mxu0 0
    %6729 = vmatmul.mubr.bf16.gmra.mrb[0].mxu0 %v457
    %v6730 = vpop.f32.mrb[0].mxu0
    %v6731 = vadd.f32 0.0, %v6730
    %v6732 = vpop.f32.mrb[0].mxu0
    %v6733 = vadd.f32 0.0, %v6732
    %v6734 = vpop.f32.mrb[0].mxu0
    %v6735 = vadd.f32 0.0, %v6734
    %v6736 = vpop.f32.mrb[0].mxu0
    %v6737 = vadd.f32 0.0, %v6736
    %6738 = vmatprep.mubr.bf16.mxu0 0
    %6739 = vmatmul.mubr.bf16.gmra.mrb[0].mxu0 %v460
    %v6740 = vpop.f32.mrb[0].mxu0
    %v6741 = vadd.f32 0.0, %v6740
    %v6742 = vpop.f32.mrb[0].mxu0
    %v6743 = vadd.f32 0.0, %v6742
    %v6744 = vpop.f32.mrb[0].mxu0
    %v6745 = vadd.f32 0.0, %v6744
    %v6746 = vpop.f32.mrb[0].mxu0
    %v6747 = vadd.f32 0.0, %v6746
    %6748 = vmatprep.mubr.bf16.mxu0 0
    %6749 = vmatmul.mubr.bf16.gmra.mrb[0].mxu0 %v463
    %v6750 = vpop.f32.mrb[0].mxu0
    %v6751 = vadd.f32 0.0, %v6750
    %v6752 = vpop.f32.mrb[0].mxu0
    %v6753 = vadd.f32 0.0, %v6752
    %v6754 = vpop.f32.mrb[0].mxu0
    %v6755 = vadd.f32 0.0, %v6754
    %v6756 = vpop.f32.mrb[0].mxu0
    %v6757 = vadd.f32 0.0, %v6756
    %6758 = vmatprep.mubr.bf16.mxu0 0
    %6759 = vmatmul.mubr.bf16.gmra.mrb[0].mxu0 %v466
    %v6760 = vpop.f32.mrb[0].mxu0
    %v6761 = vadd.f32 0.0, %v6760
    %v6762 = vpop.f32.mrb[0].mxu0
    %v6763 = vadd.f32 0.0, %v6762
    %v6764 = vpop.f32.mrb[0].mxu0
    %v6765 = vadd.f32 0.0, %v6764
    %v6766 = vpop.f32.mrb[0].mxu0
    %v6767 = vadd.f32 0.0, %v6766
    %6768 = vmatprep.mubr.bf16.mxu0 0
    %6769 = vmatmul.mubr.bf16.gmra.mrb[0].mxu0 %v469
    %v6770 = vpop.f32.mrb[0].mxu0
    %v6771 = vadd.f32 0.0, %v6770
    %v6772 = vpop.f32.mrb[0].mxu0
    %v6773 = vadd.f32 0.0, %v6772
    %v6774 = vpop.f32.mrb[0].mxu0
    %v6775 = vadd.f32 0.0, %v6774
    %v6776 = vpop.f32.mrb[0].mxu0
    %v6777 = vadd.f32 0.0, %v6776
    %6778 = vmatprep.mubr.bf16.mxu0 0
    %6779 = vmatmul.mubr.bf16.gmra.mrb[0].mxu0 %v472
    %v6780 = vpop.f32.mrb[0].mxu0
    %v6781 = vadd.f32 0.0, %v6780
    %v6782 = vpop.f32.mrb[0].mxu0
    %v6783 = vadd.f32 0.0, %v6782
    %v6784 = vpop.f32.mrb[0].mxu0
    %v6785 = vadd.f32 0.0, %v6784
    %v6786 = vpop.f32.mrb[0].mxu0
    %v6787 = vadd.f32 0.0, %v6786
    %6788 = vmatprep.mubr.bf16.mxu0 0
    %6789 = vmatmul.mubr.bf16.gmra.mrb[0].mxu0 %v475
    %v6790 = vpop.f32.mrb[0].mxu0
    %v6791 = vadd.f32 0.0, %v6790
    %v6792 = vpop.f32.mrb[0].mxu0
    %v6793 = vadd.f32 0.0, %v6792
    %v6794 = vpop.f32.mrb[0].mxu0
    %v6795 = vadd.f32 0.0, %v6794
    %v6796 = vpop.f32.mrb[0].mxu0
    %v6797 = vadd.f32 0.0, %v6796
    %6798 = vmatprep.mubr.bf16.mxu0 0
    %6799 = vmatmul.mubr.bf16.gmra.mrb[0].mxu0 %v478
    %v6800 = vpop.f32.mrb[0].mxu0
    %v6801 = vadd.f32 0.0, %v6800
    %v6802 = vpop.f32.mrb[0].mxu0
    %v6803 = vadd.f32 0.0, %v6802
    %v6804 = vpop.f32.mrb[0].mxu0
    %v6805 = vadd.f32 0.0, %v6804
    %v6806 = vpop.f32.mrb[0].mxu0
    %v6807 = vadd.f32 0.0, %v6806
    %6808 = vmatprep.mubr.bf16.mxu0 0
    %6809 = vmatmul.mubr.bf16.gmra.mrb[0].mxu0 %v481
    %v6810 = vpop.f32.mrb[0].mxu0
    %v6811 = vadd.f32 0.0, %v6810
    %v6812 = vpop.f32.mrb[0].mxu0
    %v6813 = vadd.f32 0.0, %v6812
    %v6814 = vpop.f32.mrb[0].mxu0
    %v6815 = vadd.f32 0.0, %v6814
    %v6816 = vpop.f32.mrb[0].mxu0
    %v6817 = vadd.f32 0.0, %v6816
    %6818 = vmatprep.mubr.bf16.mxu0 0
    %6819 = vmatmul.mubr.bf16.gmra.mrb[0].mxu0 %v484
    %v6820 = vpop.f32.mrb[0].mxu0
    %v6821 = vadd.f32 0.0, %v6820
    %v6822 = vpop.f32.mrb[0].mxu0
    %v6823 = vadd.f32 0.0, %v6822
    %v6824 = vpop.f32.mrb[0].mxu0
    %v6825 = vadd.f32 0.0, %v6824
    %v6826 = vpop.f32.mrb[0].mxu0
    %v6827 = vadd.f32 0.0, %v6826
    %6828 = vmatprep.mubr.bf16.mxu0 0
    %6829 = vmatmul.mubr.bf16.gmra.mrb[0].mxu0 %v487
    %v6830 = vpop.f32.mrb[0].mxu0
    %v6831 = vadd.f32 0.0, %v6830
    %v6832 = vpop.f32.mrb[0].mxu0
    %v6833 = vadd.f32 0.0, %v6832
    %v6834 = vpop.f32.mrb[0].mxu0
    %v6835 = vadd.f32 0.0, %v6834
    %v6836 = vpop.f32.mrb[0].mxu0
    %v6837 = vadd.f32 0.0, %v6836
    %6838 = vmatprep.mubr.bf16.mxu0 0
    %6839 = vmatmul.mubr.bf16.gmra.mrb[0].mxu0 %v490
    %v6840 = vpop.f32.mrb[0].mxu0
    %v6841 = vadd.f32 0.0, %v6840
    %v6842 = vpop.f32.mrb[0].mxu0
    %v6843 = vadd.f32 0.0, %v6842
    %v6844 = vpop.f32.mrb[0].mxu0
    %v6845 = vadd.f32 0.0, %v6844
    %v6846 = vpop.f32.mrb[0].mxu0
    %v6847 = vadd.f32 0.0, %v6846
    %6848 = vmatprep.mubr.bf16.mxu0 0
    %6849 = vmatmul.mubr.bf16.gmra.mrb[0].mxu0 %v493
    %v6850 = vpop.f32.mrb[0].mxu0
    %v6851 = vadd.f32 0.0, %v6850
    %v6852 = vpop.f32.mrb[0].mxu0
    %v6853 = vadd.f32 0.0, %v6852
    %v6854 = vpop.f32.mrb[0].mxu0
    %v6855 = vadd.f32 0.0, %v6854
    %v6856 = vpop.f32.mrb[0].mxu0
    %v6857 = vadd.f32 0.0, %v6856
    %6858 = vmatprep.mubr.bf16.mxu0 0
    %6859 = vmatmul.mubr.bf16.gmra.mrb[0].mxu0 %v496
    %v6860 = vpop.f32.mrb[0].mxu0
    %v6861 = vadd.f32 0.0, %v6860
    %v6862 = vpop.f32.mrb[0].mxu0
    %v6863 = vadd.f32 0.0, %v6862
    %v6864 = vpop.f32.mrb[0].mxu0
    %v6865 = vadd.f32 0.0, %v6864
    %v6866 = vpop.f32.mrb[0].mxu0
    %v6867 = vadd.f32 0.0, %v6866
    %6868 = vdwg.mxu0
    %v6869 = vld [vmem:[#allocation16] sm:$0xf]
    %v6870 = vld [vmem:[#allocation17] sm:$0xf]
    %v6871 = vadd.f32 %v6198, %v6202
    %v6872 = vadd.f32 %v6871, %v6208
    %v6873 = vadd.f32 %v6872, %v6212
    %v6874 = vadd.f32 %v6873, %v6218
    %v6875 = vadd.f32 %v6874, %v6222
    %v6876 = vadd.f32 %v6875, %v6228
    %v6877 = vadd.f32 %v6876, %v6232
    %v6878 = vadd.f32 %v6877, %v6238
    %v6879 = vadd.f32 %v6878, %v6242
    %v6880 = vadd.f32 %v6879, %v6248
    %v6881 = vadd.f32 %v6880, %v6252
    %v6882 = vadd.f32 %v6881, %v6258
    %v6883 = vadd.f32 %v6882, %v6262
    %v6884 = vadd.f32 %v6883, %v6268
    %v6885 = vadd.f32 %v6884, %v6272
    %v6886 = vadd.f32 %v6885, %v6278
    %v6887 = vadd.f32 %v6886, %v6282
    %v6888 = vadd.f32 %v6887, %v6288
    %v6889 = vadd.f32 %v6888, %v6292
    %v6890 = vadd.f32 %v6889, %v6298
    %v6891 = vadd.f32 %v6890, %v6302
    %v6892 = vadd.f32 %v6891, %v6308
    %v6893 = vadd.f32 %v6892, %v6312
    %v6894 = vadd.f32 %v6893, %v6318
    %v6895 = vadd.f32 %v6894, %v6322
    %v6896 = vadd.f32 %v6895, %v6328
    %v6897 = vadd.f32 %v6896, %v6332
    %v6898 = vadd.f32 %v6897, %v6338
    %v6899 = vadd.f32 %v6898, %v6342
    %v6900 = vadd.f32 %v6899, %v6348
    %v6901 = vadd.f32 %v6900, %v6352
    %v6902 = vadd.f32 %v6901, %v6358
    %v6903 = vadd.f32 %v6902, %v6362
    %v6904 = vadd.f32 %v6903, %v6368
    %v6905 = vadd.f32 %v6904, %v6372
    %v6906 = vadd.f32 %v6905, %v6378
    %v6907 = vadd.f32 %v6906, %v6382
    %v6908 = vadd.f32 %v6907, %v6388
    %v6909 = vadd.f32 %v6908, %v6392
    %v6910 = vadd.f32 %v6909, %v6398
    %v6911 = vadd.f32 %v6910, %v6402
    %v6912 = vadd.f32 %v6911, %v6408
    %v6913 = vadd.f32 %v6912, %v6412
    %v6914 = vadd.f32 %v6913, %v6418
    %v6915 = vadd.f32 %v6914, %v6422
    %v6916 = vadd.f32 %v6915, %v6428
    %v6917 = vadd.f32 %v6916, %v6432
    %v6918 = vadd.f32 %v6917, %v6438
    %v6919 = vadd.f32 %v6918, %v6442
    %v6920 = vadd.f32 %v6919, %v6448
    %v6921 = vadd.f32 %v6920, %v6452
    %v6922 = vadd.f32 %v6921, %v6458
    %v6923 = vadd.f32 %v6922, %v6462
    %v6924 = vadd.f32 %v6923, %v6468
    %v6925 = vadd.f32 %v6924, %v6472
    %v6926 = vadd.f32 %v6925, %v6478
    %v6927 = vadd.f32 %v6926, %v6482
    %v6928 = vadd.f32 %v6927, %v6488
    %v6929 = vadd.f32 %v6928, %v6492
    %v6930 = vadd.f32 %v6929, %v6498
    %v6931 = vadd.f32 %v6930, %v6502
    %v6932 = vadd.f32 %v6931, %v6508
    %v6933 = vadd.f32 %v6932, %v6512
    %v6934 = vrot.slane %v6933, 4
    %v6935 = vadd.f32 %v6933, %v6934
    %v6936 = vrot.slane %v6935, 2
    %v6937 = vadd.f32 %v6935, %v6936
    %v6938 = vrot.slane %v6937, 1
    %v6939 = vadd.f32 %v6937, %v6938
    %v6940 = vadd.f32 %v6200, %v6204
    %v6941 = vadd.f32 %v6940, %v6210
    %v6942 = vadd.f32 %v6941, %v6214
    %v6943 = vadd.f32 %v6942, %v6220
    %v6944 = vadd.f32 %v6943, %v6224
    %v6945 = vadd.f32 %v6944, %v6230
    %v6946 = vadd.f32 %v6945, %v6234
    %v6947 = vadd.f32 %v6946, %v6240
    %v6948 = vadd.f32 %v6947, %v6244
    %v6949 = vadd.f32 %v6948, %v6250
    %v6950 = vadd.f32 %v6949, %v6254
    %v6951 = vadd.f32 %v6950, %v6260
    %v6952 = vadd.f32 %v6951, %v6264
    %v6953 = vadd.f32 %v6952, %v6270
    %v6954 = vadd.f32 %v6953, %v6274
    %v6955 = vadd.f32 %v6954, %v6280
    %v6956 = vadd.f32 %v6955, %v6284
    %v6957 = vadd.f32 %v6956, %v6290
    %v6958 = vadd.f32 %v6957, %v6294
    %v6959 = vadd.f32 %v6958, %v6300
    %v6960 = vadd.f32 %v6959, %v6304
    %v6961 = vadd.f32 %v6960, %v6310
    %v6962 = vadd.f32 %v6961, %v6314
    %v6963 = vadd.f32 %v6962, %v6320
    %v6964 = vadd.f32 %v6963, %v6324
    %v6965 = vadd.f32 %v6964, %v6330
    %v6966 = vadd.f32 %v6965, %v6334
    %v6967 = vadd.f32 %v6966, %v6340
    %v6968 = vadd.f32 %v6967, %v6344
    %v6969 = vadd.f32 %v6968, %v6350
    %v6970 = vadd.f32 %v6969, %v6354
    %v6971 = vadd.f32 %v6970, %v6360
    %v6972 = vadd.f32 %v6971, %v6364
    %v6973 = vadd.f32 %v6972, %v6370
    %v6974 = vadd.f32 %v6973, %v6374
    %v6975 = vadd.f32 %v6974, %v6380
    %v6976 = vadd.f32 %v6975, %v6384
    %v6977 = vadd.f32 %v6976, %v6390
    %v6978 = vadd.f32 %v6977, %v6394
    %v6979 = vadd.f32 %v6978, %v6400
    %v6980 = vadd.f32 %v6979, %v6404
    %v6981 = vadd.f32 %v6980, %v6410
    %v6982 = vadd.f32 %v6981, %v6414
    %v6983 = vadd.f32 %v6982, %v6420
    %v6984 = vadd.f32 %v6983, %v6424
    %v6985 = vadd.f32 %v6984, %v6430
    %v6986 = vadd.f32 %v6985, %v6434
    %v6987 = vadd.f32 %v6986, %v6440
    %v6988 = vadd.f32 %v6987, %v6444
    %v6989 = vadd.f32 %v6988, %v6450
    %v6990 = vadd.f32 %v6989, %v6454
    %v6991 = vadd.f32 %v6990, %v6460
    %v6992 = vadd.f32 %v6991, %v6464
    %v6993 = vadd.f32 %v6992, %v6470
    %v6994 = vadd.f32 %v6993, %v6474
    %v6995 = vadd.f32 %v6994, %v6480
    %v6996 = vadd.f32 %v6995, %v6484
    %v6997 = vadd.f32 %v6996, %v6490
    %v6998 = vadd.f32 %v6997, %v6494
    %v6999 = vadd.f32 %v6998, %v6500
    %v7000 = vadd.f32 %v6999, %v6504
    %v7001 = vadd.f32 %v7000, %v6510
    %v7002 = vadd.f32 %v7001, %v6514
    %v7003 = vrot.slane %v7002, 4
    %v7004 = vadd.f32 %v7002, %v7003
    %v7005 = vrot.slane %v7004, 2
    %v7006 = vadd.f32 %v7004, %v7005
    %v7007 = vrot.slane %v7006, 1
    %v7008 = vadd.f32 %v7006, %v7007
    %v7009 = vadd.f32 %v6551, %v6555
    %v7010 = vadd.f32 %v7009, %v6561
    %v7011 = vadd.f32 %v7010, %v6565
    %v7012 = vadd.f32 %v7011, %v6571
    %v7013 = vadd.f32 %v7012, %v6575
    %v7014 = vadd.f32 %v7013, %v6581
    %v7015 = vadd.f32 %v7014, %v6585
    %v7016 = vadd.f32 %v7015, %v6591
    %v7017 = vadd.f32 %v7016, %v6595
    %v7018 = vadd.f32 %v7017, %v6601
    %v7019 = vadd.f32 %v7018, %v6605
    %v7020 = vadd.f32 %v7019, %v6611
    %v7021 = vadd.f32 %v7020, %v6615
    %v7022 = vadd.f32 %v7021, %v6621
    %v7023 = vadd.f32 %v7022, %v6625
    %v7024 = vadd.f32 %v7023, %v6631
    %v7025 = vadd.f32 %v7024, %v6635
    %v7026 = vadd.f32 %v7025, %v6641
    %v7027 = vadd.f32 %v7026, %v6645
    %v7028 = vadd.f32 %v7027, %v6651
    %v7029 = vadd.f32 %v7028, %v6655
    %v7030 = vadd.f32 %v7029, %v6661
    %v7031 = vadd.f32 %v7030, %v6665
    %v7032 = vadd.f32 %v7031, %v6671
    %v7033 = vadd.f32 %v7032, %v6675
    %v7034 = vadd.f32 %v7033, %v6681
    %v7035 = vadd.f32 %v7034, %v6685
    %v7036 = vadd.f32 %v7035, %v6691
    %v7037 = vadd.f32 %v7036, %v6695
    %v7038 = vadd.f32 %v7037, %v6701
    %v7039 = vadd.f32 %v7038, %v6705
    %v7040 = vadd.f32 %v7039, %v6711
    %v7041 = vadd.f32 %v7040, %v6715
    %v7042 = vadd.f32 %v7041, %v6721
    %v7043 = vadd.f32 %v7042, %v6725
    %v7044 = vadd.f32 %v7043, %v6731
    %v7045 = vadd.f32 %v7044, %v6735
    %v7046 = vadd.f32 %v7045, %v6741
    %v7047 = vadd.f32 %v7046, %v6745
    %v7048 = vadd.f32 %v7047, %v6751
    %v7049 = vadd.f32 %v7048, %v6755
    %v7050 = vadd.f32 %v7049, %v6761
    %v7051 = vadd.f32 %v7050, %v6765
    %v7052 = vadd.f32 %v7051, %v6771
    %v7053 = vadd.f32 %v7052, %v6775
    %v7054 = vadd.f32 %v7053, %v6781
    %v7055 = vadd.f32 %v7054, %v6785
    %v7056 = vadd.f32 %v7055, %v6791
    %v7057 = vadd.f32 %v7056, %v6795
    %v7058 = vadd.f32 %v7057, %v6801
    %v7059 = vadd.f32 %v7058, %v6805
    %v7060 = vadd.f32 %v7059, %v6811
    %v7061 = vadd.f32 %v7060, %v6815
    %v7062 = vadd.f32 %v7061, %v6821
    %v7063 = vadd.f32 %v7062, %v6825
    %v7064 = vadd.f32 %v7063, %v6831
    %v7065 = vadd.f32 %v7064, %v6835
    %v7066 = vadd.f32 %v7065, %v6841
    %v7067 = vadd.f32 %v7066, %v6845
    %v7068 = vadd.f32 %v7067, %v6851
    %v7069 = vadd.f32 %v7068, %v6855
    %v7070 = vadd.f32 %v7069, %v6861
    %v7071 = vadd.f32 %v7070, %v6865
    %v7072 = vrot.slane %v7071, 4
    %v7073 = vadd.f32 %v7071, %v7072
    %v7074 = vrot.slane %v7073, 2
    %v7075 = vadd.f32 %v7073, %v7074
    %v7076 = vrot.slane %v7075, 1
    %v7077 = vadd.f32 %v7075, %v7076
    %v7078 = vsel %vm1290, %v6553, 0.0
    %v7079 = vsel %vm1290, %v6557, 0.0
    %v7080 = vadd.f32 %v7078, %v7079
    %v7081 = vsel %vm1290, %v6563, 0.0
    %v7082 = vadd.f32 %v7080, %v7081
    %v7083 = vsel %vm1290, %v6567, 0.0
    %v7084 = vadd.f32 %v7082, %v7083
    %v7085 = vsel %vm1290, %v6573, 0.0
    %v7086 = vadd.f32 %v7084, %v7085
    %v7087 = vsel %vm1290, %v6577, 0.0
    %v7088 = vadd.f32 %v7086, %v7087
    %v7089 = vsel %vm1290, %v6583, 0.0
    %v7090 = vadd.f32 %v7088, %v7089
    %v7091 = vsel %vm1290, %v6587, 0.0
    %v7092 = vadd.f32 %v7090, %v7091
    %v7093 = vsel %vm1290, %v6593, 0.0
    %v7094 = vadd.f32 %v7092, %v7093
    %v7095 = vsel %vm1290, %v6597, 0.0
    %v7096 = vadd.f32 %v7094, %v7095
    %v7097 = vsel %vm1290, %v6603, 0.0
    %v7098 = vadd.f32 %v7096, %v7097
    %v7099 = vsel %vm1290, %v6607, 0.0
    %v7100 = vadd.f32 %v7098, %v7099
    %v7101 = vsel %vm1290, %v6613, 0.0
    %v7102 = vadd.f32 %v7100, %v7101
    %v7103 = vsel %vm1290, %v6617, 0.0
    %v7104 = vadd.f32 %v7102, %v7103
    %v7105 = vsel %vm1290, %v6623, 0.0
    %v7106 = vadd.f32 %v7104, %v7105
    %v7107 = vsel %vm1290, %v6627, 0.0
    %v7108 = vadd.f32 %v7106, %v7107
    %v7109 = vsel %vm1290, %v6633, 0.0
    %v7110 = vadd.f32 %v7108, %v7109
    %v7111 = vsel %vm1290, %v6637, 0.0
    %v7112 = vadd.f32 %v7110, %v7111
    %v7113 = vsel %vm1290, %v6643, 0.0
    %v7114 = vadd.f32 %v7112, %v7113
    %v7115 = vsel %vm1290, %v6647, 0.0
    %v7116 = vadd.f32 %v7114, %v7115
    %v7117 = vsel %vm1290, %v6653, 0.0
    %v7118 = vadd.f32 %v7116, %v7117
    %v7119 = vsel %vm1290, %v6657, 0.0
    %v7120 = vadd.f32 %v7118, %v7119
    %v7121 = vsel %vm1290, %v6663, 0.0
    %v7122 = vadd.f32 %v7120, %v7121
    %v7123 = vsel %vm1290, %v6667, 0.0
    %v7124 = vadd.f32 %v7122, %v7123
    %v7125 = vsel %vm1290, %v6673, 0.0
    %v7126 = vadd.f32 %v7124, %v7125
    %v7127 = vsel %vm1290, %v6677, 0.0
    %v7128 = vadd.f32 %v7126, %v7127
    %v7129 = vsel %vm1290, %v6683, 0.0
    %v7130 = vadd.f32 %v7128, %v7129
    %v7131 = vsel %vm1290, %v6687, 0.0
    %v7132 = vadd.f32 %v7130, %v7131
    %v7133 = vsel %vm1290, %v6693, 0.0
    %v7134 = vadd.f32 %v7132, %v7133
    %v7135 = vsel %vm1290, %v6697, 0.0
    %v7136 = vadd.f32 %v7134, %v7135
    %v7137 = vsel %vm1290, %v6703, 0.0
    %v7138 = vadd.f32 %v7136, %v7137
    %v7139 = vsel %vm1290, %v6707, 0.0
    %v7140 = vadd.f32 %v7138, %v7139
    %v7141 = vsel %vm1290, %v6713, 0.0
    %v7142 = vadd.f32 %v7140, %v7141
    %v7143 = vsel %vm1290, %v6717, 0.0
    %v7144 = vadd.f32 %v7142, %v7143
    %v7145 = vsel %vm1290, %v6723, 0.0
    %v7146 = vadd.f32 %v7144, %v7145
    %v7147 = vsel %vm1290, %v6727, 0.0
    %v7148 = vadd.f32 %v7146, %v7147
    %v7149 = vsel %vm1290, %v6733, 0.0
    %v7150 = vadd.f32 %v7148, %v7149
    %v7151 = vsel %vm1290, %v6737, 0.0
    %v7152 = vadd.f32 %v7150, %v7151
    %v7153 = vsel %vm1290, %v6743, 0.0
    %v7154 = vadd.f32 %v7152, %v7153
    %v7155 = vsel %vm1290, %v6747, 0.0
    %v7156 = vadd.f32 %v7154, %v7155
    %v7157 = vsel %vm1290, %v6753, 0.0
    %v7158 = vadd.f32 %v7156, %v7157
    %v7159 = vsel %vm1290, %v6757, 0.0
    %v7160 = vadd.f32 %v7158, %v7159
    %v7161 = vsel %vm1290, %v6763, 0.0
    %v7162 = vadd.f32 %v7160, %v7161
    %v7163 = vsel %vm1290, %v6767, 0.0
    %v7164 = vadd.f32 %v7162, %v7163
    %v7165 = vsel %vm1290, %v6773, 0.0
    %v7166 = vadd.f32 %v7164, %v7165
    %v7167 = vsel %vm1290, %v6777, 0.0
    %v7168 = vadd.f32 %v7166, %v7167
    %v7169 = vsel %vm1290, %v6783, 0.0
    %v7170 = vadd.f32 %v7168, %v7169
    %v7171 = vsel %vm1290, %v6787, 0.0
    %v7172 = vadd.f32 %v7170, %v7171
    %v7173 = vsel %vm1290, %v6793, 0.0
    %v7174 = vadd.f32 %v7172, %v7173
    %v7175 = vsel %vm1290, %v6797, 0.0
    %v7176 = vadd.f32 %v7174, %v7175
    %v7177 = vsel %vm1290, %v6803, 0.0
    %v7178 = vadd.f32 %v7176, %v7177
    %v7179 = vsel %vm1290, %v6807, 0.0
    %v7180 = vadd.f32 %v7178, %v7179
    %v7181 = vsel %vm1290, %v6813, 0.0
    %v7182 = vadd.f32 %v7180, %v7181
    %v7183 = vsel %vm1290, %v6817, 0.0
    %v7184 = vadd.f32 %v7182, %v7183
    %v7185 = vsel %vm1290, %v6823, 0.0
    %v7186 = vadd.f32 %v7184, %v7185
    %v7187 = vsel %vm1290, %v6827, 0.0
    %v7188 = vadd.f32 %v7186, %v7187
    %v7189 = vsel %vm1290, %v6833, 0.0
    %v7190 = vadd.f32 %v7188, %v7189
    %v7191 = vsel %vm1290, %v6837, 0.0
    %v7192 = vadd.f32 %v7190, %v7191
    %v7193 = vsel %vm1290, %v6843, 0.0
    %v7194 = vadd.f32 %v7192, %v7193
    %v7195 = vsel %vm1290, %v6847, 0.0
    %v7196 = vadd.f32 %v7194, %v7195
    %v7197 = vsel %vm1290, %v6853, 0.0
    %v7198 = vadd.f32 %v7196, %v7197
    %v7199 = vsel %vm1290, %v6857, 0.0
    %v7200 = vadd.f32 %v7198, %v7199
    %v7201 = vsel %vm1290, %v6863, 0.0
    %v7202 = vadd.f32 %v7200, %v7201
    %v7203 = vsel %vm1290, %v6867, 0.0
    %v7204 = vadd.f32 %v7202, %v7203
    %v7205 = vrot.slane %v7204, 4
    %v7206 = vadd.f32 %v7204, %v7205
    %v7207 = vrot.slane %v7206, 2
    %v7208 = vadd.f32 %v7206, %v7207
    %v7209 = vrot.slane %v7208, 1
    %v7210 = vadd.f32 %v7208, %v7209
    %v7211 = vmul.f32 %v6939, 0.001953125
    %v7212 = vmul.f32 %v7008, 0.001953125
    %v7213 = vmul.f32 %v7077, 0.001953125
    %v7214 = vmul.f32 %v7210, 0.001953125
    %v7215 = vsub.f32 %v6198, %v7211
    %v7216 = vsub.f32 %v6200, %v7212
    %v7217 = vsub.f32 %v6551, %v7213
    %v7218 = vsub.f32 %v6553, %v7214
    %v7219 = vsub.f32 %v6202, %v7211
    %v7220 = vsub.f32 %v6204, %v7212
    %v7221 = vsub.f32 %v6555, %v7213
    %v7222 = vsub.f32 %v6557, %v7214
    %v7223 = vsub.f32 %v6208, %v7211
    %v7224 = vsub.f32 %v6210, %v7212
    %v7225 = vsub.f32 %v6561, %v7213
    %v7226 = vsub.f32 %v6563, %v7214
    %v7227 = vsub.f32 %v6212, %v7211
    %v7228 = vsub.f32 %v6214, %v7212
    %v7229 = vsub.f32 %v6565, %v7213
    %v7230 = vsub.f32 %v6567, %v7214
    %v7231 = vsub.f32 %v6218, %v7211
    %v7232 = vsub.f32 %v6220, %v7212
    %v7233 = vsub.f32 %v6571, %v7213
    %v7234 = vsub.f32 %v6573, %v7214
    %v7235 = vsub.f32 %v6222, %v7211
    %v7236 = vsub.f32 %v6224, %v7212
    %v7237 = vsub.f32 %v6575, %v7213
    %v7238 = vsub.f32 %v6577, %v7214
    %v7239 = vsub.f32 %v6228, %v7211
    %v7240 = vsub.f32 %v6230, %v7212
    %v7241 = vsub.f32 %v6581, %v7213
    %v7242 = vsub.f32 %v6583, %v7214
    %v7243 = vsub.f32 %v6232, %v7211
    %v7244 = vsub.f32 %v6234, %v7212
    %v7245 = vsub.f32 %v6585, %v7213
    %v7246 = vsub.f32 %v6587, %v7214
    %v7247 = vsub.f32 %v6238, %v7211
    %v7248 = vsub.f32 %v6240, %v7212
    %v7249 = vsub.f32 %v6591, %v7213
    %v7250 = vsub.f32 %v6593, %v7214
    %v7251 = vsub.f32 %v6242, %v7211
    %v7252 = vsub.f32 %v6244, %v7212
    %v7253 = vsub.f32 %v6595, %v7213
    %v7254 = vsub.f32 %v6597, %v7214
    %v7255 = vsub.f32 %v6248, %v7211
    %v7256 = vsub.f32 %v6250, %v7212
    %v7257 = vsub.f32 %v6601, %v7213
    %v7258 = vsub.f32 %v6603, %v7214
    %v7259 = vsub.f32 %v6252, %v7211
    %v7260 = vsub.f32 %v6254, %v7212
    %v7261 = vsub.f32 %v6605, %v7213
    %v7262 = vsub.f32 %v6607, %v7214
    %v7263 = vsub.f32 %v6258, %v7211
    %v7264 = vsub.f32 %v6260, %v7212
    %v7265 = vsub.f32 %v6611, %v7213
    %v7266 = vsub.f32 %v6613, %v7214
    %v7267 = vsub.f32 %v6262, %v7211
    %v7268 = vsub.f32 %v6264, %v7212
    %v7269 = vsub.f32 %v6615, %v7213
    %v7270 = vsub.f32 %v6617, %v7214
    %v7271 = vsub.f32 %v6268, %v7211
    %v7272 = vsub.f32 %v6270, %v7212
    %v7273 = vsub.f32 %v6621, %v7213
    %v7274 = vsub.f32 %v6623, %v7214
    %v7275 = vsub.f32 %v6272, %v7211
    %v7276 = vsub.f32 %v6274, %v7212
    %v7277 = vsub.f32 %v6625, %v7213
    %v7278 = vsub.f32 %v6627, %v7214
    %v7279 = vsub.f32 %v6278, %v7211
    %v7280 = vsub.f32 %v6280, %v7212
    %v7281 = vsub.f32 %v6631, %v7213
    %v7282 = vsub.f32 %v6633, %v7214
    %v7283 = vsub.f32 %v6282, %v7211
    %v7284 = vsub.f32 %v6284, %v7212
    %v7285 = vsub.f32 %v6635, %v7213
    %v7286 = vsub.f32 %v6637, %v7214
    %v7287 = vsub.f32 %v6288, %v7211
    %v7288 = vsub.f32 %v6290, %v7212
    %v7289 = vsub.f32 %v6641, %v7213
    %v7290 = vsub.f32 %v6643, %v7214
    %v7291 = vsub.f32 %v6292, %v7211
    %v7292 = vsub.f32 %v6294, %v7212
    %v7293 = vsub.f32 %v6645, %v7213
    %v7294 = vsub.f32 %v6647, %v7214
    %v7295 = vsub.f32 %v6298, %v7211
    %v7296 = vsub.f32 %v6300, %v7212
    %v7297 = vsub.f32 %v6651, %v7213
    %v7298 = vsub.f32 %v6653, %v7214
    %v7299 = vsub.f32 %v6302, %v7211
    %v7300 = vsub.f32 %v6304, %v7212
    %v7301 = vsub.f32 %v6655, %v7213
    %v7302 = vsub.f32 %v6657, %v7214
    %v7303 = vsub.f32 %v6308, %v7211
    %v7304 = vsub.f32 %v6310, %v7212
    %v7305 = vsub.f32 %v6661, %v7213
    %v7306 = vsub.f32 %v6663, %v7214
    %v7307 = vsub.f32 %v6312, %v7211
    %v7308 = vsub.f32 %v6314, %v7212
    %v7309 = vsub.f32 %v6665, %v7213
    %v7310 = vsub.f32 %v6667, %v7214
    %v7311 = vsub.f32 %v6318, %v7211
    %v7312 = vsub.f32 %v6320, %v7212
    %v7313 = vsub.f32 %v6671, %v7213
    %v7314 = vsub.f32 %v6673, %v7214
    %v7315 = vsub.f32 %v6322, %v7211
    %v7316 = vsub.f32 %v6324, %v7212
    %v7317 = vsub.f32 %v6675, %v7213
    %v7318 = vsub.f32 %v6677, %v7214
    %v7319 = vsub.f32 %v6328, %v7211
    %v7320 = vsub.f32 %v6330, %v7212
    %v7321 = vsub.f32 %v6681, %v7213
    %v7322 = vsub.f32 %v6683, %v7214
    %v7323 = vsub.f32 %v6332, %v7211
    %v7324 = vsub.f32 %v6334, %v7212
    %v7325 = vsub.f32 %v6685, %v7213
    %v7326 = vsub.f32 %v6687, %v7214
    %v7327 = vsub.f32 %v6338, %v7211
    %v7328 = vsub.f32 %v6340, %v7212
    %v7329 = vsub.f32 %v6691, %v7213
    %v7330 = vsub.f32 %v6693, %v7214
    %v7331 = vsub.f32 %v6342, %v7211
    %v7332 = vsub.f32 %v6344, %v7212
    %v7333 = vsub.f32 %v6695, %v7213
    %v7334 = vsub.f32 %v6697, %v7214
    %v7335 = vsub.f32 %v6348, %v7211
    %v7336 = vsub.f32 %v6350, %v7212
    %v7337 = vsub.f32 %v6701, %v7213
    %v7338 = vsub.f32 %v6703, %v7214
    %v7339 = vsub.f32 %v6352, %v7211
    %v7340 = vsub.f32 %v6354, %v7212
    %v7341 = vsub.f32 %v6705, %v7213
    %v7342 = vsub.f32 %v6707, %v7214
    %v7343 = vsub.f32 %v6358, %v7211
    %v7344 = vsub.f32 %v6360, %v7212
    %v7345 = vsub.f32 %v6711, %v7213
    %v7346 = vsub.f32 %v6713, %v7214
    %v7347 = vsub.f32 %v6362, %v7211
    %v7348 = vsub.f32 %v6364, %v7212
    %v7349 = vsub.f32 %v6715, %v7213
    %v7350 = vsub.f32 %v6717, %v7214
    %v7351 = vsub.f32 %v6368, %v7211
    %v7352 = vsub.f32 %v6370, %v7212
    %v7353 = vsub.f32 %v6721, %v7213
    %v7354 = vsub.f32 %v6723, %v7214
    %v7355 = vsub.f32 %v6372, %v7211
    %v7356 = vsub.f32 %v6374, %v7212
    %v7357 = vsub.f32 %v6725, %v7213
    %v7358 = vsub.f32 %v6727, %v7214
    %v7359 = vsub.f32 %v6378, %v7211
    %v7360 = vsub.f32 %v6380, %v7212
    %v7361 = vsub.f32 %v6731, %v7213
    %v7362 = vsub.f32 %v6733, %v7214
    %v7363 = vsub.f32 %v6382, %v7211
    %v7364 = vsub.f32 %v6384, %v7212
    %v7365 = vsub.f32 %v6735, %v7213
    %v7366 = vsub.f32 %v6737, %v7214
    %v7367 = vsub.f32 %v6388, %v7211
    %v7368 = vsub.f32 %v6390, %v7212
    %v7369 = vsub.f32 %v6741, %v7213
    %v7370 = vsub.f32 %v6743, %v7214
    %v7371 = vsub.f32 %v6392, %v7211
    %v7372 = vsub.f32 %v6394, %v7212
    %v7373 = vsub.f32 %v6745, %v7213
    %v7374 = vsub.f32 %v6747, %v7214
    %v7375 = vsub.f32 %v6398, %v7211
    %v7376 = vsub.f32 %v6400, %v7212
    %v7377 = vsub.f32 %v6751, %v7213
    %v7378 = vsub.f32 %v6753, %v7214
    %v7379 = vsub.f32 %v6402, %v7211
    %v7380 = vsub.f32 %v6404, %v7212
    %v7381 = vsub.f32 %v6755, %v7213
    %v7382 = vsub.f32 %v6757, %v7214
    %v7383 = vsub.f32 %v6408, %v7211
    %v7384 = vsub.f32 %v6410, %v7212
    %v7385 = vsub.f32 %v6761, %v7213
    %v7386 = vsub.f32 %v6763, %v7214
    %v7387 = vsub.f32 %v6412, %v7211
    %v7388 = vsub.f32 %v6414, %v7212
    %v7389 = vsub.f32 %v6765, %v7213
    %v7390 = vsub.f32 %v6767, %v7214
    %v7391 = vsub.f32 %v6418, %v7211
    %v7392 = vsub.f32 %v6420, %v7212
    %v7393 = vsub.f32 %v6771, %v7213
    %v7394 = vsub.f32 %v6773, %v7214
    %v7395 = vsub.f32 %v6422, %v7211
    %v7396 = vsub.f32 %v6424, %v7212
    %v7397 = vsub.f32 %v6775, %v7213
    %v7398 = vsub.f32 %v6777, %v7214
    %v7399 = vsub.f32 %v6428, %v7211
    %v7400 = vsub.f32 %v6430, %v7212
    %v7401 = vsub.f32 %v6781, %v7213
    %v7402 = vsub.f32 %v6783, %v7214
    %v7403 = vsub.f32 %v6432, %v7211
    %v7404 = vsub.f32 %v6434, %v7212
    %v7405 = vsub.f32 %v6785, %v7213
    %v7406 = vsub.f32 %v6787, %v7214
    %v7407 = vsub.f32 %v6438, %v7211
    %v7408 = vsub.f32 %v6440, %v7212
    %v7409 = vsub.f32 %v6791, %v7213
    %v7410 = vsub.f32 %v6793, %v7214
    %v7411 = vsub.f32 %v6442, %v7211
    %v7412 = vsub.f32 %v6444, %v7212
    %v7413 = vsub.f32 %v6795, %v7213
    %v7414 = vsub.f32 %v6797, %v7214
    %v7415 = vsub.f32 %v6448, %v7211
    %v7416 = vsub.f32 %v6450, %v7212
    %v7417 = vsub.f32 %v6801, %v7213
    %v7418 = vsub.f32 %v6803, %v7214
    %v7419 = vsub.f32 %v6452, %v7211
    %v7420 = vsub.f32 %v6454, %v7212
    %v7421 = vsub.f32 %v6805, %v7213
    %v7422 = vsub.f32 %v6807, %v7214
    %v7423 = vsub.f32 %v6458, %v7211
    %v7424 = vsub.f32 %v6460, %v7212
    %v7425 = vsub.f32 %v6811, %v7213
    %v7426 = vsub.f32 %v6813, %v7214
    %v7427 = vsub.f32 %v6462, %v7211
    %v7428 = vsub.f32 %v6464, %v7212
    %v7429 = vsub.f32 %v6815, %v7213
    %v7430 = vsub.f32 %v6817, %v7214
    %v7431 = vsub.f32 %v6468, %v7211
    %v7432 = vsub.f32 %v6470, %v7212
    %v7433 = vsub.f32 %v6821, %v7213
    %v7434 = vsub.f32 %v6823, %v7214
    %v7435 = vsub.f32 %v6472, %v7211
    %v7436 = vsub.f32 %v6474, %v7212
    %v7437 = vsub.f32 %v6825, %v7213
    %v7438 = vsub.f32 %v6827, %v7214
    %v7439 = vsub.f32 %v6478, %v7211
    %v7440 = vsub.f32 %v6480, %v7212
    %v7441 = vsub.f32 %v6831, %v7213
    %v7442 = vsub.f32 %v6833, %v7214
    %v7443 = vsub.f32 %v6482, %v7211
    %v7444 = vsub.f32 %v6484, %v7212
    %v7445 = vsub.f32 %v6835, %v7213
    %v7446 = vsub.f32 %v6837, %v7214
    %v7447 = vsub.f32 %v6488, %v7211
    %v7448 = vsub.f32 %v6490, %v7212
    %v7449 = vsub.f32 %v6841, %v7213
    %v7450 = vsub.f32 %v6843, %v7214
    %v7451 = vsub.f32 %v6492, %v7211
    %v7452 = vsub.f32 %v6494, %v7212
    %v7453 = vsub.f32 %v6845, %v7213
    %v7454 = vsub.f32 %v6847, %v7214
    %v7455 = vsub.f32 %v6498, %v7211
    %v7456 = vsub.f32 %v6500, %v7212
    %v7457 = vsub.f32 %v6851, %v7213
    %v7458 = vsub.f32 %v6853, %v7214
    %v7459 = vsub.f32 %v6502, %v7211
    %v7460 = vsub.f32 %v6504, %v7212
    %v7461 = vsub.f32 %v6855, %v7213
    %v7462 = vsub.f32 %v6857, %v7214
    %v7463 = vsub.f32 %v6508, %v7211
    %v7464 = vsub.f32 %v6510, %v7212
    %v7465 = vsub.f32 %v6861, %v7213
    %v7466 = vsub.f32 %v6863, %v7214
    %v7467 = vsub.f32 %v6512, %v7211
    %v7468 = vsub.f32 %v6514, %v7212
    %v7469 = vsub.f32 %v6865, %v7213
    %v7470 = vsub.f32 %v6867, %v7214
    %v7471 = vmul.f32 %v7215, %v7215
    %v7472 = vmul.f32 %v7216, %v7216
    %v7473 = vmul.f32 %v7217, %v7217
    %v7474 = vmul.f32 %v7218, %v7218
    %v7475 = vmul.f32 %v7219, %v7219
    %v7476 = vmul.f32 %v7220, %v7220
    %v7477 = vmul.f32 %v7221, %v7221
    %v7478 = vmul.f32 %v7222, %v7222
    %v7479 = vmul.f32 %v7223, %v7223
    %v7480 = vmul.f32 %v7224, %v7224
    %v7481 = vmul.f32 %v7225, %v7225
    %v7482 = vmul.f32 %v7226, %v7226
    %v7483 = vmul.f32 %v7227, %v7227
    %v7484 = vmul.f32 %v7228, %v7228
    %v7485 = vmul.f32 %v7229, %v7229
    %v7486 = vmul.f32 %v7230, %v7230
    %v7487 = vmul.f32 %v7231, %v7231
    %v7488 = vmul.f32 %v7232, %v7232
    %v7489 = vmul.f32 %v7233, %v7233
    %v7490 = vmul.f32 %v7234, %v7234
    %v7491 = vmul.f32 %v7235, %v7235
    %v7492 = vmul.f32 %v7236, %v7236
    %v7493 = vmul.f32 %v7237, %v7237
    %v7494 = vmul.f32 %v7238, %v7238
    %v7495 = vmul.f32 %v7239, %v7239
    %v7496 = vmul.f32 %v7240, %v7240
    %v7497 = vmul.f32 %v7241, %v7241
    %v7498 = vmul.f32 %v7242, %v7242
    %v7499 = vmul.f32 %v7243, %v7243
    %v7500 = vmul.f32 %v7244, %v7244
    %v7501 = vmul.f32 %v7245, %v7245
    %v7502 = vmul.f32 %v7246, %v7246
    %v7503 = vmul.f32 %v7247, %v7247
    %v7504 = vmul.f32 %v7248, %v7248
    %v7505 = vmul.f32 %v7249, %v7249
    %v7506 = vmul.f32 %v7250, %v7250
    %v7507 = vmul.f32 %v7251, %v7251
    %v7508 = vmul.f32 %v7252, %v7252
    %v7509 = vmul.f32 %v7253, %v7253
    %v7510 = vmul.f32 %v7254, %v7254
    %v7511 = vmul.f32 %v7255, %v7255
    %v7512 = vmul.f32 %v7256, %v7256
    %v7513 = vmul.f32 %v7257, %v7257
    %v7514 = vmul.f32 %v7258, %v7258
    %v7515 = vmul.f32 %v7259, %v7259
    %v7516 = vmul.f32 %v7260, %v7260
    %v7517 = vmul.f32 %v7261, %v7261
    %v7518 = vmul.f32 %v7262, %v7262
    %v7519 = vmul.f32 %v7263, %v7263
    %v7520 = vmul.f32 %v7264, %v7264
    %v7521 = vmul.f32 %v7265, %v7265
    %v7522 = vmul.f32 %v7266, %v7266
    %v7523 = vmul.f32 %v7267, %v7267
    %v7524 = vmul.f32 %v7268, %v7268
    %v7525 = vmul.f32 %v7269, %v7269
    %v7526 = vmul.f32 %v7270, %v7270
    %v7527 = vmul.f32 %v7271, %v7271
    %v7528 = vmul.f32 %v7272, %v7272
    %v7529 = vmul.f32 %v7273, %v7273
    %v7530 = vmul.f32 %v7274, %v7274
    %v7531 = vmul.f32 %v7275, %v7275
    %v7532 = vmul.f32 %v7276, %v7276
    %v7533 = vmul.f32 %v7277, %v7277
    %v7534 = vmul.f32 %v7278, %v7278
    %v7535 = vmul.f32 %v7279, %v7279
    %v7536 = vmul.f32 %v7280, %v7280
    %v7537 = vmul.f32 %v7281, %v7281
    %v7538 = vmul.f32 %v7282, %v7282
    %v7539 = vmul.f32 %v7283, %v7283
    %v7540 = vmul.f32 %v7284, %v7284
    %v7541 = vmul.f32 %v7285, %v7285
    %v7542 = vmul.f32 %v7286, %v7286
    %v7543 = vmul.f32 %v7287, %v7287
    %v7544 = vmul.f32 %v7288, %v7288
    %v7545 = vmul.f32 %v7289, %v7289
    %v7546 = vmul.f32 %v7290, %v7290
    %v7547 = vmul.f32 %v7291, %v7291
    %v7548 = vmul.f32 %v7292, %v7292
    %v7549 = vmul.f32 %v7293, %v7293
    %v7550 = vmul.f32 %v7294, %v7294
    %v7551 = vmul.f32 %v7295, %v7295
    %v7552 = vmul.f32 %v7296, %v7296
    %v7553 = vmul.f32 %v7297, %v7297
    %v7554 = vmul.f32 %v7298, %v7298
    %v7555 = vmul.f32 %v7299, %v7299
    %v7556 = vmul.f32 %v7300, %v7300
    %v7557 = vmul.f32 %v7301, %v7301
    %v7558 = vmul.f32 %v7302, %v7302
    %v7559 = vmul.f32 %v7303, %v7303
    %v7560 = vmul.f32 %v7304, %v7304
    %v7561 = vmul.f32 %v7305, %v7305
    %v7562 = vmul.f32 %v7306, %v7306
    %v7563 = vmul.f32 %v7307, %v7307
    %v7564 = vmul.f32 %v7308, %v7308
    %v7565 = vmul.f32 %v7309, %v7309
    %v7566 = vmul.f32 %v7310, %v7310
    %v7567 = vmul.f32 %v7311, %v7311
    %v7568 = vmul.f32 %v7312, %v7312
    %v7569 = vmul.f32 %v7313, %v7313
    %v7570 = vmul.f32 %v7314, %v7314
    %v7571 = vmul.f32 %v7315, %v7315
    %v7572 = vmul.f32 %v7316, %v7316
    %v7573 = vmul.f32 %v7317, %v7317
    %v7574 = vmul.f32 %v7318, %v7318
    %v7575 = vmul.f32 %v7319, %v7319
    %v7576 = vmul.f32 %v7320, %v7320
    %v7577 = vmul.f32 %v7321, %v7321
    %v7578 = vmul.f32 %v7322, %v7322
    %v7579 = vmul.f32 %v7323, %v7323
    %v7580 = vmul.f32 %v7324, %v7324
    %v7581 = vmul.f32 %v7325, %v7325
    %v7582 = vmul.f32 %v7326, %v7326
    %v7583 = vmul.f32 %v7327, %v7327
    %v7584 = vmul.f32 %v7328, %v7328
    %v7585 = vmul.f32 %v7329, %v7329
    %v7586 = vmul.f32 %v7330, %v7330
    %v7587 = vmul.f32 %v7331, %v7331
    %v7588 = vmul.f32 %v7332, %v7332
    %v7589 = vmul.f32 %v7333, %v7333
    %v7590 = vmul.f32 %v7334, %v7334
    %v7591 = vmul.f32 %v7335, %v7335
    %v7592 = vmul.f32 %v7336, %v7336
    %v7593 = vmul.f32 %v7337, %v7337
    %v7594 = vmul.f32 %v7338, %v7338
    %v7595 = vmul.f32 %v7339, %v7339
    %v7596 = vmul.f32 %v7340, %v7340
    %v7597 = vmul.f32 %v7341, %v7341
    %v7598 = vmul.f32 %v7342, %v7342
    %v7599 = vmul.f32 %v7343, %v7343
    %v7600 = vmul.f32 %v7344, %v7344
    %v7601 = vmul.f32 %v7345, %v7345
    %v7602 = vmul.f32 %v7346, %v7346
    %v7603 = vmul.f32 %v7347, %v7347
    %v7604 = vmul.f32 %v7348, %v7348
    %v7605 = vmul.f32 %v7349, %v7349
    %v7606 = vmul.f32 %v7350, %v7350
    %v7607 = vmul.f32 %v7351, %v7351
    %v7608 = vmul.f32 %v7352, %v7352
    %v7609 = vmul.f32 %v7353, %v7353
    %v7610 = vmul.f32 %v7354, %v7354
    %v7611 = vmul.f32 %v7355, %v7355
    %v7612 = vmul.f32 %v7356, %v7356
    %v7613 = vmul.f32 %v7357, %v7357
    %v7614 = vmul.f32 %v7358, %v7358
    %v7615 = vmul.f32 %v7359, %v7359
    %v7616 = vmul.f32 %v7360, %v7360
    %v7617 = vmul.f32 %v7361, %v7361
    %v7618 = vmul.f32 %v7362, %v7362
    %v7619 = vmul.f32 %v7363, %v7363
    %v7620 = vmul.f32 %v7364, %v7364
    %v7621 = vmul.f32 %v7365, %v7365
    %v7622 = vmul.f32 %v7366, %v7366
    %v7623 = vmul.f32 %v7367, %v7367
    %v7624 = vmul.f32 %v7368, %v7368
    %v7625 = vmul.f32 %v7369, %v7369
    %v7626 = vmul.f32 %v7370, %v7370
    %v7627 = vmul.f32 %v7371, %v7371
    %v7628 = vmul.f32 %v7372, %v7372
    %v7629 = vmul.f32 %v7373, %v7373
    %v7630 = vmul.f32 %v7374, %v7374
    %v7631 = vmul.f32 %v7375, %v7375
    %v7632 = vmul.f32 %v7376, %v7376
    %v7633 = vmul.f32 %v7377, %v7377
    %v7634 = vmul.f32 %v7378, %v7378
    %v7635 = vmul.f32 %v7379, %v7379
    %v7636 = vmul.f32 %v7380, %v7380
    %v7637 = vmul.f32 %v7381, %v7381
    %v7638 = vmul.f32 %v7382, %v7382
    %v7639 = vmul.f32 %v7383, %v7383
    %v7640 = vmul.f32 %v7384, %v7384
    %v7641 = vmul.f32 %v7385, %v7385
    %v7642 = vmul.f32 %v7386, %v7386
    %v7643 = vmul.f32 %v7387, %v7387
    %v7644 = vmul.f32 %v7388, %v7388
    %v7645 = vmul.f32 %v7389, %v7389
    %v7646 = vmul.f32 %v7390, %v7390
    %v7647 = vmul.f32 %v7391, %v7391
    %v7648 = vmul.f32 %v7392, %v7392
    %v7649 = vmul.f32 %v7393, %v7393
    %v7650 = vmul.f32 %v7394, %v7394
    %v7651 = vmul.f32 %v7395, %v7395
    %v7652 = vmul.f32 %v7396, %v7396
    %v7653 = vmul.f32 %v7397, %v7397
    %v7654 = vmul.f32 %v7398, %v7398
    %v7655 = vmul.f32 %v7399, %v7399
    %v7656 = vmul.f32 %v7400, %v7400
    %v7657 = vmul.f32 %v7401, %v7401
    %v7658 = vmul.f32 %v7402, %v7402
    %v7659 = vmul.f32 %v7403, %v7403
    %v7660 = vmul.f32 %v7404, %v7404
    %v7661 = vmul.f32 %v7405, %v7405
    %v7662 = vmul.f32 %v7406, %v7406
    %v7663 = vmul.f32 %v7407, %v7407
    %v7664 = vmul.f32 %v7408, %v7408
    %v7665 = vmul.f32 %v7409, %v7409
    %v7666 = vmul.f32 %v7410, %v7410
    %v7667 = vmul.f32 %v7411, %v7411
    %v7668 = vmul.f32 %v7412, %v7412
    %v7669 = vmul.f32 %v7413, %v7413
    %v7670 = vmul.f32 %v7414, %v7414
    %v7671 = vmul.f32 %v7415, %v7415
    %v7672 = vmul.f32 %v7416, %v7416
    %v7673 = vmul.f32 %v7417, %v7417
    %v7674 = vmul.f32 %v7418, %v7418
    %v7675 = vmul.f32 %v7419, %v7419
    %v7676 = vmul.f32 %v7420, %v7420
    %v7677 = vmul.f32 %v7421, %v7421
    %v7678 = vmul.f32 %v7422, %v7422
    %v7679 = vmul.f32 %v7423, %v7423
    %v7680 = vmul.f32 %v7424, %v7424
    %v7681 = vmul.f32 %v7425, %v7425
    %v7682 = vmul.f32 %v7426, %v7426
    %v7683 = vmul.f32 %v7427, %v7427
    %v7684 = vmul.f32 %v7428, %v7428
    %v7685 = vmul.f32 %v7429, %v7429
    %v7686 = vmul.f32 %v7430, %v7430
    %v7687 = vmul.f32 %v7431, %v7431
    %v7688 = vmul.f32 %v7432, %v7432
    %v7689 = vmul.f32 %v7433, %v7433
    %v7690 = vmul.f32 %v7434, %v7434
    %v7691 = vmul.f32 %v7435, %v7435
    %v7692 = vmul.f32 %v7436, %v7436
    %v7693 = vmul.f32 %v7437, %v7437
    %v7694 = vmul.f32 %v7438, %v7438
    %v7695 = vmul.f32 %v7439, %v7439
    %v7696 = vmul.f32 %v7440, %v7440
    %v7697 = vmul.f32 %v7441, %v7441
    %v7698 = vmul.f32 %v7442, %v7442
    %v7699 = vmul.f32 %v7443, %v7443
    %v7700 = vmul.f32 %v7444, %v7444
    %v7701 = vmul.f32 %v7445, %v7445
    %v7702 = vmul.f32 %v7446, %v7446
    %v7703 = vmul.f32 %v7447, %v7447
    %v7704 = vmul.f32 %v7448, %v7448
    %v7705 = vmul.f32 %v7449, %v7449
    %v7706 = vmul.f32 %v7450, %v7450
    %v7707 = vmul.f32 %v7451, %v7451
    %v7708 = vmul.f32 %v7452, %v7452
    %v7709 = vmul.f32 %v7453, %v7453
    %v7710 = vmul.f32 %v7454, %v7454
    %v7711 = vmul.f32 %v7455, %v7455
    %v7712 = vmul.f32 %v7456, %v7456
    %v7713 = vmul.f32 %v7457, %v7457
    %v7714 = vmul.f32 %v7458, %v7458
    %v7715 = vmul.f32 %v7459, %v7459
    %v7716 = vmul.f32 %v7460, %v7460
    %v7717 = vmul.f32 %v7461, %v7461
    %v7718 = vmul.f32 %v7462, %v7462
    %v7719 = vmul.f32 %v7463, %v7463
    %v7720 = vmul.f32 %v7464, %v7464
    %v7721 = vmul.f32 %v7465, %v7465
    %v7722 = vmul.f32 %v7466, %v7466
    %v7723 = vmul.f32 %v7467, %v7467
    %v7724 = vmul.f32 %v7468, %v7468
    %v7725 = vmul.f32 %v7469, %v7469
    %v7726 = vmul.f32 %v7470, %v7470
    %v7727 = vadd.f32 %v7471, %v7475
    %v7728 = vadd.f32 %v7727, %v7479
    %v7729 = vadd.f32 %v7728, %v7483
    %v7730 = vadd.f32 %v7729, %v7487
    %v7731 = vadd.f32 %v7730, %v7491
    %v7732 = vadd.f32 %v7731, %v7495
    %v7733 = vadd.f32 %v7732, %v7499
    %v7734 = vadd.f32 %v7733, %v7503
    %v7735 = vadd.f32 %v7734, %v7507
    %v7736 = vadd.f32 %v7735, %v7511
    %v7737 = vadd.f32 %v7736, %v7515
    %v7738 = vadd.f32 %v7737, %v7519
    %v7739 = vadd.f32 %v7738, %v7523
    %v7740 = vadd.f32 %v7739, %v7527
    %v7741 = vadd.f32 %v7740, %v7531
    %v7742 = vadd.f32 %v7741, %v7535
    %v7743 = vadd.f32 %v7742, %v7539
    %v7744 = vadd.f32 %v7743, %v7543
    %v7745 = vadd.f32 %v7744, %v7547
    %v7746 = vadd.f32 %v7745, %v7551
    %v7747 = vadd.f32 %v7746, %v7555
    %v7748 = vadd.f32 %v7747, %v7559
    %v7749 = vadd.f32 %v7748, %v7563
    %v7750 = vadd.f32 %v7749, %v7567
    %v7751 = vadd.f32 %v7750, %v7571
    %v7752 = vadd.f32 %v7751, %v7575
    %v7753 = vadd.f32 %v7752, %v7579
    %v7754 = vadd.f32 %v7753, %v7583
    %v7755 = vadd.f32 %v7754, %v7587
    %v7756 = vadd.f32 %v7755, %v7591
    %v7757 = vadd.f32 %v7756, %v7595
    %v7758 = vadd.f32 %v7757, %v7599
    %v7759 = vadd.f32 %v7758, %v7603
    %v7760 = vadd.f32 %v7759, %v7607
    %v7761 = vadd.f32 %v7760, %v7611
    %v7762 = vadd.f32 %v7761, %v7615
    %v7763 = vadd.f32 %v7762, %v7619
    %v7764 = vadd.f32 %v7763, %v7623
    %v7765 = vadd.f32 %v7764, %v7627
    %v7766 = vadd.f32 %v7765, %v7631
    %v7767 = vadd.f32 %v7766, %v7635
    %v7768 = vadd.f32 %v7767, %v7639
    %v7769 = vadd.f32 %v7768, %v7643
    %v7770 = vadd.f32 %v7769, %v7647
    %v7771 = vadd.f32 %v7770, %v7651
    %v7772 = vadd.f32 %v7771, %v7655
    %v7773 = vadd.f32 %v7772, %v7659
    %v7774 = vadd.f32 %v7773, %v7663
    %v7775 = vadd.f32 %v7774, %v7667
    %v7776 = vadd.f32 %v7775, %v7671
    %v7777 = vadd.f32 %v7776, %v7675
    %v7778 = vadd.f32 %v7777, %v7679
    %v7779 = vadd.f32 %v7778, %v7683
    %v7780 = vadd.f32 %v7779, %v7687
    %v7781 = vadd.f32 %v7780, %v7691
    %v7782 = vadd.f32 %v7781, %v7695
    %v7783 = vadd.f32 %v7782, %v7699
    %v7784 = vadd.f32 %v7783, %v7703
    %v7785 = vadd.f32 %v7784, %v7707
    %v7786 = vadd.f32 %v7785, %v7711
    %v7787 = vadd.f32 %v7786, %v7715
    %v7788 = vadd.f32 %v7787, %v7719
    %v7789 = vadd.f32 %v7788, %v7723
    %v7790 = vrot.slane %v7789, 4
    %v7791 = vadd.f32 %v7789, %v7790
    %v7792 = vrot.slane %v7791, 2
    %v7793 = vadd.f32 %v7791, %v7792
    %v7794 = vrot.slane %v7793, 1
    %v7795 = vadd.f32 %v7793, %v7794
    %v7796 = vadd.f32 %v7472, %v7476
    %v7797 = vadd.f32 %v7796, %v7480
    %v7798 = vadd.f32 %v7797, %v7484
    %v7799 = vadd.f32 %v7798, %v7488
    %v7800 = vadd.f32 %v7799, %v7492
    %v7801 = vadd.f32 %v7800, %v7496
    %v7802 = vadd.f32 %v7801, %v7500
    %v7803 = vadd.f32 %v7802, %v7504
    %v7804 = vadd.f32 %v7803, %v7508
    %v7805 = vadd.f32 %v7804, %v7512
    %v7806 = vadd.f32 %v7805, %v7516
    %v7807 = vadd.f32 %v7806, %v7520
    %v7808 = vadd.f32 %v7807, %v7524
    %v7809 = vadd.f32 %v7808, %v7528
    %v7810 = vadd.f32 %v7809, %v7532
    %v7811 = vadd.f32 %v7810, %v7536
    %v7812 = vadd.f32 %v7811, %v7540
    %v7813 = vadd.f32 %v7812, %v7544
    %v7814 = vadd.f32 %v7813, %v7548
    %v7815 = vadd.f32 %v7814, %v7552
    %v7816 = vadd.f32 %v7815, %v7556
    %v7817 = vadd.f32 %v7816, %v7560
    %v7818 = vadd.f32 %v7817, %v7564
    %v7819 = vadd.f32 %v7818, %v7568
    %v7820 = vadd.f32 %v7819, %v7572
    %v7821 = vadd.f32 %v7820, %v7576
    %v7822 = vadd.f32 %v7821, %v7580
    %v7823 = vadd.f32 %v7822, %v7584
    %v7824 = vadd.f32 %v7823, %v7588
    %v7825 = vadd.f32 %v7824, %v7592
    %v7826 = vadd.f32 %v7825, %v7596
    %v7827 = vadd.f32 %v7826, %v7600
    %v7828 = vadd.f32 %v7827, %v7604
    %v7829 = vadd.f32 %v7828, %v7608
    %v7830 = vadd.f32 %v7829, %v7612
    %v7831 = vadd.f32 %v7830, %v7616
    %v7832 = vadd.f32 %v7831, %v7620
    %v7833 = vadd.f32 %v7832, %v7624
    %v7834 = vadd.f32 %v7833, %v7628
    %v7835 = vadd.f32 %v7834, %v7632
    %v7836 = vadd.f32 %v7835, %v7636
    %v7837 = vadd.f32 %v7836, %v7640
    %v7838 = vadd.f32 %v7837, %v7644
    %v7839 = vadd.f32 %v7838, %v7648
    %v7840 = vadd.f32 %v7839, %v7652
    %v7841 = vadd.f32 %v7840, %v7656
    %v7842 = vadd.f32 %v7841, %v7660
    %v7843 = vadd.f32 %v7842, %v7664
    %v7844 = vadd.f32 %v7843, %v7668
    %v7845 = vadd.f32 %v7844, %v7672
    %v7846 = vadd.f32 %v7845, %v7676
    %v7847 = vadd.f32 %v7846, %v7680
    %v7848 = vadd.f32 %v7847, %v7684
    %v7849 = vadd.f32 %v7848, %v7688
    %v7850 = vadd.f32 %v7849, %v7692
    %v7851 = vadd.f32 %v7850, %v7696
    %v7852 = vadd.f32 %v7851, %v7700
    %v7853 = vadd.f32 %v7852, %v7704
    %v7854 = vadd.f32 %v7853, %v7708
    %v7855 = vadd.f32 %v7854, %v7712
    %v7856 = vadd.f32 %v7855, %v7716
    %v7857 = vadd.f32 %v7856, %v7720
    %v7858 = vadd.f32 %v7857, %v7724
    %v7859 = vrot.slane %v7858, 4
    %v7860 = vadd.f32 %v7858, %v7859
    %v7861 = vrot.slane %v7860, 2
    %v7862 = vadd.f32 %v7860, %v7861
    %v7863 = vrot.slane %v7862, 1
    %v7864 = vadd.f32 %v7862, %v7863
    %v7865 = vadd.f32 %v7473, %v7477
    %v7866 = vadd.f32 %v7865, %v7481
    %v7867 = vadd.f32 %v7866, %v7485
    %v7868 = vadd.f32 %v7867, %v7489
    %v7869 = vadd.f32 %v7868, %v7493
    %v7870 = vadd.f32 %v7869, %v7497
    %v7871 = vadd.f32 %v7870, %v7501
    %v7872 = vadd.f32 %v7871, %v7505
    %v7873 = vadd.f32 %v7872, %v7509
    %v7874 = vadd.f32 %v7873, %v7513
    %v7875 = vadd.f32 %v7874, %v7517
    %v7876 = vadd.f32 %v7875, %v7521
    %v7877 = vadd.f32 %v7876, %v7525
    %v7878 = vadd.f32 %v7877, %v7529
    %v7879 = vadd.f32 %v7878, %v7533
    %v7880 = vadd.f32 %v7879, %v7537
    %v7881 = vadd.f32 %v7880, %v7541
    %v7882 = vadd.f32 %v7881, %v7545
    %v7883 = vadd.f32 %v7882, %v7549
    %v7884 = vadd.f32 %v7883, %v7553
    %v7885 = vadd.f32 %v7884, %v7557
    %v7886 = vadd.f32 %v7885, %v7561
    %v7887 = vadd.f32 %v7886, %v7565
    %v7888 = vadd.f32 %v7887, %v7569
    %v7889 = vadd.f32 %v7888, %v7573
    %v7890 = vadd.f32 %v7889, %v7577
    %v7891 = vadd.f32 %v7890, %v7581
    %v7892 = vadd.f32 %v7891, %v7585
    %v7893 = vadd.f32 %v7892, %v7589
    %v7894 = vadd.f32 %v7893, %v7593
    %v7895 = vadd.f32 %v7894, %v7597
    %v7896 = vadd.f32 %v7895, %v7601
    %v7897 = vadd.f32 %v7896, %v7605
    %v7898 = vadd.f32 %v7897, %v7609
    %v7899 = vadd.f32 %v7898, %v7613
    %v7900 = vadd.f32 %v7899, %v7617
    %v7901 = vadd.f32 %v7900, %v7621
    %v7902 = vadd.f32 %v7901, %v7625
    %v7903 = vadd.f32 %v7902, %v7629
    %v7904 = vadd.f32 %v7903, %v7633
    %v7905 = vadd.f32 %v7904, %v7637
    %v7906 = vadd.f32 %v7905, %v7641
    %v7907 = vadd.f32 %v7906, %v7645
    %v7908 = vadd.f32 %v7907, %v7649
    %v7909 = vadd.f32 %v7908, %v7653
    %v7910 = vadd.f32 %v7909, %v7657
    %v7911 = vadd.f32 %v7910, %v7661
    %v7912 = vadd.f32 %v7911, %v7665
    %v7913 = vadd.f32 %v7912, %v7669
    %v7914 = vadd.f32 %v7913, %v7673
    %v7915 = vadd.f32 %v7914, %v7677
    %v7916 = vadd.f32 %v7915, %v7681
    %v7917 = vadd.f32 %v7916, %v7685
    %v7918 = vadd.f32 %v7917, %v7689
    %v7919 = vadd.f32 %v7918, %v7693
    %v7920 = vadd.f32 %v7919, %v7697
    %v7921 = vadd.f32 %v7920, %v7701
    %v7922 = vadd.f32 %v7921, %v7705
    %v7923 = vadd.f32 %v7922, %v7709
    %v7924 = vadd.f32 %v7923, %v7713
    %v7925 = vadd.f32 %v7924, %v7717
    %v7926 = vadd.f32 %v7925, %v7721
    %v7927 = vadd.f32 %v7926, %v7725
    %v7928 = vrot.slane %v7927, 4
    %v7929 = vadd.f32 %v7927, %v7928
    %v7930 = vrot.slane %v7929, 2
    %v7931 = vadd.f32 %v7929, %v7930
    %v7932 = vrot.slane %v7931, 1
    %v7933 = vadd.f32 %v7931, %v7932
    %v7934 = vsel %vm1290, %v7474, 0.0
    %v7935 = vsel %vm1290, %v7478, 0.0
    %v7936 = vadd.f32 %v7934, %v7935
    %v7937 = vsel %vm1290, %v7482, 0.0
    %v7938 = vadd.f32 %v7936, %v7937
    %v7939 = vsel %vm1290, %v7486, 0.0
    %v7940 = vadd.f32 %v7938, %v7939
    %v7941 = vsel %vm1290, %v7490, 0.0
    %v7942 = vadd.f32 %v7940, %v7941
    %v7943 = vsel %vm1290, %v7494, 0.0
    %v7944 = vadd.f32 %v7942, %v7943
    %v7945 = vsel %vm1290, %v7498, 0.0
    %v7946 = vadd.f32 %v7944, %v7945
    %v7947 = vsel %vm1290, %v7502, 0.0
    %v7948 = vadd.f32 %v7946, %v7947
    %v7949 = vsel %vm1290, %v7506, 0.0
    %v7950 = vadd.f32 %v7948, %v7949
    %v7951 = vsel %vm1290, %v7510, 0.0
    %v7952 = vadd.f32 %v7950, %v7951
    %v7953 = vsel %vm1290, %v7514, 0.0
    %v7954 = vadd.f32 %v7952, %v7953
    %v7955 = vsel %vm1290, %v7518, 0.0
    %v7956 = vadd.f32 %v7954, %v7955
    %v7957 = vsel %vm1290, %v7522, 0.0
    %v7958 = vadd.f32 %v7956, %v7957
    %v7959 = vsel %vm1290, %v7526, 0.0
    %v7960 = vadd.f32 %v7958, %v7959
    %v7961 = vsel %vm1290, %v7530, 0.0
    %v7962 = vadd.f32 %v7960, %v7961
    %v7963 = vsel %vm1290, %v7534, 0.0
    %v7964 = vadd.f32 %v7962, %v7963
    %v7965 = vsel %vm1290, %v7538, 0.0
    %v7966 = vadd.f32 %v7964, %v7965
    %v7967 = vsel %vm1290, %v7542, 0.0
    %v7968 = vadd.f32 %v7966, %v7967
    %v7969 = vsel %vm1290, %v7546, 0.0
    %v7970 = vadd.f32 %v7968, %v7969
    %v7971 = vsel %vm1290, %v7550, 0.0
    %v7972 = vadd.f32 %v7970, %v7971
    %v7973 = vsel %vm1290, %v7554, 0.0
    %v7974 = vadd.f32 %v7972, %v7973
    %v7975 = vsel %vm1290, %v7558, 0.0
    %v7976 = vadd.f32 %v7974, %v7975
    %v7977 = vsel %vm1290, %v7562, 0.0
    %v7978 = vadd.f32 %v7976, %v7977
    %v7979 = vsel %vm1290, %v7566, 0.0
    %v7980 = vadd.f32 %v7978, %v7979
    %v7981 = vsel %vm1290, %v7570, 0.0
    %v7982 = vadd.f32 %v7980, %v7981
    %v7983 = vsel %vm1290, %v7574, 0.0
    %v7984 = vadd.f32 %v7982, %v7983
    %v7985 = vsel %vm1290, %v7578, 0.0
    %v7986 = vadd.f32 %v7984, %v7985
    %v7987 = vsel %vm1290, %v7582, 0.0
    %v7988 = vadd.f32 %v7986, %v7987
    %v7989 = vsel %vm1290, %v7586, 0.0
    %v7990 = vadd.f32 %v7988, %v7989
    %v7991 = vsel %vm1290, %v7590, 0.0
    %v7992 = vadd.f32 %v7990, %v7991
    %v7993 = vsel %vm1290, %v7594, 0.0
    %v7994 = vadd.f32 %v7992, %v7993
    %v7995 = vsel %vm1290, %v7598, 0.0
    %v7996 = vadd.f32 %v7994, %v7995
    %v7997 = vsel %vm1290, %v7602, 0.0
    %v7998 = vadd.f32 %v7996, %v7997
    %v7999 = vsel %vm1290, %v7606, 0.0
    %v8000 = vadd.f32 %v7998, %v7999
    %v8001 = vsel %vm1290, %v7610, 0.0
    %v8002 = vadd.f32 %v8000, %v8001
    %v8003 = vsel %vm1290, %v7614, 0.0
    %v8004 = vadd.f32 %v8002, %v8003
    %v8005 = vsel %vm1290, %v7618, 0.0
    %v8006 = vadd.f32 %v8004, %v8005
    %v8007 = vsel %vm1290, %v7622, 0.0
    %v8008 = vadd.f32 %v8006, %v8007
    %v8009 = vsel %vm1290, %v7626, 0.0
    %v8010 = vadd.f32 %v8008, %v8009
    %v8011 = vsel %vm1290, %v7630, 0.0
    %v8012 = vadd.f32 %v8010, %v8011
    %v8013 = vsel %vm1290, %v7634, 0.0
    %v8014 = vadd.f32 %v8012, %v8013
    %v8015 = vsel %vm1290, %v7638, 0.0
    %v8016 = vadd.f32 %v8014, %v8015
    %v8017 = vsel %vm1290, %v7642, 0.0
    %v8018 = vadd.f32 %v8016, %v8017
    %v8019 = vsel %vm1290, %v7646, 0.0
    %v8020 = vadd.f32 %v8018, %v8019
    %v8021 = vsel %vm1290, %v7650, 0.0
    %v8022 = vadd.f32 %v8020, %v8021
    %v8023 = vsel %vm1290, %v7654, 0.0
    %v8024 = vadd.f32 %v8022, %v8023
    %v8025 = vsel %vm1290, %v7658, 0.0
    %v8026 = vadd.f32 %v8024, %v8025
    %v8027 = vsel %vm1290, %v7662, 0.0
    %v8028 = vadd.f32 %v8026, %v8027
    %v8029 = vsel %vm1290, %v7666, 0.0
    %v8030 = vadd.f32 %v8028, %v8029
    %v8031 = vsel %vm1290, %v7670, 0.0
    %v8032 = vadd.f32 %v8030, %v8031
    %v8033 = vsel %vm1290, %v7674, 0.0
    %v8034 = vadd.f32 %v8032, %v8033
    %v8035 = vsel %vm1290, %v7678, 0.0
    %v8036 = vadd.f32 %v8034, %v8035
    %v8037 = vsel %vm1290, %v7682, 0.0
    %v8038 = vadd.f32 %v8036, %v8037
    %v8039 = vsel %vm1290, %v7686, 0.0
    %v8040 = vadd.f32 %v8038, %v8039
    %v8041 = vsel %vm1290, %v7690, 0.0
    %v8042 = vadd.f32 %v8040, %v8041
    %v8043 = vsel %vm1290, %v7694, 0.0
    %v8044 = vadd.f32 %v8042, %v8043
    %v8045 = vsel %vm1290, %v7698, 0.0
    %v8046 = vadd.f32 %v8044, %v8045
    %v8047 = vsel %vm1290, %v7702, 0.0
    %v8048 = vadd.f32 %v8046, %v8047
    %v8049 = vsel %vm1290, %v7706, 0.0
    %v8050 = vadd.f32 %v8048, %v8049
    %v8051 = vsel %vm1290, %v7710, 0.0
    %v8052 = vadd.f32 %v8050, %v8051
    %v8053 = vsel %vm1290, %v7714, 0.0
    %v8054 = vadd.f32 %v8052, %v8053
    %v8055 = vsel %vm1290, %v7718, 0.0
    %v8056 = vadd.f32 %v8054, %v8055
    %v8057 = vsel %vm1290, %v7722, 0.0
    %v8058 = vadd.f32 %v8056, %v8057
    %v8059 = vsel %vm1290, %v7726, 0.0
    %v8060 = vadd.f32 %v8058, %v8059
    %v8061 = vrot.slane %v8060, 4
    %v8062 = vadd.f32 %v8060, %v8061
    %v8063 = vrot.slane %v8062, 2
    %v8064 = vadd.f32 %v8062, %v8063
    %v8065 = vrot.slane %v8064, 1
    %v8066 = vadd.f32 %v8064, %v8065
    %v8067 = vmul.f32 %v7795, 0.001953125
    %v8068 = vmul.f32 %v7864, 0.001953125
    %v8069 = vmul.f32 %v7933, 0.001953125
    %v8070 = vmul.f32 %v8066, 0.001953125
    %v8071 = vadd.f32 %v8067, 0.001
    %v8072 = vadd.f32 %v8068, 0.001
    %v8073 = vadd.f32 %v8069, 0.001
    %v8074 = vadd.f32 %v8070, 0.001
    %v8075 = vrsqrt.pop %v8071
    %v8076 = vrsqrt.pop %v8072
    %v8077 = vrsqrt.pop %v8073
    %v8078 = vrsqrt.pop %v8074
    %v8079 = vmul.f32 %v7215, %v8075
    %v8080 = vmul.f32 %v7216, %v8076
    %v8081 = vmul.f32 %v7217, %v8077
    %v8082 = vmul.f32 %v7218, %v8078
    %v8083 = vmul.f32 %v7219, %v8075
    %v8084 = vmul.f32 %v7220, %v8076
    %v8085 = vmul.f32 %v7221, %v8077
    %v8086 = vmul.f32 %v7222, %v8078
    %v8087 = vmul.f32 %v7223, %v8075
    %v8088 = vmul.f32 %v7224, %v8076
    %v8089 = vmul.f32 %v7225, %v8077
    %v8090 = vmul.f32 %v7226, %v8078
    %v8091 = vmul.f32 %v7227, %v8075
    %v8092 = vmul.f32 %v7228, %v8076
    %v8093 = vmul.f32 %v7229, %v8077
    %v8094 = vmul.f32 %v7230, %v8078
    %v8095 = vmul.f32 %v7231, %v8075
    %v8096 = vmul.f32 %v7232, %v8076
    %v8097 = vmul.f32 %v7233, %v8077
    %v8098 = vmul.f32 %v7234, %v8078
    %v8099 = vmul.f32 %v7235, %v8075
    %v8100 = vmul.f32 %v7236, %v8076
    %v8101 = vmul.f32 %v7237, %v8077
    %v8102 = vmul.f32 %v7238, %v8078
    %v8103 = vmul.f32 %v7239, %v8075
    %v8104 = vmul.f32 %v7240, %v8076
    %v8105 = vmul.f32 %v7241, %v8077
    %v8106 = vmul.f32 %v7242, %v8078
    %v8107 = vmul.f32 %v7243, %v8075
    %v8108 = vmul.f32 %v7244, %v8076
    %v8109 = vmul.f32 %v7245, %v8077
    %v8110 = vmul.f32 %v7246, %v8078
    %v8111 = vmul.f32 %v7247, %v8075
    %v8112 = vmul.f32 %v7248, %v8076
    %v8113 = vmul.f32 %v7249, %v8077
    %v8114 = vmul.f32 %v7250, %v8078
    %v8115 = vmul.f32 %v7251, %v8075
    %v8116 = vmul.f32 %v7252, %v8076
    %v8117 = vmul.f32 %v7253, %v8077
    %v8118 = vmul.f32 %v7254, %v8078
    %v8119 = vmul.f32 %v7255, %v8075
    %v8120 = vmul.f32 %v7256, %v8076
    %v8121 = vmul.f32 %v7257, %v8077
    %v8122 = vmul.f32 %v7258, %v8078
    %v8123 = vmul.f32 %v7259, %v8075
    %v8124 = vmul.f32 %v7260, %v8076
    %v8125 = vmul.f32 %v7261, %v8077
    %v8126 = vmul.f32 %v7262, %v8078
    %v8127 = vmul.f32 %v7263, %v8075
    %v8128 = vmul.f32 %v7264, %v8076
    %v8129 = vmul.f32 %v7265, %v8077
    %v8130 = vmul.f32 %v7266, %v8078
    %v8131 = vmul.f32 %v7267, %v8075
    %v8132 = vmul.f32 %v7268, %v8076
    %v8133 = vmul.f32 %v7269, %v8077
    %v8134 = vmul.f32 %v7270, %v8078
    %v8135 = vmul.f32 %v7271, %v8075
    %v8136 = vmul.f32 %v7272, %v8076
    %v8137 = vmul.f32 %v7273, %v8077
    %v8138 = vmul.f32 %v7274, %v8078
    %v8139 = vmul.f32 %v7275, %v8075
    %v8140 = vmul.f32 %v7276, %v8076
    %v8141 = vmul.f32 %v7277, %v8077
    %v8142 = vmul.f32 %v7278, %v8078
    %v8143 = vmul.f32 %v7279, %v8075
    %v8144 = vmul.f32 %v7280, %v8076
    %v8145 = vmul.f32 %v7281, %v8077
    %v8146 = vmul.f32 %v7282, %v8078
    %v8147 = vmul.f32 %v7283, %v8075
    %v8148 = vmul.f32 %v7284, %v8076
    %v8149 = vmul.f32 %v7285, %v8077
    %v8150 = vmul.f32 %v7286, %v8078
    %v8151 = vmul.f32 %v7287, %v8075
    %v8152 = vmul.f32 %v7288, %v8076
    %v8153 = vmul.f32 %v7289, %v8077
    %v8154 = vmul.f32 %v7290, %v8078
    %v8155 = vmul.f32 %v7291, %v8075
    %v8156 = vmul.f32 %v7292, %v8076
    %v8157 = vmul.f32 %v7293, %v8077
    %v8158 = vmul.f32 %v7294, %v8078
    %v8159 = vmul.f32 %v7295, %v8075
    %v8160 = vmul.f32 %v7296, %v8076
    %v8161 = vmul.f32 %v7297, %v8077
    %v8162 = vmul.f32 %v7298, %v8078
    %v8163 = vmul.f32 %v7299, %v8075
    %v8164 = vmul.f32 %v7300, %v8076
    %v8165 = vmul.f32 %v7301, %v8077
    %v8166 = vmul.f32 %v7302, %v8078
    %v8167 = vmul.f32 %v7303, %v8075
    %v8168 = vmul.f32 %v7304, %v8076
    %v8169 = vmul.f32 %v7305, %v8077
    %v8170 = vmul.f32 %v7306, %v8078
    %v8171 = vmul.f32 %v7307, %v8075
    %v8172 = vmul.f32 %v7308, %v8076
    %v8173 = vmul.f32 %v7309, %v8077
    %v8174 = vmul.f32 %v7310, %v8078
    %v8175 = vmul.f32 %v7311, %v8075
    %v8176 = vmul.f32 %v7312, %v8076
    %v8177 = vmul.f32 %v7313, %v8077
    %v8178 = vmul.f32 %v7314, %v8078
    %v8179 = vmul.f32 %v7315, %v8075
    %v8180 = vmul.f32 %v7316, %v8076
    %v8181 = vmul.f32 %v7317, %v8077
    %v8182 = vmul.f32 %v7318, %v8078
    %v8183 = vmul.f32 %v7319, %v8075
    %v8184 = vmul.f32 %v7320, %v8076
    %v8185 = vmul.f32 %v7321, %v8077
    %v8186 = vmul.f32 %v7322, %v8078
    %v8187 = vmul.f32 %v7323, %v8075
    %v8188 = vmul.f32 %v7324, %v8076
    %v8189 = vmul.f32 %v7325, %v8077
    %v8190 = vmul.f32 %v7326, %v8078
    %v8191 = vmul.f32 %v7327, %v8075
    %v8192 = vmul.f32 %v7328, %v8076
    %v8193 = vmul.f32 %v7329, %v8077
    %v8194 = vmul.f32 %v7330, %v8078
    %v8195 = vmul.f32 %v7331, %v8075
    %v8196 = vmul.f32 %v7332, %v8076
    %v8197 = vmul.f32 %v7333, %v8077
    %v8198 = vmul.f32 %v7334, %v8078
    %v8199 = vmul.f32 %v7335, %v8075
    %v8200 = vmul.f32 %v7336, %v8076
    %v8201 = vmul.f32 %v7337, %v8077
    %v8202 = vmul.f32 %v7338, %v8078
    %v8203 = vmul.f32 %v7339, %v8075
    %v8204 = vmul.f32 %v7340, %v8076
    %v8205 = vmul.f32 %v7341, %v8077
    %v8206 = vmul.f32 %v7342, %v8078
    %v8207 = vmul.f32 %v7343, %v8075
    %v8208 = vmul.f32 %v7344, %v8076
    %v8209 = vmul.f32 %v7345, %v8077
    %v8210 = vmul.f32 %v7346, %v8078
    %v8211 = vmul.f32 %v7347, %v8075
    %v8212 = vmul.f32 %v7348, %v8076
    %v8213 = vmul.f32 %v7349, %v8077
    %v8214 = vmul.f32 %v7350, %v8078
    %v8215 = vmul.f32 %v7351, %v8075
    %v8216 = vmul.f32 %v7352, %v8076
    %v8217 = vmul.f32 %v7353, %v8077
    %v8218 = vmul.f32 %v7354, %v8078
    %v8219 = vmul.f32 %v7355, %v8075
    %v8220 = vmul.f32 %v7356, %v8076
    %v8221 = vmul.f32 %v7357, %v8077
    %v8222 = vmul.f32 %v7358, %v8078
    %v8223 = vmul.f32 %v7359, %v8075
    %v8224 = vmul.f32 %v7360, %v8076
    %v8225 = vmul.f32 %v7361, %v8077
    %v8226 = vmul.f32 %v7362, %v8078
    %v8227 = vmul.f32 %v7363, %v8075
    %v8228 = vmul.f32 %v7364, %v8076
    %v8229 = vmul.f32 %v7365, %v8077
    %v8230 = vmul.f32 %v7366, %v8078
    %v8231 = vmul.f32 %v7367, %v8075
    %v8232 = vmul.f32 %v7368, %v8076
    %v8233 = vmul.f32 %v7369, %v8077
    %v8234 = vmul.f32 %v7370, %v8078
    %v8235 = vmul.f32 %v7371, %v8075
    %v8236 = vmul.f32 %v7372, %v8076
    %v8237 = vmul.f32 %v7373, %v8077
    %v8238 = vmul.f32 %v7374, %v8078
    %v8239 = vmul.f32 %v7375, %v8075
    %v8240 = vmul.f32 %v7376, %v8076
    %v8241 = vmul.f32 %v7377, %v8077
    %v8242 = vmul.f32 %v7378, %v8078
    %v8243 = vmul.f32 %v7379, %v8075
    %v8244 = vmul.f32 %v7380, %v8076
    %v8245 = vmul.f32 %v7381, %v8077
    %v8246 = vmul.f32 %v7382, %v8078
    %v8247 = vmul.f32 %v7383, %v8075
    %v8248 = vmul.f32 %v7384, %v8076
    %v8249 = vmul.f32 %v7385, %v8077
    %v8250 = vmul.f32 %v7386, %v8078
    %v8251 = vmul.f32 %v7387, %v8075
    %v8252 = vmul.f32 %v7388, %v8076
    %v8253 = vmul.f32 %v7389, %v8077
    %v8254 = vmul.f32 %v7390, %v8078
    %v8255 = vmul.f32 %v7391, %v8075
    %v8256 = vmul.f32 %v7392, %v8076
    %v8257 = vmul.f32 %v7393, %v8077
    %v8258 = vmul.f32 %v7394, %v8078
    %v8259 = vmul.f32 %v7395, %v8075
    %v8260 = vmul.f32 %v7396, %v8076
    %v8261 = vmul.f32 %v7397, %v8077
    %v8262 = vmul.f32 %v7398, %v8078
    %v8263 = vmul.f32 %v7399, %v8075
    %v8264 = vmul.f32 %v7400, %v8076
    %v8265 = vmul.f32 %v7401, %v8077
    %v8266 = vmul.f32 %v7402, %v8078
    %v8267 = vmul.f32 %v7403, %v8075
    %v8268 = vmul.f32 %v7404, %v8076
    %v8269 = vmul.f32 %v7405, %v8077
    %v8270 = vmul.f32 %v7406, %v8078
    %v8271 = vmul.f32 %v7407, %v8075
    %v8272 = vmul.f32 %v7408, %v8076
    %v8273 = vmul.f32 %v7409, %v8077
    %v8274 = vmul.f32 %v7410, %v8078
    %v8275 = vmul.f32 %v7411, %v8075
    %v8276 = vmul.f32 %v7412, %v8076
    %v8277 = vmul.f32 %v7413, %v8077
    %v8278 = vmul.f32 %v7414, %v8078
    %v8279 = vmul.f32 %v7415, %v8075
    %v8280 = vmul.f32 %v7416, %v8076
    %v8281 = vmul.f32 %v7417, %v8077
    %v8282 = vmul.f32 %v7418, %v8078
    %v8283 = vmul.f32 %v7419, %v8075
    %v8284 = vmul.f32 %v7420, %v8076
    %v8285 = vmul.f32 %v7421, %v8077
    %v8286 = vmul.f32 %v7422, %v8078
    %v8287 = vmul.f32 %v7423, %v8075
    %v8288 = vmul.f32 %v7424, %v8076
    %v8289 = vmul.f32 %v7425, %v8077
    %v8290 = vmul.f32 %v7426, %v8078
    %v8291 = vmul.f32 %v7427, %v8075
    %v8292 = vmul.f32 %v7428, %v8076
    %v8293 = vmul.f32 %v7429, %v8077
    %v8294 = vmul.f32 %v7430, %v8078
    %v8295 = vmul.f32 %v7431, %v8075
    %v8296 = vmul.f32 %v7432, %v8076
    %v8297 = vmul.f32 %v7433, %v8077
    %v8298 = vmul.f32 %v7434, %v8078
    %v8299 = vmul.f32 %v7435, %v8075
    %v8300 = vmul.f32 %v7436, %v8076
    %v8301 = vmul.f32 %v7437, %v8077
    %v8302 = vmul.f32 %v7438, %v8078
    %v8303 = vmul.f32 %v7439, %v8075
    %v8304 = vmul.f32 %v7440, %v8076
    %v8305 = vmul.f32 %v7441, %v8077
    %v8306 = vmul.f32 %v7442, %v8078
    %v8307 = vmul.f32 %v7443, %v8075
    %v8308 = vmul.f32 %v7444, %v8076
    %v8309 = vmul.f32 %v7445, %v8077
    %v8310 = vmul.f32 %v7446, %v8078
    %v8311 = vmul.f32 %v7447, %v8075
    %v8312 = vmul.f32 %v7448, %v8076
    %v8313 = vmul.f32 %v7449, %v8077
    %v8314 = vmul.f32 %v7450, %v8078
    %v8315 = vmul.f32 %v7451, %v8075
    %v8316 = vmul.f32 %v7452, %v8076
    %v8317 = vmul.f32 %v7453, %v8077
    %v8318 = vmul.f32 %v7454, %v8078
    %v8319 = vmul.f32 %v7455, %v8075
    %v8320 = vmul.f32 %v7456, %v8076
    %v8321 = vmul.f32 %v7457, %v8077
    %v8322 = vmul.f32 %v7458, %v8078
    %v8323 = vmul.f32 %v7459, %v8075
    %v8324 = vmul.f32 %v7460, %v8076
    %v8325 = vmul.f32 %v7461, %v8077
    %v8326 = vmul.f32 %v7462, %v8078
    %v8327 = vmul.f32 %v7463, %v8075
    %v8328 = vmul.f32 %v7464, %v8076
    %v8329 = vmul.f32 %v7465, %v8077
    %v8330 = vmul.f32 %v7466, %v8078
    %v8331 = vmul.f32 %v7467, %v8075
    %v8332 = vmul.f32 %v7468, %v8076
    %v8333 = vmul.f32 %v7469, %v8077
    %v8334 = vmul.f32 %v7470, %v8078
    %v8336 = vlaneseq
    %v8337 = vshrl.u32 %v8336, 7
    %v8338 = vsub.s32 0, %v8337
    %v8339 = vrot.slane %v6869, %v8338
    %v8340 = vlaneseq
    %v8341 = vshrl.u32 %v8340, 7
    %v8342 = vsub.s32 1, %v8341
    %v8343 = vrot.slane %v6869, %v8342
    %v8344 = vlaneseq
    %v8345 = vshrl.u32 %v8344, 7
    %v8346 = vsub.s32 2, %v8345
    %v8347 = vrot.slane %v6869, %v8346
    %v8348 = vlaneseq
    %v8349 = vshrl.u32 %v8348, 7
    %v8350 = vsub.s32 3, %v8349
    %v8351 = vrot.slane %v6869, %v8350
    %v8356 = vmul.f32 %v8079, %v8339
    %v8357 = vmul.f32 %v8080, %v8343
    %v8358 = vmul.f32 %v8081, %v8347
    %v8359 = vmul.f32 %v8082, %v8351
    %v8360 = vmul.f32 %v8083, %v8339
    %v8361 = vmul.f32 %v8084, %v8343
    %v8362 = vmul.f32 %v8085, %v8347
    %v8363 = vmul.f32 %v8086, %v8351
    %v8364 = vmul.f32 %v8087, %v8339
    %v8365 = vmul.f32 %v8088, %v8343
    %v8366 = vmul.f32 %v8089, %v8347
    %v8367 = vmul.f32 %v8090, %v8351
    %v8368 = vmul.f32 %v8091, %v8339
    %v8369 = vmul.f32 %v8092, %v8343
    %v8370 = vmul.f32 %v8093, %v8347
    %v8371 = vmul.f32 %v8094, %v8351
    %v8372 = vmul.f32 %v8095, %v8339
    %v8373 = vmul.f32 %v8096, %v8343
    %v8374 = vmul.f32 %v8097, %v8347
    %v8375 = vmul.f32 %v8098, %v8351
    %v8376 = vmul.f32 %v8099, %v8339
    %v8377 = vmul.f32 %v8100, %v8343
    %v8378 = vmul.f32 %v8101, %v8347
    %v8379 = vmul.f32 %v8102, %v8351
    %v8380 = vmul.f32 %v8103, %v8339
    %v8381 = vmul.f32 %v8104, %v8343
    %v8382 = vmul.f32 %v8105, %v8347
    %v8383 = vmul.f32 %v8106, %v8351
    %v8384 = vmul.f32 %v8107, %v8339
    %v8385 = vmul.f32 %v8108, %v8343
    %v8386 = vmul.f32 %v8109, %v8347
    %v8387 = vmul.f32 %v8110, %v8351
    %v8388 = vmul.f32 %v8111, %v8339
    %v8389 = vmul.f32 %v8112, %v8343
    %v8390 = vmul.f32 %v8113, %v8347
    %v8391 = vmul.f32 %v8114, %v8351
    %v8392 = vmul.f32 %v8115, %v8339
    %v8393 = vmul.f32 %v8116, %v8343
    %v8394 = vmul.f32 %v8117, %v8347
    %v8395 = vmul.f32 %v8118, %v8351
    %v8396 = vmul.f32 %v8119, %v8339
    %v8397 = vmul.f32 %v8120, %v8343
    %v8398 = vmul.f32 %v8121, %v8347
    %v8399 = vmul.f32 %v8122, %v8351
    %v8400 = vmul.f32 %v8123, %v8339
    %v8401 = vmul.f32 %v8124, %v8343
    %v8402 = vmul.f32 %v8125, %v8347
    %v8403 = vmul.f32 %v8126, %v8351
    %v8404 = vmul.f32 %v8127, %v8339
    %v8405 = vmul.f32 %v8128, %v8343
    %v8406 = vmul.f32 %v8129, %v8347
    %v8407 = vmul.f32 %v8130, %v8351
    %v8408 = vmul.f32 %v8131, %v8339
    %v8409 = vmul.f32 %v8132, %v8343
    %v8410 = vmul.f32 %v8133, %v8347
    %v8411 = vmul.f32 %v8134, %v8351
    %v8412 = vmul.f32 %v8135, %v8339
    %v8413 = vmul.f32 %v8136, %v8343
    %v8414 = vmul.f32 %v8137, %v8347
    %v8415 = vmul.f32 %v8138, %v8351
    %v8416 = vmul.f32 %v8139, %v8339
    %v8417 = vmul.f32 %v8140, %v8343
    %v8418 = vmul.f32 %v8141, %v8347
    %v8419 = vmul.f32 %v8142, %v8351
    %v8420 = vmul.f32 %v8143, %v8339
    %v8421 = vmul.f32 %v8144, %v8343
    %v8422 = vmul.f32 %v8145, %v8347
    %v8423 = vmul.f32 %v8146, %v8351
    %v8424 = vmul.f32 %v8147, %v8339
    %v8425 = vmul.f32 %v8148, %v8343
    %v8426 = vmul.f32 %v8149, %v8347
    %v8427 = vmul.f32 %v8150, %v8351
    %v8428 = vmul.f32 %v8151, %v8339
    %v8429 = vmul.f32 %v8152, %v8343
    %v8430 = vmul.f32 %v8153, %v8347
    %v8431 = vmul.f32 %v8154, %v8351
    %v8432 = vmul.f32 %v8155, %v8339
    %v8433 = vmul.f32 %v8156, %v8343
    %v8434 = vmul.f32 %v8157, %v8347
    %v8435 = vmul.f32 %v8158, %v8351
    %v8436 = vmul.f32 %v8159, %v8339
    %v8437 = vmul.f32 %v8160, %v8343
    %v8438 = vmul.f32 %v8161, %v8347
    %v8439 = vmul.f32 %v8162, %v8351
    %v8440 = vmul.f32 %v8163, %v8339
    %v8441 = vmul.f32 %v8164, %v8343
    %v8442 = vmul.f32 %v8165, %v8347
    %v8443 = vmul.f32 %v8166, %v8351
    %v8444 = vmul.f32 %v8167, %v8339
    %v8445 = vmul.f32 %v8168, %v8343
    %v8446 = vmul.f32 %v8169, %v8347
    %v8447 = vmul.f32 %v8170, %v8351
    %v8448 = vmul.f32 %v8171, %v8339
    %v8449 = vmul.f32 %v8172, %v8343
    %v8450 = vmul.f32 %v8173, %v8347
    %v8451 = vmul.f32 %v8174, %v8351
    %v8452 = vmul.f32 %v8175, %v8339
    %v8453 = vmul.f32 %v8176, %v8343
    %v8454 = vmul.f32 %v8177, %v8347
    %v8455 = vmul.f32 %v8178, %v8351
    %v8456 = vmul.f32 %v8179, %v8339
    %v8457 = vmul.f32 %v8180, %v8343
    %v8458 = vmul.f32 %v8181, %v8347
    %v8459 = vmul.f32 %v8182, %v8351
    %v8460 = vmul.f32 %v8183, %v8339
    %v8461 = vmul.f32 %v8184, %v8343
    %v8462 = vmul.f32 %v8185, %v8347
    %v8463 = vmul.f32 %v8186, %v8351
    %v8464 = vmul.f32 %v8187, %v8339
    %v8465 = vmul.f32 %v8188, %v8343
    %v8466 = vmul.f32 %v8189, %v8347
    %v8467 = vmul.f32 %v8190, %v8351
    %v8468 = vmul.f32 %v8191, %v8339
    %v8469 = vmul.f32 %v8192, %v8343
    %v8470 = vmul.f32 %v8193, %v8347
    %v8471 = vmul.f32 %v8194, %v8351
    %v8472 = vmul.f32 %v8195, %v8339
    %v8473 = vmul.f32 %v8196, %v8343
    %v8474 = vmul.f32 %v8197, %v8347
    %v8475 = vmul.f32 %v8198, %v8351
    %v8476 = vmul.f32 %v8199, %v8339
    %v8477 = vmul.f32 %v8200, %v8343
    %v8478 = vmul.f32 %v8201, %v8347
    %v8479 = vmul.f32 %v8202, %v8351
    %v8480 = vmul.f32 %v8203, %v8339
    %v8481 = vmul.f32 %v8204, %v8343
    %v8482 = vmul.f32 %v8205, %v8347
    %v8483 = vmul.f32 %v8206, %v8351
    %v8484 = vmul.f32 %v8207, %v8339
    %v8485 = vmul.f32 %v8208, %v8343
    %v8486 = vmul.f32 %v8209, %v8347
    %v8487 = vmul.f32 %v8210, %v8351
    %v8488 = vmul.f32 %v8211, %v8339
    %v8489 = vmul.f32 %v8212, %v8343
    %v8490 = vmul.f32 %v8213, %v8347
    %v8491 = vmul.f32 %v8214, %v8351
    %v8492 = vmul.f32 %v8215, %v8339
    %v8493 = vmul.f32 %v8216, %v8343
    %v8494 = vmul.f32 %v8217, %v8347
    %v8495 = vmul.f32 %v8218, %v8351
    %v8496 = vmul.f32 %v8219, %v8339
    %v8497 = vmul.f32 %v8220, %v8343
    %v8498 = vmul.f32 %v8221, %v8347
    %v8499 = vmul.f32 %v8222, %v8351
    %v8500 = vmul.f32 %v8223, %v8339
    %v8501 = vmul.f32 %v8224, %v8343
    %v8502 = vmul.f32 %v8225, %v8347
    %v8503 = vmul.f32 %v8226, %v8351
    %v8504 = vmul.f32 %v8227, %v8339
    %v8505 = vmul.f32 %v8228, %v8343
    %v8506 = vmul.f32 %v8229, %v8347
    %v8507 = vmul.f32 %v8230, %v8351
    %v8508 = vmul.f32 %v8231, %v8339
    %v8509 = vmul.f32 %v8232, %v8343
    %v8510 = vmul.f32 %v8233, %v8347
    %v8511 = vmul.f32 %v8234, %v8351
    %v8512 = vmul.f32 %v8235, %v8339
    %v8513 = vmul.f32 %v8236, %v8343
    %v8514 = vmul.f32 %v8237, %v8347
    %v8515 = vmul.f32 %v8238, %v8351
    %v8516 = vmul.f32 %v8239, %v8339
    %v8517 = vmul.f32 %v8240, %v8343
    %v8518 = vmul.f32 %v8241, %v8347
    %v8519 = vmul.f32 %v8242, %v8351
    %v8520 = vmul.f32 %v8243, %v8339
    %v8521 = vmul.f32 %v8244, %v8343
    %v8522 = vmul.f32 %v8245, %v8347
    %v8523 = vmul.f32 %v8246, %v8351
    %v8524 = vmul.f32 %v8247, %v8339
    %v8525 = vmul.f32 %v8248, %v8343
    %v8526 = vmul.f32 %v8249, %v8347
    %v8527 = vmul.f32 %v8250, %v8351
    %v8528 = vmul.f32 %v8251, %v8339
    %v8529 = vmul.f32 %v8252, %v8343
    %v8530 = vmul.f32 %v8253, %v8347
    %v8531 = vmul.f32 %v8254, %v8351
    %v8532 = vmul.f32 %v8255, %v8339
    %v8533 = vmul.f32 %v8256, %v8343
    %v8534 = vmul.f32 %v8257, %v8347
    %v8535 = vmul.f32 %v8258, %v8351
    %v8536 = vmul.f32 %v8259, %v8339
    %v8537 = vmul.f32 %v8260, %v8343
    %v8538 = vmul.f32 %v8261, %v8347
    %v8539 = vmul.f32 %v8262, %v8351
    %v8540 = vmul.f32 %v8263, %v8339
    %v8541 = vmul.f32 %v8264, %v8343
    %v8542 = vmul.f32 %v8265, %v8347
    %v8543 = vmul.f32 %v8266, %v8351
    %v8544 = vmul.f32 %v8267, %v8339
    %v8545 = vmul.f32 %v8268, %v8343
    %v8546 = vmul.f32 %v8269, %v8347
    %v8547 = vmul.f32 %v8270, %v8351
    %v8548 = vmul.f32 %v8271, %v8339
    %v8549 = vmul.f32 %v8272, %v8343
    %v8550 = vmul.f32 %v8273, %v8347
    %v8551 = vmul.f32 %v8274, %v8351
    %v8552 = vmul.f32 %v8275, %v8339
    %v8553 = vmul.f32 %v8276, %v8343
    %v8554 = vmul.f32 %v8277, %v8347
    %v8555 = vmul.f32 %v8278, %v8351
    %v8556 = vmul.f32 %v8279, %v8339
    %v8557 = vmul.f32 %v8280, %v8343
    %v8558 = vmul.f32 %v8281, %v8347
    %v8559 = vmul.f32 %v8282, %v8351
    %v8560 = vmul.f32 %v8283, %v8339
    %v8561 = vmul.f32 %v8284, %v8343
    %v8562 = vmul.f32 %v8285, %v8347
    %v8563 = vmul.f32 %v8286, %v8351
    %v8564 = vmul.f32 %v8287, %v8339
    %v8565 = vmul.f32 %v8288, %v8343
    %v8566 = vmul.f32 %v8289, %v8347
    %v8567 = vmul.f32 %v8290, %v8351
    %v8568 = vmul.f32 %v8291, %v8339
    %v8569 = vmul.f32 %v8292, %v8343
    %v8570 = vmul.f32 %v8293, %v8347
    %v8571 = vmul.f32 %v8294, %v8351
    %v8572 = vmul.f32 %v8295, %v8339
    %v8573 = vmul.f32 %v8296, %v8343
    %v8574 = vmul.f32 %v8297, %v8347
    %v8575 = vmul.f32 %v8298, %v8351
    %v8576 = vmul.f32 %v8299, %v8339
    %v8577 = vmul.f32 %v8300, %v8343
    %v8578 = vmul.f32 %v8301, %v8347
    %v8579 = vmul.f32 %v8302, %v8351
    %v8580 = vmul.f32 %v8303, %v8339
    %v8581 = vmul.f32 %v8304, %v8343
    %v8582 = vmul.f32 %v8305, %v8347
    %v8583 = vmul.f32 %v8306, %v8351
    %v8584 = vmul.f32 %v8307, %v8339
    %v8585 = vmul.f32 %v8308, %v8343
    %v8586 = vmul.f32 %v8309, %v8347
    %v8587 = vmul.f32 %v8310, %v8351
    %v8588 = vmul.f32 %v8311, %v8339
    %v8589 = vmul.f32 %v8312, %v8343
    %v8590 = vmul.f32 %v8313, %v8347
    %v8591 = vmul.f32 %v8314, %v8351
    %v8592 = vmul.f32 %v8315, %v8339
    %v8593 = vmul.f32 %v8316, %v8343
    %v8594 = vmul.f32 %v8317, %v8347
    %v8595 = vmul.f32 %v8318, %v8351
    %v8596 = vmul.f32 %v8319, %v8339
    %v8597 = vmul.f32 %v8320, %v8343
    %v8598 = vmul.f32 %v8321, %v8347
    %v8599 = vmul.f32 %v8322, %v8351
    %v8600 = vmul.f32 %v8323, %v8339
    %v8601 = vmul.f32 %v8324, %v8343
    %v8602 = vmul.f32 %v8325, %v8347
    %v8603 = vmul.f32 %v8326, %v8351
    %v8604 = vmul.f32 %v8327, %v8339
    %v8605 = vmul.f32 %v8328, %v8343
    %v8606 = vmul.f32 %v8329, %v8347
    %v8607 = vmul.f32 %v8330, %v8351
    %v8608 = vmul.f32 %v8331, %v8339
    %v8609 = vmul.f32 %v8332, %v8343
    %v8610 = vmul.f32 %v8333, %v8347
    %v8611 = vmul.f32 %v8334, %v8351
    %v8613 = vlaneseq
    %v8614 = vshrl.u32 %v8613, 7
    %v8615 = vsub.s32 0, %v8614
    %v8616 = vrot.slane %v6870, %v8615
    %v8617 = vlaneseq
    %v8618 = vshrl.u32 %v8617, 7
    %v8619 = vsub.s32 1, %v8618
    %v8620 = vrot.slane %v6870, %v8619
    %v8621 = vlaneseq
    %v8622 = vshrl.u32 %v8621, 7
    %v8623 = vsub.s32 2, %v8622
    %v8624 = vrot.slane %v6870, %v8623
    %v8625 = vlaneseq
    %v8626 = vshrl.u32 %v8625, 7
    %v8627 = vsub.s32 3, %v8626
    %v8628 = vrot.slane %v6870, %v8627
    %v8633 = vadd.f32 %v8356, %v8616
    %v8634 = vadd.f32 %v8357, %v8620
    %v8635 = vadd.f32 %v8358, %v8624
    %v8636 = vadd.f32 %v8359, %v8628
    %v8637 = vadd.f32 %v8360, %v8616
    %v8638 = vadd.f32 %v8361, %v8620
    %v8639 = vadd.f32 %v8362, %v8624
    %v8640 = vadd.f32 %v8363, %v8628
    %v8641 = vadd.f32 %v8364, %v8616
    %v8642 = vadd.f32 %v8365, %v8620
    %v8643 = vadd.f32 %v8366, %v8624
    %v8644 = vadd.f32 %v8367, %v8628
    %v8645 = vadd.f32 %v8368, %v8616
    %v8646 = vadd.f32 %v8369, %v8620
    %v8647 = vadd.f32 %v8370, %v8624
    %v8648 = vadd.f32 %v8371, %v8628
    %v8649 = vadd.f32 %v8372, %v8616
    %v8650 = vadd.f32 %v8373, %v8620
    %v8651 = vadd.f32 %v8374, %v8624
    %v8652 = vadd.f32 %v8375, %v8628
    %v8653 = vadd.f32 %v8376, %v8616
    %v8654 = vadd.f32 %v8377, %v8620
    %v8655 = vadd.f32 %v8378, %v8624
    %v8656 = vadd.f32 %v8379, %v8628
    %v8657 = vadd.f32 %v8380, %v8616
    %v8658 = vadd.f32 %v8381, %v8620
    %v8659 = vadd.f32 %v8382, %v8624
    %v8660 = vadd.f32 %v8383, %v8628
    %v8661 = vadd.f32 %v8384, %v8616
    %v8662 = vadd.f32 %v8385, %v8620
    %v8663 = vadd.f32 %v8386, %v8624
    %v8664 = vadd.f32 %v8387, %v8628
    %v8665 = vadd.f32 %v8388, %v8616
    %v8666 = vadd.f32 %v8389, %v8620
    %v8667 = vadd.f32 %v8390, %v8624
    %v8668 = vadd.f32 %v8391, %v8628
    %v8669 = vadd.f32 %v8392, %v8616
    %v8670 = vadd.f32 %v8393, %v8620
    %v8671 = vadd.f32 %v8394, %v8624
    %v8672 = vadd.f32 %v8395, %v8628
    %v8673 = vadd.f32 %v8396, %v8616
    %v8674 = vadd.f32 %v8397, %v8620
    %v8675 = vadd.f32 %v8398, %v8624
    %v8676 = vadd.f32 %v8399, %v8628
    %v8677 = vadd.f32 %v8400, %v8616
    %v8678 = vadd.f32 %v8401, %v8620
    %v8679 = vadd.f32 %v8402, %v8624
    %v8680 = vadd.f32 %v8403, %v8628
    %v8681 = vadd.f32 %v8404, %v8616
    %v8682 = vadd.f32 %v8405, %v8620
    %v8683 = vadd.f32 %v8406, %v8624
    %v8684 = vadd.f32 %v8407, %v8628
    %v8685 = vadd.f32 %v8408, %v8616
    %v8686 = vadd.f32 %v8409, %v8620
    %v8687 = vadd.f32 %v8410, %v8624
    %v8688 = vadd.f32 %v8411, %v8628
    %v8689 = vadd.f32 %v8412, %v8616
    %v8690 = vadd.f32 %v8413, %v8620
    %v8691 = vadd.f32 %v8414, %v8624
    %v8692 = vadd.f32 %v8415, %v8628
    %v8693 = vadd.f32 %v8416, %v8616
    %v8694 = vadd.f32 %v8417, %v8620
    %v8695 = vadd.f32 %v8418, %v8624
    %v8696 = vadd.f32 %v8419, %v8628
    %v8697 = vadd.f32 %v8420, %v8616
    %v8698 = vadd.f32 %v8421, %v8620
    %v8699 = vadd.f32 %v8422, %v8624
    %v8700 = vadd.f32 %v8423, %v8628
    %v8701 = vadd.f32 %v8424, %v8616
    %v8702 = vadd.f32 %v8425, %v8620
    %v8703 = vadd.f32 %v8426, %v8624
    %v8704 = vadd.f32 %v8427, %v8628
    %v8705 = vadd.f32 %v8428, %v8616
    %v8706 = vadd.f32 %v8429, %v8620
    %v8707 = vadd.f32 %v8430, %v8624
    %v8708 = vadd.f32 %v8431, %v8628
    %v8709 = vadd.f32 %v8432, %v8616
    %v8710 = vadd.f32 %v8433, %v8620
    %v8711 = vadd.f32 %v8434, %v8624
    %v8712 = vadd.f32 %v8435, %v8628
    %v8713 = vadd.f32 %v8436, %v8616
    %v8714 = vadd.f32 %v8437, %v8620
    %v8715 = vadd.f32 %v8438, %v8624
    %v8716 = vadd.f32 %v8439, %v8628
    %v8717 = vadd.f32 %v8440, %v8616
    %v8718 = vadd.f32 %v8441, %v8620
    %v8719 = vadd.f32 %v8442, %v8624
    %v8720 = vadd.f32 %v8443, %v8628
    %v8721 = vadd.f32 %v8444, %v8616
    %v8722 = vadd.f32 %v8445, %v8620
    %v8723 = vadd.f32 %v8446, %v8624
    %v8724 = vadd.f32 %v8447, %v8628
    %v8725 = vadd.f32 %v8448, %v8616
    %v8726 = vadd.f32 %v8449, %v8620
    %v8727 = vadd.f32 %v8450, %v8624
    %v8728 = vadd.f32 %v8451, %v8628
    %v8729 = vadd.f32 %v8452, %v8616
    %v8730 = vadd.f32 %v8453, %v8620
    %v8731 = vadd.f32 %v8454, %v8624
    %v8732 = vadd.f32 %v8455, %v8628
    %v8733 = vadd.f32 %v8456, %v8616
    %v8734 = vadd.f32 %v8457, %v8620
    %v8735 = vadd.f32 %v8458, %v8624
    %v8736 = vadd.f32 %v8459, %v8628
    %v8737 = vadd.f32 %v8460, %v8616
    %v8738 = vadd.f32 %v8461, %v8620
    %v8739 = vadd.f32 %v8462, %v8624
    %v8740 = vadd.f32 %v8463, %v8628
    %v8741 = vadd.f32 %v8464, %v8616
    %v8742 = vadd.f32 %v8465, %v8620
    %v8743 = vadd.f32 %v8466, %v8624
    %v8744 = vadd.f32 %v8467, %v8628
    %v8745 = vadd.f32 %v8468, %v8616
    %v8746 = vadd.f32 %v8469, %v8620
    %v8747 = vadd.f32 %v8470, %v8624
    %v8748 = vadd.f32 %v8471, %v8628
    %v8749 = vadd.f32 %v8472, %v8616
    %v8750 = vadd.f32 %v8473, %v8620
    %v8751 = vadd.f32 %v8474, %v8624
    %v8752 = vadd.f32 %v8475, %v8628
    %v8753 = vadd.f32 %v8476, %v8616
    %v8754 = vadd.f32 %v8477, %v8620
    %v8755 = vadd.f32 %v8478, %v8624
    %v8756 = vadd.f32 %v8479, %v8628
    %v8757 = vadd.f32 %v8480, %v8616
    %v8758 = vadd.f32 %v8481, %v8620
    %v8759 = vadd.f32 %v8482, %v8624
    %v8760 = vadd.f32 %v8483, %v8628
    %v8761 = vadd.f32 %v8484, %v8616
    %v8762 = vadd.f32 %v8485, %v8620
    %v8763 = vadd.f32 %v8486, %v8624
    %v8764 = vadd.f32 %v8487, %v8628
    %v8765 = vadd.f32 %v8488, %v8616
    %v8766 = vadd.f32 %v8489, %v8620
    %v8767 = vadd.f32 %v8490, %v8624
    %v8768 = vadd.f32 %v8491, %v8628
    %v8769 = vadd.f32 %v8492, %v8616
    %v8770 = vadd.f32 %v8493, %v8620
    %v8771 = vadd.f32 %v8494, %v8624
    %v8772 = vadd.f32 %v8495, %v8628
    %v8773 = vadd.f32 %v8496, %v8616
    %v8774 = vadd.f32 %v8497, %v8620
    %v8775 = vadd.f32 %v8498, %v8624
    %v8776 = vadd.f32 %v8499, %v8628
    %v8777 = vadd.f32 %v8500, %v8616
    %v8778 = vadd.f32 %v8501, %v8620
    %v8779 = vadd.f32 %v8502, %v8624
    %v8780 = vadd.f32 %v8503, %v8628
    %v8781 = vadd.f32 %v8504, %v8616
    %v8782 = vadd.f32 %v8505, %v8620
    %v8783 = vadd.f32 %v8506, %v8624
    %v8784 = vadd.f32 %v8507, %v8628
    %v8785 = vadd.f32 %v8508, %v8616
    %v8786 = vadd.f32 %v8509, %v8620
    %v8787 = vadd.f32 %v8510, %v8624
    %v8788 = vadd.f32 %v8511, %v8628
    %v8789 = vadd.f32 %v8512, %v8616
    %v8790 = vadd.f32 %v8513, %v8620
    %v8791 = vadd.f32 %v8514, %v8624
    %v8792 = vadd.f32 %v8515, %v8628
    %v8793 = vadd.f32 %v8516, %v8616
    %v8794 = vadd.f32 %v8517, %v8620
    %v8795 = vadd.f32 %v8518, %v8624
    %v8796 = vadd.f32 %v8519, %v8628
    %v8797 = vadd.f32 %v8520, %v8616
    %v8798 = vadd.f32 %v8521, %v8620
    %v8799 = vadd.f32 %v8522, %v8624
    %v8800 = vadd.f32 %v8523, %v8628
    %v8801 = vadd.f32 %v8524, %v8616
    %v8802 = vadd.f32 %v8525, %v8620
    %v8803 = vadd.f32 %v8526, %v8624
    %v8804 = vadd.f32 %v8527, %v8628
    %v8805 = vadd.f32 %v8528, %v8616
    %v8806 = vadd.f32 %v8529, %v8620
    %v8807 = vadd.f32 %v8530, %v8624
    %v8808 = vadd.f32 %v8531, %v8628
    %v8809 = vadd.f32 %v8532, %v8616
    %v8810 = vadd.f32 %v8533, %v8620
    %v8811 = vadd.f32 %v8534, %v8624
    %v8812 = vadd.f32 %v8535, %v8628
    %v8813 = vadd.f32 %v8536, %v8616
    %v8814 = vadd.f32 %v8537, %v8620
    %v8815 = vadd.f32 %v8538, %v8624
    %v8816 = vadd.f32 %v8539, %v8628
    %v8817 = vadd.f32 %v8540, %v8616
    %v8818 = vadd.f32 %v8541, %v8620
    %v8819 = vadd.f32 %v8542, %v8624
    %v8820 = vadd.f32 %v8543, %v8628
    %v8821 = vadd.f32 %v8544, %v8616
    %v8822 = vadd.f32 %v8545, %v8620
    %v8823 = vadd.f32 %v8546, %v8624
    %v8824 = vadd.f32 %v8547, %v8628
    %v8825 = vadd.f32 %v8548, %v8616
    %v8826 = vadd.f32 %v8549, %v8620
    %v8827 = vadd.f32 %v8550, %v8624
    %v8828 = vadd.f32 %v8551, %v8628
    %v8829 = vadd.f32 %v8552, %v8616
    %v8830 = vadd.f32 %v8553, %v8620
    %v8831 = vadd.f32 %v8554, %v8624
    %v8832 = vadd.f32 %v8555, %v8628
    %v8833 = vadd.f32 %v8556, %v8616
    %v8834 = vadd.f32 %v8557, %v8620
    %v8835 = vadd.f32 %v8558, %v8624
    %v8836 = vadd.f32 %v8559, %v8628
    %v8837 = vadd.f32 %v8560, %v8616
    %v8838 = vadd.f32 %v8561, %v8620
    %v8839 = vadd.f32 %v8562, %v8624
    %v8840 = vadd.f32 %v8563, %v8628
    %v8841 = vadd.f32 %v8564, %v8616
    %v8842 = vadd.f32 %v8565, %v8620
    %v8843 = vadd.f32 %v8566, %v8624
    %v8844 = vadd.f32 %v8567, %v8628
    %v8845 = vadd.f32 %v8568, %v8616
    %v8846 = vadd.f32 %v8569, %v8620
    %v8847 = vadd.f32 %v8570, %v8624
    %v8848 = vadd.f32 %v8571, %v8628
    %v8849 = vadd.f32 %v8572, %v8616
    %v8850 = vadd.f32 %v8573, %v8620
    %v8851 = vadd.f32 %v8574, %v8624
    %v8852 = vadd.f32 %v8575, %v8628
    %v8853 = vadd.f32 %v8576, %v8616
    %v8854 = vadd.f32 %v8577, %v8620
    %v8855 = vadd.f32 %v8578, %v8624
    %v8856 = vadd.f32 %v8579, %v8628
    %v8857 = vadd.f32 %v8580, %v8616
    %v8858 = vadd.f32 %v8581, %v8620
    %v8859 = vadd.f32 %v8582, %v8624
    %v8860 = vadd.f32 %v8583, %v8628
    %v8861 = vadd.f32 %v8584, %v8616
    %v8862 = vadd.f32 %v8585, %v8620
    %v8863 = vadd.f32 %v8586, %v8624
    %v8864 = vadd.f32 %v8587, %v8628
    %v8865 = vadd.f32 %v8588, %v8616
    %v8866 = vadd.f32 %v8589, %v8620
    %v8867 = vadd.f32 %v8590, %v8624
    %v8868 = vadd.f32 %v8591, %v8628
    %v8869 = vadd.f32 %v8592, %v8616
    %v8870 = vadd.f32 %v8593, %v8620
    %v8871 = vadd.f32 %v8594, %v8624
    %v8872 = vadd.f32 %v8595, %v8628
    %v8873 = vadd.f32 %v8596, %v8616
    %v8874 = vadd.f32 %v8597, %v8620
    %v8875 = vadd.f32 %v8598, %v8624
    %v8876 = vadd.f32 %v8599, %v8628
    %v8877 = vadd.f32 %v8600, %v8616
    %v8878 = vadd.f32 %v8601, %v8620
    %v8879 = vadd.f32 %v8602, %v8624
    %v8880 = vadd.f32 %v8603, %v8628
    %v8881 = vadd.f32 %v8604, %v8616
    %v8882 = vadd.f32 %v8605, %v8620
    %v8883 = vadd.f32 %v8606, %v8624
    %v8884 = vadd.f32 %v8607, %v8628
    %v8885 = vadd.f32 %v8608, %v8616
    %v8886 = vadd.f32 %v8609, %v8620
    %v8887 = vadd.f32 %v8610, %v8624
    %v8888 = vadd.f32 %v8611, %v8628
    %v8889 = vmax.f32 %v8633, 0.0
    %v8890 = vmax.f32 %v8634, 0.0
    %v8891 = vmax.f32 %v8635, 0.0
    %v8892 = vmax.f32 %v8636, 0.0
    %v8893 = vmax.f32 %v8637, 0.0
    %v8894 = vmax.f32 %v8638, 0.0
    %v8895 = vmax.f32 %v8639, 0.0
    %v8896 = vmax.f32 %v8640, 0.0
    %v8897 = vmax.f32 %v8641, 0.0
    %v8898 = vmax.f32 %v8642, 0.0
    %v8899 = vmax.f32 %v8643, 0.0
    %v8900 = vmax.f32 %v8644, 0.0
    %v8901 = vmax.f32 %v8645, 0.0
    %v8902 = vmax.f32 %v8646, 0.0
    %v8903 = vmax.f32 %v8647, 0.0
    %v8904 = vmax.f32 %v8648, 0.0
    %v8905 = vmax.f32 %v8649, 0.0
    %v8906 = vmax.f32 %v8650, 0.0
    %v8907 = vmax.f32 %v8651, 0.0
    %v8908 = vmax.f32 %v8652, 0.0
    %v8909 = vmax.f32 %v8653, 0.0
    %v8910 = vmax.f32 %v8654, 0.0
    %v8911 = vmax.f32 %v8655, 0.0
    %v8912 = vmax.f32 %v8656, 0.0
    %v8913 = vmax.f32 %v8657, 0.0
    %v8914 = vmax.f32 %v8658, 0.0
    %v8915 = vmax.f32 %v8659, 0.0
    %v8916 = vmax.f32 %v8660, 0.0
    %v8917 = vmax.f32 %v8661, 0.0
    %v8918 = vmax.f32 %v8662, 0.0
    %v8919 = vmax.f32 %v8663, 0.0
    %v8920 = vmax.f32 %v8664, 0.0
    %v8921 = vmax.f32 %v8665, 0.0
    %v8922 = vmax.f32 %v8666, 0.0
    %v8923 = vmax.f32 %v8667, 0.0
    %v8924 = vmax.f32 %v8668, 0.0
    %v8925 = vmax.f32 %v8669, 0.0
    %v8926 = vmax.f32 %v8670, 0.0
    %v8927 = vmax.f32 %v8671, 0.0
    %v8928 = vmax.f32 %v8672, 0.0
    %v8929 = vmax.f32 %v8673, 0.0
    %v8930 = vmax.f32 %v8674, 0.0
    %v8931 = vmax.f32 %v8675, 0.0
    %v8932 = vmax.f32 %v8676, 0.0
    %v8933 = vmax.f32 %v8677, 0.0
    %v8934 = vmax.f32 %v8678, 0.0
    %v8935 = vmax.f32 %v8679, 0.0
    %v8936 = vmax.f32 %v8680, 0.0
    %v8937 = vmax.f32 %v8681, 0.0
    %v8938 = vmax.f32 %v8682, 0.0
    %v8939 = vmax.f32 %v8683, 0.0
    %v8940 = vmax.f32 %v8684, 0.0
    %v8941 = vmax.f32 %v8685, 0.0
    %v8942 = vmax.f32 %v8686, 0.0
    %v8943 = vmax.f32 %v8687, 0.0
    %v8944 = vmax.f32 %v8688, 0.0
    %v8945 = vmax.f32 %v8689, 0.0
    %v8946 = vmax.f32 %v8690, 0.0
    %v8947 = vmax.f32 %v8691, 0.0
    %v8948 = vmax.f32 %v8692, 0.0
    %v8949 = vmax.f32 %v8693, 0.0
    %v8950 = vmax.f32 %v8694, 0.0
    %v8951 = vmax.f32 %v8695, 0.0
    %v8952 = vmax.f32 %v8696, 0.0
    %v8953 = vmax.f32 %v8697, 0.0
    %v8954 = vmax.f32 %v8698, 0.0
    %v8955 = vmax.f32 %v8699, 0.0
    %v8956 = vmax.f32 %v8700, 0.0
    %v8957 = vmax.f32 %v8701, 0.0
    %v8958 = vmax.f32 %v8702, 0.0
    %v8959 = vmax.f32 %v8703, 0.0
    %v8960 = vmax.f32 %v8704, 0.0
    %v8961 = vmax.f32 %v8705, 0.0
    %v8962 = vmax.f32 %v8706, 0.0
    %v8963 = vmax.f32 %v8707, 0.0
    %v8964 = vmax.f32 %v8708, 0.0
    %v8965 = vmax.f32 %v8709, 0.0
    %v8966 = vmax.f32 %v8710, 0.0
    %v8967 = vmax.f32 %v8711, 0.0
    %v8968 = vmax.f32 %v8712, 0.0
    %v8969 = vmax.f32 %v8713, 0.0
    %v8970 = vmax.f32 %v8714, 0.0
    %v8971 = vmax.f32 %v8715, 0.0
    %v8972 = vmax.f32 %v8716, 0.0
    %v8973 = vmax.f32 %v8717, 0.0
    %v8974 = vmax.f32 %v8718, 0.0
    %v8975 = vmax.f32 %v8719, 0.0
    %v8976 = vmax.f32 %v8720, 0.0
    %v8977 = vmax.f32 %v8721, 0.0
    %v8978 = vmax.f32 %v8722, 0.0
    %v8979 = vmax.f32 %v8723, 0.0
    %v8980 = vmax.f32 %v8724, 0.0
    %v8981 = vmax.f32 %v8725, 0.0
    %v8982 = vmax.f32 %v8726, 0.0
    %v8983 = vmax.f32 %v8727, 0.0
    %v8984 = vmax.f32 %v8728, 0.0
    %v8985 = vmax.f32 %v8729, 0.0
    %v8986 = vmax.f32 %v8730, 0.0
    %v8987 = vmax.f32 %v8731, 0.0
    %v8988 = vmax.f32 %v8732, 0.0
    %v8989 = vmax.f32 %v8733, 0.0
    %v8990 = vmax.f32 %v8734, 0.0
    %v8991 = vmax.f32 %v8735, 0.0
    %v8992 = vmax.f32 %v8736, 0.0
    %v8993 = vmax.f32 %v8737, 0.0
    %v8994 = vmax.f32 %v8738, 0.0
    %v8995 = vmax.f32 %v8739, 0.0
    %v8996 = vmax.f32 %v8740, 0.0
    %v8997 = vmax.f32 %v8741, 0.0
    %v8998 = vmax.f32 %v8742, 0.0
    %v8999 = vmax.f32 %v8743, 0.0
    %v9000 = vmax.f32 %v8744, 0.0
    %v9001 = vmax.f32 %v8745, 0.0
    %v9002 = vmax.f32 %v8746, 0.0
    %v9003 = vmax.f32 %v8747, 0.0
    %v9004 = vmax.f32 %v8748, 0.0
    %v9005 = vmax.f32 %v8749, 0.0
    %v9006 = vmax.f32 %v8750, 0.0
    %v9007 = vmax.f32 %v8751, 0.0
    %v9008 = vmax.f32 %v8752, 0.0
    %v9009 = vmax.f32 %v8753, 0.0
    %v9010 = vmax.f32 %v8754, 0.0
    %v9011 = vmax.f32 %v8755, 0.0
    %v9012 = vmax.f32 %v8756, 0.0
    %v9013 = vmax.f32 %v8757, 0.0
    %v9014 = vmax.f32 %v8758, 0.0
    %v9015 = vmax.f32 %v8759, 0.0
    %v9016 = vmax.f32 %v8760, 0.0
    %v9017 = vmax.f32 %v8761, 0.0
    %v9018 = vmax.f32 %v8762, 0.0
    %v9019 = vmax.f32 %v8763, 0.0
    %v9020 = vmax.f32 %v8764, 0.0
    %v9021 = vmax.f32 %v8765, 0.0
    %v9022 = vmax.f32 %v8766, 0.0
    %v9023 = vmax.f32 %v8767, 0.0
    %v9024 = vmax.f32 %v8768, 0.0
    %v9025 = vmax.f32 %v8769, 0.0
    %v9026 = vmax.f32 %v8770, 0.0
    %v9027 = vmax.f32 %v8771, 0.0
    %v9028 = vmax.f32 %v8772, 0.0
    %v9029 = vmax.f32 %v8773, 0.0
    %v9030 = vmax.f32 %v8774, 0.0
    %v9031 = vmax.f32 %v8775, 0.0
    %v9032 = vmax.f32 %v8776, 0.0
    %v9033 = vmax.f32 %v8777, 0.0
    %v9034 = vmax.f32 %v8778, 0.0
    %v9035 = vmax.f32 %v8779, 0.0
    %v9036 = vmax.f32 %v8780, 0.0
    %v9037 = vmax.f32 %v8781, 0.0
    %v9038 = vmax.f32 %v8782, 0.0
    %v9039 = vmax.f32 %v8783, 0.0
    %v9040 = vmax.f32 %v8784, 0.0
    %v9041 = vmax.f32 %v8785, 0.0
    %v9042 = vmax.f32 %v8786, 0.0
    %v9043 = vmax.f32 %v8787, 0.0
    %v9044 = vmax.f32 %v8788, 0.0
    %v9045 = vmax.f32 %v8789, 0.0
    %v9046 = vmax.f32 %v8790, 0.0
    %v9047 = vmax.f32 %v8791, 0.0
    %v9048 = vmax.f32 %v8792, 0.0
    %v9049 = vmax.f32 %v8793, 0.0
    %v9050 = vmax.f32 %v8794, 0.0
    %v9051 = vmax.f32 %v8795, 0.0
    %v9052 = vmax.f32 %v8796, 0.0
    %v9053 = vmax.f32 %v8797, 0.0
    %v9054 = vmax.f32 %v8798, 0.0
    %v9055 = vmax.f32 %v8799, 0.0
    %v9056 = vmax.f32 %v8800, 0.0
    %v9057 = vmax.f32 %v8801, 0.0
    %v9058 = vmax.f32 %v8802, 0.0
    %v9059 = vmax.f32 %v8803, 0.0
    %v9060 = vmax.f32 %v8804, 0.0
    %v9061 = vmax.f32 %v8805, 0.0
    %v9062 = vmax.f32 %v8806, 0.0
    %v9063 = vmax.f32 %v8807, 0.0
    %v9064 = vmax.f32 %v8808, 0.0
    %v9065 = vmax.f32 %v8809, 0.0
    %v9066 = vmax.f32 %v8810, 0.0
    %v9067 = vmax.f32 %v8811, 0.0
    %v9068 = vmax.f32 %v8812, 0.0
    %v9069 = vmax.f32 %v8813, 0.0
    %v9070 = vmax.f32 %v8814, 0.0
    %v9071 = vmax.f32 %v8815, 0.0
    %v9072 = vmax.f32 %v8816, 0.0
    %v9073 = vmax.f32 %v8817, 0.0
    %v9074 = vmax.f32 %v8818, 0.0
    %v9075 = vmax.f32 %v8819, 0.0
    %v9076 = vmax.f32 %v8820, 0.0
    %v9077 = vmax.f32 %v8821, 0.0
    %v9078 = vmax.f32 %v8822, 0.0
    %v9079 = vmax.f32 %v8823, 0.0
    %v9080 = vmax.f32 %v8824, 0.0
    %v9081 = vmax.f32 %v8825, 0.0
    %v9082 = vmax.f32 %v8826, 0.0
    %v9083 = vmax.f32 %v8827, 0.0
    %v9084 = vmax.f32 %v8828, 0.0
    %v9085 = vmax.f32 %v8829, 0.0
    %v9086 = vmax.f32 %v8830, 0.0
    %v9087 = vmax.f32 %v8831, 0.0
    %v9088 = vmax.f32 %v8832, 0.0
    %v9089 = vmax.f32 %v8833, 0.0
    %v9090 = vmax.f32 %v8834, 0.0
    %v9091 = vmax.f32 %v8835, 0.0
    %v9092 = vmax.f32 %v8836, 0.0
    %v9093 = vmax.f32 %v8837, 0.0
    %v9094 = vmax.f32 %v8838, 0.0
    %v9095 = vmax.f32 %v8839, 0.0
    %v9096 = vmax.f32 %v8840, 0.0
    %v9097 = vmax.f32 %v8841, 0.0
    %v9098 = vmax.f32 %v8842, 0.0
    %v9099 = vmax.f32 %v8843, 0.0
    %v9100 = vmax.f32 %v8844, 0.0
    %v9101 = vmax.f32 %v8845, 0.0
    %v9102 = vmax.f32 %v8846, 0.0
    %v9103 = vmax.f32 %v8847, 0.0
    %v9104 = vmax.f32 %v8848, 0.0
    %v9105 = vmax.f32 %v8849, 0.0
    %v9106 = vmax.f32 %v8850, 0.0
    %v9107 = vmax.f32 %v8851, 0.0
    %v9108 = vmax.f32 %v8852, 0.0
    %v9109 = vmax.f32 %v8853, 0.0
    %v9110 = vmax.f32 %v8854, 0.0
    %v9111 = vmax.f32 %v8855, 0.0
    %v9112 = vmax.f32 %v8856, 0.0
    %v9113 = vmax.f32 %v8857, 0.0
    %v9114 = vmax.f32 %v8858, 0.0
    %v9115 = vmax.f32 %v8859, 0.0
    %v9116 = vmax.f32 %v8860, 0.0
    %v9117 = vmax.f32 %v8861, 0.0
    %v9118 = vmax.f32 %v8862, 0.0
    %v9119 = vmax.f32 %v8863, 0.0
    %v9120 = vmax.f32 %v8864, 0.0
    %v9121 = vmax.f32 %v8865, 0.0
    %v9122 = vmax.f32 %v8866, 0.0
    %v9123 = vmax.f32 %v8867, 0.0
    %v9124 = vmax.f32 %v8868, 0.0
    %v9125 = vmax.f32 %v8869, 0.0
    %v9126 = vmax.f32 %v8870, 0.0
    %v9127 = vmax.f32 %v8871, 0.0
    %v9128 = vmax.f32 %v8872, 0.0
    %v9129 = vmax.f32 %v8873, 0.0
    %v9130 = vmax.f32 %v8874, 0.0
    %v9131 = vmax.f32 %v8875, 0.0
    %v9132 = vmax.f32 %v8876, 0.0
    %v9133 = vmax.f32 %v8877, 0.0
    %v9134 = vmax.f32 %v8878, 0.0
    %v9135 = vmax.f32 %v8879, 0.0
    %v9136 = vmax.f32 %v8880, 0.0
    %v9137 = vmax.f32 %v8881, 0.0
    %v9138 = vmax.f32 %v8882, 0.0
    %v9139 = vmax.f32 %v8883, 0.0
    %v9140 = vmax.f32 %v8884, 0.0
    %v9141 = vmax.f32 %v8885, 0.0
    %v9142 = vmax.f32 %v8886, 0.0
    %v9143 = vmax.f32 %v8887, 0.0
    %v9144 = vmax.f32 %v8888, 0.0
    %v9145 = vpack.c.bf16 %v8893, %v8889
    %v9146 = vpack.c.bf16 %v8894, %v8890
    %v9147 = vpack.c.bf16 %v8895, %v8891
    %v9148 = vpack.c.bf16 %v8896, %v8892
    %v9149 = vpack.c.bf16 %v8901, %v8897
    %v9150 = vpack.c.bf16 %v8902, %v8898
    %v9151 = vpack.c.bf16 %v8903, %v8899
    %v9152 = vpack.c.bf16 %v8904, %v8900
    %v9153 = vpack.c.bf16 %v8909, %v8905
    %v9154 = vpack.c.bf16 %v8910, %v8906
    %v9155 = vpack.c.bf16 %v8911, %v8907
    %v9156 = vpack.c.bf16 %v8912, %v8908
    %v9157 = vpack.c.bf16 %v8917, %v8913
    %v9158 = vpack.c.bf16 %v8918, %v8914
    %v9159 = vpack.c.bf16 %v8919, %v8915
    %v9160 = vpack.c.bf16 %v8920, %v8916
    %v9161 = vpack.c.bf16 %v8925, %v8921
    %v9162 = vpack.c.bf16 %v8926, %v8922
    %v9163 = vpack.c.bf16 %v8927, %v8923
    %v9164 = vpack.c.bf16 %v8928, %v8924
    %v9165 = vpack.c.bf16 %v8933, %v8929
    %v9166 = vpack.c.bf16 %v8934, %v8930
    %v9167 = vpack.c.bf16 %v8935, %v8931
    %v9168 = vpack.c.bf16 %v8936, %v8932
    %v9169 = vpack.c.bf16 %v8941, %v8937
    %v9170 = vpack.c.bf16 %v8942, %v8938
    %v9171 = vpack.c.bf16 %v8943, %v8939
    %v9172 = vpack.c.bf16 %v8944, %v8940
    %v9173 = vpack.c.bf16 %v8949, %v8945
    %v9174 = vpack.c.bf16 %v8950, %v8946
    %v9175 = vpack.c.bf16 %v8951, %v8947
    %v9176 = vpack.c.bf16 %v8952, %v8948
    %v9177 = vpack.c.bf16 %v8957, %v8953
    %v9178 = vpack.c.bf16 %v8958, %v8954
    %v9179 = vpack.c.bf16 %v8959, %v8955
    %v9180 = vpack.c.bf16 %v8960, %v8956
    %v9181 = vpack.c.bf16 %v8965, %v8961
    %v9182 = vpack.c.bf16 %v8966, %v8962
    %v9183 = vpack.c.bf16 %v8967, %v8963
    %v9184 = vpack.c.bf16 %v8968, %v8964
    %v9185 = vpack.c.bf16 %v8973, %v8969
    %v9186 = vpack.c.bf16 %v8974, %v8970
    %v9187 = vpack.c.bf16 %v8975, %v8971
    %v9188 = vpack.c.bf16 %v8976, %v8972
    %v9189 = vpack.c.bf16 %v8981, %v8977
    %v9190 = vpack.c.bf16 %v8982, %v8978
    %v9191 = vpack.c.bf16 %v8983, %v8979
    %v9192 = vpack.c.bf16 %v8984, %v8980
    %v9193 = vpack.c.bf16 %v8989, %v8985
    %v9194 = vpack.c.bf16 %v8990, %v8986
    %v9195 = vpack.c.bf16 %v8991, %v8987
    %v9196 = vpack.c.bf16 %v8992, %v8988
    %v9197 = vpack.c.bf16 %v8997, %v8993
    %v9198 = vpack.c.bf16 %v8998, %v8994
    %v9199 = vpack.c.bf16 %v8999, %v8995
    %v9200 = vpack.c.bf16 %v9000, %v8996
    %v9201 = vpack.c.bf16 %v9005, %v9001
    %v9202 = vpack.c.bf16 %v9006, %v9002
    %v9203 = vpack.c.bf16 %v9007, %v9003
    %v9204 = vpack.c.bf16 %v9008, %v9004
    %v9205 = vpack.c.bf16 %v9013, %v9009
    %v9206 = vpack.c.bf16 %v9014, %v9010
    %v9207 = vpack.c.bf16 %v9015, %v9011
    %v9208 = vpack.c.bf16 %v9016, %v9012
    %v9209 = vpack.c.bf16 %v9021, %v9017
    %v9210 = vpack.c.bf16 %v9022, %v9018
    %v9211 = vpack.c.bf16 %v9023, %v9019
    %v9212 = vpack.c.bf16 %v9024, %v9020
    %v9213 = vpack.c.bf16 %v9029, %v9025
    %v9214 = vpack.c.bf16 %v9030, %v9026
    %v9215 = vpack.c.bf16 %v9031, %v9027
    %v9216 = vpack.c.bf16 %v9032, %v9028
    %v9217 = vpack.c.bf16 %v9037, %v9033
    %v9218 = vpack.c.bf16 %v9038, %v9034
    %v9219 = vpack.c.bf16 %v9039, %v9035
    %v9220 = vpack.c.bf16 %v9040, %v9036
    %v9221 = vpack.c.bf16 %v9045, %v9041
    %v9222 = vpack.c.bf16 %v9046, %v9042
    %v9223 = vpack.c.bf16 %v9047, %v9043
    %v9224 = vpack.c.bf16 %v9048, %v9044
    %v9225 = vpack.c.bf16 %v9053, %v9049
    %v9226 = vpack.c.bf16 %v9054, %v9050
    %v9227 = vpack.c.bf16 %v9055, %v9051
    %v9228 = vpack.c.bf16 %v9056, %v9052
    %v9229 = vpack.c.bf16 %v9061, %v9057
    %v9230 = vpack.c.bf16 %v9062, %v9058
    %v9231 = vpack.c.bf16 %v9063, %v9059
    %v9232 = vpack.c.bf16 %v9064, %v9060
    %v9233 = vpack.c.bf16 %v9069, %v9065
    %v9234 = vpack.c.bf16 %v9070, %v9066
    %v9235 = vpack.c.bf16 %v9071, %v9067
    %v9236 = vpack.c.bf16 %v9072, %v9068
    %v9237 = vpack.c.bf16 %v9077, %v9073
    %v9238 = vpack.c.bf16 %v9078, %v9074
    %v9239 = vpack.c.bf16 %v9079, %v9075
    %v9240 = vpack.c.bf16 %v9080, %v9076
    %v9241 = vpack.c.bf16 %v9085, %v9081
    %v9242 = vpack.c.bf16 %v9086, %v9082
    %v9243 = vpack.c.bf16 %v9087, %v9083
    %v9244 = vpack.c.bf16 %v9088, %v9084
    %v9245 = vpack.c.bf16 %v9093, %v9089
    %v9246 = vpack.c.bf16 %v9094, %v9090
    %v9247 = vpack.c.bf16 %v9095, %v9091
    %v9248 = vpack.c.bf16 %v9096, %v9092
    %v9249 = vpack.c.bf16 %v9101, %v9097
    %v9250 = vpack.c.bf16 %v9102, %v9098
    %v9251 = vpack.c.bf16 %v9103, %v9099
    %v9252 = vpack.c.bf16 %v9104, %v9100
    %v9253 = vpack.c.bf16 %v9109, %v9105
    %v9254 = vpack.c.bf16 %v9110, %v9106
    %v9255 = vpack.c.bf16 %v9111, %v9107
    %v9256 = vpack.c.bf16 %v9112, %v9108
    %v9257 = vpack.c.bf16 %v9117, %v9113
    %v9258 = vpack.c.bf16 %v9118, %v9114
    %v9259 = vpack.c.bf16 %v9119, %v9115
    %v9260 = vpack.c.bf16 %v9120, %v9116
    %v9261 = vpack.c.bf16 %v9125, %v9121
    %v9262 = vpack.c.bf16 %v9126, %v9122
    %v9263 = vpack.c.bf16 %v9127, %v9123
    %v9264 = vpack.c.bf16 %v9128, %v9124
    %v9265 = vpack.c.bf16 %v9133, %v9129
    %v9266 = vpack.c.bf16 %v9134, %v9130
    %v9267 = vpack.c.bf16 %v9135, %v9131
    %v9268 = vpack.c.bf16 %v9136, %v9132
    %v9269 = vpack.c.bf16 %v9141, %v9137
    %v9270 = vpack.c.bf16 %v9142, %v9138
    %v9271 = vpack.c.bf16 %v9143, %v9139
    %v9272 = vpack.c.bf16 %v9144, %v9140
    %v9401 = vunpack.c.l.b16 %v9145
    %v9402 = vunpack.c.l.b16 %v9146
    %v9403 = vunpack.c.l.b16 %v9147
    %v9404 = vunpack.c.l.b16 %v9148
    %v9405 = vunpack.c.h.b16 %v9145
    %v9406 = vunpack.c.h.b16 %v9146
    %v9407 = vunpack.c.h.b16 %v9147
    %v9408 = vunpack.c.h.b16 %v9148
    %v9409 = vunpack.c.l.b16 %v9149
    %v9410 = vunpack.c.l.b16 %v9150
    %v9411 = vunpack.c.l.b16 %v9151
    %v9412 = vunpack.c.l.b16 %v9152
    %v9413 = vunpack.c.h.b16 %v9149
    %v9414 = vunpack.c.h.b16 %v9150
    %v9415 = vunpack.c.h.b16 %v9151
    %v9416 = vunpack.c.h.b16 %v9152
    %v9417 = vunpack.c.l.b16 %v9153
    %v9418 = vunpack.c.l.b16 %v9154
    %v9419 = vunpack.c.l.b16 %v9155
    %v9420 = vunpack.c.l.b16 %v9156
    %v9421 = vunpack.c.h.b16 %v9153
    %v9422 = vunpack.c.h.b16 %v9154
    %v9423 = vunpack.c.h.b16 %v9155
    %v9424 = vunpack.c.h.b16 %v9156
    %v9425 = vunpack.c.l.b16 %v9157
    %v9426 = vunpack.c.l.b16 %v9158
    %v9427 = vunpack.c.l.b16 %v9159
    %v9428 = vunpack.c.l.b16 %v9160
    %v9429 = vunpack.c.h.b16 %v9157
    %v9430 = vunpack.c.h.b16 %v9158
    %v9431 = vunpack.c.h.b16 %v9159
    %v9432 = vunpack.c.h.b16 %v9160
    %v9433 = vunpack.c.l.b16 %v9161
    %v9434 = vunpack.c.l.b16 %v9162
    %v9435 = vunpack.c.l.b16 %v9163
    %v9436 = vunpack.c.l.b16 %v9164
    %v9437 = vunpack.c.h.b16 %v9161
    %v9438 = vunpack.c.h.b16 %v9162
    %v9439 = vunpack.c.h.b16 %v9163
    %v9440 = vunpack.c.h.b16 %v9164
    %v9441 = vunpack.c.l.b16 %v9165
    %v9442 = vunpack.c.l.b16 %v9166
    %v9443 = vunpack.c.l.b16 %v9167
    %v9444 = vunpack.c.l.b16 %v9168
    %v9445 = vunpack.c.h.b16 %v9165
    %v9446 = vunpack.c.h.b16 %v9166
    %v9447 = vunpack.c.h.b16 %v9167
    %v9448 = vunpack.c.h.b16 %v9168
    %v9449 = vunpack.c.l.b16 %v9169
    %v9450 = vunpack.c.l.b16 %v9170
    %v9451 = vunpack.c.l.b16 %v9171
    %v9452 = vunpack.c.l.b16 %v9172
    %v9453 = vunpack.c.h.b16 %v9169
    %v9454 = vunpack.c.h.b16 %v9170
    %v9455 = vunpack.c.h.b16 %v9171
    %v9456 = vunpack.c.h.b16 %v9172
    %v9457 = vunpack.c.l.b16 %v9173
    %v9458 = vunpack.c.l.b16 %v9174
    %v9459 = vunpack.c.l.b16 %v9175
    %v9460 = vunpack.c.l.b16 %v9176
    %v9461 = vunpack.c.h.b16 %v9173
    %v9462 = vunpack.c.h.b16 %v9174
    %v9463 = vunpack.c.h.b16 %v9175
    %v9464 = vunpack.c.h.b16 %v9176
    %v9465 = vunpack.c.l.b16 %v9177
    %v9466 = vunpack.c.l.b16 %v9178
    %v9467 = vunpack.c.l.b16 %v9179
    %v9468 = vunpack.c.l.b16 %v9180
    %v9469 = vunpack.c.h.b16 %v9177
    %v9470 = vunpack.c.h.b16 %v9178
    %v9471 = vunpack.c.h.b16 %v9179
    %v9472 = vunpack.c.h.b16 %v9180
    %v9473 = vunpack.c.l.b16 %v9181
    %v9474 = vunpack.c.l.b16 %v9182
    %v9475 = vunpack.c.l.b16 %v9183
    %v9476 = vunpack.c.l.b16 %v9184
    %v9477 = vunpack.c.h.b16 %v9181
    %v9478 = vunpack.c.h.b16 %v9182
    %v9479 = vunpack.c.h.b16 %v9183
    %v9480 = vunpack.c.h.b16 %v9184
    %v9481 = vunpack.c.l.b16 %v9185
    %v9482 = vunpack.c.l.b16 %v9186
    %v9483 = vunpack.c.l.b16 %v9187
    %v9484 = vunpack.c.l.b16 %v9188
    %v9485 = vunpack.c.h.b16 %v9185
    %v9486 = vunpack.c.h.b16 %v9186
    %v9487 = vunpack.c.h.b16 %v9187
    %v9488 = vunpack.c.h.b16 %v9188
    %v9489 = vunpack.c.l.b16 %v9189
    %v9490 = vunpack.c.l.b16 %v9190
    %v9491 = vunpack.c.l.b16 %v9191
    %v9492 = vunpack.c.l.b16 %v9192
    %v9493 = vunpack.c.h.b16 %v9189
    %v9494 = vunpack.c.h.b16 %v9190
    %v9495 = vunpack.c.h.b16 %v9191
    %v9496 = vunpack.c.h.b16 %v9192
    %v9497 = vunpack.c.l.b16 %v9193
    %v9498 = vunpack.c.l.b16 %v9194
    %v9499 = vunpack.c.l.b16 %v9195
    %v9500 = vunpack.c.l.b16 %v9196
    %v9501 = vunpack.c.h.b16 %v9193
    %v9502 = vunpack.c.h.b16 %v9194
    %v9503 = vunpack.c.h.b16 %v9195
    %v9504 = vunpack.c.h.b16 %v9196
    %v9505 = vunpack.c.l.b16 %v9197
    %v9506 = vunpack.c.l.b16 %v9198
    %v9507 = vunpack.c.l.b16 %v9199
    %v9508 = vunpack.c.l.b16 %v9200
    %v9509 = vunpack.c.h.b16 %v9197
    %v9510 = vunpack.c.h.b16 %v9198
    %v9511 = vunpack.c.h.b16 %v9199
    %v9512 = vunpack.c.h.b16 %v9200
    %v9513 = vunpack.c.l.b16 %v9201
    %v9514 = vunpack.c.l.b16 %v9202
    %v9515 = vunpack.c.l.b16 %v9203
    %v9516 = vunpack.c.l.b16 %v9204
    %v9517 = vunpack.c.h.b16 %v9201
    %v9518 = vunpack.c.h.b16 %v9202
    %v9519 = vunpack.c.h.b16 %v9203
    %v9520 = vunpack.c.h.b16 %v9204
    %v9521 = vunpack.c.l.b16 %v9205
    %v9522 = vunpack.c.l.b16 %v9206
    %v9523 = vunpack.c.l.b16 %v9207
    %v9524 = vunpack.c.l.b16 %v9208
    %v9525 = vunpack.c.h.b16 %v9205
    %v9526 = vunpack.c.h.b16 %v9206
    %v9527 = vunpack.c.h.b16 %v9207
    %v9528 = vunpack.c.h.b16 %v9208
    %v9529 = vunpack.c.l.b16 %v9209
    %v9530 = vunpack.c.l.b16 %v9210
    %v9531 = vunpack.c.l.b16 %v9211
    %v9532 = vunpack.c.l.b16 %v9212
    %v9533 = vunpack.c.h.b16 %v9209
    %v9534 = vunpack.c.h.b16 %v9210
    %v9535 = vunpack.c.h.b16 %v9211
    %v9536 = vunpack.c.h.b16 %v9212
    %v9537 = vunpack.c.l.b16 %v9213
    %v9538 = vunpack.c.l.b16 %v9214
    %v9539 = vunpack.c.l.b16 %v9215
    %v9540 = vunpack.c.l.b16 %v9216
    %v9541 = vunpack.c.h.b16 %v9213
    %v9542 = vunpack.c.h.b16 %v9214
    %v9543 = vunpack.c.h.b16 %v9215
    %v9544 = vunpack.c.h.b16 %v9216
    %v9545 = vunpack.c.l.b16 %v9217
    %v9546 = vunpack.c.l.b16 %v9218
    %v9547 = vunpack.c.l.b16 %v9219
    %v9548 = vunpack.c.l.b16 %v9220
    %v9549 = vunpack.c.h.b16 %v9217
    %v9550 = vunpack.c.h.b16 %v9218
    %v9551 = vunpack.c.h.b16 %v9219
    %v9552 = vunpack.c.h.b16 %v9220
    %v9553 = vunpack.c.l.b16 %v9221
    %v9554 = vunpack.c.l.b16 %v9222
    %v9555 = vunpack.c.l.b16 %v9223
    %v9556 = vunpack.c.l.b16 %v9224
    %v9557 = vunpack.c.h.b16 %v9221
    %v9558 = vunpack.c.h.b16 %v9222
    %v9559 = vunpack.c.h.b16 %v9223
    %v9560 = vunpack.c.h.b16 %v9224
    %v9561 = vunpack.c.l.b16 %v9225
    %v9562 = vunpack.c.l.b16 %v9226
    %v9563 = vunpack.c.l.b16 %v9227
    %v9564 = vunpack.c.l.b16 %v9228
    %v9565 = vunpack.c.h.b16 %v9225
    %v9566 = vunpack.c.h.b16 %v9226
    %v9567 = vunpack.c.h.b16 %v9227
    %v9568 = vunpack.c.h.b16 %v9228
    %v9569 = vunpack.c.l.b16 %v9229
    %v9570 = vunpack.c.l.b16 %v9230
    %v9571 = vunpack.c.l.b16 %v9231
    %v9572 = vunpack.c.l.b16 %v9232
    %v9573 = vunpack.c.h.b16 %v9229
    %v9574 = vunpack.c.h.b16 %v9230
    %v9575 = vunpack.c.h.b16 %v9231
    %v9576 = vunpack.c.h.b16 %v9232
    %v9577 = vunpack.c.l.b16 %v9233
    %v9578 = vunpack.c.l.b16 %v9234
    %v9579 = vunpack.c.l.b16 %v9235
    %v9580 = vunpack.c.l.b16 %v9236
    %v9581 = vunpack.c.h.b16 %v9233
    %v9582 = vunpack.c.h.b16 %v9234
    %v9583 = vunpack.c.h.b16 %v9235
    %v9584 = vunpack.c.h.b16 %v9236
    %v9585 = vunpack.c.l.b16 %v9237
    %v9586 = vunpack.c.l.b16 %v9238
    %v9587 = vunpack.c.l.b16 %v9239
    %v9588 = vunpack.c.l.b16 %v9240
    %v9589 = vunpack.c.h.b16 %v9237
    %v9590 = vunpack.c.h.b16 %v9238
    %v9591 = vunpack.c.h.b16 %v9239
    %v9592 = vunpack.c.h.b16 %v9240
    %v9593 = vunpack.c.l.b16 %v9241
    %v9594 = vunpack.c.l.b16 %v9242
    %v9595 = vunpack.c.l.b16 %v9243
    %v9596 = vunpack.c.l.b16 %v9244
    %v9597 = vunpack.c.h.b16 %v9241
    %v9598 = vunpack.c.h.b16 %v9242
    %v9599 = vunpack.c.h.b16 %v9243
    %v9600 = vunpack.c.h.b16 %v9244
    %v9601 = vunpack.c.l.b16 %v9245
    %v9602 = vunpack.c.l.b16 %v9246
    %v9603 = vunpack.c.l.b16 %v9247
    %v9604 = vunpack.c.l.b16 %v9248
    %v9605 = vunpack.c.h.b16 %v9245
    %v9606 = vunpack.c.h.b16 %v9246
    %v9607 = vunpack.c.h.b16 %v9247
    %v9608 = vunpack.c.h.b16 %v9248
    %v9609 = vunpack.c.l.b16 %v9249
    %v9610 = vunpack.c.l.b16 %v9250
    %v9611 = vunpack.c.l.b16 %v9251
    %v9612 = vunpack.c.l.b16 %v9252
    %v9613 = vunpack.c.h.b16 %v9249
    %v9614 = vunpack.c.h.b16 %v9250
    %v9615 = vunpack.c.h.b16 %v9251
    %v9616 = vunpack.c.h.b16 %v9252
    %v9617 = vunpack.c.l.b16 %v9253
    %v9618 = vunpack.c.l.b16 %v9254
    %v9619 = vunpack.c.l.b16 %v9255
    %v9620 = vunpack.c.l.b16 %v9256
    %v9621 = vunpack.c.h.b16 %v9253
    %v9622 = vunpack.c.h.b16 %v9254
    %v9623 = vunpack.c.h.b16 %v9255
    %v9624 = vunpack.c.h.b16 %v9256
    %v9625 = vunpack.c.l.b16 %v9257
    %v9626 = vunpack.c.l.b16 %v9258
    %v9627 = vunpack.c.l.b16 %v9259
    %v9628 = vunpack.c.l.b16 %v9260
    %v9629 = vunpack.c.h.b16 %v9257
    %v9630 = vunpack.c.h.b16 %v9258
    %v9631 = vunpack.c.h.b16 %v9259
    %v9632 = vunpack.c.h.b16 %v9260
    %v9633 = vunpack.c.l.b16 %v9261
    %v9634 = vunpack.c.l.b16 %v9262
    %v9635 = vunpack.c.l.b16 %v9263
    %v9636 = vunpack.c.l.b16 %v9264
    %v9637 = vunpack.c.h.b16 %v9261
    %v9638 = vunpack.c.h.b16 %v9262
    %v9639 = vunpack.c.h.b16 %v9263
    %v9640 = vunpack.c.h.b16 %v9264
    %v9641 = vunpack.c.l.b16 %v9265
    %v9642 = vunpack.c.l.b16 %v9266
    %v9643 = vunpack.c.l.b16 %v9267
    %v9644 = vunpack.c.l.b16 %v9268
    %v9645 = vunpack.c.h.b16 %v9265
    %v9646 = vunpack.c.h.b16 %v9266
    %v9647 = vunpack.c.h.b16 %v9267
    %v9648 = vunpack.c.h.b16 %v9268
    %v9649 = vunpack.c.l.b16 %v9269
    %v9650 = vunpack.c.l.b16 %v9270
    %v9651 = vunpack.c.l.b16 %v9271
    %v9652 = vunpack.c.l.b16 %v9272
    %v9653 = vunpack.c.h.b16 %v9269
    %v9654 = vunpack.c.h.b16 %v9270
    %v9655 = vunpack.c.h.b16 %v9271
    %v9656 = vunpack.c.h.b16 %v9272
    %v9657 = vpack.c.b16 %v9402, %v9401
    %v9658 = vpack.c.b16 %v9404, %v9403
    %v9659 = vpack.c.b16 %v9406, %v9405
    %v9660 = vpack.c.b16 %v9408, %v9407
    %v9661 = vpack.c.b16 %v9410, %v9409
    %v9662 = vpack.c.b16 %v9412, %v9411
    %v9663 = vpack.c.b16 %v9414, %v9413
    %v9664 = vpack.c.b16 %v9416, %v9415
    %v9665 = vpack.c.b16 %v9418, %v9417
    %v9666 = vpack.c.b16 %v9420, %v9419
    %v9667 = vpack.c.b16 %v9422, %v9421
    %v9668 = vpack.c.b16 %v9424, %v9423
    %v9669 = vpack.c.b16 %v9426, %v9425
    %v9670 = vpack.c.b16 %v9428, %v9427
    %v9671 = vpack.c.b16 %v9430, %v9429
    %v9672 = vpack.c.b16 %v9432, %v9431
    %v9673 = vpack.c.b16 %v9434, %v9433
    %v9674 = vpack.c.b16 %v9436, %v9435
    %v9675 = vpack.c.b16 %v9438, %v9437
    %v9676 = vpack.c.b16 %v9440, %v9439
    %v9677 = vpack.c.b16 %v9442, %v9441
    %v9678 = vpack.c.b16 %v9444, %v9443
    %v9679 = vpack.c.b16 %v9446, %v9445
    %v9680 = vpack.c.b16 %v9448, %v9447
    %v9681 = vpack.c.b16 %v9450, %v9449
    %v9682 = vpack.c.b16 %v9452, %v9451
    %v9683 = vpack.c.b16 %v9454, %v9453
    %v9684 = vpack.c.b16 %v9456, %v9455
    %v9685 = vpack.c.b16 %v9458, %v9457
    %v9686 = vpack.c.b16 %v9460, %v9459
    %v9687 = vpack.c.b16 %v9462, %v9461
    %v9688 = vpack.c.b16 %v9464, %v9463
    %v9689 = vpack.c.b16 %v9466, %v9465
    %v9690 = vpack.c.b16 %v9468, %v9467
    %v9691 = vpack.c.b16 %v9470, %v9469
    %v9692 = vpack.c.b16 %v9472, %v9471
    %v9693 = vpack.c.b16 %v9474, %v9473
    %v9694 = vpack.c.b16 %v9476, %v9475
    %v9695 = vpack.c.b16 %v9478, %v9477
    %v9696 = vpack.c.b16 %v9480, %v9479
    %v9697 = vpack.c.b16 %v9482, %v9481
    %v9698 = vpack.c.b16 %v9484, %v9483
    %v9699 = vpack.c.b16 %v9486, %v9485
    %v9700 = vpack.c.b16 %v9488, %v9487
    %v9701 = vpack.c.b16 %v9490, %v9489
    %v9702 = vpack.c.b16 %v9492, %v9491
    %v9703 = vpack.c.b16 %v9494, %v9493
    %v9704 = vpack.c.b16 %v9496, %v9495
    %v9705 = vpack.c.b16 %v9498, %v9497
    %v9706 = vpack.c.b16 %v9500, %v9499
    %v9707 = vpack.c.b16 %v9502, %v9501
    %v9708 = vpack.c.b16 %v9504, %v9503
    %v9709 = vpack.c.b16 %v9506, %v9505
    %v9710 = vpack.c.b16 %v9508, %v9507
    %v9711 = vpack.c.b16 %v9510, %v9509
    %v9712 = vpack.c.b16 %v9512, %v9511
    %v9713 = vpack.c.b16 %v9514, %v9513
    %v9714 = vpack.c.b16 %v9516, %v9515
    %v9715 = vpack.c.b16 %v9518, %v9517
    %v9716 = vpack.c.b16 %v9520, %v9519
    %v9717 = vpack.c.b16 %v9522, %v9521
    %v9718 = vpack.c.b16 %v9524, %v9523
    %v9719 = vpack.c.b16 %v9526, %v9525
    %v9720 = vpack.c.b16 %v9528, %v9527
    %v9721 = vpack.c.b16 %v9530, %v9529
    %v9722 = vpack.c.b16 %v9532, %v9531
    %v9723 = vpack.c.b16 %v9534, %v9533
    %v9724 = vpack.c.b16 %v9536, %v9535
    %v9725 = vpack.c.b16 %v9538, %v9537
    %v9726 = vpack.c.b16 %v9540, %v9539
    %v9727 = vpack.c.b16 %v9542, %v9541
    %v9728 = vpack.c.b16 %v9544, %v9543
    %v9729 = vpack.c.b16 %v9546, %v9545
    %v9730 = vpack.c.b16 %v9548, %v9547
    %v9731 = vpack.c.b16 %v9550, %v9549
    %v9732 = vpack.c.b16 %v9552, %v9551
    %v9733 = vpack.c.b16 %v9554, %v9553
    %v9734 = vpack.c.b16 %v9556, %v9555
    %v9735 = vpack.c.b16 %v9558, %v9557
    %v9736 = vpack.c.b16 %v9560, %v9559
    %v9737 = vpack.c.b16 %v9562, %v9561
    %v9738 = vpack.c.b16 %v9564, %v9563
    %v9739 = vpack.c.b16 %v9566, %v9565
    %v9740 = vpack.c.b16 %v9568, %v9567
    %v9741 = vpack.c.b16 %v9570, %v9569
    %v9742 = vpack.c.b16 %v9572, %v9571
    %v9743 = vpack.c.b16 %v9574, %v9573
    %v9744 = vpack.c.b16 %v9576, %v9575
    %v9745 = vpack.c.b16 %v9578, %v9577
    %v9746 = vpack.c.b16 %v9580, %v9579
    %v9747 = vpack.c.b16 %v9582, %v9581
    %v9748 = vpack.c.b16 %v9584, %v9583
    %v9749 = vpack.c.b16 %v9586, %v9585
    %v9750 = vpack.c.b16 %v9588, %v9587
    %v9751 = vpack.c.b16 %v9590, %v9589
    %v9752 = vpack.c.b16 %v9592, %v9591
    %v9753 = vpack.c.b16 %v9594, %v9593
    %v9754 = vpack.c.b16 %v9596, %v9595
    %v9755 = vpack.c.b16 %v9598, %v9597
    %v9756 = vpack.c.b16 %v9600, %v9599
    %v9757 = vpack.c.b16 %v9602, %v9601
    %v9758 = vpack.c.b16 %v9604, %v9603
    %v9759 = vpack.c.b16 %v9606, %v9605
    %v9760 = vpack.c.b16 %v9608, %v9607
    %v9761 = vpack.c.b16 %v9610, %v9609
    %v9762 = vpack.c.b16 %v9612, %v9611
    %v9763 = vpack.c.b16 %v9614, %v9613
    %v9764 = vpack.c.b16 %v9616, %v9615
    %v9765 = vpack.c.b16 %v9618, %v9617
    %v9766 = vpack.c.b16 %v9620, %v9619
    %v9767 = vpack.c.b16 %v9622, %v9621
    %v9768 = vpack.c.b16 %v9624, %v9623
    %v9769 = vpack.c.b16 %v9626, %v9625
    %v9770 = vpack.c.b16 %v9628, %v9627
    %v9771 = vpack.c.b16 %v9630, %v9629
    %v9772 = vpack.c.b16 %v9632, %v9631
    %v9773 = vpack.c.b16 %v9634, %v9633
    %v9774 = vpack.c.b16 %v9636, %v9635
    %v9775 = vpack.c.b16 %v9638, %v9637
    %v9776 = vpack.c.b16 %v9640, %v9639
    %v9777 = vpack.c.b16 %v9642, %v9641
    %v9778 = vpack.c.b16 %v9644, %v9643
    %v9779 = vpack.c.b16 %v9646, %v9645
    %v9780 = vpack.c.b16 %v9648, %v9647
    %v9781 = vpack.c.b16 %v9650, %v9649
    %v9782 = vpack.c.b16 %v9652, %v9651
    %v9783 = vpack.c.b16 %v9654, %v9653
    %v9784 = vpack.c.b16 %v9656, %v9655
    %9913 = vst [vmem:[#allocation22] sm:$0xff] %v9657
    %vm9914 = vcmask 1043456
    %vm9915 = vcmask 523268
    %vm9916 = vmor %vm9915, %vm9914
    %9917 = vst.msk [vmem:[#allocation22 + $0x8] sm:$0xff] %vm9916, %v9658
    %9918 = vst [vmem:[#allocation22 + $0x10] sm:$0xff] %v9659
    %9919 = vst.msk [vmem:[#allocation22 + $0x18] sm:$0xff] %vm9916, %v9660
    %9920 = vst [vmem:[#allocation22 + $0x20] sm:$0xff] %v9661
    %9921 = vst.msk [vmem:[#allocation22 + $0x28] sm:$0xff] %vm9916, %v9662
    %9922 = vst [vmem:[#allocation22 + $0x30] sm:$0xff] %v9663
    %9923 = vst.msk [vmem:[#allocation22 + $0x38] sm:$0xff] %vm9916, %v9664
    %9924 = vst [vmem:[#allocation22 + $0x40] sm:$0xff] %v9665
    %9925 = vst.msk [vmem:[#allocation22 + $0x48] sm:$0xff] %vm9916, %v9666
    %9926 = vst [vmem:[#allocation22 + $0x50] sm:$0xff] %v9667
    %9927 = vst.msk [vmem:[#allocation22 + $0x58] sm:$0xff] %vm9916, %v9668
    %9928 = vst [vmem:[#allocation22 + $0x60] sm:$0xff] %v9669
    %9929 = vst.msk [vmem:[#allocation22 + $0x68] sm:$0xff] %vm9916, %v9670
    %9930 = vst [vmem:[#allocation22 + $0x70] sm:$0xff] %v9671
    %9931 = vst.msk [vmem:[#allocation22 + $0x78] sm:$0xff] %vm9916, %v9672
    %9932 = vst [vmem:[#allocation22 + $0x80] sm:$0xff] %v9673
    %9933 = vst.msk [vmem:[#allocation22 + $0x88] sm:$0xff] %vm9916, %v9674
    %9934 = vst [vmem:[#allocation22 + $0x90] sm:$0xff] %v9675
    %9935 = vst.msk [vmem:[#allocation22 + $0x98] sm:$0xff] %vm9916, %v9676
    %9936 = vst [vmem:[#allocation22 + $0xa0] sm:$0xff] %v9677
    %9937 = vst.msk [vmem:[#allocation22 + $0xa8] sm:$0xff] %vm9916, %v9678
    %9938 = vst [vmem:[#allocation22 + $0xb0] sm:$0xff] %v9679
    %9939 = vst.msk [vmem:[#allocation22 + $0xb8] sm:$0xff] %vm9916, %v9680
    %9940 = vst [vmem:[#allocation22 + $0xc0] sm:$0xff] %v9681
    %9941 = vst.msk [vmem:[#allocation22 + $0xc8] sm:$0xff] %vm9916, %v9682
    %9942 = vst [vmem:[#allocation22 + $0xd0] sm:$0xff] %v9683
    %9943 = vst.msk [vmem:[#allocation22 + $0xd8] sm:$0xff] %vm9916, %v9684
    %9944 = vst [vmem:[#allocation22 + $0xe0] sm:$0xff] %v9685
    %9945 = vst.msk [vmem:[#allocation22 + $0xe8] sm:$0xff] %vm9916, %v9686
    %9946 = vst [vmem:[#allocation22 + $0xf0] sm:$0xff] %v9687
    %9947 = vst.msk [vmem:[#allocation22 + $0xf8] sm:$0xff] %vm9916, %v9688
    %9948 = vst [vmem:[#allocation22 + $0x100] sm:$0xff] %v9689
    %9949 = vst.msk [vmem:[#allocation22 + $0x108] sm:$0xff] %vm9916, %v9690
    %9950 = vst [vmem:[#allocation22 + $0x110] sm:$0xff] %v9691
    %9951 = vst.msk [vmem:[#allocation22 + $0x118] sm:$0xff] %vm9916, %v9692
    %9952 = vst [vmem:[#allocation22 + $0x120] sm:$0xff] %v9693
    %9953 = vst.msk [vmem:[#allocation22 + $0x128] sm:$0xff] %vm9916, %v9694
    %9954 = vst [vmem:[#allocation22 + $0x130] sm:$0xff] %v9695
    %9955 = vst.msk [vmem:[#allocation22 + $0x138] sm:$0xff] %vm9916, %v9696
    %9956 = vst [vmem:[#allocation22 + $0x140] sm:$0xff] %v9697
    %9957 = vst.msk [vmem:[#allocation22 + $0x148] sm:$0xff] %vm9916, %v9698
    %9958 = vst [vmem:[#allocation22 + $0x150] sm:$0xff] %v9699
    %9959 = vst.msk [vmem:[#allocation22 + $0x158] sm:$0xff] %vm9916, %v9700
    %9960 = vst [vmem:[#allocation22 + $0x160] sm:$0xff] %v9701
    %9961 = vst.msk [vmem:[#allocation22 + $0x168] sm:$0xff] %vm9916, %v9702
    %9962 = vst [vmem:[#allocation22 + $0x170] sm:$0xff] %v9703
    %9963 = vst.msk [vmem:[#allocation22 + $0x178] sm:$0xff] %vm9916, %v9704
    %9964 = vst [vmem:[#allocation22 + $0x180] sm:$0xff] %v9705
    %9965 = vst.msk [vmem:[#allocation22 + $0x188] sm:$0xff] %vm9916, %v9706
    %9966 = vst [vmem:[#allocation22 + $0x190] sm:$0xff] %v9707
    %9967 = vst.msk [vmem:[#allocation22 + $0x198] sm:$0xff] %vm9916, %v9708
    %9968 = vst [vmem:[#allocation22 + $0x1a0] sm:$0xff] %v9709
    %9969 = vst.msk [vmem:[#allocation22 + $0x1a8] sm:$0xff] %vm9916, %v9710
    %9970 = vst [vmem:[#allocation22 + $0x1b0] sm:$0xff] %v9711
    %9971 = vst.msk [vmem:[#allocation22 + $0x1b8] sm:$0xff] %vm9916, %v9712
    %9972 = vst [vmem:[#allocation22 + $0x1c0] sm:$0xff] %v9713
    %9973 = vst.msk [vmem:[#allocation22 + $0x1c8] sm:$0xff] %vm9916, %v9714
    %9974 = vst [vmem:[#allocation22 + $0x1d0] sm:$0xff] %v9715
    %9975 = vst.msk [vmem:[#allocation22 + $0x1d8] sm:$0xff] %vm9916, %v9716
    %9976 = vst [vmem:[#allocation22 + $0x1e0] sm:$0xff] %v9717
    %9977 = vst.msk [vmem:[#allocation22 + $0x1e8] sm:$0xff] %vm9916, %v9718
    %9978 = vst [vmem:[#allocation22 + $0x1f0] sm:$0xff] %v9719
    %9979 = vst.msk [vmem:[#allocation22 + $0x1f8] sm:$0xff] %vm9916, %v9720
    %9980 = vst [vmem:[#allocation22 + $0x200] sm:$0xff] %v9721
    %9981 = vst.msk [vmem:[#allocation22 + $0x208] sm:$0xff] %vm9916, %v9722
    %9982 = vst [vmem:[#allocation22 + $0x210] sm:$0xff] %v9723
    %9983 = vst.msk [vmem:[#allocation22 + $0x218] sm:$0xff] %vm9916, %v9724
    %9984 = vst [vmem:[#allocation22 + $0x220] sm:$0xff] %v9725
    %9985 = vst.msk [vmem:[#allocation22 + $0x228] sm:$0xff] %vm9916, %v9726
    %9986 = vst [vmem:[#allocation22 + $0x230] sm:$0xff] %v9727
    %9987 = vst.msk [vmem:[#allocation22 + $0x238] sm:$0xff] %vm9916, %v9728
    %9988 = vst [vmem:[#allocation22 + $0x240] sm:$0xff] %v9729
    %9989 = vst.msk [vmem:[#allocation22 + $0x248] sm:$0xff] %vm9916, %v9730
    %9990 = vst [vmem:[#allocation22 + $0x250] sm:$0xff] %v9731
    %9991 = vst.msk [vmem:[#allocation22 + $0x258] sm:$0xff] %vm9916, %v9732
    %9992 = vst [vmem:[#allocation22 + $0x260] sm:$0xff] %v9733
    %9993 = vst.msk [vmem:[#allocation22 + $0x268] sm:$0xff] %vm9916, %v9734
    %9994 = vst [vmem:[#allocation22 + $0x270] sm:$0xff] %v9735
    %9995 = vst.msk [vmem:[#allocation22 + $0x278] sm:$0xff] %vm9916, %v9736
    %9996 = vst [vmem:[#allocation22 + $0x280] sm:$0xff] %v9737
    %9997 = vst.msk [vmem:[#allocation22 + $0x288] sm:$0xff] %vm9916, %v9738
    %9998 = vst [vmem:[#allocation22 + $0x290] sm:$0xff] %v9739
    %9999 = vst.msk [vmem:[#allocation22 + $0x298] sm:$0xff] %vm9916, %v9740
    %10000 = vst [vmem:[#allocation22 + $0x2a0] sm:$0xff] %v9741
    %10001 = vst.msk [vmem:[#allocation22 + $0x2a8] sm:$0xff] %vm9916, %v9742
    %10002 = vst [vmem:[#allocation22 + $0x2b0] sm:$0xff] %v9743
    %10003 = vst.msk [vmem:[#allocation22 + $0x2b8] sm:$0xff] %vm9916, %v9744
    %10004 = vst [vmem:[#allocation22 + $0x2c0] sm:$0xff] %v9745
    %10005 = vst.msk [vmem:[#allocation22 + $0x2c8] sm:$0xff] %vm9916, %v9746
    %10006 = vst [vmem:[#allocation22 + $0x2d0] sm:$0xff] %v9747
    %10007 = vst.msk [vmem:[#allocation22 + $0x2d8] sm:$0xff] %vm9916, %v9748
    %10008 = vst [vmem:[#allocation22 + $0x2e0] sm:$0xff] %v9749
    %10009 = vst.msk [vmem:[#allocation22 + $0x2e8] sm:$0xff] %vm9916, %v9750
    %10010 = vst [vmem:[#allocation22 + $0x2f0] sm:$0xff] %v9751
    %10011 = vst.msk [vmem:[#allocation22 + $0x2f8] sm:$0xff] %vm9916, %v9752
    %10012 = vst [vmem:[#allocation22 + $0x300] sm:$0xff] %v9753
    %10013 = vst.msk [vmem:[#allocation22 + $0x308] sm:$0xff] %vm9916, %v9754
    %10014 = vst [vmem:[#allocation22 + $0x310] sm:$0xff] %v9755
    %10015 = vst.msk [vmem:[#allocation22 + $0x318] sm:$0xff] %vm9916, %v9756
    %10016 = vst [vmem:[#allocation22 + $0x320] sm:$0xff] %v9757
    %10017 = vst.msk [vmem:[#allocation22 + $0x328] sm:$0xff] %vm9916, %v9758
    %10018 = vst [vmem:[#allocation22 + $0x330] sm:$0xff] %v9759
    %10019 = vst.msk [vmem:[#allocation22 + $0x338] sm:$0xff] %vm9916, %v9760
    %10020 = vst [vmem:[#allocation22 + $0x340] sm:$0xff] %v9761
    %10021 = vst.msk [vmem:[#allocation22 + $0x348] sm:$0xff] %vm9916, %v9762
    %10022 = vst [vmem:[#allocation22 + $0x350] sm:$0xff] %v9763
    %10023 = vst.msk [vmem:[#allocation22 + $0x358] sm:$0xff] %vm9916, %v9764
    %10024 = vst [vmem:[#allocation22 + $0x360] sm:$0xff] %v9765
    %10025 = vst.msk [vmem:[#allocation22 + $0x368] sm:$0xff] %vm9916, %v9766
    %10026 = vst [vmem:[#allocation22 + $0x370] sm:$0xff] %v9767
    %10027 = vst.msk [vmem:[#allocation22 + $0x378] sm:$0xff] %vm9916, %v9768
    %10028 = vst [vmem:[#allocation22 + $0x380] sm:$0xff] %v9769
    %10029 = vst.msk [vmem:[#allocation22 + $0x388] sm:$0xff] %vm9916, %v9770
    %10030 = vst [vmem:[#allocation22 + $0x390] sm:$0xff] %v9771
    %10031 = vst.msk [vmem:[#allocation22 + $0x398] sm:$0xff] %vm9916, %v9772
    %10032 = vst [vmem:[#allocation22 + $0x3a0] sm:$0xff] %v9773
    %10033 = vst.msk [vmem:[#allocation22 + $0x3a8] sm:$0xff] %vm9916, %v9774
    %10034 = vst [vmem:[#allocation22 + $0x3b0] sm:$0xff] %v9775
    %10035 = vst.msk [vmem:[#allocation22 + $0x3b8] sm:$0xff] %vm9916, %v9776
    %10036 = vst [vmem:[#allocation22 + $0x3c0] sm:$0xff] %v9777
    %10037 = vst.msk [vmem:[#allocation22 + $0x3c8] sm:$0xff] %vm9916, %v9778
    %10038 = vst [vmem:[#allocation22 + $0x3d0] sm:$0xff] %v9779
    %10039 = vst.msk [vmem:[#allocation22 + $0x3d8] sm:$0xff] %vm9916, %v9780
    %10040 = vst [vmem:[#allocation22 + $0x3e0] sm:$0xff] %v9781
    %10041 = vst.msk [vmem:[#allocation22 + $0x3e8] sm:$0xff] %vm9916, %v9782
    %10042 = vst [vmem:[#allocation22 + $0x3f0] sm:$0xff] %v9783
    %10043 = vst.msk [vmem:[#allocation22 + $0x3f8] sm:$0xff] %vm9916, %v9784
    // Predicated region
    $region82: #{tpu_custom_call.1} parent=1 // pred_check
      _
    $region83: #{tpu_custom_call.1} parent=1 // pred_check_branch
      %10045 = sbr.rel (0) target = $region85
    $region84: #{tpu_custom_call.1} parent=1 // pred_region
      %s10047 = ssub.s32 24576, 24576
      %10048 = vsyncadd [#allocation4], %s10047
      %s10049 = sshll.u32 [#allocation19], 4
      %s10050 = int_to_ptr.vmem [resolvable:$true] %s10049
      %10055 = dma.vmem_to_hbm [thread:$0]  %s10050, 24576, %s10, [#allocation4], 384, 384, 24
    $region85: #{tpu_custom_call.1} parent=1 // pred_fallthru
      _
    // Predicated region
    $region86: #{tpu_custom_call.1} parent=1 // pred_check
      _
    $region87: #{tpu_custom_call.1} parent=1 // pred_check_branch
      %10057 = sbr.rel (0) target = $region89
    $region88: #{tpu_custom_call.1} parent=1 // pred_region
      %s10059 = ssub.s32 12288, 12288
      %10060 = vsyncadd [#allocation21], %s10059
      %s10061 = sshll.u32 [#allocation20], 4
      %s10062 = int_to_ptr.vmem [resolvable:$true] %s10061
      %10067 = dma.vmem_to_hbm [thread:$0]  %s10062, 12288, %s11, [#allocation21], 192, 192, 12
    $region89: #{tpu_custom_call.1} parent=1 // pred_fallthru
      _
    // Predicated region
    $region90: #{tpu_custom_call.1} parent=1 // pred_check
      _
    $region91: #{tpu_custom_call.1} parent=1 // pred_check_branch
      %10069 = sbr.rel (0) target = $region93
    $region92: #{tpu_custom_call.1} parent=1 // pred_region
      %s10071 = ssub.s32 16384, 16384
      %10072 = vsyncadd [#allocation21], %s10071
      %s10073 = sshll.u32 [#allocation22], 4
      %s10074 = int_to_ptr.vmem [resolvable:$true] %s10073
      %10079 = dma.vmem_to_hbm [thread:$0]  %s10074, 16384, %s12, [#allocation21], 256, 256, 16
    $region93: #{tpu_custom_call.1} parent=1 // pred_fallthru
      _
    // Predicated region
    $region94: #{tpu_custom_call.1} parent=1 // pred_check
      _
    $region95: #{tpu_custom_call.1} parent=1 // pred_check_branch
      %10081 = sbr.rel (0) target = $region97
    $region96: #{tpu_custom_call.1} parent=1 // pred_region
      %10082 = dma.done [#allocation4], 24576
    $region97: #{tpu_custom_call.1} parent=1 // pred_fallthru
      _
    // Predicated region
    $region98: #{tpu_custom_call.1} parent=1 // pred_check
      _
    $region99: #{tpu_custom_call.1} parent=1 // pred_check_branch
      %10084 = sbr.rel (0) target = $region101
    $region100: #{tpu_custom_call.1} parent=1 // pred_region
      %10085 = dma.done [#allocation21], 12288
    $region101: #{tpu_custom_call.1} parent=1 // pred_fallthru
      _
    // Predicated region
    $region102: #{tpu_custom_call.1} parent=1 // pred_check
      _
    $region103: #{tpu_custom_call.1} parent=1 // pred_check_branch
      %10087 = sbr.rel (0) target = $region105
    $region104: #{tpu_custom_call.1} parent=1 // pred_region
      %10088 = dma.done [#allocation21], 16384
    $region105: #{tpu_custom_call.1} parent=1 // pred_fallthru
      _
    %10089 = vsyncpa [#allocation3], 1
    %10090 = vsyncpa [#allocation6], 1
    %10091 = vsyncpa [#allocation9], 1
    %10092 = vsyncpa [#allocation12], 1
    %10093 = vsyncpa [#allocation15], 1
    %10094 = vsyncpa [#allocation18], 1
    %10095 = vsyncpa [#allocation4], 1
    %10096 = vsyncpa [#allocation21], 1

</llo_original>
